<compile_context>
chip_gen: v7x
topology: tpu7x:2x2x1
jax: 0.10.0
libtpu: 0.0.40
codegen_flags: <defaults>
</compile_context>

<pallas_src>
import functools
import math

import numpy as np
import jax
import jax.numpy as jnp
from jax.experimental import pallas as pl
from jax.experimental.pallas import tpu as pltpu

# ----------------------------- config (small) --------------------------------
B = 2            # batch
S = 8            # token sequence length for the text BERT
VOCAB = 64
MAX_POS = 16
TYPE_VOCAB = 2

BERT_HIDDEN = 32
BERT_HEADS = 2
BERT_INTER = 64
BERT_LAYERS = 1

GRAPH_HIDDEN = 16
GRAPH_HEADS = 2
GRAPH_INTER = 32
GRAPH_LAYERS = 1
MAX_INTI_POS = 4
GRAPH_SEQ = 4            # [self, n1, n2, n3]

NUM_LABELS = 3
NUM_NEIGHBORS = 14       # len(namelist)
LN_EPS = 1e-12

PACK_W = 128             # lane width of the packed weight / bias slabs
NEG_BIG = -1e9           # off-block additive mask (exp underflows to exactly 0)

# ------------------------- static packing layout ------------------------------


def encoder_meta(hid, inter, num_layers, *, lead_rows=0, lead_vecs=0):
    """Static (row, rows, cols) / (row, cols) offsets into the packed slabs."""
    meta = {}
    r, v = lead_rows, lead_vecs
    meta["emb_ln_g"] = (v, hid); v += 1
    meta["emb_ln_b"] = (v, hid); v += 1
    layers = []
    for _ in range(num_layers):
        lm = {}
        lm["qkv"] = (r, hid, 3 * hid); r += hid
        lm["ao"] = (r, hid, hid); r += hid
        lm["iw"] = (r, hid, inter); r += hid
        lm["ow"] = (r, inter, hid); r += inter
        lm["qkv_b"] = (v, 3 * hid); v += 1
        lm["ao_b"] = (v, hid); v += 1
        lm["ln1_g"] = (v, hid); v += 1
        lm["ln1_b"] = (v, hid); v += 1
        lm["i_b"] = (v, inter); v += 1
        lm["o_b"] = (v, hid); v += 1
        lm["ln2_g"] = (v, hid); v += 1
        lm["ln2_b"] = (v, hid); v += 1
        layers.append(lm)
    meta["layers"] = layers
    meta["pool"] = (r, hid, hid); r += hid
    meta["pool_b"] = (v, hid); v += 1
    meta["w_rows"] = r
    meta["b_rows"] = v
    return meta


BERT_META = encoder_meta(BERT_HIDDEN, BERT_INTER, BERT_LAYERS)
GRAPH_META = encoder_meta(GRAPH_HIDDEN, GRAPH_INTER, GRAPH_LAYERS,
                          lead_rows=BERT_HIDDEN, lead_vecs=1)
GRAPH_META["transform"] = (0, BERT_HIDDEN, GRAPH_HIDDEN)   # fused transform layer
GRAPH_META["transform_b"] = (0, GRAPH_HIDDEN)

# ----------------------------- in-kernel helpers ------------------------------


def _w(w_ref, off):
    """Static slice of the bf16 weight slab: [rows, cols]."""
    r, rows, cols = off
    return w_ref[r:r + rows, 0:cols]


def _b(b_ref, off):
    """Static slice of the f32 bias/LN slab: [1, cols]."""
    r, cols = off
    return b_ref[r:r + 1, 0:cols]


def _mm(a, w16):
    """MXU matmul: activation cast to bf16, weight already bf16, f32 accumulation."""
    return jnp.dot(a.astype(jnp.bfloat16), w16, preferred_element_type=jnp.float32)


def _ln(x, g, b, eps):
    mu = jnp.mean(x, axis=-1, keepdims=True)
    var = jnp.mean(jnp.square(x - mu), axis=-1, keepdims=True)
    return (x - mu) * jax.lax.rsqrt(var + eps) * g + b


def _encoder_pool(x2, mask, w_ref, b_ref, meta, *, nbt, seq, hid,
                  num_heads, num_layers, eps):
    """BERT encoder stack + pooler on a flattened [nbt*seq, hid] activation.

    mask: [nbt*seq, nbt*seq] additive block-diagonal mask (0 / -10000 in-block for
    padding, -1e9 off-block) so the whole batch attends in ONE matmul per head.
    """
    dh = hid // num_heads
    for l in range(num_layers):
        lm = meta["layers"][l]
        # Fused QKV (Q columns pre-scaled by 1/sqrt(dh) at pack time).
        y = (_mm(x2, _w(w_ref, lm["qkv"])) + _b(b_ref, lm["qkv_b"])
             ).astype(jnp.bfloat16)                      # [m, 3*hid]
        ctx_heads = []
        for h in range(num_heads):
            qh = y[:, h * dh:(h + 1) * dh]
            kh = y[:, hid + h * dh:hid + (h + 1) * dh]
            vh = y[:, 2 * hid + h * dh:2 * hid + (h + 1) * dh]
            s = jnp.einsum("md,nd->mn", qh, kh,
                           preferred_element_type=jnp.float32)
            s = s + mask
            s = s - jnp.max(s, axis=-1, keepdims=True)
            e = jnp.exp(s)
            p = e * pl.reciprocal(jnp.sum(e, axis=-1, keepdims=True), approx=True)
            ctx_heads.append(jnp.dot(p.astype(jnp.bfloat16), vh,
                                     preferred_element_type=jnp.float32))
        ctx = jnp.concatenate(ctx_heads, axis=-1)        # [m, hid]
        attn = _mm(ctx, _w(w_ref, lm["ao"])) + _b(b_ref, lm["ao_b"])
        x2 = _ln(attn + x2, _b(b_ref, lm["ln1_g"]), _b(b_ref, lm["ln1_b"]), eps)

        # TODO(synk): HF BertIntermediate uses erf-GELU; tanh approximation here
        # (~1e-3 drift) for Mosaic lowering robustness.
        h_ff = jax.nn.gelu(_mm(x2, _w(w_ref, lm["iw"])) + _b(b_ref, lm["i_b"]),
                           approximate=True)
        out = _mm(h_ff, _w(w_ref, lm["ow"])) + _b(b_ref, lm["o_b"])
        x2 = _ln(out + x2, _b(b_ref, lm["ln2_g"]), _b(b_ref, lm["ln2_b"]), eps)

    x3 = x2.reshape(nbt, seq, hid)
    first = jax.lax.slice_in_dim(x3, 0, 1, axis=1).reshape(nbt, hid)
    return jnp.tanh(_mm(first, _w(w_ref, meta["pool"])) + _b(b_ref, meta["pool_b"]))


# ----------------------------- fused tower kernels ----------------------------


def _bert_tower_kernel(emb_ref, mask_ref, w_ref, b_ref, pooled_ref, *,
                       meta, nbt, seq, hid, num_heads, num_layers, eps):
    x2 = _ln(emb_ref[...], _b(b_ref, meta["emb_ln_g"]),
             _b(b_ref, meta["emb_ln_b"]), eps)
    pooled_ref[...] = _encoder_pool(
        x2, mask_ref[...], w_ref, b_ref, meta, nbt=nbt, seq=seq, hid=hid,
        num_heads=num_heads, num_layers=num_layers, eps=eps)


def _graph_tower_kernel(x_ref, pos_ref, mask_ref, w_ref, b_ref, pooled_ref, *,
                        meta, nbt, seq, hid, num_heads, num_layers, eps):
    # graph_bert_transform_layer fused in, then + positional embeddings, LN.
    proj = _mm(x_ref[...], _w(w_ref, meta["transform"])) + _b(b_ref, meta["transform_b"])
    x2 = _ln(proj + pos_ref[...], _b(b_ref, meta["emb_ln_g"]),
             _b(b_ref, meta["emb_ln_b"]), eps)
    pooled_ref[...] = _encoder_pool(
        x2, mask_ref[...], w_ref, b_ref, meta, nbt=nbt, seq=seq, hid=hid,
        num_heads=num_heads, num_layers=num_layers, eps=eps)


# ----------------------------- pallas_call wrappers ---------------------------


def _full_spec(shape):
    nd = len(shape)
    return pl.BlockSpec(shape, lambda i, _nd=nd: (0,) * _nd)


def bert_pooled_batched(bp, input_ids, input_mask, segment_ids):
    """HF BertModel(...)[1] for the whole (1+14)*B batch in ONE fused kernel."""
    nbt, ss = input_ids.shape
    hid = BERT_HIDDEN
    m = nbt * ss

    pos_ids = jnp.arange(ss, dtype=jnp.int32)[None, :]
    emb = (bp["word_emb"][input_ids]
           + bp["pos_emb"][pos_ids]
           + bp["type_emb"][segment_ids]).astype(jnp.float32).reshape(m, hid)

    # Block-diagonal additive mask: in-block = HF extended mask (0 / -10000),
    # off-block = -1e9 (exp underflows to 0 -> identical to per-example attention).
    add_vec = ((1.0 - input_mask.astype(jnp.float32)) * -10000.0).reshape(m)
    bidx = jnp.repeat(jnp.arange(nbt, dtype=jnp.int32), ss)
    mask = jnp.where(bidx[:, None] == bidx[None, :], add_vec[None, :],
                     NEG_BIG).astype(jnp.float32)

    kern = functools.partial(_bert_tower_kernel, meta=BERT_META, nbt=nbt, seq=ss,
                             hid=hid, num_heads=BERT_HEADS,
                             num_layers=BERT_LAYERS, eps=LN_EPS)
    # TODO(synk): on v7x (2 TCs) a 2-way "parallel" batch split may help; single
    # fused step is best on 1-TC v5e/v6e, so grid=(1,) here.
    return pl.pallas_call(
        kern,
        grid=(1,),
        in_specs=[_full_spec(emb.shape), _full_spec(mask.shape),
                  _full_spec(bp["wslab"].shape), _full_spec(bp["bslab"].shape)],
        out_specs=_full_spec((nbt, hid)),
        out_shape=jax.ShapeDtypeStruct((nbt, hid), jnp.float32),
        compiler_params=pltpu.CompilerParams(dimension_semantics=("arbitrary",)),
    )(emb, mask, bp["wslab"], bp["bslab"])


def graph_pooled_batched(gp, seq_cat, pos_index):
    """graph_bert_transform_layer + GraphBertBlock(...)[1]; q/k branches batched."""
    nbt, sg, hin = seq_cat.shape
    hid = GRAPH_HIDDEN
    m = nbt * sg

    x = seq_cat.astype(jnp.float32).reshape(m, hin)
    pos = gp["pos_emb"][pos_index].astype(jnp.float32).reshape(m, hid)

    bidx = jnp.repeat(jnp.arange(nbt, dtype=jnp.int32), sg)
    mask = jnp.where(bidx[:, None] == bidx[None, :], 0.0,
                     NEG_BIG).astype(jnp.float32)        # attention mask is all-ones

    kern = functools.partial(_graph_tower_kernel, meta=GRAPH_META, nbt=nbt, seq=sg,
                             hid=hid, num_heads=GRAPH_HEADS,
                             num_layers=GRAPH_LAYERS, eps=LN_EPS)
    return pl.pallas_call(
        kern,
        grid=(1,),
        in_specs=[_full_spec(x.shape), _full_spec(pos.shape), _full_spec(mask.shape),
                  _full_spec(gp["wslab"].shape), _full_spec(gp["bslab"].shape)],
        out_specs=_full_spec((nbt, hid)),
        out_shape=jax.ShapeDtypeStruct((nbt, hid), jnp.float32),
        compiler_params=pltpu.CompilerParams(dimension_semantics=("arbitrary",)),
    )(x, pos, mask, gp["wslab"], gp["bslab"])


# ----------------------------- model forward ----------------------------------


def model_forward(packed, input_ids, input_mask, segment_ids,
                  neighbor_ids, neighbor_mask, neighbor_seg, label_id):
    bb, ss = input_ids.shape

    # Batch the main example + all 14 neighbors into ONE BERT forward.
    all_ids = jnp.concatenate([input_ids[None], neighbor_ids], axis=0).reshape(-1, ss)
    all_mask = jnp.concatenate([input_mask[None], neighbor_mask], axis=0).reshape(-1, ss)
    all_seg = jnp.concatenate([segment_ids[None], neighbor_seg], axis=0).reshape(-1, ss)

    pooled_all = bert_pooled_batched(packed["bert"], all_ids, all_mask, all_seg)
    pooled_all = pooled_all.reshape(1 + NUM_NEIGHBORS, bb, BERT_HIDDEN)

    output_layer_qk = pooled_all[0]
    (qself_out, kself_out, qk1_out, qk2_out, qk3_out,
     kq1_out, kq2_out, kq3_out,
     kk1_out, kk2_out, kk3_out,
     qq1_out, qq2_out, qq3_out) = [pooled_all[1 + i] for i in range(NUM_NEIGHBORS)]
    # output_layer_qk_dropout (p=0.1) is identity in eval mode.

    # use_kkqq and use_qk branch; both graph branches batched together.
    seq_cat_q = jnp.stack([output_layer_qk, qk1_out, qk2_out, qk3_out], axis=1)
    seq_cat_k = jnp.stack([output_layer_qk, kq1_out, kq2_out, kq3_out], axis=1)
    seq_cat = jnp.concatenate([seq_cat_q, seq_cat_k], axis=0)        # [2B, 4, H]

    pos_index_q = jnp.tile(jnp.array([0, 1, 1, 1], jnp.int32), (bb, 1))
    pos_index_k = jnp.tile(jnp.array([0, 2, 2, 2], jnp.int32), (bb, 1))
    pos_index = jnp.concatenate([pos_index_q, pos_index_k], axis=0)

    pooled_graph = graph_pooled_batched(packed["graph"], seq_cat, pos_index)
    pooled_graph_emb_q = pooled_graph[:bb]
    pooled_graph_emb_k = pooled_graph[bb:]

    # Logit head in plain JAX (XLA fuses it; a standalone pallas_call costs more
    # than the compute).  The edge linear has bias=False.
    logits_ori = output_layer_qk @ packed["ori_w"] + packed["ori_b"]
    edge_in = jnp.concatenate([output_layer_qk, pooled_graph_emb_q,
                               pooled_graph_emb_k], axis=-1)
    logits_new = edge_in @ packed["edge_w"]
    logits = 0.2 * logits_ori + 0.8 * logits_new

    # CrossEntropyLoss (num_labels > 1), mean reduction.
    logp = jax.nn.log_softmax(logits, axis=-1)
    loss = -jnp.mean(jnp.take_along_axis(logp, label_id[:, None], axis=-1))
    return loss, logits


# ----------------------------- parameter init ---------------------------------


def _normal(key, shape, scale=0.02):
    return scale * jax.random.normal(key, shape, jnp.float32)


def init_encoder_layers(key, num_layers, hidden, inter):
    def one(k):
        ks = jax.random.split(k, 6)
        return {
            "q_w": _normal(ks[0], (hidden, hidden)), "q_b": jnp.zeros((hidden,)),
            "k_w": _normal(ks[1], (hidden, hidden)), "k_b": jnp.zeros((hidden,)),
            "v_w": _normal(ks[2], (hidden, hidden)), "v_b": jnp.zeros((hidden,)),
            "ao_w": _normal(ks[3], (hidden, hidden)), "ao_b": jnp.zeros((hidden,)),
            "ln1_g": jnp.ones((hidden,)), "ln1_b": jnp.zeros((hidden,)),
            "i_w": _normal(ks[4], (hidden, inter)), "i_b": jnp.zeros((inter,)),
            "o_w": _normal(ks[5], (inter, hidden)), "o_b": jnp.zeros((hidden,)),
            "ln2_g": jnp.ones((hidden,)), "ln2_b": jnp.zeros((hidden,)),
        }
    return [one(k) for k in jax.random.split(key, num_layers)]


def init_bert(key):
    ks = jax.random.split(key, 5)
    return {
        "word_emb": _normal(ks[0], (VOCAB, BERT_HIDDEN)),
        "pos_emb": _normal(ks[1], (MAX_POS, BERT_HIDDEN)),
        "type_emb": _normal(ks[2], (TYPE_VOCAB, BERT_HIDDEN)),
        "emb_ln_g": jnp.ones((BERT_HIDDEN,)), "emb_ln_b": jnp.zeros((BERT_HIDDEN,)),
        "layers": init_encoder_layers(ks[3], BERT_LAYERS, BERT_HIDDEN, BERT_INTER),
        "pool_w": _normal(ks[4], (BERT_HIDDEN, BERT_HIDDEN)),
        "pool_b": jnp.zeros((BERT_HIDDEN,)),
    }


def init_graph_bert(key):
    ks = jax.random.split(key, 3)
    return {
        "pos_emb": _normal(ks[0], (MAX_INTI_POS, GRAPH_HIDDEN)),
        "emb_ln_g": jnp.ones((GRAPH_HIDDEN,)), "emb_ln_b": jnp.zeros((GRAPH_HIDDEN,)),
        "layers": init_encoder_layers(ks[1], GRAPH_LAYERS, GRAPH_HIDDEN, GRAPH_INTER),
        "pool_w": _normal(ks[2], (GRAPH_HIDDEN, GRAPH_HIDDEN)),
        "pool_b": jnp.zeros((GRAPH_HIDDEN,)),
    }


def init_params(key):
    ks = jax.random.split(key, 6)
    return {
        "bert": init_bert(ks[0]),
        "q_graph_bert": init_graph_bert(ks[1]),
        "k_graph_bert": init_graph_bert(ks[2]),  # declared in torch __init__, unused in forward
        "transform_w": _normal(ks[3], (BERT_HIDDEN, GRAPH_HIDDEN)),
        "transform_b": jnp.zeros((GRAPH_HIDDEN,)),
        "ori_w": _normal(ks[4], (BERT_HIDDEN, NUM_LABELS)),
        "ori_b": jnp.zeros((NUM_LABELS,)),
        "edge_w": _normal(ks[5], (BERT_HIDDEN + 2 * GRAPH_HIDDEN, NUM_LABELS)),
    }


# ----------------------------- weight packing ----------------------------------


def _put_w(slab, off, mat):
    r, rows, cols = off
    slab[r:r + rows, :cols] = np.asarray(mat, np.float32)


def _put_b(slab, off, vec):
    r, cols = off
    slab[r, :cols] = np.asarray(vec, np.float32).reshape(-1)


def _pack_encoder(wslab, bslab, p, meta, num_heads, hid):
    dh = hid // num_heads
    scale = 1.0 / math.sqrt(dh)
    _put_b(bslab, meta["emb_ln_g"], p["emb_ln_g"])
    _put_b(bslab, meta["emb_ln_b"], p["emb_ln_b"])
    for lm, lp in zip(meta["layers"], p["layers"]):
        # Fold the 1/sqrt(dh) attention scale into the Q projection (exact).
        qkv_w = np.concatenate([np.asarray(lp["q_w"]) * scale,
                                np.asarray(lp["k_w"]),
                                np.asarray(lp["v_w"])], axis=1)
        qkv_b = np.concatenate([np.asarray(lp["q_b"]) * scale,
                                np.asarray(lp["k_b"]),
                                np.asarray(lp["v_b"])], axis=0)
        _put_w(wslab, lm["qkv"], qkv_w)
        _put_b(bslab, lm["qkv_b"], qkv_b)
        _put_w(wslab, lm["ao"], lp["ao_w"])
        _put_b(bslab, lm["ao_b"], lp["ao_b"])
        _put_b(bslab, lm["ln1_g"], lp["ln1_g"])
        _put_b(bslab, lm["ln1_b"], lp["ln1_b"])
        _put_w(wslab, lm["iw"], lp["i_w"])
        _put_b(bslab, lm["i_b"], lp["i_b"])
        _put_w(wslab, lm["ow"], lp["o_w"])
        _put_b(bslab, lm["o_b"], lp["o_b"])
        _put_b(bslab, lm["ln2_g"], lp["ln2_g"])
        _put_b(bslab, lm["ln2_b"], lp["ln2_b"])
    _put_w(wslab, meta["pool"], p["pool_w"])
    _put_b(bslab, meta["pool_b"], p["pool_b"])


def pack_params(params):
    """Pack all tower weights into one bf16 matmul slab + one f32 bias/LN slab each."""
    bw = np.zeros((BERT_META["w_rows"], PACK_W), np.float32)
    bb_ = np.zeros((BERT_META["b_rows"], PACK_W), np.float32)
    _pack_encoder(bw, bb_, params["bert"], BERT_META, BERT_HEADS, BERT_HIDDEN)

    gw = np.zeros((GRAPH_META["w_rows"], PACK_W), np.float32)
    gb = np.zeros((GRAPH_META["b_rows"], PACK_W), np.float32)
    _put_w(gw, GRAPH_META["transform"], params["transform_w"])
    _put_b(gb, GRAPH_META["transform_b"], params["transform_b"])
    # The torch forward uses q_graph_bert for BOTH graph branches.
    _pack_encoder(gw, gb, params["q_graph_bert"], GRAPH_META, GRAPH_HEADS, GRAPH_HIDDEN)

    return {
        "bert": {"word_emb": params["bert"]["word_emb"],
                 "pos_emb": params["bert"]["pos_emb"],
                 "type_emb": params["bert"]["type_emb"],
                 "wslab": jnp.asarray(bw, jnp.bfloat16),
                 "bslab": jnp.asarray(bb_, jnp.float32)},
        "graph": {"pos_emb": params["q_graph_bert"]["pos_emb"],
                  "wslab": jnp.asarray(gw, jnp.bfloat16),
                  "bslab": jnp.asarray(gb, jnp.float32)},
        "ori_w": params["ori_w"], "ori_b": params["ori_b"],
        "edge_w": params["edge_w"],
    }


# ----------------------------- main --------------------------------------------

if __name__ == "__main__":
    params = init_params(jax.random.PRNGKey(42))
    packed = pack_params(params)

    key = jax.random.PRNGKey(0)
    k1, k2, k3 = jax.random.split(key, 3)
    input_ids = jax.random.randint(k1, (B, S), 0, VOCAB, dtype=jnp.int32)
    input_mask = jnp.ones((B, S), jnp.int32)
    segment_ids = jnp.zeros((B, S), jnp.int32)

    # input_neighbor: 14 triples of (ids, mask, segment_ids), stacked on axis 0.
    neighbor_ids = jax.random.randint(k2, (NUM_NEIGHBORS, B, S), 0, VOCAB,
                                      dtype=jnp.int32)
    neighbor_mask = jnp.ones((NUM_NEIGHBORS, B, S), jnp.int32)
    neighbor_seg = jnp.zeros((NUM_NEIGHBORS, B, S), jnp.int32)

    label_id = jax.random.randint(k3, (B,), 0, NUM_LABELS, dtype=jnp.int32)

    fwd = jax.jit(model_forward)
    loss, logits = fwd(packed, input_ids, input_mask, segment_ids,
                       neighbor_ids, neighbor_mask, neighbor_seg, label_id)
    jax.block_until_ready((loss, logits))
    assert logits.shape == (B, NUM_LABELS)
    assert jnp.isfinite(loss)
    print("KERNEL_OK")
</pallas_src>

<mosaic_0001>
module attributes {stable_mosaic.version = 11 : i64} {
  func.func @_bert_tower_kernel(%arg0: i32, %arg1: memref<240x32xf32, #tpu.memory_space<vmem>>, %arg2: memref<240x240xf32, #tpu.memory_space<vmem>>, %arg3: memref<192x128xbf16, #tpu.memory_space<vmem>>, %arg4: memref<11x128xf32, #tpu.memory_space<vmem>>, %arg5: memref<30x32xf32, #tpu.memory_space<vmem>>) attributes {dimension_semantics = [#tpu.dimension_semantics<arbitrary>], iteration_bounds = array<i64: 1>, scalar_prefetch = 0 : i64, scratch_operands = 0 : i64, tpu.core_type = #tpu.core_type<tc>, window_params = [{pipeline_mode = #tpu.pipeline_mode<synchronous>, transform_indices = @transform_0, window_bounds = array<i64: 240, 32>}, {pipeline_mode = #tpu.pipeline_mode<synchronous>, transform_indices = @transform_1, window_bounds = array<i64: 240, 240>}, {pipeline_mode = #tpu.pipeline_mode<synchronous>, transform_indices = @transform_2, window_bounds = array<i64: 192, 128>}, {pipeline_mode = #tpu.pipeline_mode<synchronous>, transform_indices = @transform_3, window_bounds = array<i64: 11, 128>}, {pipeline_mode = #tpu.pipeline_mode<synchronous>, transform_indices = @transform_4, window_bounds = array<i64: 30, 32>}]} {
    %c0 = arith.constant 0 : index
    %c0_0 = arith.constant 0 : index
    %0 = vector.load %arg1[%c0, %c0_0] : memref<240x32xf32, #tpu.memory_space<vmem>>, vector<240x32xf32>
    %c0_1 = arith.constant 0 : index
    %c0_2 = arith.constant 0 : index
    %1 = vector.load %arg4[%c0_1, %c0_2] : memref<11x128xf32, #tpu.memory_space<vmem>>, vector<1x32xf32>
    %c1 = arith.constant 1 : index
    %c0_3 = arith.constant 0 : index
    %2 = vector.load %arg4[%c1, %c0_3] : memref<11x128xf32, #tpu.memory_space<vmem>>, vector<1x32xf32>
    %cst = arith.constant dense<0.000000e+00> : vector<240xf32>
    %3 = vector.multi_reduction <add>, %0, %cst [1] : vector<240x32xf32> to vector<240xf32>
    %4 = vector.shape_cast %3 : vector<240xf32> to vector<240x1xf32>
    %cst_4 = arith.constant 3.200000e+01 : f32
    %5 = vector.broadcast %cst_4 : f32 to vector<240x1xf32>
    %6 = arith.divf %4, %5 : vector<240x1xf32>
    %7 = vector.broadcast %6 : vector<240x1xf32> to vector<240x32xf32>
    %8 = arith.subf %0, %7 : vector<240x32xf32>
    %9 = arith.mulf %8, %8 : vector<240x32xf32>
    %cst_5 = arith.constant dense<0.000000e+00> : vector<240xf32>
    %10 = vector.multi_reduction <add>, %9, %cst_5 [1] : vector<240x32xf32> to vector<240xf32>
    %11 = vector.shape_cast %10 : vector<240xf32> to vector<240x1xf32>
    %cst_6 = arith.constant 3.200000e+01 : f32
    %12 = vector.broadcast %cst_6 : f32 to vector<240x1xf32>
    %13 = arith.divf %11, %12 : vector<240x1xf32>
    %14 = vector.broadcast %6 : vector<240x1xf32> to vector<240x32xf32>
    %15 = arith.subf %0, %14 : vector<240x32xf32>
    %cst_7 = arith.constant 9.99999996E-13 : f32
    %16 = vector.broadcast %cst_7 : f32 to vector<240x1xf32>
    %17 = arith.addf %13, %16 : vector<240x1xf32>
    %18 = math.rsqrt %17 : vector<240x1xf32>
    %19 = vector.broadcast %18 : vector<240x1xf32> to vector<240x32xf32>
    %20 = arith.mulf %15, %19 : vector<240x32xf32>
    %21 = vector.broadcast %1 : vector<1x32xf32> to vector<240x32xf32>
    %22 = arith.mulf %20, %21 : vector<240x32xf32>
    %23 = vector.broadcast %2 : vector<1x32xf32> to vector<240x32xf32>
    %24 = arith.addf %22, %23 : vector<240x32xf32>
    %c0_8 = arith.constant 0 : index
    %c0_9 = arith.constant 0 : index
    %25 = vector.load %arg2[%c0_8, %c0_9] : memref<240x240xf32, #tpu.memory_space<vmem>>, vector<240x240xf32>
    %c0_10 = arith.constant 0 : index
    %c0_11 = arith.constant 0 : index
    %26 = vector.load %arg3[%c0_10, %c0_11] : memref<192x128xbf16, #tpu.memory_space<vmem>>, vector<32x96xbf16>
    %27 = arith.truncf %24 : vector<240x32xf32> to vector<240x32xbf16>
    %cst_12 = arith.constant dense<0.000000e+00> : vector<240x96xf32>
    %28 = tpu.matmul %27, %26, %cst_12 {dimension_numbers = #tpu.dot_dimension_numbers<[1], [0], [0], [1], [0, 0, 1, 1], [], []>} : vector<240x32xbf16>, vector<32x96xbf16>, vector<240x96xf32> -> vector<240x96xf32>
    %c2 = arith.constant 2 : index
    %c0_13 = arith.constant 0 : index
    %29 = vector.load %arg4[%c2, %c0_13] : memref<11x128xf32, #tpu.memory_space<vmem>>, vector<1x96xf32>
    %30 = vector.broadcast %29 : vector<1x96xf32> to vector<240x96xf32>
    %31 = arith.addf %28, %30 : vector<240x96xf32>
    %32 = arith.truncf %31 : vector<240x96xf32> to vector<240x96xbf16>
    %33 = vector.extract_strided_slice %32 {offsets = [0, 0], sizes = [240, 16], strides = [1, 1]} : vector<240x96xbf16> to vector<240x16xbf16>
    %34 = vector.extract_strided_slice %32 {offsets = [0, 32], sizes = [240, 16], strides = [1, 1]} : vector<240x96xbf16> to vector<240x16xbf16>
    %35 = vector.extract_strided_slice %32 {offsets = [0, 64], sizes = [240, 16], strides = [1, 1]} : vector<240x96xbf16> to vector<240x16xbf16>
    "tpu.trace_start"() <{level = 10 : i32, message = "md,nd->mn"}> : () -> ()
    %cst_14 = arith.constant dense<0.000000e+00> : vector<240x240xf32>
    %36 = tpu.matmul %33, %34, %cst_14 {dimension_numbers = #tpu.dot_dimension_numbers<[1], [1], [0], [0], [0, 0, 1, 0], [], []>} : vector<240x16xbf16>, vector<240x16xbf16>, vector<240x240xf32> -> vector<240x240xf32>
    "tpu.trace_stop"() : () -> ()
    %37 = arith.addf %36, %25 : vector<240x240xf32>
    %cst_15 = arith.constant dense<0xFF800000> : vector<240xf32>
    %38 = vector.multi_reduction <maximumf>, %37, %cst_15 [1] : vector<240x240xf32> to vector<240xf32>
    %39 = vector.shape_cast %38 : vector<240xf32> to vector<240x1xf32>
    %40 = vector.broadcast %39 : vector<240x1xf32> to vector<240x240xf32>
    %41 = arith.subf %37, %40 : vector<240x240xf32>
    %42 = math.exp %41 : vector<240x240xf32>
    %cst_16 = arith.constant dense<0.000000e+00> : vector<240xf32>
    %43 = vector.multi_reduction <add>, %42, %cst_16 [1] : vector<240x240xf32> to vector<240xf32>
    %44 = vector.shape_cast %43 : vector<240xf32> to vector<240x1xf32>
    %45 = tpu.reciprocal %44 {approx = true} : vector<240x1xf32> -> vector<240x1xf32>
    %46 = vector.broadcast %45 : vector<240x1xf32> to vector<240x240xf32>
    %47 = arith.mulf %42, %46 : vector<240x240xf32>
    %48 = arith.truncf %47 : vector<240x240xf32> to vector<240x240xbf16>
    %cst_17 = arith.constant dense<0.000000e+00> : vector<240x16xf32>
    %49 = tpu.matmul %48, %35, %cst_17 {dimension_numbers = #tpu.dot_dimension_numbers<[1], [0], [0], [1], [0, 0, 1, 1], [], []>} : vector<240x240xbf16>, vector<240x16xbf16>, vector<240x16xf32> -> vector<240x16xf32>
    %50 = vector.extract_strided_slice %32 {offsets = [0, 16], sizes = [240, 16], strides = [1, 1]} : vector<240x96xbf16> to vector<240x16xbf16>
    %51 = vector.extract_strided_slice %32 {offsets = [0, 48], sizes = [240, 16], strides = [1, 1]} : vector<240x96xbf16> to vector<240x16xbf16>
    %52 = vector.extract_strided_slice %32 {offsets = [0, 80], sizes = [240, 16], strides = [1, 1]} : vector<240x96xbf16> to vector<240x16xbf16>
    "tpu.trace_start"() <{level = 10 : i32, message = "md,nd->mn"}> : () -> ()
    %cst_18 = arith.constant dense<0.000000e+00> : vector<240x240xf32>
    %53 = tpu.matmul %50, %51, %cst_18 {dimension_numbers = #tpu.dot_dimension_numbers<[1], [1], [0], [0], [0, 0, 1, 0], [], []>} : vector<240x16xbf16>, vector<240x16xbf16>, vector<240x240xf32> -> vector<240x240xf32>
    "tpu.trace_stop"() : () -> ()
    %54 = arith.addf %53, %25 : vector<240x240xf32>
    %cst_19 = arith.constant dense<0xFF800000> : vector<240xf32>
    %55 = vector.multi_reduction <maximumf>, %54, %cst_19 [1] : vector<240x240xf32> to vector<240xf32>
    %56 = vector.shape_cast %55 : vector<240xf32> to vector<240x1xf32>
    %57 = vector.broadcast %56 : vector<240x1xf32> to vector<240x240xf32>
    %58 = arith.subf %54, %57 : vector<240x240xf32>
    %59 = math.exp %58 : vector<240x240xf32>
    %cst_20 = arith.constant dense<0.000000e+00> : vector<240xf32>
    %60 = vector.multi_reduction <add>, %59, %cst_20 [1] : vector<240x240xf32> to vector<240xf32>
    %61 = vector.shape_cast %60 : vector<240xf32> to vector<240x1xf32>
    %62 = tpu.reciprocal %61 {approx = true} : vector<240x1xf32> -> vector<240x1xf32>
    %63 = vector.broadcast %62 : vector<240x1xf32> to vector<240x240xf32>
    %64 = arith.mulf %59, %63 : vector<240x240xf32>
    %65 = arith.truncf %64 : vector<240x240xf32> to vector<240x240xbf16>
    %cst_21 = arith.constant dense<0.000000e+00> : vector<240x16xf32>
    %66 = tpu.matmul %65, %52, %cst_21 {dimension_numbers = #tpu.dot_dimension_numbers<[1], [0], [0], [1], [0, 0, 1, 1], [], []>} : vector<240x240xbf16>, vector<240x16xbf16>, vector<240x16xf32> -> vector<240x16xf32>
    %67 = tpu.concatenate %49, %66 in 1 : vector<240x16xf32>, vector<240x16xf32> -> vector<240x32xf32>
    %c32 = arith.constant 32 : index
    %c0_22 = arith.constant 0 : index
    %68 = vector.load %arg3[%c32, %c0_22] : memref<192x128xbf16, #tpu.memory_space<vmem>>, vector<32x32xbf16>
    %69 = arith.truncf %67 : vector<240x32xf32> to vector<240x32xbf16>
    %cst_23 = arith.constant dense<0.000000e+00> : vector<240x32xf32>
    %70 = tpu.matmul %69, %68, %cst_23 {dimension_numbers = #tpu.dot_dimension_numbers<[1], [0], [0], [1], [0, 0, 1, 1], [], []>} : vector<240x32xbf16>, vector<32x32xbf16>, vector<240x32xf32> -> vector<240x32xf32>
    %c3 = arith.constant 3 : index
    %c0_24 = arith.constant 0 : index
    %71 = vector.load %arg4[%c3, %c0_24] : memref<11x128xf32, #tpu.memory_space<vmem>>, vector<1x32xf32>
    %72 = vector.broadcast %71 : vector<1x32xf32> to vector<240x32xf32>
    %73 = arith.addf %70, %72 : vector<240x32xf32>
    %74 = arith.addf %73, %24 : vector<240x32xf32>
    %c4 = arith.constant 4 : index
    %c0_25 = arith.constant 0 : index
    %75 = vector.load %arg4[%c4, %c0_25] : memref<11x128xf32, #tpu.memory_space<vmem>>, vector<1x32xf32>
    %c5 = arith.constant 5 : index
    %c0_26 = arith.constant 0 : index
    %76 = vector.load %arg4[%c5, %c0_26] : memref<11x128xf32, #tpu.memory_space<vmem>>, vector<1x32xf32>
    %cst_27 = arith.constant dense<0.000000e+00> : vector<240xf32>
    %77 = vector.multi_reduction <add>, %74, %cst_27 [1] : vector<240x32xf32> to vector<240xf32>
    %78 = vector.shape_cast %77 : vector<240xf32> to vector<240x1xf32>
    %cst_28 = arith.constant 3.200000e+01 : f32
    %79 = vector.broadcast %cst_28 : f32 to vector<240x1xf32>
    %80 = arith.divf %78, %79 : vector<240x1xf32>
    %81 = vector.broadcast %80 : vector<240x1xf32> to vector<240x32xf32>
    %82 = arith.subf %74, %81 : vector<240x32xf32>
    %83 = arith.mulf %82, %82 : vector<240x32xf32>
    %cst_29 = arith.constant dense<0.000000e+00> : vector<240xf32>
    %84 = vector.multi_reduction <add>, %83, %cst_29 [1] : vector<240x32xf32> to vector<240xf32>
    %85 = vector.shape_cast %84 : vector<240xf32> to vector<240x1xf32>
    %cst_30 = arith.constant 3.200000e+01 : f32
    %86 = vector.broadcast %cst_30 : f32 to vector<240x1xf32>
    %87 = arith.divf %85, %86 : vector<240x1xf32>
    %88 = vector.broadcast %80 : vector<240x1xf32> to vector<240x32xf32>
    %89 = arith.subf %74, %88 : vector<240x32xf32>
    %cst_31 = arith.constant 9.99999996E-13 : f32
    %90 = vector.broadcast %cst_31 : f32 to vector<240x1xf32>
    %91 = arith.addf %87, %90 : vector<240x1xf32>
    %92 = math.rsqrt %91 : vector<240x1xf32>
    %93 = vector.broadcast %92 : vector<240x1xf32> to vector<240x32xf32>
    %94 = arith.mulf %89, %93 : vector<240x32xf32>
    %95 = vector.broadcast %75 : vector<1x32xf32> to vector<240x32xf32>
    %96 = arith.mulf %94, %95 : vector<240x32xf32>
    %97 = vector.broadcast %76 : vector<1x32xf32> to vector<240x32xf32>
    %98 = arith.addf %96, %97 : vector<240x32xf32>
    %c64 = arith.constant 64 : index
    %c0_32 = arith.constant 0 : index
    %99 = vector.load %arg3[%c64, %c0_32] : memref<192x128xbf16, #tpu.memory_space<vmem>>, vector<32x64xbf16>
    %100 = arith.truncf %98 : vector<240x32xf32> to vector<240x32xbf16>
    %cst_33 = arith.constant dense<0.000000e+00> : vector<240x64xf32>
    %101 = tpu.matmul %100, %99, %cst_33 {dimension_numbers = #tpu.dot_dimension_numbers<[1], [0], [0], [1], [0, 0, 1, 1], [], []>} : vector<240x32xbf16>, vector<32x64xbf16>, vector<240x64xf32> -> vector<240x64xf32>
    %c6 = arith.constant 6 : index
    %c0_34 = arith.constant 0 : index
    %102 = vector.load %arg4[%c6, %c0_34] : memref<11x128xf32, #tpu.memory_space<vmem>>, vector<1x64xf32>
    %103 = vector.broadcast %102 : vector<1x64xf32> to vector<240x64xf32>
    %104 = arith.addf %101, %103 : vector<240x64xf32>
    %105 = arith.mulf %104, %104 : vector<240x64xf32>
    %106 = arith.mulf %104, %105 : vector<240x64xf32>
    %cst_35 = arith.constant 4.471500e-02 : f32
    %107 = vector.broadcast %cst_35 : f32 to vector<240x64xf32>
    %108 = arith.mulf %107, %106 : vector<240x64xf32>
    %109 = arith.addf %104, %108 : vector<240x64xf32>
    %cst_36 = arith.constant 0.797884583 : f32
    %110 = vector.broadcast %cst_36 : f32 to vector<240x64xf32>
    %111 = arith.mulf %110, %109 : vector<240x64xf32>
    %112 = math.tanh %111 : vector<240x64xf32>
    %cst_37 = arith.constant 1.000000e+00 : f32
    %113 = vector.broadcast %cst_37 : f32 to vector<240x64xf32>
    %114 = arith.addf %113, %112 : vector<240x64xf32>
    %cst_38 = arith.constant 5.000000e-01 : f32
    %115 = vector.broadcast %cst_38 : f32 to vector<240x64xf32>
    %116 = arith.mulf %115, %114 : vector<240x64xf32>
    %117 = arith.mulf %104, %116 : vector<240x64xf32>
    %c96 = arith.constant 96 : index
    %c0_39 = arith.constant 0 : index
    %118 = vector.load %arg3[%c96, %c0_39] : memref<192x128xbf16, #tpu.memory_space<vmem>>, vector<64x32xbf16>
    %119 = arith.truncf %117 : vector<240x64xf32> to vector<240x64xbf16>
    %cst_40 = arith.constant dense<0.000000e+00> : vector<240x32xf32>
    %120 = tpu.matmul %119, %118, %cst_40 {dimension_numbers = #tpu.dot_dimension_numbers<[1], [0], [0], [1], [0, 0, 1, 1], [], []>} : vector<240x64xbf16>, vector<64x32xbf16>, vector<240x32xf32> -> vector<240x32xf32>
    %c7 = arith.constant 7 : index
    %c0_41 = arith.constant 0 : index
    %121 = vector.load %arg4[%c7, %c0_41] : memref<11x128xf32, #tpu.memory_space<vmem>>, vector<1x32xf32>
    %122 = vector.broadcast %121 : vector<1x32xf32> to vector<240x32xf32>
    %123 = arith.addf %120, %122 : vector<240x32xf32>
    %124 = arith.addf %123, %98 : vector<240x32xf32>
    %c8 = arith.constant 8 : index
    %c0_42 = arith.constant 0 : index
    %125 = vector.load %arg4[%c8, %c0_42] : memref<11x128xf32, #tpu.memory_space<vmem>>, vector<1x32xf32>
    %c9 = arith.constant 9 : index
    %c0_43 = arith.constant 0 : index
    %126 = vector.load %arg4[%c9, %c0_43] : memref<11x128xf32, #tpu.memory_space<vmem>>, vector<1x32xf32>
    %cst_44 = arith.constant dense<0.000000e+00> : vector<240xf32>
    %127 = vector.multi_reduction <add>, %124, %cst_44 [1] : vector<240x32xf32> to vector<240xf32>
    %128 = vector.shape_cast %127 : vector<240xf32> to vector<240x1xf32>
    %cst_45 = arith.constant 3.200000e+01 : f32
    %129 = vector.broadcast %cst_45 : f32 to vector<240x1xf32>
    %130 = arith.divf %128, %129 : vector<240x1xf32>
    %131 = vector.broadcast %130 : vector<240x1xf32> to vector<240x32xf32>
    %132 = arith.subf %124, %131 : vector<240x32xf32>
    %133 = arith.mulf %132, %132 : vector<240x32xf32>
    %cst_46 = arith.constant dense<0.000000e+00> : vector<240xf32>
    %134 = vector.multi_reduction <add>, %133, %cst_46 [1] : vector<240x32xf32> to vector<240xf32>
    %135 = vector.shape_cast %134 : vector<240xf32> to vector<240x1xf32>
    %cst_47 = arith.constant 3.200000e+01 : f32
    %136 = vector.broadcast %cst_47 : f32 to vector<240x1xf32>
    %137 = arith.divf %135, %136 : vector<240x1xf32>
    %138 = vector.broadcast %130 : vector<240x1xf32> to vector<240x32xf32>
    %139 = arith.subf %124, %138 : vector<240x32xf32>
    %cst_48 = arith.constant 9.99999996E-13 : f32
    %140 = vector.broadcast %cst_48 : f32 to vector<240x1xf32>
    %141 = arith.addf %137, %140 : vector<240x1xf32>
    %142 = math.rsqrt %141 : vector<240x1xf32>
    %143 = vector.broadcast %142 : vector<240x1xf32> to vector<240x32xf32>
    %144 = arith.mulf %139, %143 : vector<240x32xf32>
    %145 = vector.broadcast %125 : vector<1x32xf32> to vector<240x32xf32>
    %146 = arith.mulf %144, %145 : vector<240x32xf32>
    %147 = vector.broadcast %126 : vector<1x32xf32> to vector<240x32xf32>
    %148 = arith.addf %146, %147 : vector<240x32xf32>
    %149 = vector.shape_cast %148 : vector<240x32xf32> to vector<30x8x32xf32>
    %150 = vector.extract_strided_slice %149 {offsets = [0, 0, 0], sizes = [30, 1, 32], strides = [1, 1, 1]} : vector<30x8x32xf32> to vector<30x1x32xf32>
    %151 = vector.shape_cast %150 : vector<30x1x32xf32> to vector<30x32xf32>
    %c160 = arith.constant 160 : index
    %c0_49 = arith.constant 0 : index
    %152 = vector.load %arg3[%c160, %c0_49] : memref<192x128xbf16, #tpu.memory_space<vmem>>, vector<32x32xbf16>
    %153 = arith.truncf %151 : vector<30x32xf32> to vector<30x32xbf16>
    %cst_50 = arith.constant dense<0.000000e+00> : vector<30x32xf32>
    %154 = tpu.matmul %153, %152, %cst_50 {dimension_numbers = #tpu.dot_dimension_numbers<[1], [0], [0], [1], [0, 0, 1, 1], [], []>} : vector<30x32xbf16>, vector<32x32xbf16>, vector<30x32xf32> -> vector<30x32xf32>
    %c10 = arith.constant 10 : index
    %c0_51 = arith.constant 0 : index
    %155 = vector.load %arg4[%c10, %c0_51] : memref<11x128xf32, #tpu.memory_space<vmem>>, vector<1x32xf32>
    %156 = vector.broadcast %155 : vector<1x32xf32> to vector<30x32xf32>
    %157 = arith.addf %154, %156 : vector<30x32xf32>
    %158 = math.tanh %157 : vector<30x32xf32>
    %c0_52 = arith.constant 0 : index
    %c0_53 = arith.constant 0 : index
    %159 = vector.load %arg5[%c0_52, %c0_53] : memref<30x32xf32, #tpu.memory_space<vmem>>, vector<30x32xf32>
    tpu.vector_store %arg5[%c0_52, %c0_53], %158 {strides = array<i32>} : memref<30x32xf32, #tpu.memory_space<vmem>>, vector<30x32xf32>,
    return
  }
  func.func @transform_0(%arg0: i32) -> (i32, i32) {
    %c0_i32 = arith.constant 0 : i32
    %c0_i32_0 = arith.constant 0 : i32
    %c0_i32_1 = arith.constant 0 : i32
    return %c0_i32, %c0_i32_0 : i32, i32
  }
  func.func @transform_1(%arg0: i32) -> (i32, i32) {
    %c0_i32 = arith.constant 0 : i32
    %c0_i32_0 = arith.constant 0 : i32
    %c0_i32_1 = arith.constant 0 : i32
    return %c0_i32, %c0_i32_0 : i32, i32
  }
  func.func @transform_2(%arg0: i32) -> (i32, i32) {
    %c0_i32 = arith.constant 0 : i32
    %c0_i32_0 = arith.constant 0 : i32
    %c0_i32_1 = arith.constant 0 : i32
    return %c0_i32, %c0_i32_0 : i32, i32
  }
  func.func @transform_3(%arg0: i32) -> (i32, i32) {
    %c0_i32 = arith.constant 0 : i32
    %c0_i32_0 = arith.constant 0 : i32
    %c0_i32_1 = arith.constant 0 : i32
    return %c0_i32, %c0_i32_0 : i32, i32
  }
  func.func @transform_4(%arg0: i32) -> (i32, i32) {
    %c0_i32 = arith.constant 0 : i32
    %c0_i32_0 = arith.constant 0 : i32
    %c0_i32_1 = arith.constant 0 : i32
    return %c0_i32, %c0_i32_0 : i32, i32
  }
}

module attributes {stable_mosaic.version = 11 : i64} {
  func.func @_graph_tower_kernel(%arg0: i32, %arg1: memref<16x32xf32, #tpu.memory_space<vmem>>, %arg2: memref<16x16xf32, #tpu.memory_space<vmem>>, %arg3: memref<16x16xf32, #tpu.memory_space<vmem>>, %arg4: memref<128x128xbf16, #tpu.memory_space<vmem>>, %arg5: memref<12x128xf32, #tpu.memory_space<vmem>>, %arg6: memref<4x16xf32, #tpu.memory_space<vmem>>) attributes {dimension_semantics = [#tpu.dimension_semantics<arbitrary>], iteration_bounds = array<i64: 1>, scalar_prefetch = 0 : i64, scratch_operands = 0 : i64, tpu.core_type = #tpu.core_type<tc>, window_params = [{pipeline_mode = #tpu.pipeline_mode<synchronous>, transform_indices = @transform_0, window_bounds = array<i64: 16, 32>}, {pipeline_mode = #tpu.pipeline_mode<synchronous>, transform_indices = @transform_1, window_bounds = array<i64: 16, 16>}, {pipeline_mode = #tpu.pipeline_mode<synchronous>, transform_indices = @transform_2, window_bounds = array<i64: 16, 16>}, {pipeline_mode = #tpu.pipeline_mode<synchronous>, transform_indices = @transform_3, window_bounds = array<i64: 128, 128>}, {pipeline_mode = #tpu.pipeline_mode<synchronous>, transform_indices = @transform_4, window_bounds = array<i64: 12, 128>}, {pipeline_mode = #tpu.pipeline_mode<synchronous>, transform_indices = @transform_5, window_bounds = array<i64: 4, 16>}]} {
    %c0 = arith.constant 0 : index
    %c0_0 = arith.constant 0 : index
    %0 = vector.load %arg1[%c0, %c0_0] : memref<16x32xf32, #tpu.memory_space<vmem>>, vector<16x32xf32>
    %c0_1 = arith.constant 0 : index
    %c0_2 = arith.constant 0 : index
    %1 = vector.load %arg4[%c0_1, %c0_2] : memref<128x128xbf16, #tpu.memory_space<vmem>>, vector<32x16xbf16>
    %2 = arith.truncf %0 : vector<16x32xf32> to vector<16x32xbf16>
    %cst = arith.constant dense<0.000000e+00> : vector<16x16xf32>
    %3 = tpu.matmul %2, %1, %cst {dimension_numbers = #tpu.dot_dimension_numbers<[1], [0], [0], [1], [0, 0, 1, 1], [], []>} : vector<16x32xbf16>, vector<32x16xbf16>, vector<16x16xf32> -> vector<16x16xf32>
    %c0_3 = arith.constant 0 : index
    %c0_4 = arith.constant 0 : index
    %4 = vector.load %arg5[%c0_3, %c0_4] : memref<12x128xf32, #tpu.memory_space<vmem>>, vector<1x16xf32>
    %5 = vector.broadcast %4 : vector<1x16xf32> to vector<16x16xf32>
    %6 = arith.addf %3, %5 : vector<16x16xf32>
    %c0_5 = arith.constant 0 : index
    %c0_6 = arith.constant 0 : index
    %7 = vector.load %arg2[%c0_5, %c0_6] : memref<16x16xf32, #tpu.memory_space<vmem>>, vector<16x16xf32>
    %8 = arith.addf %6, %7 : vector<16x16xf32>
    %c1 = arith.constant 1 : index
    %c0_7 = arith.constant 0 : index
    %9 = vector.load %arg5[%c1, %c0_7] : memref<12x128xf32, #tpu.memory_space<vmem>>, vector<1x16xf32>
    %c2 = arith.constant 2 : index
    %c0_8 = arith.constant 0 : index
    %10 = vector.load %arg5[%c2, %c0_8] : memref<12x128xf32, #tpu.memory_space<vmem>>, vector<1x16xf32>
    %cst_9 = arith.constant dense<0.000000e+00> : vector<16xf32>
    %11 = vector.multi_reduction <add>, %8, %cst_9 [1] : vector<16x16xf32> to vector<16xf32>
    %12 = vector.shape_cast %11 : vector<16xf32> to vector<16x1xf32>
    %cst_10 = arith.constant 1.600000e+01 : f32
    %13 = vector.broadcast %cst_10 : f32 to vector<16x1xf32>
    %14 = arith.divf %12, %13 : vector<16x1xf32>
    %15 = vector.broadcast %14 : vector<16x1xf32> to vector<16x16xf32>
    %16 = arith.subf %8, %15 : vector<16x16xf32>
    %17 = arith.mulf %16, %16 : vector<16x16xf32>
    %cst_11 = arith.constant dense<0.000000e+00> : vector<16xf32>
    %18 = vector.multi_reduction <add>, %17, %cst_11 [1] : vector<16x16xf32> to vector<16xf32>
    %19 = vector.shape_cast %18 : vector<16xf32> to vector<16x1xf32>
    %cst_12 = arith.constant 1.600000e+01 : f32
    %20 = vector.broadcast %cst_12 : f32 to vector<16x1xf32>
    %21 = arith.divf %19, %20 : vector<16x1xf32>
    %22 = vector.broadcast %14 : vector<16x1xf32> to vector<16x16xf32>
    %23 = arith.subf %8, %22 : vector<16x16xf32>
    %cst_13 = arith.constant 9.99999996E-13 : f32
    %24 = vector.broadcast %cst_13 : f32 to vector<16x1xf32>
    %25 = arith.addf %21, %24 : vector<16x1xf32>
    %26 = math.rsqrt %25 : vector<16x1xf32>
    %27 = vector.broadcast %26 : vector<16x1xf32> to vector<16x16xf32>
    %28 = arith.mulf %23, %27 : vector<16x16xf32>
    %29 = vector.broadcast %9 : vector<1x16xf32> to vector<16x16xf32>
    %30 = arith.mulf %28, %29 : vector<16x16xf32>
    %31 = vector.broadcast %10 : vector<1x16xf32> to vector<16x16xf32>
    %32 = arith.addf %30, %31 : vector<16x16xf32>
    %c0_14 = arith.constant 0 : index
    %c0_15 = arith.constant 0 : index
    %33 = vector.load %arg3[%c0_14, %c0_15] : memref<16x16xf32, #tpu.memory_space<vmem>>, vector<16x16xf32>
    %c32 = arith.constant 32 : index
    %c0_16 = arith.constant 0 : index
    %34 = vector.load %arg4[%c32, %c0_16] : memref<128x128xbf16, #tpu.memory_space<vmem>>, vector<16x48xbf16>
    %35 = arith.truncf %32 : vector<16x16xf32> to vector<16x16xbf16>
    %cst_17 = arith.constant dense<0.000000e+00> : vector<16x48xf32>
    %36 = tpu.matmul %35, %34, %cst_17 {dimension_numbers = #tpu.dot_dimension_numbers<[1], [0], [0], [1], [0, 0, 1, 1], [], []>} : vector<16x16xbf16>, vector<16x48xbf16>, vector<16x48xf32> -> vector<16x48xf32>
    %c3 = arith.constant 3 : index
    %c0_18 = arith.constant 0 : index
    %37 = vector.load %arg5[%c3, %c0_18] : memref<12x128xf32, #tpu.memory_space<vmem>>, vector<1x48xf32>
    %38 = vector.broadcast %37 : vector<1x48xf32> to vector<16x48xf32>
    %39 = arith.addf %36, %38 : vector<16x48xf32>
    %40 = arith.truncf %39 : vector<16x48xf32> to vector<16x48xbf16>
    %41 = vector.extract_strided_slice %40 {offsets = [0, 0], sizes = [16, 8], strides = [1, 1]} : vector<16x48xbf16> to vector<16x8xbf16>
    %42 = vector.extract_strided_slice %40 {offsets = [0, 16], sizes = [16, 8], strides = [1, 1]} : vector<16x48xbf16> to vector<16x8xbf16>
    %43 = vector.extract_strided_slice %40 {offsets = [0, 32], sizes = [16, 8], strides = [1, 1]} : vector<16x48xbf16> to vector<16x8xbf16>
    "tpu.trace_start"() <{level = 10 : i32, message = "md,nd->mn"}> : () -> ()
    %cst_19 = arith.constant dense<0.000000e+00> : vector<16x16xf32>
    %44 = tpu.matmul %41, %42, %cst_19 {dimension_numbers = #tpu.dot_dimension_numbers<[1], [1], [0], [0], [0, 0, 1, 0], [], []>} : vector<16x8xbf16>, vector<16x8xbf16>, vector<16x16xf32> -> vector<16x16xf32>
    "tpu.trace_stop"() : () -> ()
    %45 = arith.addf %44, %33 : vector<16x16xf32>
    %cst_20 = arith.constant dense<0xFF800000> : vector<16xf32>
    %46 = vector.multi_reduction <maximumf>, %45, %cst_20 [1] : vector<16x16xf32> to vector<16xf32>
    %47 = vector.shape_cast %46 : vector<16xf32> to vector<16x1xf32>
    %48 = vector.broadcast %47 : vector<16x1xf32> to vector<16x16xf32>
    %49 = arith.subf %45, %48 : vector<16x16xf32>
    %50 = math.exp %49 : vector<16x16xf32>
    %cst_21 = arith.constant dense<0.000000e+00> : vector<16xf32>
    %51 = vector.multi_reduction <add>, %50, %cst_21 [1] : vector<16x16xf32> to vector<16xf32>
    %52 = vector.shape_cast %51 : vector<16xf32> to vector<16x1xf32>
    %53 = tpu.reciprocal %52 {approx = true} : vector<16x1xf32> -> vector<16x1xf32>
    %54 = vector.broadcast %53 : vector<16x1xf32> to vector<16x16xf32>
    %55 = arith.mulf %50, %54 : vector<16x16xf32>
    %56 = arith.truncf %55 : vector<16x16xf32> to vector<16x16xbf16>
    %cst_22 = arith.constant dense<0.000000e+00> : vector<16x8xf32>
    %57 = tpu.matmul %56, %43, %cst_22 {dimension_numbers = #tpu.dot_dimension_numbers<[1], [0], [0], [1], [0, 0, 1, 1], [], []>} : vector<16x16xbf16>, vector<16x8xbf16>, vector<16x8xf32> -> vector<16x8xf32>
    %58 = vector.extract_strided_slice %40 {offsets = [0, 8], sizes = [16, 8], strides = [1, 1]} : vector<16x48xbf16> to vector<16x8xbf16>
    %59 = vector.extract_strided_slice %40 {offsets = [0, 24], sizes = [16, 8], strides = [1, 1]} : vector<16x48xbf16> to vector<16x8xbf16>
    %60 = vector.extract_strided_slice %40 {offsets = [0, 40], sizes = [16, 8], strides = [1, 1]} : vector<16x48xbf16> to vector<16x8xbf16>
    "tpu.trace_start"() <{level = 10 : i32, message = "md,nd->mn"}> : () -> ()
    %cst_23 = arith.constant dense<0.000000e+00> : vector<16x16xf32>
    %61 = tpu.matmul %58, %59, %cst_23 {dimension_numbers = #tpu.dot_dimension_numbers<[1], [1], [0], [0], [0, 0, 1, 0], [], []>} : vector<16x8xbf16>, vector<16x8xbf16>, vector<16x16xf32> -> vector<16x16xf32>
    "tpu.trace_stop"() : () -> ()
    %62 = arith.addf %61, %33 : vector<16x16xf32>
    %cst_24 = arith.constant dense<0xFF800000> : vector<16xf32>
    %63 = vector.multi_reduction <maximumf>, %62, %cst_24 [1] : vector<16x16xf32> to vector<16xf32>
    %64 = vector.shape_cast %63 : vector<16xf32> to vector<16x1xf32>
    %65 = vector.broadcast %64 : vector<16x1xf32> to vector<16x16xf32>
    %66 = arith.subf %62, %65 : vector<16x16xf32>
    %67 = math.exp %66 : vector<16x16xf32>
    %cst_25 = arith.constant dense<0.000000e+00> : vector<16xf32>
    %68 = vector.multi_reduction <add>, %67, %cst_25 [1] : vector<16x16xf32> to vector<16xf32>
    %69 = vector.shape_cast %68 : vector<16xf32> to vector<16x1xf32>
    %70 = tpu.reciprocal %69 {approx = true} : vector<16x1xf32> -> vector<16x1xf32>
    %71 = vector.broadcast %70 : vector<16x1xf32> to vector<16x16xf32>
    %72 = arith.mulf %67, %71 : vector<16x16xf32>
    %73 = arith.truncf %72 : vector<16x16xf32> to vector<16x16xbf16>
    %cst_26 = arith.constant dense<0.000000e+00> : vector<16x8xf32>
    %74 = tpu.matmul %73, %60, %cst_26 {dimension_numbers = #tpu.dot_dimension_numbers<[1], [0], [0], [1], [0, 0, 1, 1], [], []>} : vector<16x16xbf16>, vector<16x8xbf16>, vector<16x8xf32> -> vector<16x8xf32>
    %75 = tpu.concatenate %57, %74 in 1 : vector<16x8xf32>, vector<16x8xf32> -> vector<16x16xf32>
    %c48 = arith.constant 48 : index
    %c0_27 = arith.constant 0 : index
    %76 = vector.load %arg4[%c48, %c0_27] : memref<128x128xbf16, #tpu.memory_space<vmem>>, vector<16x16xbf16>
    %77 = arith.truncf %75 : vector<16x16xf32> to vector<16x16xbf16>
    %cst_28 = arith.constant dense<0.000000e+00> : vector<16x16xf32>
    %78 = tpu.matmul %77, %76, %cst_28 {dimension_numbers = #tpu.dot_dimension_numbers<[1], [0], [0], [1], [0, 0, 1, 1], [], []>} : vector<16x16xbf16>, vector<16x16xbf16>, vector<16x16xf32> -> vector<16x16xf32>
    %c4 = arith.constant 4 : index
    %c0_29 = arith.constant 0 : index
    %79 = vector.load %arg5[%c4, %c0_29] : memref<12x128xf32, #tpu.memory_space<vmem>>, vector<1x16xf32>
    %80 = vector.broadcast %79 : vector<1x16xf32> to vector<16x16xf32>
    %81 = arith.addf %78, %80 : vector<16x16xf32>
    %82 = arith.addf %81, %32 : vector<16x16xf32>
    %c5 = arith.constant 5 : index
    %c0_30 = arith.constant 0 : index
    %83 = vector.load %arg5[%c5, %c0_30] : memref<12x128xf32, #tpu.memory_space<vmem>>, vector<1x16xf32>
    %c6 = arith.constant 6 : index
    %c0_31 = arith.constant 0 : index
    %84 = vector.load %arg5[%c6, %c0_31] : memref<12x128xf32, #tpu.memory_space<vmem>>, vector<1x16xf32>
    %cst_32 = arith.constant dense<0.000000e+00> : vector<16xf32>
    %85 = vector.multi_reduction <add>, %82, %cst_32 [1] : vector<16x16xf32> to vector<16xf32>
    %86 = vector.shape_cast %85 : vector<16xf32> to vector<16x1xf32>
    %cst_33 = arith.constant 1.600000e+01 : f32
    %87 = vector.broadcast %cst_33 : f32 to vector<16x1xf32>
    %88 = arith.divf %86, %87 : vector<16x1xf32>
    %89 = vector.broadcast %88 : vector<16x1xf32> to vector<16x16xf32>
    %90 = arith.subf %82, %89 : vector<16x16xf32>
    %91 = arith.mulf %90, %90 : vector<16x16xf32>
    %cst_34 = arith.constant dense<0.000000e+00> : vector<16xf32>
    %92 = vector.multi_reduction <add>, %91, %cst_34 [1] : vector<16x16xf32> to vector<16xf32>
    %93 = vector.shape_cast %92 : vector<16xf32> to vector<16x1xf32>
    %cst_35 = arith.constant 1.600000e+01 : f32
    %94 = vector.broadcast %cst_35 : f32 to vector<16x1xf32>
    %95 = arith.divf %93, %94 : vector<16x1xf32>
    %96 = vector.broadcast %88 : vector<16x1xf32> to vector<16x16xf32>
    %97 = arith.subf %82, %96 : vector<16x16xf32>
    %cst_36 = arith.constant 9.99999996E-13 : f32
    %98 = vector.broadcast %cst_36 : f32 to vector<16x1xf32>
    %99 = arith.addf %95, %98 : vector<16x1xf32>
    %100 = math.rsqrt %99 : vector<16x1xf32>
    %101 = vector.broadcast %100 : vector<16x1xf32> to vector<16x16xf32>
    %102 = arith.mulf %97, %101 : vector<16x16xf32>
    %103 = vector.broadcast %83 : vector<1x16xf32> to vector<16x16xf32>
    %104 = arith.mulf %102, %103 : vector<16x16xf32>
    %105 = vector.broadcast %84 : vector<1x16xf32> to vector<16x16xf32>
    %106 = arith.addf %104, %105 : vector<16x16xf32>
    %c64 = arith.constant 64 : index
    %c0_37 = arith.constant 0 : index
    %107 = vector.load %arg4[%c64, %c0_37] : memref<128x128xbf16, #tpu.memory_space<vmem>>, vector<16x32xbf16>
    %108 = arith.truncf %106 : vector<16x16xf32> to vector<16x16xbf16>
    %cst_38 = arith.constant dense<0.000000e+00> : vector<16x32xf32>
    %109 = tpu.matmul %108, %107, %cst_38 {dimension_numbers = #tpu.dot_dimension_numbers<[1], [0], [0], [1], [0, 0, 1, 1], [], []>} : vector<16x16xbf16>, vector<16x32xbf16>, vector<16x32xf32> -> vector<16x32xf32>
    %c7 = arith.constant 7 : index
    %c0_39 = arith.constant 0 : index
    %110 = vector.load %arg5[%c7, %c0_39] : memref<12x128xf32, #tpu.memory_space<vmem>>, vector<1x32xf32>
    %111 = vector.broadcast %110 : vector<1x32xf32> to vector<16x32xf32>
    %112 = arith.addf %109, %111 : vector<16x32xf32>
    %113 = arith.mulf %112, %112 : vector<16x32xf32>
    %114 = arith.mulf %112, %113 : vector<16x32xf32>
    %cst_40 = arith.constant 4.471500e-02 : f32
    %115 = vector.broadcast %cst_40 : f32 to vector<16x32xf32>
    %116 = arith.mulf %115, %114 : vector<16x32xf32>
    %117 = arith.addf %112, %116 : vector<16x32xf32>
    %cst_41 = arith.constant 0.797884583 : f32
    %118 = vector.broadcast %cst_41 : f32 to vector<16x32xf32>
    %119 = arith.mulf %118, %117 : vector<16x32xf32>
    %120 = math.tanh %119 : vector<16x32xf32>
    %cst_42 = arith.constant 1.000000e+00 : f32
    %121 = vector.broadcast %cst_42 : f32 to vector<16x32xf32>
    %122 = arith.addf %121, %120 : vector<16x32xf32>
    %cst_43 = arith.constant 5.000000e-01 : f32
    %123 = vector.broadcast %cst_43 : f32 to vector<16x32xf32>
    %124 = arith.mulf %123, %122 : vector<16x32xf32>
    %125 = arith.mulf %112, %124 : vector<16x32xf32>
    %c80 = arith.constant 80 : index
    %c0_44 = arith.constant 0 : index
    %126 = vector.load %arg4[%c80, %c0_44] : memref<128x128xbf16, #tpu.memory_space<vmem>>, vector<32x16xbf16>
    %127 = arith.truncf %125 : vector<16x32xf32> to vector<16x32xbf16>
    %cst_45 = arith.constant dense<0.000000e+00> : vector<16x16xf32>
    %128 = tpu.matmul %127, %126, %cst_45 {dimension_numbers = #tpu.dot_dimension_numbers<[1], [0], [0], [1], [0, 0, 1, 1], [], []>} : vector<16x32xbf16>, vector<32x16xbf16>, vector<16x16xf32> -> vector<16x16xf32>
    %c8 = arith.constant 8 : index
    %c0_46 = arith.constant 0 : index
    %129 = vector.load %arg5[%c8, %c0_46] : memref<12x128xf32, #tpu.memory_space<vmem>>, vector<1x16xf32>
    %130 = vector.broadcast %129 : vector<1x16xf32> to vector<16x16xf32>
    %131 = arith.addf %128, %130 : vector<16x16xf32>
    %132 = arith.addf %131, %106 : vector<16x16xf32>
    %c9 = arith.constant 9 : index
    %c0_47 = arith.constant 0 : index
    %133 = vector.load %arg5[%c9, %c0_47] : memref<12x128xf32, #tpu.memory_space<vmem>>, vector<1x16xf32>
    %c10 = arith.constant 10 : index
    %c0_48 = arith.constant 0 : index
    %134 = vector.load %arg5[%c10, %c0_48] : memref<12x128xf32, #tpu.memory_space<vmem>>, vector<1x16xf32>
    %cst_49 = arith.constant dense<0.000000e+00> : vector<16xf32>
    %135 = vector.multi_reduction <add>, %132, %cst_49 [1] : vector<16x16xf32> to vector<16xf32>
    %136 = vector.shape_cast %135 : vector<16xf32> to vector<16x1xf32>
    %cst_50 = arith.constant 1.600000e+01 : f32
    %137 = vector.broadcast %cst_50 : f32 to vector<16x1xf32>
    %138 = arith.divf %136, %137 : vector<16x1xf32>
    %139 = vector.broadcast %138 : vector<16x1xf32> to vector<16x16xf32>
    %140 = arith.subf %132, %139 : vector<16x16xf32>
    %141 = arith.mulf %140, %140 : vector<16x16xf32>
    %cst_51 = arith.constant dense<0.000000e+00> : vector<16xf32>
    %142 = vector.multi_reduction <add>, %141, %cst_51 [1] : vector<16x16xf32> to vector<16xf32>
    %143 = vector.shape_cast %142 : vector<16xf32> to vector<16x1xf32>
    %cst_52 = arith.constant 1.600000e+01 : f32
    %144 = vector.broadcast %cst_52 : f32 to vector<16x1xf32>
    %145 = arith.divf %143, %144 : vector<16x1xf32>
    %146 = vector.broadcast %138 : vector<16x1xf32> to vector<16x16xf32>
    %147 = arith.subf %132, %146 : vector<16x16xf32>
    %cst_53 = arith.constant 9.99999996E-13 : f32
    %148 = vector.broadcast %cst_53 : f32 to vector<16x1xf32>
    %149 = arith.addf %145, %148 : vector<16x1xf32>
    %150 = math.rsqrt %149 : vector<16x1xf32>
    %151 = vector.broadcast %150 : vector<16x1xf32> to vector<16x16xf32>
    %152 = arith.mulf %147, %151 : vector<16x16xf32>
    %153 = vector.broadcast %133 : vector<1x16xf32> to vector<16x16xf32>
    %154 = arith.mulf %152, %153 : vector<16x16xf32>
    %155 = vector.broadcast %134 : vector<1x16xf32> to vector<16x16xf32>
    %156 = arith.addf %154, %155 : vector<16x16xf32>
    %157 = vector.shape_cast %156 : vector<16x16xf32> to vector<4x4x16xf32>
    %158 = vector.extract_strided_slice %157 {offsets = [0, 0, 0], sizes = [4, 1, 16], strides = [1, 1, 1]} : vector<4x4x16xf32> to vector<4x1x16xf32>
    %159 = vector.shape_cast %158 : vector<4x1x16xf32> to vector<4x16xf32>
    %c112 = arith.constant 112 : index
    %c0_54 = arith.constant 0 : index
    %160 = vector.load %arg4[%c112, %c0_54] : memref<128x128xbf16, #tpu.memory_space<vmem>>, vector<16x16xbf16>
    %161 = arith.truncf %159 : vector<4x16xf32> to vector<4x16xbf16>
    %cst_55 = arith.constant dense<0.000000e+00> : vector<4x16xf32>
    %162 = tpu.matmul %161, %160, %cst_55 {dimension_numbers = #tpu.dot_dimension_numbers<[1], [0], [0], [1], [0, 0, 1, 1], [], []>} : vector<4x16xbf16>, vector<16x16xbf16>, vector<4x16xf32> -> vector<4x16xf32>
    %c11 = arith.constant 11 : index
    %c0_56 = arith.constant 0 : index
    %163 = vector.load %arg5[%c11, %c0_56] : memref<12x128xf32, #tpu.memory_space<vmem>>, vector<1x16xf32>
    %164 = vector.broadcast %163 : vector<1x16xf32> to vector<4x16xf32>
    %165 = arith.addf %162, %164 : vector<4x16xf32>
    %166 = math.tanh %165 : vector<4x16xf32>
    %c0_57 = arith.constant 0 : index
    %c0_58 = arith.constant 0 : index
    %167 = vector.load %arg6[%c0_57, %c0_58] : memref<4x16xf32, #tpu.memory_space<vmem>>, vector<4x16xf32>
    tpu.vector_store %arg6[%c0_57, %c0_58], %166 {strides = array<i32>} : memref<4x16xf32, #tpu.memory_space<vmem>>, vector<4x16xf32>,
    return
  }
  func.func @transform_0(%arg0: i32) -> (i32, i32) {
    %c0_i32 = arith.constant 0 : i32
    %c0_i32_0 = arith.constant 0 : i32
    %c0_i32_1 = arith.constant 0 : i32
    return %c0_i32, %c0_i32_0 : i32, i32
  }
  func.func @transform_1(%arg0: i32) -> (i32, i32) {
    %c0_i32 = arith.constant 0 : i32
    %c0_i32_0 = arith.constant 0 : i32
    %c0_i32_1 = arith.constant 0 : i32
    return %c0_i32, %c0_i32_0 : i32, i32
  }
  func.func @transform_2(%arg0: i32) -> (i32, i32) {
    %c0_i32 = arith.constant 0 : i32
    %c0_i32_0 = arith.constant 0 : i32
    %c0_i32_1 = arith.constant 0 : i32
    return %c0_i32, %c0_i32_0 : i32, i32
  }
  func.func @transform_3(%arg0: i32) -> (i32, i32) {
    %c0_i32 = arith.constant 0 : i32
    %c0_i32_0 = arith.constant 0 : i32
    %c0_i32_1 = arith.constant 0 : i32
    return %c0_i32, %c0_i32_0 : i32, i32
  }
  func.func @transform_4(%arg0: i32) -> (i32, i32) {
    %c0_i32 = arith.constant 0 : i32
    %c0_i32_0 = arith.constant 0 : i32
    %c0_i32_1 = arith.constant 0 : i32
    return %c0_i32, %c0_i32_0 : i32, i32
  }
  func.func @transform_5(%arg0: i32) -> (i32, i32) {
    %c0_i32 = arith.constant 0 : i32
    %c0_i32_0 = arith.constant 0 : i32
    %c0_i32_1 = arith.constant 0 : i32
    return %c0_i32, %c0_i32_0 : i32, i32
  }
}

</mosaic_0001>

<llo_original>
// kernel: eq.15
$region0: #{eq.15}
  %s0 = inlined_call_operand.vmem [shape: s32[30,8], index: 0, kind: input, shape index: {}]
  %s1 = inlined_call_operand.vmem [shape: s32[240], index: 1, kind: output, shape index: {}]
  $region1: #{eq.15} parent=0
    #allocation0 [shape = 'u8[4096]{0}', space=vmem, size = 0x1000, scoped, tag = 'scoped mem for output reshape']
    %s2 = smov 3
    %v3 = vld [vmem:[%s0] ss:$16 sm:%s2]
    %vm4 = vcmask 64512
    %5 = vst.msk [vmem:[#allocation0] sm:$0x3] %vm4, %v3
    %s6 = scalar_lea.vmem %s0, 15
    %v7 = vld [vmem:[%s6] sm:$0x1]
    %8 = vrot.lane.b32.xlu0 %v7, 120
    %v9 = vpop.permute.xlu0 %8
    %vm10 = vcmask 1048512
    %11 = vst.msk [vmem:[#allocation0] sm:$0x1] %vm10, %v9
    %s12 = scalar_lea.vmem %s0, 14
    %v13 = vld [vmem:[%s12] sm:$0x1]
    %14 = vrot.lane.b32.xlu0 %v13, 112
    %v15 = vpop.permute.xlu0 %14
    %vm16 = vcmask 982912
    %17 = vst.msk [vmem:[#allocation0] sm:$0x1] %vm16, %v15
    %s18 = scalar_lea.vmem %s0, 13
    %s19 = smov 3
    %v20 = vld [vmem:[%s18] ss:$16 sm:%s19]
    %21 = vrot.lane.b32.xlu0 %v20, 104
    %v22 = vpop.permute.xlu0 %21
    %vm23 = vcmask 917312
    %24 = vst.msk [vmem:[#allocation0] sm:$0x3] %vm23, %v22
    %s25 = scalar_lea.vmem %s0, 12
    %s26 = smov 3
    %v27 = vld [vmem:[%s25] ss:$16 sm:%s26]
    %28 = vrot.lane.b32.xlu0 %v27, 96
    %v29 = vpop.permute.xlu0 %28
    %vm30 = vcmask 851712
    %31 = vst.msk [vmem:[#allocation0] sm:$0x3] %vm30, %v29
    %s32 = scalar_lea.vmem %s0, 11
    %s33 = smov 3
    %v34 = vld [vmem:[%s32] ss:$16 sm:%s33]
    %35 = vrot.lane.b32.xlu0 %v34, 88
    %v36 = vpop.permute.xlu0 %35
    %vm37 = vcmask 786112
    %38 = vst.msk [vmem:[#allocation0] sm:$0x3] %vm37, %v36
    %s39 = scalar_lea.vmem %s0, 10
    %s40 = smov 3
    %v41 = vld [vmem:[%s39] ss:$16 sm:%s40]
    %42 = vrot.lane.b32.xlu0 %v41, 80
    %v43 = vpop.permute.xlu0 %42
    %vm44 = vcmask 720512
    %45 = vst.msk [vmem:[#allocation0] sm:$0x3] %vm44, %v43
    %s46 = scalar_lea.vmem %s0, 9
    %s47 = smov 3
    %v48 = vld [vmem:[%s46] ss:$16 sm:%s47]
    %49 = vrot.lane.b32.xlu0 %v48, 72
    %v50 = vpop.permute.xlu0 %49
    %vm51 = vcmask 654912
    %52 = vst.msk [vmem:[#allocation0] sm:$0x3] %vm51, %v50
    %s53 = scalar_lea.vmem %s0, 8
    %s54 = smov 3
    %v55 = vld [vmem:[%s53] ss:$16 sm:%s54]
    %56 = vrot.lane.b32.xlu0 %v55, 64
    %v57 = vpop.permute.xlu0 %56
    %vm58 = vcmask 589312
    %59 = vst.msk [vmem:[#allocation0] sm:$0x3] %vm58, %v57
    %s60 = scalar_lea.vmem %s0, 7
    %s61 = smov 3
    %v62 = vld [vmem:[%s60] ss:$16 sm:%s61]
    %63 = vrot.lane.b32.xlu0 %v62, 56
    %v64 = vpop.permute.xlu0 %63
    %vm65 = vcmask 523712
    %66 = vst.msk [vmem:[#allocation0] sm:$0x3] %vm65, %v64
    %s67 = scalar_lea.vmem %s0, 6
    %s68 = smov 3
    %v69 = vld [vmem:[%s67] ss:$16 sm:%s68]
    %70 = vrot.lane.b32.xlu0 %v69, 48
    %v71 = vpop.permute.xlu0 %70
    %vm72 = vcmask 458112
    %73 = vst.msk [vmem:[#allocation0] sm:$0x3] %vm72, %v71
    %s74 = scalar_lea.vmem %s0, 5
    %s75 = smov 3
    %v76 = vld [vmem:[%s74] ss:$16 sm:%s75]
    %77 = vrot.lane.b32.xlu0 %v76, 40
    %v78 = vpop.permute.xlu0 %77
    %vm79 = vcmask 392512
    %80 = vst.msk [vmem:[#allocation0] sm:$0x3] %vm79, %v78
    %s81 = scalar_lea.vmem %s0, 4
    %s82 = smov 3
    %v83 = vld [vmem:[%s81] ss:$16 sm:%s82]
    %84 = vrot.lane.b32.xlu0 %v83, 32
    %v85 = vpop.permute.xlu0 %84
    %vm86 = vcmask 326912
    %87 = vst.msk [vmem:[#allocation0] sm:$0x3] %vm86, %v85
    %s88 = scalar_lea.vmem %s0, 3
    %s89 = smov 3
    %v90 = vld [vmem:[%s88] ss:$16 sm:%s89]
    %91 = vrot.lane.b32.xlu0 %v90, 24
    %v92 = vpop.permute.xlu0 %91
    %vm93 = vcmask 261312
    %94 = vst.msk [vmem:[#allocation0] sm:$0x3] %vm93, %v92
    %s95 = scalar_lea.vmem %s0, 2
    %s96 = smov 3
    %v97 = vld [vmem:[%s95] ss:$16 sm:%s96]
    %98 = vrot.lane.b32.xlu0 %v97, 16
    %v99 = vpop.permute.xlu0 %98
    %vm100 = vcmask 195712
    %101 = vst.msk [vmem:[#allocation0] sm:$0x3] %vm100, %v99
    %s102 = scalar_lea.vmem %s0, 1
    %s103 = smov 3
    %v104 = vld [vmem:[%s102] ss:$16 sm:%s103]
    %105 = vrot.lane.b32.xlu0 %v104, 8
    %v106 = vpop.permute.xlu0 %105
    %vm107 = vcmask 130112
    %108 = vst.msk [vmem:[#allocation0] sm:$0x3] %vm107, %v106
    %s110 = sshllo.u32 0, 2
    %v112 = vld [vmem:[#allocation0] sm:%s110]
    %s113 = sshllo.u32 0, 2
    %114 = vst [vmem:[%s1] sm:%s113] %v112

// kernel: eq.22
$region0: #{eq.22}
  %s0 = inlined_call_operand.vmem [shape: s32[4,4], index: 0, kind: input, shape index: {}]
  %s1 = inlined_call_operand.vmem [shape: s32[16], index: 1, kind: output, shape index: {}]
  $region1: #{eq.22} parent=0
    #allocation0 [shape = 'u8[4096]{0}', space=vmem, size = 0x1000, scoped, tag = 'scoped mem for output reshape']
    #allocation1 [shape = 'u8[4096]{0}', space=vmem, size = 0x1000, scoped, tag = 'scoped mem for input reshape']
    %s3 = sshllo.u32 0, 4
    %v4 = vld [vmem:[%s0] sm:%s3]
    %5 = vst [vmem:[#allocation1] sm:%s3] %v4
    %v6 = vld [vmem:[#allocation1] sm:$0x1]
    %vm7 = vcmask 31744
    %8 = vst.msk [vmem:[#allocation0] sm:$0x1] %vm7, %v6
    %s9 = scalar_lea.vmem [#allocation1], 3
    %v10 = vld [vmem:[%s9] sm:$0x1]
    %11 = vrot.lane.b32.xlu0 %v10, 12
    %v12 = vpop.permute.xlu0 %11
    %vm13 = vcmask 130144
    %14 = vst.msk [vmem:[#allocation0] sm:$0x1] %vm13, %v12
    %s15 = scalar_lea.vmem [#allocation1], 2
    %v16 = vld [vmem:[%s15] sm:$0x1]
    %17 = vrot.lane.b32.xlu0 %v16, 8
    %v18 = vpop.permute.xlu0 %17
    %vm19 = vcmask 97344
    %20 = vst.msk [vmem:[#allocation0] sm:$0x1] %vm19, %v18
    %s21 = scalar_lea.vmem [#allocation1], 1
    %v22 = vld [vmem:[%s21] sm:$0x1]
    %23 = vrot.lane.b32.xlu0 %v22, 4
    %v24 = vpop.permute.xlu0 %23
    %vm25 = vcmask 64544
    %26 = vst.msk [vmem:[#allocation0] sm:$0x1] %vm25, %v24
    %s28 = sshllo.u32 0, 1
    %v30 = vld [vmem:[#allocation0] sm:%s28]
    %s31 = sshllo.u32 0, 1
    %32 = vst [vmem:[%s1] sm:%s31] %v30

// kernel: model_forward.3
$region0: #{model_forward.3}
  #allocation0 [shape = 'u32[]', space=smem, size = 0x4, offset = 0x4, fixed_abs, tag = 'smem constant byte address 0x4 - core index']
  #allocation1 [shape = 'u32[144,128]{1,0:T(1,128)}', space=vmem, size = 0x12000, scoped, tag = 'internal scratch']
  %s0 = inlined_call_operand.vmem [shape: f32[16,32], index: 0, kind: input, shape index: {}]
  %s1 = inlined_call_operand.vmem [shape: f32[16,16], index: 1, kind: input, shape index: {}]
  %s2 = inlined_call_operand.vmem [shape: f32[16,16], index: 2, kind: input, shape index: {}]
  %s3 = inlined_call_operand.vmem [shape: bf16[128,128], index: 3, kind: input, shape index: {}]
  %s4 = inlined_call_operand.vmem [shape: f32[12,128], index: 4, kind: input, shape index: {}]
  %s5 = inlined_call_operand.vmem [shape: f32[4,16], index: 5, kind: output, shape index: {}]
  %s6 = sld [smem:[#allocation0]]
  $region30: #{model_forward.3} parent=0
    _
  %s8 = ssub.s32 1, %s6
  %s9 = scalar_select 0, %s8, %s6
  // Predicated region
  $region2: #{model_forward.3} parent=0 // pred_check
    _
  $region3: #{model_forward.3} parent=0 // pred_check_branch
    %11 = sbr.rel (0) target = $region5
  $region4: #{model_forward.3} parent=0 // pred_region
    _
  $region5: #{model_forward.3} parent=0 // pred_fallthru
    _
  // Predicated region
  $region6: #{model_forward.3} parent=0 // pred_check
    _
  $region7: #{model_forward.3} parent=0 // pred_check_branch
    %13 = sbr.rel (0) target = $region9
  $region8: #{model_forward.3} parent=0 // pred_region
    _
  $region9: #{model_forward.3} parent=0 // pred_fallthru
    _
  // Predicated region
  $region10: #{model_forward.3} parent=0 // pred_check
    _
  $region11: #{model_forward.3} parent=0 // pred_check_branch
    %15 = sbr.rel (0) target = $region13
  $region12: #{model_forward.3} parent=0 // pred_region
    _
  $region13: #{model_forward.3} parent=0 // pred_fallthru
    _
  // Predicated region
  $region14: #{model_forward.3} parent=0 // pred_check
    _
  $region15: #{model_forward.3} parent=0 // pred_check_branch
    %17 = sbr.rel (0) target = $region17
  $region16: #{model_forward.3} parent=0 // pred_region
    _
  $region17: #{model_forward.3} parent=0 // pred_fallthru
    _
  // Predicated region
  $region18: #{model_forward.3} parent=0 // pred_check
    _
  $region19: #{model_forward.3} parent=0 // pred_check_branch
    %19 = sbr.rel (0) target = $region21
  $region20: #{model_forward.3} parent=0 // pred_region
    _
  $region21: #{model_forward.3} parent=0 // pred_fallthru
    _
  %v21 = vld [vmem:[%s0] sm:$0xff]
  %v22 = vld [vmem:[%s0 + $0x8] sm:$0xff]
  %v23 = vld [vmem:[%s3] sm:$0xf]
  %v24 = vld [vmem:[%s3 + $0x4] sm:$0xf]
  %v25 = vld [vmem:[%s3 + $0x8] sm:$0xf]
  %v26 = vld [vmem:[%s3 + $0xc] sm:$0xf]
  %v27 = vpack.c.bf16 %v22, %v21
  %v28 = vld [vmem:[%s4] sm:$0x1]
  %v29 = vlaneseq
  %v30 = vshrl.u32 %v29, 7
  %v31 = vsub.s32 0, %v30
  %v32 = vrot.slane %v28, %v31
  %v37 = vunpack.c.l.b16 %v23
  %v38 = vunpack.c.l.b16 %v24
  %v39 = vunpack.c.l.b16 %v25
  %v40 = vunpack.c.l.b16 %v26
  %v41 = vpack.c.b16 %v38, %v37
  %v42 = vpack.c.b16 %v40, %v39
  %vm45 = vcmask 261120
  %v47 = vsel %vm45, %v27, 0
  %49 = vmatprep.subr.bf16.mxu0 0
  %50 = vmatpush1.bf16.msra.mxu0 %v41
  %51 = vmatprep.subr.bf16.mxu0 0
  %52 = vmatpush1.bf16.msra.mxu0 %v42
  %53 = vmatprep.subr.bf16.mxu0 0
  %54 = vmatpush1.bf16.msra.mxu0 0
  %55 = vmatprep.subr.bf16.mxu0 0
  %56 = vmatpush1.bf16.msra.mxu0 0
  %57 = vmatprep.subr.bf16.mxu0 0
  %58 = vmatpush1.bf16.msra.mxu0 0
  %59 = vmatprep.subr.bf16.mxu0 0
  %60 = vmatpush1.bf16.msra.mxu0 0
  %61 = vmatprep.subr.bf16.mxu0 0
  %62 = vmatpush1.bf16.msra.mxu0 0
  %63 = vmatprep.subr.bf16.mxu0 0
  %64 = vmatpush1.bf16.msra.mxu0 0
  %65 = vmatprep.subr.bf16.mxu0 0
  %66 = vmatpush1.bf16.msra.mxu0 0
  %67 = vmatprep.subr.bf16.mxu0 0
  %68 = vmatpush1.bf16.msra.mxu0 0
  %69 = vmatprep.subr.bf16.mxu0 0
  %70 = vmatpush1.bf16.msra.mxu0 0
  %71 = vmatprep.subr.bf16.mxu0 0
  %72 = vmatpush1.bf16.msra.mxu0 0
  %73 = vmatprep.subr.bf16.mxu0 0
  %74 = vmatpush1.bf16.msra.mxu0 0
  %75 = vmatprep.subr.bf16.mxu0 0
  %76 = vmatpush1.bf16.msra.mxu0 0
  %77 = vmatprep.subr.bf16.mxu0 0
  %78 = vmatpush1.bf16.msra.mxu0 0
  %79 = vmatprep.subr.bf16.mxu0 0
  %80 = vmatpush1.bf16.msra.mxu0 0
  %81 = vmatprep.mubr.bf16.mxu0 0
  %82 = vmatmul.mubr.bf16.gmra.mrb[0].mxu0 %v47
  %v83 = vpop.f32.mrb[0].mxu0
  %v84 = vadd.f32 %v32, %v83
  %v85 = vpop.f32.mrb[0].mxu0
  %v86 = vpop.f32.mrb[0].mxu0
  %v87 = vadd.f32 %v32, %v86
  %v88 = vpop.f32.mrb[0].mxu0
  %89 = vdwg.mxu0
  %v90 = vld [vmem:[%s1] sm:$0xff]
  %v91 = vld [vmem:[%s1 + $0x8] sm:$0xff]
  %v92 = vadd.f32 %v84, %v90
  %v93 = vadd.f32 %v87, %v91
  %v94 = vld [vmem:[%s4 + $0x1] sm:$0x1]
  %v95 = vld [vmem:[%s4 + $0x2] sm:$0x1]
  %vm96 = vcmask 130048
  %v97 = vsel %vm96, %v92, 0.0
  %98 = vadd.xlane.f32.xlu0 %v97
  %v99 = vpop.xlane.xlu0 %98
  %v100 = vsel %vm96, %v93, 0.0
  %101 = vadd.xlane.f32.xlu0 %v100
  %v102 = vpop.xlane.xlu0 %101
  %v103 = vrcp.pop 16.0
  %v104 = vmul.f32 %v99, %v103
  %v105 = vmul.f32 %v102, %v103
  %v106 = vsub.f32 %v92, %v104
  %v107 = vsub.f32 %v93, %v105
  %v108 = vmul.f32 %v106, %v106
  %v109 = vmul.f32 %v107, %v107
  %v110 = vsel %vm96, %v108, 0.0
  %111 = vadd.xlane.f32.xlu0 %v110
  %v112 = vpop.xlane.xlu0 %111
  %v113 = vsel %vm96, %v109, 0.0
  %114 = vadd.xlane.f32.xlu0 %v113
  %v115 = vpop.xlane.xlu0 %114
  %v116 = vmul.f32 %v112, %v103
  %v117 = vmul.f32 %v115, %v103
  %v118 = vadd.f32 %v116, 1e-12
  %v119 = vadd.f32 %v117, 1e-12
  %v120 = vrsqrt.pop %v118
  %v121 = vrsqrt.pop %v119
  %v122 = vmul.f32 %v106, %v120
  %v123 = vmul.f32 %v107, %v121
  %v124 = vlaneseq
  %v125 = vshrl.u32 %v124, 7
  %v126 = vsub.s32 0, %v125
  %v127 = vrot.slane %v94, %v126
  %v128 = vmul.f32 %v122, %v127
  %v129 = vmul.f32 %v123, %v127
  %v130 = vlaneseq
  %v131 = vshrl.u32 %v130, 7
  %v132 = vsub.s32 0, %v131
  %v133 = vrot.slane %v95, %v132
  %v134 = vadd.f32 %v128, %v133
  %v135 = vadd.f32 %v129, %v133
  %v136 = vld [vmem:[%s2] sm:$0xff]
  %v137 = vld [vmem:[%s2 + $0x8] sm:$0xff]
  %v138 = vld [vmem:[%s3 + $0x10] sm:$0xf]
  %v139 = vld [vmem:[%s3 + $0x14] sm:$0xf]
  %v140 = vpack.c.bf16 %v135, %v134
  %v141 = vld [vmem:[%s4 + $0x3] sm:$0x1]
  %v142 = vlaneseq
  %v143 = vshrl.u32 %v142, 7
  %v144 = vsub.s32 0, %v143
  %v145 = vrot.slane %v141, %v144
  %v148 = vunpack.c.l.b16 %v138
  %v149 = vunpack.c.l.b16 %v139
  %v150 = vpack.c.b16 %v149, %v148
  %v153 = vsel %vm96, %v140, 0
  %155 = vmatprep.subr.bf16.mxu0 0
  %156 = vmatpush1.bf16.msra.mxu0 %v150
  %157 = vmatprep.subr.bf16.mxu0 0
  %158 = vmatpush1.bf16.msra.mxu0 0
  %159 = vmatprep.subr.bf16.mxu0 0
  %160 = vmatpush1.bf16.msra.mxu0 0
  %161 = vmatprep.subr.bf16.mxu0 0
  %162 = vmatpush1.bf16.msra.mxu0 0
  %163 = vmatprep.subr.bf16.mxu0 0
  %164 = vmatpush1.bf16.msra.mxu0 0
  %165 = vmatprep.subr.bf16.mxu0 0
  %166 = vmatpush1.bf16.msra.mxu0 0
  %167 = vmatprep.subr.bf16.mxu0 0
  %168 = vmatpush1.bf16.msra.mxu0 0
  %169 = vmatprep.subr.bf16.mxu0 0
  %170 = vmatpush1.bf16.msra.mxu0 0
  %171 = vmatprep.subr.bf16.mxu0 0
  %172 = vmatpush1.bf16.msra.mxu0 0
  %173 = vmatprep.subr.bf16.mxu0 0
  %174 = vmatpush1.bf16.msra.mxu0 0
  %175 = vmatprep.subr.bf16.mxu0 0
  %176 = vmatpush1.bf16.msra.mxu0 0
  %177 = vmatprep.subr.bf16.mxu0 0
  %178 = vmatpush1.bf16.msra.mxu0 0
  %179 = vmatprep.subr.bf16.mxu0 0
  %180 = vmatpush1.bf16.msra.mxu0 0
  %181 = vmatprep.subr.bf16.mxu0 0
  %182 = vmatpush1.bf16.msra.mxu0 0
  %183 = vmatprep.subr.bf16.mxu0 0
  %184 = vmatpush1.bf16.msra.mxu0 0
  %185 = vmatprep.subr.bf16.mxu0 0
  %186 = vmatpush1.bf16.msra.mxu0 0
  %187 = vmatprep.mubr.bf16.mxu0 0
  %188 = vmatmul.mubr.bf16.gmra.mrb[0].mxu0 %v153
  %v189 = vpop.f32.mrb[0].mxu0
  %v190 = vadd.f32 %v145, %v189
  %v191 = vpop.f32.mrb[0].mxu0
  %v192 = vpop.f32.mrb[0].mxu0
  %v193 = vadd.f32 %v145, %v192
  %v194 = vpop.f32.mrb[0].mxu0
  %195 = vdwg.mxu0
  %v196 = vpack.c.bf16 %v193, %v190
  %198 = vrot.lane.b32.xlu0 %v196, 112
  %v199 = vpop.permute.xlu0 %198
  %vm200 = vcmask 64512
  %v202 = vsel %vm200, %v196, 0
  %v205 = vsel %vm200, %v199, 0
  %207 = vmatprep.subr.bf16.mxu0 0
  %208 = vmatpush1.bf16.xpose.msra.mxu0 %v205
  %209 = vmatprep.subr.bf16.mxu0 0
  %210 = vmatpush1.bf16.xpose.msra.mxu0 0
  %211 = vmatprep.subr.bf16.mxu0 0
  %212 = vmatpush1.bf16.xpose.msra.mxu0 0
  %213 = vmatprep.subr.bf16.mxu0 0
  %214 = vmatpush1.bf16.xpose.msra.mxu0 0
  %215 = vmatprep.subr.bf16.mxu0 0
  %216 = vmatpush1.bf16.xpose.msra.mxu0 0
  %217 = vmatprep.subr.bf16.mxu0 0
  %218 = vmatpush1.bf16.xpose.msra.mxu0 0
  %219 = vmatprep.subr.bf16.mxu0 0
  %220 = vmatpush1.bf16.xpose.msra.mxu0 0
  %221 = vmatprep.subr.bf16.mxu0 0
  %222 = vmatpush1.bf16.xpose.msra.mxu0 0
  %223 = vmatprep.subr.bf16.mxu0 0
  %224 = vmatpush1.bf16.xpose.msra.mxu0 0
  %225 = vmatprep.subr.bf16.mxu0 0
  %226 = vmatpush1.bf16.xpose.msra.mxu0 0
  %227 = vmatprep.subr.bf16.mxu0 0
  %228 = vmatpush1.bf16.xpose.msra.mxu0 0
  %229 = vmatprep.subr.bf16.mxu0 0
  %230 = vmatpush1.bf16.xpose.msra.mxu0 0
  %231 = vmatprep.subr.bf16.mxu0 0
  %232 = vmatpush1.bf16.xpose.msra.mxu0 0
  %233 = vmatprep.subr.bf16.mxu0 0
  %234 = vmatpush1.bf16.xpose.msra.mxu0 0
  %235 = vmatprep.subr.bf16.mxu0 0
  %236 = vmatpush1.bf16.xpose.msra.mxu0 0
  %237 = vmatprep.subr.bf16.mxu0 0
  %238 = vmatpush1.bf16.xpose.msra.mxu0 0
  %239 = vmatprep.mubr.bf16.mxu0 0
  %240 = vmatmul.mubr.bf16.gmra.mrb[0].mxu0 %v202
  %v241 = vpop.f32.mrb[0].mxu0
  %v242 = vadd.f32 %v136, %v241
  %v243 = vpop.f32.mrb[0].mxu0
  %v244 = vpop.f32.mrb[0].mxu0
  %v245 = vadd.f32 %v137, %v244
  %v246 = vpop.f32.mrb[0].mxu0
  %247 = vdwg.mxu0
  %v248 = vsel %vm96, %v242, -inf
  %249 = vmax.xlane.f32.xlu0 %v248
  %v250 = vpop.xlane.xlu0 %249
  %v251 = vsel %vm96, %v245, -inf
  %252 = vmax.xlane.f32.xlu0 %v251
  %v253 = vpop.xlane.xlu0 %252
  %v254 = vsub.f32 %v242, %v250
  %v255 = vsub.f32 %v245, %v253
  %v256 = vmul.f32 %v254, 1.442695
  %v257 = vpow.pop %v256
  %v258 = vmul.f32 %v255, 1.442695
  %v259 = vpow.pop %v258
  %v260 = vsel %vm96, %v257, 0.0
  %261 = vadd.xlane.f32.xlu0 %v260
  %v262 = vpop.xlane.xlu0 %261
  %v263 = vsel %vm96, %v259, 0.0
  %264 = vadd.xlane.f32.xlu0 %v263
  %v265 = vpop.xlane.xlu0 %264
  %v266 = vrcp.pop %v262
  %v267 = vrcp.pop %v265
  %v268 = vmul.f32 %v257, %v266
  %v269 = vmul.f32 %v259, %v267
  %v270 = vpack.c.bf16 %v269, %v268
  %271 = vrot.lane.b32.xlu0 %v196, 96
  %v272 = vpop.permute.xlu0 %271
  %v275 = vsel %vm96, %v270, 0
  %277 = vmatprep.subr.bf16.mxu0 0
  %278 = vmatpush1.bf16.msra.mxu0 %v272
  %279 = vmatprep.subr.bf16.mxu0 0
  %280 = vmatpush1.bf16.msra.mxu0 0
  %281 = vmatprep.subr.bf16.mxu0 0
  %282 = vmatpush1.bf16.msra.mxu0 0
  %283 = vmatprep.subr.bf16.mxu0 0
  %284 = vmatpush1.bf16.msra.mxu0 0
  %285 = vmatprep.subr.bf16.mxu0 0
  %286 = vmatpush1.bf16.msra.mxu0 0
  %287 = vmatprep.subr.bf16.mxu0 0
  %288 = vmatpush1.bf16.msra.mxu0 0
  %289 = vmatprep.subr.bf16.mxu0 0
  %290 = vmatpush1.bf16.msra.mxu0 0
  %291 = vmatprep.subr.bf16.mxu0 0
  %292 = vmatpush1.bf16.msra.mxu0 0
  %293 = vmatprep.subr.bf16.mxu0 0
  %294 = vmatpush1.bf16.msra.mxu0 0
  %295 = vmatprep.subr.bf16.mxu0 0
  %296 = vmatpush1.bf16.msra.mxu0 0
  %297 = vmatprep.subr.bf16.mxu0 0
  %298 = vmatpush1.bf16.msra.mxu0 0
  %299 = vmatprep.subr.bf16.mxu0 0
  %300 = vmatpush1.bf16.msra.mxu0 0
  %301 = vmatprep.subr.bf16.mxu0 0
  %302 = vmatpush1.bf16.msra.mxu0 0
  %303 = vmatprep.subr.bf16.mxu0 0
  %304 = vmatpush1.bf16.msra.mxu0 0
  %305 = vmatprep.subr.bf16.mxu0 0
  %306 = vmatpush1.bf16.msra.mxu0 0
  %307 = vmatprep.subr.bf16.mxu0 0
  %308 = vmatpush1.bf16.msra.mxu0 0
  %309 = vmatprep.mubr.bf16.mxu0 0
  %310 = vmatmul.mubr.bf16.gmra.mrb[0].mxu0 %v275
  %v311 = vpop.f32.mrb[0].mxu0
  %v312 = vadd.f32 0.0, %v311
  %v313 = vpop.f32.mrb[0].mxu0
  %v314 = vpop.f32.mrb[0].mxu0
  %v315 = vadd.f32 0.0, %v314
  %v316 = vpop.f32.mrb[0].mxu0
  %317 = vdwg.mxu0
  %318 = vrot.lane.b32.xlu0 %v196, 120
  %v319 = vpop.permute.xlu0 %318
  %320 = vrot.lane.b32.xlu0 %v196, 104
  %v321 = vpop.permute.xlu0 %320
  %v323 = vsel %vm200, %v319, 0
  %v326 = vsel %vm200, %v321, 0
  %328 = vmatprep.subr.bf16.mxu0 0
  %329 = vmatpush1.bf16.xpose.msra.mxu0 %v326
  %330 = vmatprep.subr.bf16.mxu0 0
  %331 = vmatpush1.bf16.xpose.msra.mxu0 0
  %332 = vmatprep.subr.bf16.mxu0 0
  %333 = vmatpush1.bf16.xpose.msra.mxu0 0
  %334 = vmatprep.subr.bf16.mxu0 0
  %335 = vmatpush1.bf16.xpose.msra.mxu0 0
  %336 = vmatprep.subr.bf16.mxu0 0
  %337 = vmatpush1.bf16.xpose.msra.mxu0 0
  %338 = vmatprep.subr.bf16.mxu0 0
  %339 = vmatpush1.bf16.xpose.msra.mxu0 0
  %340 = vmatprep.subr.bf16.mxu0 0
  %341 = vmatpush1.bf16.xpose.msra.mxu0 0
  %342 = vmatprep.subr.bf16.mxu0 0
  %343 = vmatpush1.bf16.xpose.msra.mxu0 0
  %344 = vmatprep.subr.bf16.mxu0 0
  %345 = vmatpush1.bf16.xpose.msra.mxu0 0
  %346 = vmatprep.subr.bf16.mxu0 0
  %347 = vmatpush1.bf16.xpose.msra.mxu0 0
  %348 = vmatprep.subr.bf16.mxu0 0
  %349 = vmatpush1.bf16.xpose.msra.mxu0 0
  %350 = vmatprep.subr.bf16.mxu0 0
  %351 = vmatpush1.bf16.xpose.msra.mxu0 0
  %352 = vmatprep.subr.bf16.mxu0 0
  %353 = vmatpush1.bf16.xpose.msra.mxu0 0
  %354 = vmatprep.subr.bf16.mxu0 0
  %355 = vmatpush1.bf16.xpose.msra.mxu0 0
  %356 = vmatprep.subr.bf16.mxu0 0
  %357 = vmatpush1.bf16.xpose.msra.mxu0 0
  %358 = vmatprep.subr.bf16.mxu0 0
  %359 = vmatpush1.bf16.xpose.msra.mxu0 0
  %360 = vmatprep.mubr.bf16.mxu0 0
  %361 = vmatmul.mubr.bf16.gmra.mrb[0].mxu0 %v323
  %v362 = vpop.f32.mrb[0].mxu0
  %v363 = vadd.f32 %v136, %v362
  %v364 = vpop.f32.mrb[0].mxu0
  %v365 = vpop.f32.mrb[0].mxu0
  %v366 = vadd.f32 %v137, %v365
  %v367 = vpop.f32.mrb[0].mxu0
  %368 = vdwg.mxu0
  %v369 = vsel %vm96, %v363, -inf
  %370 = vmax.xlane.f32.xlu0 %v369
  %v371 = vpop.xlane.xlu0 %370
  %v372 = vsel %vm96, %v366, -inf
  %373 = vmax.xlane.f32.xlu0 %v372
  %v374 = vpop.xlane.xlu0 %373
  %v375 = vsub.f32 %v363, %v371
  %v376 = vsub.f32 %v366, %v374
  %v377 = vmul.f32 %v375, 1.442695
  %v378 = vpow.pop %v377
  %v379 = vmul.f32 %v376, 1.442695
  %v380 = vpow.pop %v379
  %v381 = vsel %vm96, %v378, 0.0
  %382 = vadd.xlane.f32.xlu0 %v381
  %v383 = vpop.xlane.xlu0 %382
  %v384 = vsel %vm96, %v380, 0.0
  %385 = vadd.xlane.f32.xlu0 %v384
  %v386 = vpop.xlane.xlu0 %385
  %v387 = vrcp.pop %v383
  %v388 = vrcp.pop %v386
  %v389 = vmul.f32 %v378, %v387
  %v390 = vmul.f32 %v380, %v388
  %v391 = vpack.c.bf16 %v390, %v389
  %392 = vrot.lane.b32.xlu0 %v196, 88
  %v393 = vpop.permute.xlu0 %392
  %v396 = vsel %vm96, %v391, 0
  %398 = vmatprep.subr.bf16.mxu0 0
  %399 = vmatpush1.bf16.msra.mxu0 %v393
  %400 = vmatprep.subr.bf16.mxu0 0
  %401 = vmatpush1.bf16.msra.mxu0 0
  %402 = vmatprep.subr.bf16.mxu0 0
  %403 = vmatpush1.bf16.msra.mxu0 0
  %404 = vmatprep.subr.bf16.mxu0 0
  %405 = vmatpush1.bf16.msra.mxu0 0
  %406 = vmatprep.subr.bf16.mxu0 0
  %407 = vmatpush1.bf16.msra.mxu0 0
  %408 = vmatprep.subr.bf16.mxu0 0
  %409 = vmatpush1.bf16.msra.mxu0 0
  %410 = vmatprep.subr.bf16.mxu0 0
  %411 = vmatpush1.bf16.msra.mxu0 0
  %412 = vmatprep.subr.bf16.mxu0 0
  %413 = vmatpush1.bf16.msra.mxu0 0
  %414 = vmatprep.subr.bf16.mxu0 0
  %415 = vmatpush1.bf16.msra.mxu0 0
  %416 = vmatprep.subr.bf16.mxu0 0
  %417 = vmatpush1.bf16.msra.mxu0 0
  %418 = vmatprep.subr.bf16.mxu0 0
  %419 = vmatpush1.bf16.msra.mxu0 0
  %420 = vmatprep.subr.bf16.mxu0 0
  %421 = vmatpush1.bf16.msra.mxu0 0
  %422 = vmatprep.subr.bf16.mxu0 0
  %423 = vmatpush1.bf16.msra.mxu0 0
  %424 = vmatprep.subr.bf16.mxu0 0
  %425 = vmatpush1.bf16.msra.mxu0 0
  %426 = vmatprep.subr.bf16.mxu0 0
  %427 = vmatpush1.bf16.msra.mxu0 0
  %428 = vmatprep.subr.bf16.mxu0 0
  %429 = vmatpush1.bf16.msra.mxu0 0
  %430 = vmatprep.mubr.bf16.mxu0 0
  %431 = vmatmul.mubr.bf16.gmra.mrb[0].mxu0 %v396
  %v432 = vpop.f32.mrb[0].mxu0
  %v433 = vadd.f32 0.0, %v432
  %v434 = vpop.f32.mrb[0].mxu0
  %v435 = vpop.f32.mrb[0].mxu0
  %v436 = vadd.f32 0.0, %v435
  %v437 = vpop.f32.mrb[0].mxu0
  %438 = vdwg.mxu0
  %441 = vrot.lane.b32.xlu0 %v433, 8
  %v442 = vpop.permute.xlu0 %441
  %443 = vrot.lane.b32.xlu0 %v436, 8
  %v444 = vpop.permute.xlu0 %443
  %v447 = vsel %vm200, %v312, %v442
  %v448 = vsel %vm200, %v315, %v444
  %v449 = vld [vmem:[%s3 + $0x18] sm:$0xf]
  %v450 = vld [vmem:[%s3 + $0x1c] sm:$0xf]
  %v451 = vpack.c.bf16 %v448, %v447
  %v452 = vld [vmem:[%s4 + $0x4] sm:$0x1]
  %v453 = vlaneseq
  %v454 = vshrl.u32 %v453, 7
  %v455 = vsub.s32 0, %v454
  %v456 = vrot.slane %v452, %v455
  %v459 = vunpack.c.l.b16 %v449
  %v460 = vunpack.c.l.b16 %v450
  %v461 = vpack.c.b16 %v460, %v459
  %v464 = vsel %vm96, %v451, 0
  %466 = vmatprep.subr.bf16.mxu0 0
  %467 = vmatpush1.bf16.msra.mxu0 %v461
  %468 = vmatprep.subr.bf16.mxu0 0
  %469 = vmatpush1.bf16.msra.mxu0 0
  %470 = vmatprep.subr.bf16.mxu0 0
  %471 = vmatpush1.bf16.msra.mxu0 0
  %472 = vmatprep.subr.bf16.mxu0 0
  %473 = vmatpush1.bf16.msra.mxu0 0
  %474 = vmatprep.subr.bf16.mxu0 0
  %475 = vmatpush1.bf16.msra.mxu0 0
  %476 = vmatprep.subr.bf16.mxu0 0
  %477 = vmatpush1.bf16.msra.mxu0 0
  %478 = vmatprep.subr.bf16.mxu0 0
  %479 = vmatpush1.bf16.msra.mxu0 0
  %480 = vmatprep.subr.bf16.mxu0 0
  %481 = vmatpush1.bf16.msra.mxu0 0
  %482 = vmatprep.subr.bf16.mxu0 0
  %483 = vmatpush1.bf16.msra.mxu0 0
  %484 = vmatprep.subr.bf16.mxu0 0
  %485 = vmatpush1.bf16.msra.mxu0 0
  %486 = vmatprep.subr.bf16.mxu0 0
  %487 = vmatpush1.bf16.msra.mxu0 0
  %488 = vmatprep.subr.bf16.mxu0 0
  %489 = vmatpush1.bf16.msra.mxu0 0
  %490 = vmatprep.subr.bf16.mxu0 0
  %491 = vmatpush1.bf16.msra.mxu0 0
  %492 = vmatprep.subr.bf16.mxu0 0
  %493 = vmatpush1.bf16.msra.mxu0 0
  %494 = vmatprep.subr.bf16.mxu0 0
  %495 = vmatpush1.bf16.msra.mxu0 0
  %496 = vmatprep.subr.bf16.mxu0 0
  %497 = vmatpush1.bf16.msra.mxu0 0
  %498 = vmatprep.mubr.bf16.mxu0 0
  %499 = vmatmul.mubr.bf16.gmra.mrb[0].mxu0 %v464
  %v500 = vpop.f32.mrb[0].mxu0
  %v501 = vadd.f32 %v456, %v500
  %v502 = vpop.f32.mrb[0].mxu0
  %v503 = vpop.f32.mrb[0].mxu0
  %v504 = vadd.f32 %v456, %v503
  %v505 = vpop.f32.mrb[0].mxu0
  %506 = vdwg.mxu0
  %v507 = vadd.f32 %v501, %v134
  %v508 = vadd.f32 %v504, %v135
  %v509 = vld [vmem:[%s4 + $0x5] sm:$0x1]
  %v510 = vld [vmem:[%s4 + $0x6] sm:$0x1]
  %v511 = vsel %vm96, %v507, 0.0
  %512 = vadd.xlane.f32.xlu0 %v511
  %v513 = vpop.xlane.xlu0 %512
  %v514 = vsel %vm96, %v508, 0.0
  %515 = vadd.xlane.f32.xlu0 %v514
  %v516 = vpop.xlane.xlu0 %515
  %v517 = vmul.f32 %v513, %v103
  %v518 = vmul.f32 %v516, %v103
  %v519 = vsub.f32 %v507, %v517
  %v520 = vsub.f32 %v508, %v518
  %v521 = vmul.f32 %v519, %v519
  %v522 = vmul.f32 %v520, %v520
  %v523 = vsel %vm96, %v521, 0.0
  %524 = vadd.xlane.f32.xlu0 %v523
  %v525 = vpop.xlane.xlu0 %524
  %v526 = vsel %vm96, %v522, 0.0
  %527 = vadd.xlane.f32.xlu0 %v526
  %v528 = vpop.xlane.xlu0 %527
  %v529 = vmul.f32 %v525, %v103
  %v530 = vmul.f32 %v528, %v103
  %v531 = vadd.f32 %v529, 1e-12
  %v532 = vadd.f32 %v530, 1e-12
  %v533 = vrsqrt.pop %v531
  %v534 = vrsqrt.pop %v532
  %v535 = vmul.f32 %v519, %v533
  %v536 = vmul.f32 %v520, %v534
  %v537 = vlaneseq
  %v538 = vshrl.u32 %v537, 7
  %v539 = vsub.s32 0, %v538
  %v540 = vrot.slane %v509, %v539
  %v541 = vmul.f32 %v535, %v540
  %v542 = vmul.f32 %v536, %v540
  %v543 = vlaneseq
  %v544 = vshrl.u32 %v543, 7
  %v545 = vsub.s32 0, %v544
  %v546 = vrot.slane %v510, %v545
  %v547 = vadd.f32 %v541, %v546
  %v548 = vadd.f32 %v542, %v546
  %v549 = vld [vmem:[%s3 + $0x20] sm:$0xf]
  %v550 = vld [vmem:[%s3 + $0x24] sm:$0xf]
  %v551 = vpack.c.bf16 %v548, %v547
  %v552 = vld [vmem:[%s4 + $0x7] sm:$0x1]
  %v553 = vlaneseq
  %v554 = vshrl.u32 %v553, 7
  %v555 = vsub.s32 0, %v554
  %v556 = vrot.slane %v552, %v555
  %v559 = vunpack.c.l.b16 %v549
  %v560 = vunpack.c.l.b16 %v550
  %v561 = vpack.c.b16 %v560, %v559
  %v564 = vsel %vm96, %v551, 0
  %566 = vmatprep.subr.bf16.mxu0 0
  %567 = vmatpush1.bf16.msra.mxu0 %v561
  %568 = vmatprep.subr.bf16.mxu0 0
  %569 = vmatpush1.bf16.msra.mxu0 0
  %570 = vmatprep.subr.bf16.mxu0 0
  %571 = vmatpush1.bf16.msra.mxu0 0
  %572 = vmatprep.subr.bf16.mxu0 0
  %573 = vmatpush1.bf16.msra.mxu0 0
  %574 = vmatprep.subr.bf16.mxu0 0
  %575 = vmatpush1.bf16.msra.mxu0 0
  %576 = vmatprep.subr.bf16.mxu0 0
  %577 = vmatpush1.bf16.msra.mxu0 0
  %578 = vmatprep.subr.bf16.mxu0 0
  %579 = vmatpush1.bf16.msra.mxu0 0
  %580 = vmatprep.subr.bf16.mxu0 0
  %581 = vmatpush1.bf16.msra.mxu0 0
  %582 = vmatprep.subr.bf16.mxu0 0
  %583 = vmatpush1.bf16.msra.mxu0 0
  %584 = vmatprep.subr.bf16.mxu0 0
  %585 = vmatpush1.bf16.msra.mxu0 0
  %586 = vmatprep.subr.bf16.mxu0 0
  %587 = vmatpush1.bf16.msra.mxu0 0
  %588 = vmatprep.subr.bf16.mxu0 0
  %589 = vmatpush1.bf16.msra.mxu0 0
  %590 = vmatprep.subr.bf16.mxu0 0
  %591 = vmatpush1.bf16.msra.mxu0 0
  %592 = vmatprep.subr.bf16.mxu0 0
  %593 = vmatpush1.bf16.msra.mxu0 0
  %594 = vmatprep.subr.bf16.mxu0 0
  %595 = vmatpush1.bf16.msra.mxu0 0
  %596 = vmatprep.subr.bf16.mxu0 0
  %597 = vmatpush1.bf16.msra.mxu0 0
  %598 = vmatprep.mubr.bf16.mxu0 0
  %599 = vmatmul.mubr.bf16.gmra.mrb[0].mxu0 %v564
  %v600 = vpop.f32.mrb[0].mxu0
  %v601 = vadd.f32 %v556, %v600
  %v602 = vpop.f32.mrb[0].mxu0
  %v603 = vpop.f32.mrb[0].mxu0
  %v604 = vadd.f32 %v556, %v603
  %v605 = vpop.f32.mrb[0].mxu0
  %606 = vdwg.mxu0
  %v607 = vmul.f32 %v601, %v601
  %v608 = vmul.f32 %v604, %v604
  %v609 = vmul.f32 %v601, %v607
  %v610 = vmul.f32 %v604, %v608
  %v611 = vmul.f32 %v609, 0.044715
  %v612 = vmul.f32 %v610, 0.044715
  %v613 = vadd.f32 %v601, %v611
  %v614 = vadd.f32 %v604, %v612
  %v615 = vmul.f32 %v613, 0.7978846
  %v616 = vmul.f32 %v614, 0.7978846
  %v617 = vtanh.pop %v615
  %v618 = vtanh.pop %v616
  %v619 = vadd.f32 %v617, 1.0
  %v620 = vadd.f32 %v618, 1.0
  %v621 = vmul.f32 %v619, 0.5
  %v622 = vmul.f32 %v620, 0.5
  %v623 = vmul.f32 %v601, %v621
  %v624 = vmul.f32 %v604, %v622
  %v625 = vld [vmem:[%s3 + $0x28] sm:$0xf]
  %v626 = vld [vmem:[%s3 + $0x2c] sm:$0xf]
  %v627 = vld [vmem:[%s3 + $0x30] sm:$0xf]
  %v628 = vld [vmem:[%s3 + $0x34] sm:$0xf]
  %v629 = vpack.c.bf16 %v624, %v623
  %v630 = vld [vmem:[%s4 + $0x8] sm:$0x1]
  %v631 = vlaneseq
  %v632 = vshrl.u32 %v631, 7
  %v633 = vsub.s32 0, %v632
  %v634 = vrot.slane %v630, %v633
  %v639 = vunpack.c.l.b16 %v625
  %v640 = vunpack.c.l.b16 %v626
  %v641 = vunpack.c.l.b16 %v627
  %v642 = vunpack.c.l.b16 %v628
  %v643 = vpack.c.b16 %v640, %v639
  %v644 = vpack.c.b16 %v642, %v641
  %v648 = vsel %vm45, %v629, 0
  %650 = vmatprep.subr.bf16.mxu0 0
  %651 = vmatpush1.bf16.msra.mxu0 %v643
  %652 = vmatprep.subr.bf16.mxu0 0
  %653 = vmatpush1.bf16.msra.mxu0 %v644
  %654 = vmatprep.subr.bf16.mxu0 0
  %655 = vmatpush1.bf16.msra.mxu0 0
  %656 = vmatprep.subr.bf16.mxu0 0
  %657 = vmatpush1.bf16.msra.mxu0 0
  %658 = vmatprep.subr.bf16.mxu0 0
  %659 = vmatpush1.bf16.msra.mxu0 0
  %660 = vmatprep.subr.bf16.mxu0 0
  %661 = vmatpush1.bf16.msra.mxu0 0
  %662 = vmatprep.subr.bf16.mxu0 0
  %663 = vmatpush1.bf16.msra.mxu0 0
  %664 = vmatprep.subr.bf16.mxu0 0
  %665 = vmatpush1.bf16.msra.mxu0 0
  %666 = vmatprep.subr.bf16.mxu0 0
  %667 = vmatpush1.bf16.msra.mxu0 0
  %668 = vmatprep.subr.bf16.mxu0 0
  %669 = vmatpush1.bf16.msra.mxu0 0
  %670 = vmatprep.subr.bf16.mxu0 0
  %671 = vmatpush1.bf16.msra.mxu0 0
  %672 = vmatprep.subr.bf16.mxu0 0
  %673 = vmatpush1.bf16.msra.mxu0 0
  %674 = vmatprep.subr.bf16.mxu0 0
  %675 = vmatpush1.bf16.msra.mxu0 0
  %676 = vmatprep.subr.bf16.mxu0 0
  %677 = vmatpush1.bf16.msra.mxu0 0
  %678 = vmatprep.subr.bf16.mxu0 0
  %679 = vmatpush1.bf16.msra.mxu0 0
  %680 = vmatprep.subr.bf16.mxu0 0
  %681 = vmatpush1.bf16.msra.mxu0 0
  %682 = vmatprep.mubr.bf16.mxu0 0
  %683 = vmatmul.mubr.bf16.gmra.mrb[0].mxu0 %v648
  %v684 = vpop.f32.mrb[0].mxu0
  %v685 = vadd.f32 %v634, %v684
  %v686 = vpop.f32.mrb[0].mxu0
  %v687 = vpop.f32.mrb[0].mxu0
  %v688 = vadd.f32 %v634, %v687
  %v689 = vpop.f32.mrb[0].mxu0
  %690 = vdwg.mxu0
  %v691 = vadd.f32 %v685, %v547
  %v692 = vadd.f32 %v688, %v548
  %v693 = vld [vmem:[%s4 + $0x9] sm:$0x1]
  %v694 = vld [vmem:[%s4 + $0xa] sm:$0x1]
  %v695 = vsel %vm96, %v691, 0.0
  %696 = vadd.xlane.f32.xlu0 %v695
  %v697 = vpop.xlane.xlu0 %696
  %v698 = vsel %vm96, %v692, 0.0
  %699 = vadd.xlane.f32.xlu0 %v698
  %v700 = vpop.xlane.xlu0 %699
  %v701 = vmul.f32 %v697, %v103
  %v702 = vmul.f32 %v700, %v103
  %v703 = vsub.f32 %v691, %v701
  %v704 = vsub.f32 %v692, %v702
  %v705 = vmul.f32 %v703, %v703
  %v706 = vmul.f32 %v704, %v704
  %v707 = vsel %vm96, %v705, 0.0
  %708 = vadd.xlane.f32.xlu0 %v707
  %v709 = vpop.xlane.xlu0 %708
  %v710 = vsel %vm96, %v706, 0.0
  %711 = vadd.xlane.f32.xlu0 %v710
  %v712 = vpop.xlane.xlu0 %711
  %v713 = vmul.f32 %v709, %v103
  %v714 = vmul.f32 %v712, %v103
  %v715 = vadd.f32 %v713, 1e-12
  %v716 = vadd.f32 %v714, 1e-12
  %v717 = vrsqrt.pop %v715
  %v718 = vrsqrt.pop %v716
  %v719 = vmul.f32 %v703, %v717
  %v720 = vmul.f32 %v704, %v718
  %v721 = vlaneseq
  %v722 = vshrl.u32 %v721, 7
  %v723 = vsub.s32 0, %v722
  %v724 = vrot.slane %v693, %v723
  %v725 = vmul.f32 %v719, %v724
  %v726 = vmul.f32 %v720, %v724
  %v727 = vlaneseq
  %v728 = vshrl.u32 %v727, 7
  %v729 = vsub.s32 0, %v728
  %v730 = vrot.slane %v694, %v729
  %v731 = vadd.f32 %v725, %v730
  %v732 = vadd.f32 %v726, %v730
  %v735 = vcombine.high %v731, %v731
  %v736 = vcombine.high %v732, %v732
  %v739 = vld [vmem:[%s3 + $0x38] sm:$0xf]
  %v740 = vld [vmem:[%s3 + $0x3c] sm:$0xf]
  %v741 = vpack.c.bf16 %v731, %v731
  %v742 = vpack.c.bf16 %v735, %v735
  %v743 = vpack.c.bf16 %v732, %v732
  %v744 = vpack.c.bf16 %v736, %v736
  %v745 = vld [vmem:[%s4 + $0xb] sm:$0x1]
  %v746 = vlaneseq
  %v747 = vshrl.u32 %v746, 7
  %v748 = vsub.s32 0, %v747
  %v749 = vrot.slane %v745, %v748
  %v754 = vunpack.c.l.b16 %v741
  %v755 = vunpack.c.l.b16 %v742
  %v756 = vunpack.c.l.b16 %v743
  %v757 = vunpack.c.l.b16 %v744
  %v758 = vrot.slane %v755, 7
  %vm759 = vcmask 1041409
  %v760 = vsel %vm759, %v758, %v754
  %v761 = vrot.slane %v756, 6
  %vm762 = vcmask 1042434
  %v763 = vsel %vm762, %v761, %v760
  %v764 = vrot.slane %v757, 5
  %vm765 = vcmask 1043459
  %v766 = vsel %vm765, %v764, %v763
  %v767 = vpack.c.b16 %v766, %v766
  %v770 = vunpack.c.l.b16 %v739
  %v771 = vunpack.c.l.b16 %v740
  %v772 = vpack.c.b16 %v771, %v770
  %v775 = vsel %vm96, %v767, 0
  %777 = vmatprep.subr.bf16.mxu0 0
  %778 = vmatpush1.bf16.msra.mxu0 %v772
  %779 = vmatprep.subr.bf16.mxu0 0
  %780 = vmatpush1.bf16.msra.mxu0 0
  %781 = vmatprep.subr.bf16.mxu0 0
  %782 = vmatpush1.bf16.msra.mxu0 0
  %783 = vmatprep.subr.bf16.mxu0 0
  %784 = vmatpush1.bf16.msra.mxu0 0
  %785 = vmatprep.subr.bf16.mxu0 0
  %786 = vmatpush1.bf16.msra.mxu0 0
  %787 = vmatprep.subr.bf16.mxu0 0
  %788 = vmatpush1.bf16.msra.mxu0 0
  %789 = vmatprep.subr.bf16.mxu0 0
  %790 = vmatpush1.bf16.msra.mxu0 0
  %791 = vmatprep.subr.bf16.mxu0 0
  %792 = vmatpush1.bf16.msra.mxu0 0
  %793 = vmatprep.subr.bf16.mxu0 0
  %794 = vmatpush1.bf16.msra.mxu0 0
  %795 = vmatprep.subr.bf16.mxu0 0
  %796 = vmatpush1.bf16.msra.mxu0 0
  %797 = vmatprep.subr.bf16.mxu0 0
  %798 = vmatpush1.bf16.msra.mxu0 0
  %799 = vmatprep.subr.bf16.mxu0 0
  %800 = vmatpush1.bf16.msra.mxu0 0
  %801 = vmatprep.subr.bf16.mxu0 0
  %802 = vmatpush1.bf16.msra.mxu0 0
  %803 = vmatprep.subr.bf16.mxu0 0
  %804 = vmatpush1.bf16.msra.mxu0 0
  %805 = vmatprep.subr.bf16.mxu0 0
  %806 = vmatpush1.bf16.msra.mxu0 0
  %807 = vmatprep.subr.bf16.mxu0 0
  %808 = vmatpush1.bf16.msra.mxu0 0
  %809 = vmatprep.mubr.bf16.mxu0 0
  %810 = vmatmul.mubr.bf16.gmra.mrb[0].mxu0 %v775
  %v811 = vpop.f32.mrb[0].mxu0
  %v812 = vadd.f32 %v749, %v811
  %v813 = vpop.f32.mrb[0].mxu0
  %v814 = vpop.f32.mrb[0].mxu0
  %v815 = vpop.f32.mrb[0].mxu0
  %816 = vdwg.mxu0
  %v817 = vtanh.pop %v812
  %vm818 = vcmask 125952
  %819 = vst.msk [vmem:[%s5] sm:$0xf] %vm818, %v817
  // Predicated region
  $region22: #{model_forward.3} parent=0 // pred_check
    _
  $region23: #{model_forward.3} parent=0 // pred_check_branch
    %821 = sbr.rel (0) target = $region25
  $region24: #{model_forward.3} parent=0 // pred_region
    _
  $region25: #{model_forward.3} parent=0 // pred_fallthru
    _
  // Predicated region
  $region26: #{model_forward.3} parent=0 // pred_check
    _
  $region27: #{model_forward.3} parent=0 // pred_check_branch
    %823 = sbr.rel (0) target = $region29
  $region28: #{model_forward.3} parent=0 // pred_region
    _
  $region29: #{model_forward.3} parent=0 // pred_fallthru
    _

// kernel: model_forward.2
$region0: #{model_forward.2}
  #allocation0 [shape = 'u32[]', space=smem, size = 0x4, offset = 0x4, fixed_abs, tag = 'smem constant byte address 0x4 - core index']
  #allocation1 [shape = 'u32[144,128]{1,0:T(1,128)}', space=vmem, size = 0x12000, scoped, tag = 'internal scratch']
  %s0 = inlined_call_operand.vmem [shape: f32[240,32], index: 0, kind: input, shape index: {}]
  %s1 = inlined_call_operand.vmem [shape: f32[240,240], index: 1, kind: input, shape index: {}]
  %s2 = inlined_call_operand.vmem [shape: bf16[192,128], index: 2, kind: input, shape index: {}]
  %s3 = inlined_call_operand.vmem [shape: f32[11,128], index: 3, kind: input, shape index: {}]
  %s4 = inlined_call_operand.vmem [shape: f32[30,32], index: 4, kind: output, shape index: {}]
  %s5 = sld [smem:[#allocation0]]
  $region26: #{model_forward.2} parent=0
    _
  %s7 = ssub.s32 1, %s5
  %s8 = scalar_select 0, %s7, %s5
  // Predicated region
  $region2: #{model_forward.2} parent=0 // pred_check
    _
  $region3: #{model_forward.2} parent=0 // pred_check_branch
    %10 = sbr.rel (0) target = $region5
  $region4: #{model_forward.2} parent=0 // pred_region
    _
  $region5: #{model_forward.2} parent=0 // pred_fallthru
    _
  // Predicated region
  $region6: #{model_forward.2} parent=0 // pred_check
    _
  $region7: #{model_forward.2} parent=0 // pred_check_branch
    %12 = sbr.rel (0) target = $region9
  $region8: #{model_forward.2} parent=0 // pred_region
    _
  $region9: #{model_forward.2} parent=0 // pred_fallthru
    _
  // Predicated region
  $region10: #{model_forward.2} parent=0 // pred_check
    _
  $region11: #{model_forward.2} parent=0 // pred_check_branch
    %14 = sbr.rel (0) target = $region13
  $region12: #{model_forward.2} parent=0 // pred_region
    _
  $region13: #{model_forward.2} parent=0 // pred_fallthru
    _
  // Predicated region
  $region14: #{model_forward.2} parent=0 // pred_check
    _
  $region15: #{model_forward.2} parent=0 // pred_check_branch
    %16 = sbr.rel (0) target = $region17
  $region16: #{model_forward.2} parent=0 // pred_region
    _
  $region17: #{model_forward.2} parent=0 // pred_fallthru
    _
  %v18 = vld [vmem:[%s0] sm:$0xff]
  %v19 = vld [vmem:[%s0 + $0x8] sm:$0xff]
  %v20 = vld [vmem:[%s0 + $0x10] sm:$0xff]
  %v21 = vld [vmem:[%s0 + $0x18] sm:$0xff]
  %v22 = vld [vmem:[%s0 + $0x20] sm:$0xff]
  %v23 = vld [vmem:[%s0 + $0x28] sm:$0xff]
  %v24 = vld [vmem:[%s0 + $0x30] sm:$0xff]
  %v25 = vld [vmem:[%s0 + $0x38] sm:$0xff]
  %v26 = vld [vmem:[%s0 + $0x40] sm:$0xff]
  %v27 = vld [vmem:[%s0 + $0x48] sm:$0xff]
  %v28 = vld [vmem:[%s0 + $0x50] sm:$0xff]
  %v29 = vld [vmem:[%s0 + $0x58] sm:$0xff]
  %v30 = vld [vmem:[%s0 + $0x60] sm:$0xff]
  %v31 = vld [vmem:[%s0 + $0x68] sm:$0xff]
  %v32 = vld [vmem:[%s0 + $0x70] sm:$0xff]
  %v33 = vld [vmem:[%s0 + $0x78] sm:$0xff]
  %v34 = vld [vmem:[%s0 + $0x80] sm:$0xff]
  %v35 = vld [vmem:[%s0 + $0x88] sm:$0xff]
  %v36 = vld [vmem:[%s0 + $0x90] sm:$0xff]
  %v37 = vld [vmem:[%s0 + $0x98] sm:$0xff]
  %v38 = vld [vmem:[%s0 + $0xa0] sm:$0xff]
  %v39 = vld [vmem:[%s0 + $0xa8] sm:$0xff]
  %v40 = vld [vmem:[%s0 + $0xb0] sm:$0xff]
  %v41 = vld [vmem:[%s0 + $0xb8] sm:$0xff]
  %v42 = vld [vmem:[%s0 + $0xc0] sm:$0xff]
  %v43 = vld [vmem:[%s0 + $0xc8] sm:$0xff]
  %v44 = vld [vmem:[%s0 + $0xd0] sm:$0xff]
  %v45 = vld [vmem:[%s0 + $0xd8] sm:$0xff]
  %v46 = vld [vmem:[%s0 + $0xe0] sm:$0xff]
  %v47 = vld [vmem:[%s0 + $0xe8] sm:$0xff]
  %v48 = vld [vmem:[%s3] sm:$0x1]
  %v49 = vld [vmem:[%s3 + $0x1] sm:$0x1]
  %vm50 = vcmask 261120
  %v51 = vsel %vm50, %v18, 0.0
  %52 = vadd.xlane.f32.xlu0 %v51
  %v53 = vpop.xlane.xlu0 %52
  %v54 = vsel %vm50, %v19, 0.0
  %55 = vadd.xlane.f32.xlu0 %v54
  %v56 = vpop.xlane.xlu0 %55
  %v57 = vsel %vm50, %v20, 0.0
  %58 = vadd.xlane.f32.xlu0 %v57
  %v59 = vpop.xlane.xlu0 %58
  %v60 = vsel %vm50, %v21, 0.0
  %61 = vadd.xlane.f32.xlu0 %v60
  %v62 = vpop.xlane.xlu0 %61
  %v63 = vsel %vm50, %v22, 0.0
  %64 = vadd.xlane.f32.xlu0 %v63
  %v65 = vpop.xlane.xlu0 %64
  %v66 = vsel %vm50, %v23, 0.0
  %67 = vadd.xlane.f32.xlu0 %v66
  %v68 = vpop.xlane.xlu0 %67
  %v69 = vsel %vm50, %v24, 0.0
  %70 = vadd.xlane.f32.xlu0 %v69
  %v71 = vpop.xlane.xlu0 %70
  %v72 = vsel %vm50, %v25, 0.0
  %73 = vadd.xlane.f32.xlu0 %v72
  %v74 = vpop.xlane.xlu0 %73
  %v75 = vsel %vm50, %v26, 0.0
  %76 = vadd.xlane.f32.xlu0 %v75
  %v77 = vpop.xlane.xlu0 %76
  %v78 = vsel %vm50, %v27, 0.0
  %79 = vadd.xlane.f32.xlu0 %v78
  %v80 = vpop.xlane.xlu0 %79
  %v81 = vsel %vm50, %v28, 0.0
  %82 = vadd.xlane.f32.xlu0 %v81
  %v83 = vpop.xlane.xlu0 %82
  %v84 = vsel %vm50, %v29, 0.0
  %85 = vadd.xlane.f32.xlu0 %v84
  %v86 = vpop.xlane.xlu0 %85
  %v87 = vsel %vm50, %v30, 0.0
  %88 = vadd.xlane.f32.xlu0 %v87
  %v89 = vpop.xlane.xlu0 %88
  %v90 = vsel %vm50, %v31, 0.0
  %91 = vadd.xlane.f32.xlu0 %v90
  %v92 = vpop.xlane.xlu0 %91
  %v93 = vsel %vm50, %v32, 0.0
  %94 = vadd.xlane.f32.xlu0 %v93
  %v95 = vpop.xlane.xlu0 %94
  %v96 = vsel %vm50, %v33, 0.0
  %97 = vadd.xlane.f32.xlu0 %v96
  %v98 = vpop.xlane.xlu0 %97
  %v99 = vsel %vm50, %v34, 0.0
  %100 = vadd.xlane.f32.xlu0 %v99
  %v101 = vpop.xlane.xlu0 %100
  %v102 = vsel %vm50, %v35, 0.0
  %103 = vadd.xlane.f32.xlu0 %v102
  %v104 = vpop.xlane.xlu0 %103
  %v105 = vsel %vm50, %v36, 0.0
  %106 = vadd.xlane.f32.xlu0 %v105
  %v107 = vpop.xlane.xlu0 %106
  %v108 = vsel %vm50, %v37, 0.0
  %109 = vadd.xlane.f32.xlu0 %v108
  %v110 = vpop.xlane.xlu0 %109
  %v111 = vsel %vm50, %v38, 0.0
  %112 = vadd.xlane.f32.xlu0 %v111
  %v113 = vpop.xlane.xlu0 %112
  %v114 = vsel %vm50, %v39, 0.0
  %115 = vadd.xlane.f32.xlu0 %v114
  %v116 = vpop.xlane.xlu0 %115
  %v117 = vsel %vm50, %v40, 0.0
  %118 = vadd.xlane.f32.xlu0 %v117
  %v119 = vpop.xlane.xlu0 %118
  %v120 = vsel %vm50, %v41, 0.0
  %121 = vadd.xlane.f32.xlu0 %v120
  %v122 = vpop.xlane.xlu0 %121
  %v123 = vsel %vm50, %v42, 0.0
  %124 = vadd.xlane.f32.xlu0 %v123
  %v125 = vpop.xlane.xlu0 %124
  %v126 = vsel %vm50, %v43, 0.0
  %127 = vadd.xlane.f32.xlu0 %v126
  %v128 = vpop.xlane.xlu0 %127
  %v129 = vsel %vm50, %v44, 0.0
  %130 = vadd.xlane.f32.xlu0 %v129
  %v131 = vpop.xlane.xlu0 %130
  %v132 = vsel %vm50, %v45, 0.0
  %133 = vadd.xlane.f32.xlu0 %v132
  %v134 = vpop.xlane.xlu0 %133
  %v135 = vsel %vm50, %v46, 0.0
  %136 = vadd.xlane.f32.xlu0 %v135
  %v137 = vpop.xlane.xlu0 %136
  %v138 = vsel %vm50, %v47, 0.0
  %139 = vadd.xlane.f32.xlu0 %v138
  %v140 = vpop.xlane.xlu0 %139
  %v141 = vrcp.pop 32.0
  %v142 = vmul.f32 %v53, %v141
  %v143 = vmul.f32 %v56, %v141
  %v144 = vmul.f32 %v59, %v141
  %v145 = vmul.f32 %v62, %v141
  %v146 = vmul.f32 %v65, %v141
  %v147 = vmul.f32 %v68, %v141
  %v148 = vmul.f32 %v71, %v141
  %v149 = vmul.f32 %v74, %v141
  %v150 = vmul.f32 %v77, %v141
  %v151 = vmul.f32 %v80, %v141
  %v152 = vmul.f32 %v83, %v141
  %v153 = vmul.f32 %v86, %v141
  %v154 = vmul.f32 %v89, %v141
  %v155 = vmul.f32 %v92, %v141
  %v156 = vmul.f32 %v95, %v141
  %v157 = vmul.f32 %v98, %v141
  %v158 = vmul.f32 %v101, %v141
  %v159 = vmul.f32 %v104, %v141
  %v160 = vmul.f32 %v107, %v141
  %v161 = vmul.f32 %v110, %v141
  %v162 = vmul.f32 %v113, %v141
  %v163 = vmul.f32 %v116, %v141
  %v164 = vmul.f32 %v119, %v141
  %v165 = vmul.f32 %v122, %v141
  %v166 = vmul.f32 %v125, %v141
  %v167 = vmul.f32 %v128, %v141
  %v168 = vmul.f32 %v131, %v141
  %v169 = vmul.f32 %v134, %v141
  %v170 = vmul.f32 %v137, %v141
  %v171 = vmul.f32 %v140, %v141
  %v172 = vsub.f32 %v18, %v142
  %v173 = vsub.f32 %v19, %v143
  %v174 = vsub.f32 %v20, %v144
  %v175 = vsub.f32 %v21, %v145
  %v176 = vsub.f32 %v22, %v146
  %v177 = vsub.f32 %v23, %v147
  %v178 = vsub.f32 %v24, %v148
  %v179 = vsub.f32 %v25, %v149
  %v180 = vsub.f32 %v26, %v150
  %v181 = vsub.f32 %v27, %v151
  %v182 = vsub.f32 %v28, %v152
  %v183 = vsub.f32 %v29, %v153
  %v184 = vsub.f32 %v30, %v154
  %v185 = vsub.f32 %v31, %v155
  %v186 = vsub.f32 %v32, %v156
  %v187 = vsub.f32 %v33, %v157
  %v188 = vsub.f32 %v34, %v158
  %v189 = vsub.f32 %v35, %v159
  %v190 = vsub.f32 %v36, %v160
  %v191 = vsub.f32 %v37, %v161
  %v192 = vsub.f32 %v38, %v162
  %v193 = vsub.f32 %v39, %v163
  %v194 = vsub.f32 %v40, %v164
  %v195 = vsub.f32 %v41, %v165
  %v196 = vsub.f32 %v42, %v166
  %v197 = vsub.f32 %v43, %v167
  %v198 = vsub.f32 %v44, %v168
  %v199 = vsub.f32 %v45, %v169
  %v200 = vsub.f32 %v46, %v170
  %v201 = vsub.f32 %v47, %v171
  %v202 = vmul.f32 %v172, %v172
  %v203 = vmul.f32 %v173, %v173
  %v204 = vmul.f32 %v174, %v174
  %v205 = vmul.f32 %v175, %v175
  %v206 = vmul.f32 %v176, %v176
  %v207 = vmul.f32 %v177, %v177
  %v208 = vmul.f32 %v178, %v178
  %v209 = vmul.f32 %v179, %v179
  %v210 = vmul.f32 %v180, %v180
  %v211 = vmul.f32 %v181, %v181
  %v212 = vmul.f32 %v182, %v182
  %v213 = vmul.f32 %v183, %v183
  %v214 = vmul.f32 %v184, %v184
  %v215 = vmul.f32 %v185, %v185
  %v216 = vmul.f32 %v186, %v186
  %v217 = vmul.f32 %v187, %v187
  %v218 = vmul.f32 %v188, %v188
  %v219 = vmul.f32 %v189, %v189
  %v220 = vmul.f32 %v190, %v190
  %v221 = vmul.f32 %v191, %v191
  %v222 = vmul.f32 %v192, %v192
  %v223 = vmul.f32 %v193, %v193
  %v224 = vmul.f32 %v194, %v194
  %v225 = vmul.f32 %v195, %v195
  %v226 = vmul.f32 %v196, %v196
  %v227 = vmul.f32 %v197, %v197
  %v228 = vmul.f32 %v198, %v198
  %v229 = vmul.f32 %v199, %v199
  %v230 = vmul.f32 %v200, %v200
  %v231 = vmul.f32 %v201, %v201
  %v232 = vsel %vm50, %v202, 0.0
  %233 = vadd.xlane.f32.xlu0 %v232
  %v234 = vpop.xlane.xlu0 %233
  %v235 = vsel %vm50, %v203, 0.0
  %236 = vadd.xlane.f32.xlu0 %v235
  %v237 = vpop.xlane.xlu0 %236
  %v238 = vsel %vm50, %v204, 0.0
  %239 = vadd.xlane.f32.xlu0 %v238
  %v240 = vpop.xlane.xlu0 %239
  %v241 = vsel %vm50, %v205, 0.0
  %242 = vadd.xlane.f32.xlu0 %v241
  %v243 = vpop.xlane.xlu0 %242
  %v244 = vsel %vm50, %v206, 0.0
  %245 = vadd.xlane.f32.xlu0 %v244
  %v246 = vpop.xlane.xlu0 %245
  %v247 = vsel %vm50, %v207, 0.0
  %248 = vadd.xlane.f32.xlu0 %v247
  %v249 = vpop.xlane.xlu0 %248
  %v250 = vsel %vm50, %v208, 0.0
  %251 = vadd.xlane.f32.xlu0 %v250
  %v252 = vpop.xlane.xlu0 %251
  %v253 = vsel %vm50, %v209, 0.0
  %254 = vadd.xlane.f32.xlu0 %v253
  %v255 = vpop.xlane.xlu0 %254
  %v256 = vsel %vm50, %v210, 0.0
  %257 = vadd.xlane.f32.xlu0 %v256
  %v258 = vpop.xlane.xlu0 %257
  %v259 = vsel %vm50, %v211, 0.0
  %260 = vadd.xlane.f32.xlu0 %v259
  %v261 = vpop.xlane.xlu0 %260
  %v262 = vsel %vm50, %v212, 0.0
  %263 = vadd.xlane.f32.xlu0 %v262
  %v264 = vpop.xlane.xlu0 %263
  %v265 = vsel %vm50, %v213, 0.0
  %266 = vadd.xlane.f32.xlu0 %v265
  %v267 = vpop.xlane.xlu0 %266
  %v268 = vsel %vm50, %v214, 0.0
  %269 = vadd.xlane.f32.xlu0 %v268
  %v270 = vpop.xlane.xlu0 %269
  %v271 = vsel %vm50, %v215, 0.0
  %272 = vadd.xlane.f32.xlu0 %v271
  %v273 = vpop.xlane.xlu0 %272
  %v274 = vsel %vm50, %v216, 0.0
  %275 = vadd.xlane.f32.xlu0 %v274
  %v276 = vpop.xlane.xlu0 %275
  %v277 = vsel %vm50, %v217, 0.0
  %278 = vadd.xlane.f32.xlu0 %v277
  %v279 = vpop.xlane.xlu0 %278
  %v280 = vsel %vm50, %v218, 0.0
  %281 = vadd.xlane.f32.xlu0 %v280
  %v282 = vpop.xlane.xlu0 %281
  %v283 = vsel %vm50, %v219, 0.0
  %284 = vadd.xlane.f32.xlu0 %v283
  %v285 = vpop.xlane.xlu0 %284
  %v286 = vsel %vm50, %v220, 0.0
  %287 = vadd.xlane.f32.xlu0 %v286
  %v288 = vpop.xlane.xlu0 %287
  %v289 = vsel %vm50, %v221, 0.0
  %290 = vadd.xlane.f32.xlu0 %v289
  %v291 = vpop.xlane.xlu0 %290
  %v292 = vsel %vm50, %v222, 0.0
  %293 = vadd.xlane.f32.xlu0 %v292
  %v294 = vpop.xlane.xlu0 %293
  %v295 = vsel %vm50, %v223, 0.0
  %296 = vadd.xlane.f32.xlu0 %v295
  %v297 = vpop.xlane.xlu0 %296
  %v298 = vsel %vm50, %v224, 0.0
  %299 = vadd.xlane.f32.xlu0 %v298
  %v300 = vpop.xlane.xlu0 %299
  %v301 = vsel %vm50, %v225, 0.0
  %302 = vadd.xlane.f32.xlu0 %v301
  %v303 = vpop.xlane.xlu0 %302
  %v304 = vsel %vm50, %v226, 0.0
  %305 = vadd.xlane.f32.xlu0 %v304
  %v306 = vpop.xlane.xlu0 %305
  %v307 = vsel %vm50, %v227, 0.0
  %308 = vadd.xlane.f32.xlu0 %v307
  %v309 = vpop.xlane.xlu0 %308
  %v310 = vsel %vm50, %v228, 0.0
  %311 = vadd.xlane.f32.xlu0 %v310
  %v312 = vpop.xlane.xlu0 %311
  %v313 = vsel %vm50, %v229, 0.0
  %314 = vadd.xlane.f32.xlu0 %v313
  %v315 = vpop.xlane.xlu0 %314
  %v316 = vsel %vm50, %v230, 0.0
  %317 = vadd.xlane.f32.xlu0 %v316
  %v318 = vpop.xlane.xlu0 %317
  %v319 = vsel %vm50, %v231, 0.0
  %320 = vadd.xlane.f32.xlu0 %v319
  %v321 = vpop.xlane.xlu0 %320
  %v322 = vmul.f32 %v234, %v141
  %v323 = vmul.f32 %v237, %v141
  %v324 = vmul.f32 %v240, %v141
  %v325 = vmul.f32 %v243, %v141
  %v326 = vmul.f32 %v246, %v141
  %v327 = vmul.f32 %v249, %v141
  %v328 = vmul.f32 %v252, %v141
  %v329 = vmul.f32 %v255, %v141
  %v330 = vmul.f32 %v258, %v141
  %v331 = vmul.f32 %v261, %v141
  %v332 = vmul.f32 %v264, %v141
  %v333 = vmul.f32 %v267, %v141
  %v334 = vmul.f32 %v270, %v141
  %v335 = vmul.f32 %v273, %v141
  %v336 = vmul.f32 %v276, %v141
  %v337 = vmul.f32 %v279, %v141
  %v338 = vmul.f32 %v282, %v141
  %v339 = vmul.f32 %v285, %v141
  %v340 = vmul.f32 %v288, %v141
  %v341 = vmul.f32 %v291, %v141
  %v342 = vmul.f32 %v294, %v141
  %v343 = vmul.f32 %v297, %v141
  %v344 = vmul.f32 %v300, %v141
  %v345 = vmul.f32 %v303, %v141
  %v346 = vmul.f32 %v306, %v141
  %v347 = vmul.f32 %v309, %v141
  %v348 = vmul.f32 %v312, %v141
  %v349 = vmul.f32 %v315, %v141
  %v350 = vmul.f32 %v318, %v141
  %v351 = vmul.f32 %v321, %v141
  %v352 = vadd.f32 %v322, 1e-12
  %v353 = vadd.f32 %v323, 1e-12
  %v354 = vadd.f32 %v324, 1e-12
  %v355 = vadd.f32 %v325, 1e-12
  %v356 = vadd.f32 %v326, 1e-12
  %v357 = vadd.f32 %v327, 1e-12
  %v358 = vadd.f32 %v328, 1e-12
  %v359 = vadd.f32 %v329, 1e-12
  %v360 = vadd.f32 %v330, 1e-12
  %v361 = vadd.f32 %v331, 1e-12
  %v362 = vadd.f32 %v332, 1e-12
  %v363 = vadd.f32 %v333, 1e-12
  %v364 = vadd.f32 %v334, 1e-12
  %v365 = vadd.f32 %v335, 1e-12
  %v366 = vadd.f32 %v336, 1e-12
  %v367 = vadd.f32 %v337, 1e-12
  %v368 = vadd.f32 %v338, 1e-12
  %v369 = vadd.f32 %v339, 1e-12
  %v370 = vadd.f32 %v340, 1e-12
  %v371 = vadd.f32 %v341, 1e-12
  %v372 = vadd.f32 %v342, 1e-12
  %v373 = vadd.f32 %v343, 1e-12
  %v374 = vadd.f32 %v344, 1e-12
  %v375 = vadd.f32 %v345, 1e-12
  %v376 = vadd.f32 %v346, 1e-12
  %v377 = vadd.f32 %v347, 1e-12
  %v378 = vadd.f32 %v348, 1e-12
  %v379 = vadd.f32 %v349, 1e-12
  %v380 = vadd.f32 %v350, 1e-12
  %v381 = vadd.f32 %v351, 1e-12
  %v382 = vrsqrt.pop %v352
  %v383 = vrsqrt.pop %v353
  %v384 = vrsqrt.pop %v354
  %v385 = vrsqrt.pop %v355
  %v386 = vrsqrt.pop %v356
  %v387 = vrsqrt.pop %v357
  %v388 = vrsqrt.pop %v358
  %v389 = vrsqrt.pop %v359
  %v390 = vrsqrt.pop %v360
  %v391 = vrsqrt.pop %v361
  %v392 = vrsqrt.pop %v362
  %v393 = vrsqrt.pop %v363
  %v394 = vrsqrt.pop %v364
  %v395 = vrsqrt.pop %v365
  %v396 = vrsqrt.pop %v366
  %v397 = vrsqrt.pop %v367
  %v398 = vrsqrt.pop %v368
  %v399 = vrsqrt.pop %v369
  %v400 = vrsqrt.pop %v370
  %v401 = vrsqrt.pop %v371
  %v402 = vrsqrt.pop %v372
  %v403 = vrsqrt.pop %v373
  %v404 = vrsqrt.pop %v374
  %v405 = vrsqrt.pop %v375
  %v406 = vrsqrt.pop %v376
  %v407 = vrsqrt.pop %v377
  %v408 = vrsqrt.pop %v378
  %v409 = vrsqrt.pop %v379
  %v410 = vrsqrt.pop %v380
  %v411 = vrsqrt.pop %v381
  %v412 = vmul.f32 %v172, %v382
  %v413 = vmul.f32 %v173, %v383
  %v414 = vmul.f32 %v174, %v384
  %v415 = vmul.f32 %v175, %v385
  %v416 = vmul.f32 %v176, %v386
  %v417 = vmul.f32 %v177, %v387
  %v418 = vmul.f32 %v178, %v388
  %v419 = vmul.f32 %v179, %v389
  %v420 = vmul.f32 %v180, %v390
  %v421 = vmul.f32 %v181, %v391
  %v422 = vmul.f32 %v182, %v392
  %v423 = vmul.f32 %v183, %v393
  %v424 = vmul.f32 %v184, %v394
  %v425 = vmul.f32 %v185, %v395
  %v426 = vmul.f32 %v186, %v396
  %v427 = vmul.f32 %v187, %v397
  %v428 = vmul.f32 %v188, %v398
  %v429 = vmul.f32 %v189, %v399
  %v430 = vmul.f32 %v190, %v400
  %v431 = vmul.f32 %v191, %v401
  %v432 = vmul.f32 %v192, %v402
  %v433 = vmul.f32 %v193, %v403
  %v434 = vmul.f32 %v194, %v404
  %v435 = vmul.f32 %v195, %v405
  %v436 = vmul.f32 %v196, %v406
  %v437 = vmul.f32 %v197, %v407
  %v438 = vmul.f32 %v198, %v408
  %v439 = vmul.f32 %v199, %v409
  %v440 = vmul.f32 %v200, %v410
  %v441 = vmul.f32 %v201, %v411
  %v442 = vlaneseq
  %v443 = vshrl.u32 %v442, 7
  %v444 = vsub.s32 0, %v443
  %v445 = vrot.slane %v48, %v444
  %v446 = vmul.f32 %v412, %v445
  %v447 = vmul.f32 %v413, %v445
  %v448 = vmul.f32 %v414, %v445
  %v449 = vmul.f32 %v415, %v445
  %v450 = vmul.f32 %v416, %v445
  %v451 = vmul.f32 %v417, %v445
  %v452 = vmul.f32 %v418, %v445
  %v453 = vmul.f32 %v419, %v445
  %v454 = vmul.f32 %v420, %v445
  %v455 = vmul.f32 %v421, %v445
  %v456 = vmul.f32 %v422, %v445
  %v457 = vmul.f32 %v423, %v445
  %v458 = vmul.f32 %v424, %v445
  %v459 = vmul.f32 %v425, %v445
  %v460 = vmul.f32 %v426, %v445
  %v461 = vmul.f32 %v427, %v445
  %v462 = vmul.f32 %v428, %v445
  %v463 = vmul.f32 %v429, %v445
  %v464 = vmul.f32 %v430, %v445
  %v465 = vmul.f32 %v431, %v445
  %v466 = vmul.f32 %v432, %v445
  %v467 = vmul.f32 %v433, %v445
  %v468 = vmul.f32 %v434, %v445
  %v469 = vmul.f32 %v435, %v445
  %v470 = vmul.f32 %v436, %v445
  %v471 = vmul.f32 %v437, %v445
  %v472 = vmul.f32 %v438, %v445
  %v473 = vmul.f32 %v439, %v445
  %v474 = vmul.f32 %v440, %v445
  %v475 = vmul.f32 %v441, %v445
  %v476 = vlaneseq
  %v477 = vshrl.u32 %v476, 7
  %v478 = vsub.s32 0, %v477
  %v479 = vrot.slane %v49, %v478
  %v480 = vadd.f32 %v446, %v479
  %v481 = vadd.f32 %v447, %v479
  %v482 = vadd.f32 %v448, %v479
  %v483 = vadd.f32 %v449, %v479
  %v484 = vadd.f32 %v450, %v479
  %v485 = vadd.f32 %v451, %v479
  %v486 = vadd.f32 %v452, %v479
  %v487 = vadd.f32 %v453, %v479
  %v488 = vadd.f32 %v454, %v479
  %v489 = vadd.f32 %v455, %v479
  %v490 = vadd.f32 %v456, %v479
  %v491 = vadd.f32 %v457, %v479
  %v492 = vadd.f32 %v458, %v479
  %v493 = vadd.f32 %v459, %v479
  %v494 = vadd.f32 %v460, %v479
  %v495 = vadd.f32 %v461, %v479
  %v496 = vadd.f32 %v462, %v479
  %v497 = vadd.f32 %v463, %v479
  %v498 = vadd.f32 %v464, %v479
  %v499 = vadd.f32 %v465, %v479
  %v500 = vadd.f32 %v466, %v479
  %v501 = vadd.f32 %v467, %v479
  %v502 = vadd.f32 %v468, %v479
  %v503 = vadd.f32 %v469, %v479
  %v504 = vadd.f32 %v470, %v479
  %v505 = vadd.f32 %v471, %v479
  %v506 = vadd.f32 %v472, %v479
  %v507 = vadd.f32 %v473, %v479
  %v508 = vadd.f32 %v474, %v479
  %v509 = vadd.f32 %v475, %v479
  %v510 = vld [vmem:[%s1] sm:$0xff]
  %v511 = vld [vmem:[%s1 + $0x8] sm:$0xff]
  %v512 = vld [vmem:[%s1 + $0x10] sm:$0xff]
  %v513 = vld [vmem:[%s1 + $0x18] sm:$0xff]
  %v514 = vld [vmem:[%s1 + $0x20] sm:$0xff]
  %v515 = vld [vmem:[%s1 + $0x28] sm:$0xff]
  %v516 = vld [vmem:[%s1 + $0x30] sm:$0xff]
  %v517 = vld [vmem:[%s1 + $0x38] sm:$0xff]
  %v518 = vld [vmem:[%s1 + $0x40] sm:$0xff]
  %v519 = vld [vmem:[%s1 + $0x48] sm:$0xff]
  %v520 = vld [vmem:[%s1 + $0x50] sm:$0xff]
  %v521 = vld [vmem:[%s1 + $0x58] sm:$0xff]
  %v522 = vld [vmem:[%s1 + $0x60] sm:$0xff]
  %v523 = vld [vmem:[%s1 + $0x68] sm:$0xff]
  %v524 = vld [vmem:[%s1 + $0x70] sm:$0xff]
  %v525 = vld [vmem:[%s1 + $0x78] sm:$0xff]
  %v526 = vld [vmem:[%s1 + $0x80] sm:$0xff]
  %v527 = vld [vmem:[%s1 + $0x88] sm:$0xff]
  %v528 = vld [vmem:[%s1 + $0x90] sm:$0xff]
  %v529 = vld [vmem:[%s1 + $0x98] sm:$0xff]
  %v530 = vld [vmem:[%s1 + $0xa0] sm:$0xff]
  %v531 = vld [vmem:[%s1 + $0xa8] sm:$0xff]
  %v532 = vld [vmem:[%s1 + $0xb0] sm:$0xff]
  %v533 = vld [vmem:[%s1 + $0xb8] sm:$0xff]
  %v534 = vld [vmem:[%s1 + $0xc0] sm:$0xff]
  %v535 = vld [vmem:[%s1 + $0xc8] sm:$0xff]
  %v536 = vld [vmem:[%s1 + $0xd0] sm:$0xff]
  %v537 = vld [vmem:[%s1 + $0xd8] sm:$0xff]
  %v538 = vld [vmem:[%s1 + $0xe0] sm:$0xff]
  %v539 = vld [vmem:[%s1 + $0xe8] sm:$0xff]
  %v540 = vld [vmem:[%s1 + $0xf0] sm:$0xff]
  %v541 = vld [vmem:[%s1 + $0xf8] sm:$0xff]
  %v542 = vld [vmem:[%s1 + $0x100] sm:$0xff]
  %v543 = vld [vmem:[%s1 + $0x108] sm:$0xff]
  %v544 = vld [vmem:[%s1 + $0x110] sm:$0xff]
  %v545 = vld [vmem:[%s1 + $0x118] sm:$0xff]
  %v546 = vld [vmem:[%s1 + $0x120] sm:$0xff]
  %v547 = vld [vmem:[%s1 + $0x128] sm:$0xff]
  %v548 = vld [vmem:[%s1 + $0x130] sm:$0xff]
  %v549 = vld [vmem:[%s1 + $0x138] sm:$0xff]
  %v550 = vld [vmem:[%s1 + $0x140] sm:$0xff]
  %v551 = vld [vmem:[%s1 + $0x148] sm:$0xff]
  %v552 = vld [vmem:[%s1 + $0x150] sm:$0xff]
  %v553 = vld [vmem:[%s1 + $0x158] sm:$0xff]
  %v554 = vld [vmem:[%s1 + $0x160] sm:$0xff]
  %v555 = vld [vmem:[%s1 + $0x168] sm:$0xff]
  %v556 = vld [vmem:[%s1 + $0x170] sm:$0xff]
  %v557 = vld [vmem:[%s1 + $0x178] sm:$0xff]
  %v558 = vld [vmem:[%s1 + $0x180] sm:$0xff]
  %v559 = vld [vmem:[%s1 + $0x188] sm:$0xff]
  %v560 = vld [vmem:[%s1 + $0x190] sm:$0xff]
  %v561 = vld [vmem:[%s1 + $0x198] sm:$0xff]
  %v562 = vld [vmem:[%s1 + $0x1a0] sm:$0xff]
  %v563 = vld [vmem:[%s1 + $0x1a8] sm:$0xff]
  %v564 = vld [vmem:[%s1 + $0x1b0] sm:$0xff]
  %v565 = vld [vmem:[%s1 + $0x1b8] sm:$0xff]
  %v566 = vld [vmem:[%s1 + $0x1c0] sm:$0xff]
  %v567 = vld [vmem:[%s1 + $0x1c8] sm:$0xff]
  %v568 = vld [vmem:[%s1 + $0x1d0] sm:$0xff]
  %v569 = vld [vmem:[%s1 + $0x1d8] sm:$0xff]
  %v570 = vld [vmem:[%s2] sm:$0xf]
  %v571 = vld [vmem:[%s2 + $0x4] sm:$0xf]
  %v572 = vld [vmem:[%s2 + $0x8] sm:$0xf]
  %v573 = vld [vmem:[%s2 + $0xc] sm:$0xf]
  %v574 = vpack.c.bf16 %v481, %v480
  %v575 = vpack.c.bf16 %v483, %v482
  %v576 = vpack.c.bf16 %v485, %v484
  %v577 = vpack.c.bf16 %v487, %v486
  %v578 = vpack.c.bf16 %v489, %v488
  %v579 = vpack.c.bf16 %v491, %v490
  %v580 = vpack.c.bf16 %v493, %v492
  %v581 = vpack.c.bf16 %v495, %v494
  %v582 = vpack.c.bf16 %v497, %v496
  %v583 = vpack.c.bf16 %v499, %v498
  %v584 = vpack.c.bf16 %v501, %v500
  %v585 = vpack.c.bf16 %v503, %v502
  %v586 = vpack.c.bf16 %v505, %v504
  %v587 = vpack.c.bf16 %v507, %v506
  %v588 = vpack.c.bf16 %v509, %v508
  %v589 = vld [vmem:[%s3 + $0x2] sm:$0x1]
  %v590 = vlaneseq
  %v591 = vshrl.u32 %v590, 7
  %v592 = vsub.s32 0, %v591
  %v593 = vrot.slane %v589, %v592
  %v598 = vunpack.c.l.b16 %v570
  %v599 = vunpack.c.l.b16 %v571
  %v600 = vunpack.c.l.b16 %v572
  %v601 = vunpack.c.l.b16 %v573
  %v602 = vpack.c.b16 %v599, %v598
  %v603 = vpack.c.b16 %v601, %v600
  %v607 = vsel %vm50, %v574, 0
  %v610 = vsel %vm50, %v575, 0
  %v613 = vsel %vm50, %v576, 0
  %v616 = vsel %vm50, %v577, 0
  %v619 = vsel %vm50, %v578, 0
  %v622 = vsel %vm50, %v579, 0
  %v625 = vsel %vm50, %v580, 0
  %v628 = vsel %vm50, %v581, 0
  %v631 = vsel %vm50, %v582, 0
  %v634 = vsel %vm50, %v583, 0
  %v637 = vsel %vm50, %v584, 0
  %v640 = vsel %vm50, %v585, 0
  %v643 = vsel %vm50, %v586, 0
  %v646 = vsel %vm50, %v587, 0
  %v649 = vsel %vm50, %v588, 0
  %651 = vmatprep.subr.bf16.mxu0 0
  %652 = vmatpush1.bf16.msra.mxu0 %v602
  %653 = vmatprep.subr.bf16.mxu0 0
  %654 = vmatpush1.bf16.msra.mxu0 %v603
  %655 = vmatprep.subr.bf16.mxu0 0
  %656 = vmatpush1.bf16.msra.mxu0 0
  %657 = vmatprep.subr.bf16.mxu0 0
  %658 = vmatpush1.bf16.msra.mxu0 0
  %659 = vmatprep.subr.bf16.mxu0 0
  %660 = vmatpush1.bf16.msra.mxu0 0
  %661 = vmatprep.subr.bf16.mxu0 0
  %662 = vmatpush1.bf16.msra.mxu0 0
  %663 = vmatprep.subr.bf16.mxu0 0
  %664 = vmatpush1.bf16.msra.mxu0 0
  %665 = vmatprep.subr.bf16.mxu0 0
  %666 = vmatpush1.bf16.msra.mxu0 0
  %667 = vmatprep.subr.bf16.mxu0 0
  %668 = vmatpush1.bf16.msra.mxu0 0
  %669 = vmatprep.subr.bf16.mxu0 0
  %670 = vmatpush1.bf16.msra.mxu0 0
  %671 = vmatprep.subr.bf16.mxu0 0
  %672 = vmatpush1.bf16.msra.mxu0 0
  %673 = vmatprep.subr.bf16.mxu0 0
  %674 = vmatpush1.bf16.msra.mxu0 0
  %675 = vmatprep.subr.bf16.mxu0 0
  %676 = vmatpush1.bf16.msra.mxu0 0
  %677 = vmatprep.subr.bf16.mxu0 0
  %678 = vmatpush1.bf16.msra.mxu0 0
  %679 = vmatprep.subr.bf16.mxu0 0
  %680 = vmatpush1.bf16.msra.mxu0 0
  %681 = vmatprep.subr.bf16.mxu0 0
  %682 = vmatpush1.bf16.msra.mxu0 0
  %683 = vmatprep.mubr.bf16.mxu0 0
  %684 = vmatmul.mubr.bf16.gmra.mrb[0].mxu0 %v607
  %v685 = vpop.f32.mrb[0].mxu0
  %v686 = vadd.f32 %v593, %v685
  %v687 = vpop.f32.mrb[0].mxu0
  %v688 = vpop.f32.mrb[0].mxu0
  %v689 = vadd.f32 %v593, %v688
  %v690 = vpop.f32.mrb[0].mxu0
  %691 = vmatprep.mubr.bf16.mxu0 0
  %692 = vmatmul.mubr.bf16.gmra.mrb[0].mxu0 %v610
  %v693 = vpop.f32.mrb[0].mxu0
  %v694 = vadd.f32 %v593, %v693
  %v695 = vpop.f32.mrb[0].mxu0
  %v696 = vpop.f32.mrb[0].mxu0
  %v697 = vadd.f32 %v593, %v696
  %v698 = vpop.f32.mrb[0].mxu0
  %699 = vmatprep.mubr.bf16.mxu0 0
  %700 = vmatmul.mubr.bf16.gmra.mrb[0].mxu0 %v613
  %v701 = vpop.f32.mrb[0].mxu0
  %v702 = vadd.f32 %v593, %v701
  %v703 = vpop.f32.mrb[0].mxu0
  %v704 = vpop.f32.mrb[0].mxu0
  %v705 = vadd.f32 %v593, %v704
  %v706 = vpop.f32.mrb[0].mxu0
  %707 = vmatprep.mubr.bf16.mxu0 0
  %708 = vmatmul.mubr.bf16.gmra.mrb[0].mxu0 %v616
  %v709 = vpop.f32.mrb[0].mxu0
  %v710 = vadd.f32 %v593, %v709
  %v711 = vpop.f32.mrb[0].mxu0
  %v712 = vpop.f32.mrb[0].mxu0
  %v713 = vadd.f32 %v593, %v712
  %v714 = vpop.f32.mrb[0].mxu0
  %715 = vmatprep.mubr.bf16.mxu0 0
  %716 = vmatmul.mubr.bf16.gmra.mrb[0].mxu0 %v619
  %v717 = vpop.f32.mrb[0].mxu0
  %v718 = vadd.f32 %v593, %v717
  %v719 = vpop.f32.mrb[0].mxu0
  %v720 = vpop.f32.mrb[0].mxu0
  %v721 = vadd.f32 %v593, %v720
  %v722 = vpop.f32.mrb[0].mxu0
  %723 = vmatprep.mubr.bf16.mxu0 0
  %724 = vmatmul.mubr.bf16.gmra.mrb[0].mxu0 %v622
  %v725 = vpop.f32.mrb[0].mxu0
  %v726 = vadd.f32 %v593, %v725
  %v727 = vpop.f32.mrb[0].mxu0
  %v728 = vpop.f32.mrb[0].mxu0
  %v729 = vadd.f32 %v593, %v728
  %v730 = vpop.f32.mrb[0].mxu0
  %731 = vmatprep.mubr.bf16.mxu0 0
  %732 = vmatmul.mubr.bf16.gmra.mrb[0].mxu0 %v625
  %v733 = vpop.f32.mrb[0].mxu0
  %v734 = vadd.f32 %v593, %v733
  %v735 = vpop.f32.mrb[0].mxu0
  %v736 = vpop.f32.mrb[0].mxu0
  %v737 = vadd.f32 %v593, %v736
  %v738 = vpop.f32.mrb[0].mxu0
  %739 = vmatprep.mubr.bf16.mxu0 0
  %740 = vmatmul.mubr.bf16.gmra.mrb[0].mxu0 %v628
  %v741 = vpop.f32.mrb[0].mxu0
  %v742 = vadd.f32 %v593, %v741
  %v743 = vpop.f32.mrb[0].mxu0
  %v744 = vpop.f32.mrb[0].mxu0
  %v745 = vadd.f32 %v593, %v744
  %v746 = vpop.f32.mrb[0].mxu0
  %747 = vmatprep.mubr.bf16.mxu0 0
  %748 = vmatmul.mubr.bf16.gmra.mrb[0].mxu0 %v631
  %v749 = vpop.f32.mrb[0].mxu0
  %v750 = vadd.f32 %v593, %v749
  %v751 = vpop.f32.mrb[0].mxu0
  %v752 = vpop.f32.mrb[0].mxu0
  %v753 = vadd.f32 %v593, %v752
  %v754 = vpop.f32.mrb[0].mxu0
  %755 = vmatprep.mubr.bf16.mxu0 0
  %756 = vmatmul.mubr.bf16.gmra.mrb[0].mxu0 %v634
  %v757 = vpop.f32.mrb[0].mxu0
  %v758 = vadd.f32 %v593, %v757
  %v759 = vpop.f32.mrb[0].mxu0
  %v760 = vpop.f32.mrb[0].mxu0
  %v761 = vadd.f32 %v593, %v760
  %v762 = vpop.f32.mrb[0].mxu0
  %763 = vmatprep.mubr.bf16.mxu0 0
  %764 = vmatmul.mubr.bf16.gmra.mrb[0].mxu0 %v637
  %v765 = vpop.f32.mrb[0].mxu0
  %v766 = vadd.f32 %v593, %v765
  %v767 = vpop.f32.mrb[0].mxu0
  %v768 = vpop.f32.mrb[0].mxu0
  %v769 = vadd.f32 %v593, %v768
  %v770 = vpop.f32.mrb[0].mxu0
  %771 = vmatprep.mubr.bf16.mxu0 0
  %772 = vmatmul.mubr.bf16.gmra.mrb[0].mxu0 %v640
  %v773 = vpop.f32.mrb[0].mxu0
  %v774 = vadd.f32 %v593, %v773
  %v775 = vpop.f32.mrb[0].mxu0
  %v776 = vpop.f32.mrb[0].mxu0
  %v777 = vadd.f32 %v593, %v776
  %v778 = vpop.f32.mrb[0].mxu0
  %779 = vmatprep.mubr.bf16.mxu0 0
  %780 = vmatmul.mubr.bf16.gmra.mrb[0].mxu0 %v643
  %v781 = vpop.f32.mrb[0].mxu0
  %v782 = vadd.f32 %v593, %v781
  %v783 = vpop.f32.mrb[0].mxu0
  %v784 = vpop.f32.mrb[0].mxu0
  %v785 = vadd.f32 %v593, %v784
  %v786 = vpop.f32.mrb[0].mxu0
  %787 = vmatprep.mubr.bf16.mxu0 0
  %788 = vmatmul.mubr.bf16.gmra.mrb[0].mxu0 %v646
  %v789 = vpop.f32.mrb[0].mxu0
  %v790 = vadd.f32 %v593, %v789
  %v791 = vpop.f32.mrb[0].mxu0
  %v792 = vpop.f32.mrb[0].mxu0
  %v793 = vadd.f32 %v593, %v792
  %v794 = vpop.f32.mrb[0].mxu0
  %795 = vmatprep.mubr.bf16.mxu0 0
  %796 = vmatmul.mubr.bf16.gmra.mrb[0].mxu0 %v649
  %v797 = vpop.f32.mrb[0].mxu0
  %v798 = vadd.f32 %v593, %v797
  %v799 = vpop.f32.mrb[0].mxu0
  %v800 = vpop.f32.mrb[0].mxu0
  %v801 = vadd.f32 %v593, %v800
  %v802 = vpop.f32.mrb[0].mxu0
  %803 = vdwg.mxu0
  %v804 = vpack.c.bf16 %v689, %v686
  %v805 = vpack.c.bf16 %v697, %v694
  %v806 = vpack.c.bf16 %v705, %v702
  %v807 = vpack.c.bf16 %v713, %v710
  %v808 = vpack.c.bf16 %v721, %v718
  %v809 = vpack.c.bf16 %v729, %v726
  %v810 = vpack.c.bf16 %v737, %v734
  %v811 = vpack.c.bf16 %v745, %v742
  %v812 = vpack.c.bf16 %v753, %v750
  %v813 = vpack.c.bf16 %v761, %v758
  %v814 = vpack.c.bf16 %v769, %v766
  %v815 = vpack.c.bf16 %v777, %v774
  %v816 = vpack.c.bf16 %v785, %v782
  %v817 = vpack.c.bf16 %v793, %v790
  %v818 = vpack.c.bf16 %v801, %v798
  %834 = vrot.lane.b32.xlu0 %v804, 96
  %v835 = vpop.permute.xlu0 %834
  %836 = vrot.lane.b32.xlu0 %v805, 96
  %v837 = vpop.permute.xlu0 %836
  %838 = vrot.lane.b32.xlu0 %v806, 96
  %v839 = vpop.permute.xlu0 %838
  %840 = vrot.lane.b32.xlu0 %v807, 96
  %v841 = vpop.permute.xlu0 %840
  %842 = vrot.lane.b32.xlu0 %v808, 96
  %v843 = vpop.permute.xlu0 %842
  %844 = vrot.lane.b32.xlu0 %v809, 96
  %v845 = vpop.permute.xlu0 %844
  %846 = vrot.lane.b32.xlu0 %v810, 96
  %v847 = vpop.permute.xlu0 %846
  %848 = vrot.lane.b32.xlu0 %v811, 96
  %v849 = vpop.permute.xlu0 %848
  %850 = vrot.lane.b32.xlu0 %v812, 96
  %v851 = vpop.permute.xlu0 %850
  %852 = vrot.lane.b32.xlu0 %v813, 96
  %v853 = vpop.permute.xlu0 %852
  %854 = vrot.lane.b32.xlu0 %v814, 96
  %v855 = vpop.permute.xlu0 %854
  %856 = vrot.lane.b32.xlu0 %v815, 96
  %v857 = vpop.permute.xlu0 %856
  %858 = vrot.lane.b32.xlu0 %v816, 96
  %v859 = vpop.permute.xlu0 %858
  %860 = vrot.lane.b32.xlu0 %v817, 96
  %v861 = vpop.permute.xlu0 %860
  %862 = vrot.lane.b32.xlu0 %v818, 96
  %v863 = vpop.permute.xlu0 %862
  %vm864 = vcmask 130048
  %v866 = vsel %vm864, %v804, 0
  %v869 = vsel %vm864, %v805, 0
  %v872 = vsel %vm864, %v806, 0
  %v875 = vsel %vm864, %v807, 0
  %v878 = vsel %vm864, %v808, 0
  %v881 = vsel %vm864, %v809, 0
  %v884 = vsel %vm864, %v810, 0
  %v887 = vsel %vm864, %v811, 0
  %v890 = vsel %vm864, %v812, 0
  %v893 = vsel %vm864, %v813, 0
  %v896 = vsel %vm864, %v814, 0
  %v899 = vsel %vm864, %v815, 0
  %v902 = vsel %vm864, %v816, 0
  %v905 = vsel %vm864, %v817, 0
  %v908 = vsel %vm864, %v818, 0
  %v911 = vsel %vm864, %v835, 0
  %v914 = vsel %vm864, %v837, 0
  %v917 = vsel %vm864, %v839, 0
  %v920 = vsel %vm864, %v841, 0
  %v923 = vsel %vm864, %v843, 0
  %v926 = vsel %vm864, %v845, 0
  %v929 = vsel %vm864, %v847, 0
  %v932 = vsel %vm864, %v849, 0
  %v935 = vsel %vm864, %v851, 0
  %v938 = vsel %vm864, %v853, 0
  %v941 = vsel %vm864, %v855, 0
  %v944 = vsel %vm864, %v857, 0
  %v947 = vsel %vm864, %v859, 0
  %v950 = vsel %vm864, %v861, 0
  %v953 = vsel %vm864, %v863, 0
  %955 = vmatprep.subr.bf16.mxu0 0
  %956 = vmatpush1.bf16.xpose.msra.mxu0 %v911
  %957 = vmatprep.subr.bf16.mxu0 0
  %958 = vmatpush1.bf16.xpose.msra.mxu0 %v914
  %959 = vmatprep.subr.bf16.mxu0 0
  %960 = vmatpush1.bf16.xpose.msra.mxu0 %v917
  %961 = vmatprep.subr.bf16.mxu0 0
  %962 = vmatpush1.bf16.xpose.msra.mxu0 %v920
  %963 = vmatprep.subr.bf16.mxu0 0
  %964 = vmatpush1.bf16.xpose.msra.mxu0 %v923
  %965 = vmatprep.subr.bf16.mxu0 0
  %966 = vmatpush1.bf16.xpose.msra.mxu0 %v926
  %967 = vmatprep.subr.bf16.mxu0 0
  %968 = vmatpush1.bf16.xpose.msra.mxu0 %v929
  %969 = vmatprep.subr.bf16.mxu0 0
  %970 = vmatpush1.bf16.xpose.msra.mxu0 %v932
  %971 = vmatprep.subr.bf16.mxu0 0
  %972 = vmatpush1.bf16.xpose.msra.mxu0 %v935
  %973 = vmatprep.subr.bf16.mxu0 0
  %974 = vmatpush1.bf16.xpose.msra.mxu0 %v938
  %975 = vmatprep.subr.bf16.mxu0 0
  %976 = vmatpush1.bf16.xpose.msra.mxu0 %v941
  %977 = vmatprep.subr.bf16.mxu0 0
  %978 = vmatpush1.bf16.xpose.msra.mxu0 %v944
  %979 = vmatprep.subr.bf16.mxu0 0
  %980 = vmatpush1.bf16.xpose.msra.mxu0 %v947
  %981 = vmatprep.subr.bf16.mxu0 0
  %982 = vmatpush1.bf16.xpose.msra.mxu0 %v950
  %983 = vmatprep.subr.bf16.mxu0 0
  %984 = vmatpush1.bf16.xpose.msra.mxu0 %v953
  %985 = vmatprep.subr.bf16.mxu0 0
  %986 = vmatpush1.bf16.xpose.msra.mxu0 0
  %987 = vmatprep.mubr.bf16.mxu0 0
  %988 = vmatmul.mubr.bf16.gmra.mrb[0].mxu0 %v866
  %v989 = vpop.f32.mrb[0].mxu0
  %v990 = vadd.f32 %v510, %v989
  %v991 = vpop.f32.mrb[0].mxu0
  %v992 = vadd.f32 %v511, %v991
  %v993 = vpop.f32.mrb[0].mxu0
  %v994 = vadd.f32 %v512, %v993
  %v995 = vpop.f32.mrb[0].mxu0
  %v996 = vadd.f32 %v513, %v995
  %997 = vmatprep.mubr.bf16.mxu0 0
  %998 = vmatmul.mubr.bf16.gmra.mrb[0].mxu0 %v869
  %v999 = vpop.f32.mrb[0].mxu0
  %v1000 = vadd.f32 %v514, %v999
  %v1001 = vpop.f32.mrb[0].mxu0
  %v1002 = vadd.f32 %v515, %v1001
  %v1003 = vpop.f32.mrb[0].mxu0
  %v1004 = vadd.f32 %v516, %v1003
  %v1005 = vpop.f32.mrb[0].mxu0
  %v1006 = vadd.f32 %v517, %v1005
  %1007 = vmatprep.mubr.bf16.mxu0 0
  %1008 = vmatmul.mubr.bf16.gmra.mrb[0].mxu0 %v872
  %v1009 = vpop.f32.mrb[0].mxu0
  %v1010 = vadd.f32 %v518, %v1009
  %v1011 = vpop.f32.mrb[0].mxu0
  %v1012 = vadd.f32 %v519, %v1011
  %v1013 = vpop.f32.mrb[0].mxu0
  %v1014 = vadd.f32 %v520, %v1013
  %v1015 = vpop.f32.mrb[0].mxu0
  %v1016 = vadd.f32 %v521, %v1015
  %1017 = vmatprep.mubr.bf16.mxu0 0
  %1018 = vmatmul.mubr.bf16.gmra.mrb[0].mxu0 %v875
  %v1019 = vpop.f32.mrb[0].mxu0
  %v1020 = vadd.f32 %v522, %v1019
  %v1021 = vpop.f32.mrb[0].mxu0
  %v1022 = vadd.f32 %v523, %v1021
  %v1023 = vpop.f32.mrb[0].mxu0
  %v1024 = vadd.f32 %v524, %v1023
  %v1025 = vpop.f32.mrb[0].mxu0
  %v1026 = vadd.f32 %v525, %v1025
  %1027 = vmatprep.mubr.bf16.mxu0 0
  %1028 = vmatmul.mubr.bf16.gmra.mrb[0].mxu0 %v878
  %v1029 = vpop.f32.mrb[0].mxu0
  %v1030 = vadd.f32 %v526, %v1029
  %v1031 = vpop.f32.mrb[0].mxu0
  %v1032 = vadd.f32 %v527, %v1031
  %v1033 = vpop.f32.mrb[0].mxu0
  %v1034 = vadd.f32 %v528, %v1033
  %v1035 = vpop.f32.mrb[0].mxu0
  %v1036 = vadd.f32 %v529, %v1035
  %1037 = vmatprep.mubr.bf16.mxu0 0
  %1038 = vmatmul.mubr.bf16.gmra.mrb[0].mxu0 %v881
  %v1039 = vpop.f32.mrb[0].mxu0
  %v1040 = vadd.f32 %v530, %v1039
  %v1041 = vpop.f32.mrb[0].mxu0
  %v1042 = vadd.f32 %v531, %v1041
  %v1043 = vpop.f32.mrb[0].mxu0
  %v1044 = vadd.f32 %v532, %v1043
  %v1045 = vpop.f32.mrb[0].mxu0
  %v1046 = vadd.f32 %v533, %v1045
  %1047 = vmatprep.mubr.bf16.mxu0 0
  %1048 = vmatmul.mubr.bf16.gmra.mrb[0].mxu0 %v884
  %v1049 = vpop.f32.mrb[0].mxu0
  %v1050 = vadd.f32 %v534, %v1049
  %v1051 = vpop.f32.mrb[0].mxu0
  %v1052 = vadd.f32 %v535, %v1051
  %v1053 = vpop.f32.mrb[0].mxu0
  %v1054 = vadd.f32 %v536, %v1053
  %v1055 = vpop.f32.mrb[0].mxu0
  %v1056 = vadd.f32 %v537, %v1055
  %1057 = vmatprep.mubr.bf16.mxu0 0
  %1058 = vmatmul.mubr.bf16.gmra.mrb[0].mxu0 %v887
  %v1059 = vpop.f32.mrb[0].mxu0
  %v1060 = vadd.f32 %v538, %v1059
  %v1061 = vpop.f32.mrb[0].mxu0
  %v1062 = vadd.f32 %v539, %v1061
  %v1063 = vpop.f32.mrb[0].mxu0
  %v1064 = vadd.f32 %v540, %v1063
  %v1065 = vpop.f32.mrb[0].mxu0
  %v1066 = vadd.f32 %v541, %v1065
  %1067 = vmatprep.mubr.bf16.mxu0 0
  %1068 = vmatmul.mubr.bf16.gmra.mrb[0].mxu0 %v890
  %v1069 = vpop.f32.mrb[0].mxu0
  %v1070 = vadd.f32 %v542, %v1069
  %v1071 = vpop.f32.mrb[0].mxu0
  %v1072 = vadd.f32 %v543, %v1071
  %v1073 = vpop.f32.mrb[0].mxu0
  %v1074 = vadd.f32 %v544, %v1073
  %v1075 = vpop.f32.mrb[0].mxu0
  %v1076 = vadd.f32 %v545, %v1075
  %1077 = vmatprep.mubr.bf16.mxu0 0
  %1078 = vmatmul.mubr.bf16.gmra.mrb[0].mxu0 %v893
  %v1079 = vpop.f32.mrb[0].mxu0
  %v1080 = vadd.f32 %v546, %v1079
  %v1081 = vpop.f32.mrb[0].mxu0
  %v1082 = vadd.f32 %v547, %v1081
  %v1083 = vpop.f32.mrb[0].mxu0
  %v1084 = vadd.f32 %v548, %v1083
  %v1085 = vpop.f32.mrb[0].mxu0
  %v1086 = vadd.f32 %v549, %v1085
  %1087 = vmatprep.mubr.bf16.mxu0 0
  %1088 = vmatmul.mubr.bf16.gmra.mrb[0].mxu0 %v896
  %v1089 = vpop.f32.mrb[0].mxu0
  %v1090 = vadd.f32 %v550, %v1089
  %v1091 = vpop.f32.mrb[0].mxu0
  %v1092 = vadd.f32 %v551, %v1091
  %v1093 = vpop.f32.mrb[0].mxu0
  %v1094 = vadd.f32 %v552, %v1093
  %v1095 = vpop.f32.mrb[0].mxu0
  %v1096 = vadd.f32 %v553, %v1095
  %1097 = vmatprep.mubr.bf16.mxu0 0
  %1098 = vmatmul.mubr.bf16.gmra.mrb[0].mxu0 %v899
  %v1099 = vpop.f32.mrb[0].mxu0
  %v1100 = vadd.f32 %v554, %v1099
  %v1101 = vpop.f32.mrb[0].mxu0
  %v1102 = vadd.f32 %v555, %v1101
  %v1103 = vpop.f32.mrb[0].mxu0
  %v1104 = vadd.f32 %v556, %v1103
  %v1105 = vpop.f32.mrb[0].mxu0
  %v1106 = vadd.f32 %v557, %v1105
  %1107 = vmatprep.mubr.bf16.mxu0 0
  %1108 = vmatmul.mubr.bf16.gmra.mrb[0].mxu0 %v902
  %v1109 = vpop.f32.mrb[0].mxu0
  %v1110 = vadd.f32 %v558, %v1109
  %v1111 = vpop.f32.mrb[0].mxu0
  %v1112 = vadd.f32 %v559, %v1111
  %v1113 = vpop.f32.mrb[0].mxu0
  %v1114 = vadd.f32 %v560, %v1113
  %v1115 = vpop.f32.mrb[0].mxu0
  %v1116 = vadd.f32 %v561, %v1115
  %1117 = vmatprep.mubr.bf16.mxu0 0
  %1118 = vmatmul.mubr.bf16.gmra.mrb[0].mxu0 %v905
  %v1119 = vpop.f32.mrb[0].mxu0
  %v1120 = vadd.f32 %v562, %v1119
  %v1121 = vpop.f32.mrb[0].mxu0
  %v1122 = vadd.f32 %v563, %v1121
  %v1123 = vpop.f32.mrb[0].mxu0
  %v1124 = vadd.f32 %v564, %v1123
  %v1125 = vpop.f32.mrb[0].mxu0
  %v1126 = vadd.f32 %v565, %v1125
  %1127 = vmatprep.mubr.bf16.mxu0 0
  %1128 = vmatmul.mubr.bf16.gmra.mrb[0].mxu0 %v908
  %v1129 = vpop.f32.mrb[0].mxu0
  %v1130 = vadd.f32 %v566, %v1129
  %v1131 = vpop.f32.mrb[0].mxu0
  %v1132 = vadd.f32 %v567, %v1131
  %v1133 = vpop.f32.mrb[0].mxu0
  %v1134 = vadd.f32 %v568, %v1133
  %v1135 = vpop.f32.mrb[0].mxu0
  %v1136 = vadd.f32 %v569, %v1135
  %1137 = vdwg.mxu0
  %vm1138 = vcmask 916480
  %v1139 = vsel %vm1138, %v992, -inf
  %v1140 = vmax.f32 %v990, %v1139
  %1141 = vmax.xlane.f32.xlu0 %v1140
  %v1142 = vpop.xlane.xlu0 %1141
  %v1143 = vsel %vm1138, %v996, -inf
  %v1144 = vmax.f32 %v994, %v1143
  %1145 = vmax.xlane.f32.xlu0 %v1144
  %v1146 = vpop.xlane.xlu0 %1145
  %v1147 = vsel %vm1138, %v1002, -inf
  %v1148 = vmax.f32 %v1000, %v1147
  %1149 = vmax.xlane.f32.xlu0 %v1148
  %v1150 = vpop.xlane.xlu0 %1149
  %v1151 = vsel %vm1138, %v1006, -inf
  %v1152 = vmax.f32 %v1004, %v1151
  %1153 = vmax.xlane.f32.xlu0 %v1152
  %v1154 = vpop.xlane.xlu0 %1153
  %v1155 = vsel %vm1138, %v1012, -inf
  %v1156 = vmax.f32 %v1010, %v1155
  %1157 = vmax.xlane.f32.xlu0 %v1156
  %v1158 = vpop.xlane.xlu0 %1157
  %v1159 = vsel %vm1138, %v1016, -inf
  %v1160 = vmax.f32 %v1014, %v1159
  %1161 = vmax.xlane.f32.xlu0 %v1160
  %v1162 = vpop.xlane.xlu0 %1161
  %v1163 = vsel %vm1138, %v1022, -inf
  %v1164 = vmax.f32 %v1020, %v1163
  %1165 = vmax.xlane.f32.xlu0 %v1164
  %v1166 = vpop.xlane.xlu0 %1165
  %v1167 = vsel %vm1138, %v1026, -inf
  %v1168 = vmax.f32 %v1024, %v1167
  %1169 = vmax.xlane.f32.xlu0 %v1168
  %v1170 = vpop.xlane.xlu0 %1169
  %v1171 = vsel %vm1138, %v1032, -inf
  %v1172 = vmax.f32 %v1030, %v1171
  %1173 = vmax.xlane.f32.xlu0 %v1172
  %v1174 = vpop.xlane.xlu0 %1173
  %v1175 = vsel %vm1138, %v1036, -inf
  %v1176 = vmax.f32 %v1034, %v1175
  %1177 = vmax.xlane.f32.xlu0 %v1176
  %v1178 = vpop.xlane.xlu0 %1177
  %v1179 = vsel %vm1138, %v1042, -inf
  %v1180 = vmax.f32 %v1040, %v1179
  %1181 = vmax.xlane.f32.xlu0 %v1180
  %v1182 = vpop.xlane.xlu0 %1181
  %v1183 = vsel %vm1138, %v1046, -inf
  %v1184 = vmax.f32 %v1044, %v1183
  %1185 = vmax.xlane.f32.xlu0 %v1184
  %v1186 = vpop.xlane.xlu0 %1185
  %v1187 = vsel %vm1138, %v1052, -inf
  %v1188 = vmax.f32 %v1050, %v1187
  %1189 = vmax.xlane.f32.xlu0 %v1188
  %v1190 = vpop.xlane.xlu0 %1189
  %v1191 = vsel %vm1138, %v1056, -inf
  %v1192 = vmax.f32 %v1054, %v1191
  %1193 = vmax.xlane.f32.xlu0 %v1192
  %v1194 = vpop.xlane.xlu0 %1193
  %v1195 = vsel %vm1138, %v1062, -inf
  %v1196 = vmax.f32 %v1060, %v1195
  %1197 = vmax.xlane.f32.xlu0 %v1196
  %v1198 = vpop.xlane.xlu0 %1197
  %v1199 = vsel %vm1138, %v1066, -inf
  %v1200 = vmax.f32 %v1064, %v1199
  %1201 = vmax.xlane.f32.xlu0 %v1200
  %v1202 = vpop.xlane.xlu0 %1201
  %v1203 = vsel %vm1138, %v1072, -inf
  %v1204 = vmax.f32 %v1070, %v1203
  %1205 = vmax.xlane.f32.xlu0 %v1204
  %v1206 = vpop.xlane.xlu0 %1205
  %v1207 = vsel %vm1138, %v1076, -inf
  %v1208 = vmax.f32 %v1074, %v1207
  %1209 = vmax.xlane.f32.xlu0 %v1208
  %v1210 = vpop.xlane.xlu0 %1209
  %v1211 = vsel %vm1138, %v1082, -inf
  %v1212 = vmax.f32 %v1080, %v1211
  %1213 = vmax.xlane.f32.xlu0 %v1212
  %v1214 = vpop.xlane.xlu0 %1213
  %v1215 = vsel %vm1138, %v1086, -inf
  %v1216 = vmax.f32 %v1084, %v1215
  %1217 = vmax.xlane.f32.xlu0 %v1216
  %v1218 = vpop.xlane.xlu0 %1217
  %v1219 = vsel %vm1138, %v1092, -inf
  %v1220 = vmax.f32 %v1090, %v1219
  %1221 = vmax.xlane.f32.xlu0 %v1220
  %v1222 = vpop.xlane.xlu0 %1221
  %v1223 = vsel %vm1138, %v1096, -inf
  %v1224 = vmax.f32 %v1094, %v1223
  %1225 = vmax.xlane.f32.xlu0 %v1224
  %v1226 = vpop.xlane.xlu0 %1225
  %v1227 = vsel %vm1138, %v1102, -inf
  %v1228 = vmax.f32 %v1100, %v1227
  %1229 = vmax.xlane.f32.xlu0 %v1228
  %v1230 = vpop.xlane.xlu0 %1229
  %v1231 = vsel %vm1138, %v1106, -inf
  %v1232 = vmax.f32 %v1104, %v1231
  %1233 = vmax.xlane.f32.xlu0 %v1232
  %v1234 = vpop.xlane.xlu0 %1233
  %v1235 = vsel %vm1138, %v1112, -inf
  %v1236 = vmax.f32 %v1110, %v1235
  %1237 = vmax.xlane.f32.xlu0 %v1236
  %v1238 = vpop.xlane.xlu0 %1237
  %v1239 = vsel %vm1138, %v1116, -inf
  %v1240 = vmax.f32 %v1114, %v1239
  %1241 = vmax.xlane.f32.xlu0 %v1240
  %v1242 = vpop.xlane.xlu0 %1241
  %v1243 = vsel %vm1138, %v1122, -inf
  %v1244 = vmax.f32 %v1120, %v1243
  %1245 = vmax.xlane.f32.xlu0 %v1244
  %v1246 = vpop.xlane.xlu0 %1245
  %v1247 = vsel %vm1138, %v1126, -inf
  %v1248 = vmax.f32 %v1124, %v1247
  %1249 = vmax.xlane.f32.xlu0 %v1248
  %v1250 = vpop.xlane.xlu0 %1249
  %v1251 = vsel %vm1138, %v1132, -inf
  %v1252 = vmax.f32 %v1130, %v1251
  %1253 = vmax.xlane.f32.xlu0 %v1252
  %v1254 = vpop.xlane.xlu0 %1253
  %v1255 = vsel %vm1138, %v1136, -inf
  %v1256 = vmax.f32 %v1134, %v1255
  %1257 = vmax.xlane.f32.xlu0 %v1256
  %v1258 = vpop.xlane.xlu0 %1257
  %v1259 = vsub.f32 %v990, %v1142
  %v1260 = vsub.f32 %v992, %v1142
  %v1261 = vsub.f32 %v994, %v1146
  %v1262 = vsub.f32 %v996, %v1146
  %v1263 = vsub.f32 %v1000, %v1150
  %v1264 = vsub.f32 %v1002, %v1150
  %v1265 = vsub.f32 %v1004, %v1154
  %v1266 = vsub.f32 %v1006, %v1154
  %v1267 = vsub.f32 %v1010, %v1158
  %v1268 = vsub.f32 %v1012, %v1158
  %v1269 = vsub.f32 %v1014, %v1162
  %v1270 = vsub.f32 %v1016, %v1162
  %v1271 = vsub.f32 %v1020, %v1166
  %v1272 = vsub.f32 %v1022, %v1166
  %v1273 = vsub.f32 %v1024, %v1170
  %v1274 = vsub.f32 %v1026, %v1170
  %v1275 = vsub.f32 %v1030, %v1174
  %v1276 = vsub.f32 %v1032, %v1174
  %v1277 = vsub.f32 %v1034, %v1178
  %v1278 = vsub.f32 %v1036, %v1178
  %v1279 = vsub.f32 %v1040, %v1182
  %v1280 = vsub.f32 %v1042, %v1182
  %v1281 = vsub.f32 %v1044, %v1186
  %v1282 = vsub.f32 %v1046, %v1186
  %v1283 = vsub.f32 %v1050, %v1190
  %v1284 = vsub.f32 %v1052, %v1190
  %v1285 = vsub.f32 %v1054, %v1194
  %v1286 = vsub.f32 %v1056, %v1194
  %v1287 = vsub.f32 %v1060, %v1198
  %v1288 = vsub.f32 %v1062, %v1198
  %v1289 = vsub.f32 %v1064, %v1202
  %v1290 = vsub.f32 %v1066, %v1202
  %v1291 = vsub.f32 %v1070, %v1206
  %v1292 = vsub.f32 %v1072, %v1206
  %v1293 = vsub.f32 %v1074, %v1210
  %v1294 = vsub.f32 %v1076, %v1210
  %v1295 = vsub.f32 %v1080, %v1214
  %v1296 = vsub.f32 %v1082, %v1214
  %v1297 = vsub.f32 %v1084, %v1218
  %v1298 = vsub.f32 %v1086, %v1218
  %v1299 = vsub.f32 %v1090, %v1222
  %v1300 = vsub.f32 %v1092, %v1222
  %v1301 = vsub.f32 %v1094, %v1226
  %v1302 = vsub.f32 %v1096, %v1226
  %v1303 = vsub.f32 %v1100, %v1230
  %v1304 = vsub.f32 %v1102, %v1230
  %v1305 = vsub.f32 %v1104, %v1234
  %v1306 = vsub.f32 %v1106, %v1234
  %v1307 = vsub.f32 %v1110, %v1238
  %v1308 = vsub.f32 %v1112, %v1238
  %v1309 = vsub.f32 %v1114, %v1242
  %v1310 = vsub.f32 %v1116, %v1242
  %v1311 = vsub.f32 %v1120, %v1246
  %v1312 = vsub.f32 %v1122, %v1246
  %v1313 = vsub.f32 %v1124, %v1250
  %v1314 = vsub.f32 %v1126, %v1250
  %v1315 = vsub.f32 %v1130, %v1254
  %v1316 = vsub.f32 %v1132, %v1254
  %v1317 = vsub.f32 %v1134, %v1258
  %v1318 = vsub.f32 %v1136, %v1258
  %v1319 = vmul.f32 %v1259, 1.442695
  %v1320 = vpow.pop %v1319
  %v1321 = vmul.f32 %v1260, 1.442695
  %v1322 = vpow.pop %v1321
  %v1323 = vmul.f32 %v1261, 1.442695
  %v1324 = vpow.pop %v1323
  %v1325 = vmul.f32 %v1262, 1.442695
  %v1326 = vpow.pop %v1325
  %v1327 = vmul.f32 %v1263, 1.442695
  %v1328 = vpow.pop %v1327
  %v1329 = vmul.f32 %v1264, 1.442695
  %v1330 = vpow.pop %v1329
  %v1331 = vmul.f32 %v1265, 1.442695
  %v1332 = vpow.pop %v1331
  %v1333 = vmul.f32 %v1266, 1.442695
  %v1334 = vpow.pop %v1333
  %v1335 = vmul.f32 %v1267, 1.442695
  %v1336 = vpow.pop %v1335
  %v1337 = vmul.f32 %v1268, 1.442695
  %v1338 = vpow.pop %v1337
  %v1339 = vmul.f32 %v1269, 1.442695
  %v1340 = vpow.pop %v1339
  %v1341 = vmul.f32 %v1270, 1.442695
  %v1342 = vpow.pop %v1341
  %v1343 = vmul.f32 %v1271, 1.442695
  %v1344 = vpow.pop %v1343
  %v1345 = vmul.f32 %v1272, 1.442695
  %v1346 = vpow.pop %v1345
  %v1347 = vmul.f32 %v1273, 1.442695
  %v1348 = vpow.pop %v1347
  %v1349 = vmul.f32 %v1274, 1.442695
  %v1350 = vpow.pop %v1349
  %v1351 = vmul.f32 %v1275, 1.442695
  %v1352 = vpow.pop %v1351
  %v1353 = vmul.f32 %v1276, 1.442695
  %v1354 = vpow.pop %v1353
  %v1355 = vmul.f32 %v1277, 1.442695
  %v1356 = vpow.pop %v1355
  %v1357 = vmul.f32 %v1278, 1.442695
  %v1358 = vpow.pop %v1357
  %v1359 = vmul.f32 %v1279, 1.442695
  %v1360 = vpow.pop %v1359
  %v1361 = vmul.f32 %v1280, 1.442695
  %v1362 = vpow.pop %v1361
  %v1363 = vmul.f32 %v1281, 1.442695
  %v1364 = vpow.pop %v1363
  %v1365 = vmul.f32 %v1282, 1.442695
  %v1366 = vpow.pop %v1365
  %v1367 = vmul.f32 %v1283, 1.442695
  %v1368 = vpow.pop %v1367
  %v1369 = vmul.f32 %v1284, 1.442695
  %v1370 = vpow.pop %v1369
  %v1371 = vmul.f32 %v1285, 1.442695
  %v1372 = vpow.pop %v1371
  %v1373 = vmul.f32 %v1286, 1.442695
  %v1374 = vpow.pop %v1373
  %v1375 = vmul.f32 %v1287, 1.442695
  %v1376 = vpow.pop %v1375
  %v1377 = vmul.f32 %v1288, 1.442695
  %v1378 = vpow.pop %v1377
  %v1379 = vmul.f32 %v1289, 1.442695
  %v1380 = vpow.pop %v1379
  %v1381 = vmul.f32 %v1290, 1.442695
  %v1382 = vpow.pop %v1381
  %v1383 = vmul.f32 %v1291, 1.442695
  %v1384 = vpow.pop %v1383
  %v1385 = vmul.f32 %v1292, 1.442695
  %v1386 = vpow.pop %v1385
  %v1387 = vmul.f32 %v1293, 1.442695
  %v1388 = vpow.pop %v1387
  %v1389 = vmul.f32 %v1294, 1.442695
  %v1390 = vpow.pop %v1389
  %v1391 = vmul.f32 %v1295, 1.442695
  %v1392 = vpow.pop %v1391
  %v1393 = vmul.f32 %v1296, 1.442695
  %v1394 = vpow.pop %v1393
  %v1395 = vmul.f32 %v1297, 1.442695
  %v1396 = vpow.pop %v1395
  %v1397 = vmul.f32 %v1298, 1.442695
  %v1398 = vpow.pop %v1397
  %v1399 = vmul.f32 %v1299, 1.442695
  %v1400 = vpow.pop %v1399
  %v1401 = vmul.f32 %v1300, 1.442695
  %v1402 = vpow.pop %v1401
  %v1403 = vmul.f32 %v1301, 1.442695
  %v1404 = vpow.pop %v1403
  %v1405 = vmul.f32 %v1302, 1.442695
  %v1406 = vpow.pop %v1405
  %v1407 = vmul.f32 %v1303, 1.442695
  %v1408 = vpow.pop %v1407
  %v1409 = vmul.f32 %v1304, 1.442695
  %v1410 = vpow.pop %v1409
  %v1411 = vmul.f32 %v1305, 1.442695
  %v1412 = vpow.pop %v1411
  %v1413 = vmul.f32 %v1306, 1.442695
  %v1414 = vpow.pop %v1413
  %v1415 = vmul.f32 %v1307, 1.442695
  %v1416 = vpow.pop %v1415
  %v1417 = vmul.f32 %v1308, 1.442695
  %v1418 = vpow.pop %v1417
  %v1419 = vmul.f32 %v1309, 1.442695
  %v1420 = vpow.pop %v1419
  %v1421 = vmul.f32 %v1310, 1.442695
  %v1422 = vpow.pop %v1421
  %v1423 = vmul.f32 %v1311, 1.442695
  %v1424 = vpow.pop %v1423
  %v1425 = vmul.f32 %v1312, 1.442695
  %v1426 = vpow.pop %v1425
  %v1427 = vmul.f32 %v1313, 1.442695
  %v1428 = vpow.pop %v1427
  %v1429 = vmul.f32 %v1314, 1.442695
  %v1430 = vpow.pop %v1429
  %v1431 = vmul.f32 %v1315, 1.442695
  %v1432 = vpow.pop %v1431
  %v1433 = vmul.f32 %v1316, 1.442695
  %v1434 = vpow.pop %v1433
  %v1435 = vmul.f32 %v1317, 1.442695
  %v1436 = vpow.pop %v1435
  %v1437 = vmul.f32 %v1318, 1.442695
  %v1438 = vpow.pop %v1437
  %v1439 = vsel %vm1138, %v1322, 0.0
  %v1440 = vadd.f32 %v1320, %v1439
  %1441 = vadd.xlane.f32.xlu0 %v1440
  %v1442 = vpop.xlane.xlu0 %1441
  %v1443 = vsel %vm1138, %v1326, 0.0
  %v1444 = vadd.f32 %v1324, %v1443
  %1445 = vadd.xlane.f32.xlu0 %v1444
  %v1446 = vpop.xlane.xlu0 %1445
  %v1447 = vsel %vm1138, %v1330, 0.0
  %v1448 = vadd.f32 %v1328, %v1447
  %1449 = vadd.xlane.f32.xlu0 %v1448
  %v1450 = vpop.xlane.xlu0 %1449
  %v1451 = vsel %vm1138, %v1334, 0.0
  %v1452 = vadd.f32 %v1332, %v1451
  %1453 = vadd.xlane.f32.xlu0 %v1452
  %v1454 = vpop.xlane.xlu0 %1453
  %v1455 = vsel %vm1138, %v1338, 0.0
  %v1456 = vadd.f32 %v1336, %v1455
  %1457 = vadd.xlane.f32.xlu0 %v1456
  %v1458 = vpop.xlane.xlu0 %1457
  %v1459 = vsel %vm1138, %v1342, 0.0
  %v1460 = vadd.f32 %v1340, %v1459
  %1461 = vadd.xlane.f32.xlu0 %v1460
  %v1462 = vpop.xlane.xlu0 %1461
  %v1463 = vsel %vm1138, %v1346, 0.0
  %v1464 = vadd.f32 %v1344, %v1463
  %1465 = vadd.xlane.f32.xlu0 %v1464
  %v1466 = vpop.xlane.xlu0 %1465
  %v1467 = vsel %vm1138, %v1350, 0.0
  %v1468 = vadd.f32 %v1348, %v1467
  %1469 = vadd.xlane.f32.xlu0 %v1468
  %v1470 = vpop.xlane.xlu0 %1469
  %v1471 = vsel %vm1138, %v1354, 0.0
  %v1472 = vadd.f32 %v1352, %v1471
  %1473 = vadd.xlane.f32.xlu0 %v1472
  %v1474 = vpop.xlane.xlu0 %1473
  %v1475 = vsel %vm1138, %v1358, 0.0
  %v1476 = vadd.f32 %v1356, %v1475
  %1477 = vadd.xlane.f32.xlu0 %v1476
  %v1478 = vpop.xlane.xlu0 %1477
  %v1479 = vsel %vm1138, %v1362, 0.0
  %v1480 = vadd.f32 %v1360, %v1479
  %1481 = vadd.xlane.f32.xlu0 %v1480
  %v1482 = vpop.xlane.xlu0 %1481
  %v1483 = vsel %vm1138, %v1366, 0.0
  %v1484 = vadd.f32 %v1364, %v1483
  %1485 = vadd.xlane.f32.xlu0 %v1484
  %v1486 = vpop.xlane.xlu0 %1485
  %v1487 = vsel %vm1138, %v1370, 0.0
  %v1488 = vadd.f32 %v1368, %v1487
  %1489 = vadd.xlane.f32.xlu0 %v1488
  %v1490 = vpop.xlane.xlu0 %1489
  %v1491 = vsel %vm1138, %v1374, 0.0
  %v1492 = vadd.f32 %v1372, %v1491
  %1493 = vadd.xlane.f32.xlu0 %v1492
  %v1494 = vpop.xlane.xlu0 %1493
  %v1495 = vsel %vm1138, %v1378, 0.0
  %v1496 = vadd.f32 %v1376, %v1495
  %1497 = vadd.xlane.f32.xlu0 %v1496
  %v1498 = vpop.xlane.xlu0 %1497
  %v1499 = vsel %vm1138, %v1382, 0.0
  %v1500 = vadd.f32 %v1380, %v1499
  %1501 = vadd.xlane.f32.xlu0 %v1500
  %v1502 = vpop.xlane.xlu0 %1501
  %v1503 = vsel %vm1138, %v1386, 0.0
  %v1504 = vadd.f32 %v1384, %v1503
  %1505 = vadd.xlane.f32.xlu0 %v1504
  %v1506 = vpop.xlane.xlu0 %1505
  %v1507 = vsel %vm1138, %v1390, 0.0
  %v1508 = vadd.f32 %v1388, %v1507
  %1509 = vadd.xlane.f32.xlu0 %v1508
  %v1510 = vpop.xlane.xlu0 %1509
  %v1511 = vsel %vm1138, %v1394, 0.0
  %v1512 = vadd.f32 %v1392, %v1511
  %1513 = vadd.xlane.f32.xlu0 %v1512
  %v1514 = vpop.xlane.xlu0 %1513
  %v1515 = vsel %vm1138, %v1398, 0.0
  %v1516 = vadd.f32 %v1396, %v1515
  %1517 = vadd.xlane.f32.xlu0 %v1516
  %v1518 = vpop.xlane.xlu0 %1517
  %v1519 = vsel %vm1138, %v1402, 0.0
  %v1520 = vadd.f32 %v1400, %v1519
  %1521 = vadd.xlane.f32.xlu0 %v1520
  %v1522 = vpop.xlane.xlu0 %1521
  %v1523 = vsel %vm1138, %v1406, 0.0
  %v1524 = vadd.f32 %v1404, %v1523
  %1525 = vadd.xlane.f32.xlu0 %v1524
  %v1526 = vpop.xlane.xlu0 %1525
  %v1527 = vsel %vm1138, %v1410, 0.0
  %v1528 = vadd.f32 %v1408, %v1527
  %1529 = vadd.xlane.f32.xlu0 %v1528
  %v1530 = vpop.xlane.xlu0 %1529
  %v1531 = vsel %vm1138, %v1414, 0.0
  %v1532 = vadd.f32 %v1412, %v1531
  %1533 = vadd.xlane.f32.xlu0 %v1532
  %v1534 = vpop.xlane.xlu0 %1533
  %v1535 = vsel %vm1138, %v1418, 0.0
  %v1536 = vadd.f32 %v1416, %v1535
  %1537 = vadd.xlane.f32.xlu0 %v1536
  %v1538 = vpop.xlane.xlu0 %1537
  %v1539 = vsel %vm1138, %v1422, 0.0
  %v1540 = vadd.f32 %v1420, %v1539
  %1541 = vadd.xlane.f32.xlu0 %v1540
  %v1542 = vpop.xlane.xlu0 %1541
  %v1543 = vsel %vm1138, %v1426, 0.0
  %v1544 = vadd.f32 %v1424, %v1543
  %1545 = vadd.xlane.f32.xlu0 %v1544
  %v1546 = vpop.xlane.xlu0 %1545
  %v1547 = vsel %vm1138, %v1430, 0.0
  %v1548 = vadd.f32 %v1428, %v1547
  %1549 = vadd.xlane.f32.xlu0 %v1548
  %v1550 = vpop.xlane.xlu0 %1549
  %v1551 = vsel %vm1138, %v1434, 0.0
  %v1552 = vadd.f32 %v1432, %v1551
  %1553 = vadd.xlane.f32.xlu0 %v1552
  %v1554 = vpop.xlane.xlu0 %1553
  %v1555 = vsel %vm1138, %v1438, 0.0
  %v1556 = vadd.f32 %v1436, %v1555
  %1557 = vadd.xlane.f32.xlu0 %v1556
  %v1558 = vpop.xlane.xlu0 %1557
  %v1559 = vrcp.pop %v1442
  %v1560 = vrcp.pop %v1446
  %v1561 = vrcp.pop %v1450
  %v1562 = vrcp.pop %v1454
  %v1563 = vrcp.pop %v1458
  %v1564 = vrcp.pop %v1462
  %v1565 = vrcp.pop %v1466
  %v1566 = vrcp.pop %v1470
  %v1567 = vrcp.pop %v1474
  %v1568 = vrcp.pop %v1478
  %v1569 = vrcp.pop %v1482
  %v1570 = vrcp.pop %v1486
  %v1571 = vrcp.pop %v1490
  %v1572 = vrcp.pop %v1494
  %v1573 = vrcp.pop %v1498
  %v1574 = vrcp.pop %v1502
  %v1575 = vrcp.pop %v1506
  %v1576 = vrcp.pop %v1510
  %v1577 = vrcp.pop %v1514
  %v1578 = vrcp.pop %v1518
  %v1579 = vrcp.pop %v1522
  %v1580 = vrcp.pop %v1526
  %v1581 = vrcp.pop %v1530
  %v1582 = vrcp.pop %v1534
  %v1583 = vrcp.pop %v1538
  %v1584 = vrcp.pop %v1542
  %v1585 = vrcp.pop %v1546
  %v1586 = vrcp.pop %v1550
  %v1587 = vrcp.pop %v1554
  %v1588 = vrcp.pop %v1558
  %v1589 = vmul.f32 %v1320, %v1559
  %v1590 = vmul.f32 %v1322, %v1559
  %v1591 = vmul.f32 %v1324, %v1560
  %v1592 = vmul.f32 %v1326, %v1560
  %v1593 = vmul.f32 %v1328, %v1561
  %v1594 = vmul.f32 %v1330, %v1561
  %v1595 = vmul.f32 %v1332, %v1562
  %v1596 = vmul.f32 %v1334, %v1562
  %v1597 = vmul.f32 %v1336, %v1563
  %v1598 = vmul.f32 %v1338, %v1563
  %v1599 = vmul.f32 %v1340, %v1564
  %v1600 = vmul.f32 %v1342, %v1564
  %v1601 = vmul.f32 %v1344, %v1565
  %v1602 = vmul.f32 %v1346, %v1565
  %v1603 = vmul.f32 %v1348, %v1566
  %v1604 = vmul.f32 %v1350, %v1566
  %v1605 = vmul.f32 %v1352, %v1567
  %v1606 = vmul.f32 %v1354, %v1567
  %v1607 = vmul.f32 %v1356, %v1568
  %v1608 = vmul.f32 %v1358, %v1568
  %v1609 = vmul.f32 %v1360, %v1569
  %v1610 = vmul.f32 %v1362, %v1569
  %v1611 = vmul.f32 %v1364, %v1570
  %v1612 = vmul.f32 %v1366, %v1570
  %v1613 = vmul.f32 %v1368, %v1571
  %v1614 = vmul.f32 %v1370, %v1571
  %v1615 = vmul.f32 %v1372, %v1572
  %v1616 = vmul.f32 %v1374, %v1572
  %v1617 = vmul.f32 %v1376, %v1573
  %v1618 = vmul.f32 %v1378, %v1573
  %v1619 = vmul.f32 %v1380, %v1574
  %v1620 = vmul.f32 %v1382, %v1574
  %v1621 = vmul.f32 %v1384, %v1575
  %v1622 = vmul.f32 %v1386, %v1575
  %v1623 = vmul.f32 %v1388, %v1576
  %v1624 = vmul.f32 %v1390, %v1576
  %v1625 = vmul.f32 %v1392, %v1577
  %v1626 = vmul.f32 %v1394, %v1577
  %v1627 = vmul.f32 %v1396, %v1578
  %v1628 = vmul.f32 %v1398, %v1578
  %v1629 = vmul.f32 %v1400, %v1579
  %v1630 = vmul.f32 %v1402, %v1579
  %v1631 = vmul.f32 %v1404, %v1580
  %v1632 = vmul.f32 %v1406, %v1580
  %v1633 = vmul.f32 %v1408, %v1581
  %v1634 = vmul.f32 %v1410, %v1581
  %v1635 = vmul.f32 %v1412, %v1582
  %v1636 = vmul.f32 %v1414, %v1582
  %v1637 = vmul.f32 %v1416, %v1583
  %v1638 = vmul.f32 %v1418, %v1583
  %v1639 = vmul.f32 %v1420, %v1584
  %v1640 = vmul.f32 %v1422, %v1584
  %v1641 = vmul.f32 %v1424, %v1585
  %v1642 = vmul.f32 %v1426, %v1585
  %v1643 = vmul.f32 %v1428, %v1586
  %v1644 = vmul.f32 %v1430, %v1586
  %v1645 = vmul.f32 %v1432, %v1587
  %v1646 = vmul.f32 %v1434, %v1587
  %v1647 = vmul.f32 %v1436, %v1588
  %v1648 = vmul.f32 %v1438, %v1588
  %v1649 = vpack.c.bf16 %v1591, %v1589
  %v1650 = vpack.c.bf16 %v1592, %v1590
  %v1651 = vpack.c.bf16 %v1595, %v1593
  %v1652 = vpack.c.bf16 %v1596, %v1594
  %v1653 = vpack.c.bf16 %v1599, %v1597
  %v1654 = vpack.c.bf16 %v1600, %v1598
  %v1655 = vpack.c.bf16 %v1603, %v1601
  %v1656 = vpack.c.bf16 %v1604, %v1602
  %v1657 = vpack.c.bf16 %v1607, %v1605
  %v1658 = vpack.c.bf16 %v1608, %v1606
  %v1659 = vpack.c.bf16 %v1611, %v1609
  %v1660 = vpack.c.bf16 %v1612, %v1610
  %v1661 = vpack.c.bf16 %v1615, %v1613
  %v1662 = vpack.c.bf16 %v1616, %v1614
  %v1663 = vpack.c.bf16 %v1619, %v1617
  %v1664 = vpack.c.bf16 %v1620, %v1618
  %v1665 = vpack.c.bf16 %v1623, %v1621
  %v1666 = vpack.c.bf16 %v1624, %v1622
  %v1667 = vpack.c.bf16 %v1627, %v1625
  %v1668 = vpack.c.bf16 %v1628, %v1626
  %v1669 = vpack.c.bf16 %v1631, %v1629
  %v1670 = vpack.c.bf16 %v1632, %v1630
  %v1671 = vpack.c.bf16 %v1635, %v1633
  %v1672 = vpack.c.bf16 %v1636, %v1634
  %v1673 = vpack.c.bf16 %v1639, %v1637
  %v1674 = vpack.c.bf16 %v1640, %v1638
  %v1675 = vpack.c.bf16 %v1643, %v1641
  %v1676 = vpack.c.bf16 %v1644, %v1642
  %v1677 = vpack.c.bf16 %v1647, %v1645
  %v1678 = vpack.c.bf16 %v1648, %v1646
  %1679 = vrot.lane.b32.xlu0 %v804, 64
  %v1680 = vpop.permute.xlu0 %1679
  %1681 = vrot.lane.b32.xlu0 %v805, 64
  %v1682 = vpop.permute.xlu0 %1681
  %1683 = vrot.lane.b32.xlu0 %v806, 64
  %v1684 = vpop.permute.xlu0 %1683
  %1685 = vrot.lane.b32.xlu0 %v807, 64
  %v1686 = vpop.permute.xlu0 %1685
  %1687 = vrot.lane.b32.xlu0 %v808, 64
  %v1688 = vpop.permute.xlu0 %1687
  %1689 = vrot.lane.b32.xlu0 %v809, 64
  %v1690 = vpop.permute.xlu0 %1689
  %1691 = vrot.lane.b32.xlu0 %v810, 64
  %v1692 = vpop.permute.xlu0 %1691
  %1693 = vrot.lane.b32.xlu0 %v811, 64
  %v1694 = vpop.permute.xlu0 %1693
  %1695 = vrot.lane.b32.xlu0 %v812, 64
  %v1696 = vpop.permute.xlu0 %1695
  %1697 = vrot.lane.b32.xlu0 %v813, 64
  %v1698 = vpop.permute.xlu0 %1697
  %1699 = vrot.lane.b32.xlu0 %v814, 64
  %v1700 = vpop.permute.xlu0 %1699
  %1701 = vrot.lane.b32.xlu0 %v815, 64
  %v1702 = vpop.permute.xlu0 %1701
  %1703 = vrot.lane.b32.xlu0 %v816, 64
  %v1704 = vpop.permute.xlu0 %1703
  %1705 = vrot.lane.b32.xlu0 %v817, 64
  %v1706 = vpop.permute.xlu0 %1705
  %1707 = vrot.lane.b32.xlu0 %v818, 64
  %v1708 = vpop.permute.xlu0 %1707
  %v1725 = vsel %vm1138, %v1650, 0
  %v1728 = vsel %vm1138, %v1652, 0
  %v1731 = vsel %vm1138, %v1654, 0
  %v1734 = vsel %vm1138, %v1656, 0
  %v1737 = vsel %vm1138, %v1658, 0
  %v1740 = vsel %vm1138, %v1660, 0
  %v1743 = vsel %vm1138, %v1662, 0
  %v1746 = vsel %vm1138, %v1664, 0
  %v1749 = vsel %vm1138, %v1666, 0
  %v1752 = vsel %vm1138, %v1668, 0
  %v1755 = vsel %vm1138, %v1670, 0
  %v1758 = vsel %vm1138, %v1672, 0
  %v1761 = vsel %vm1138, %v1674, 0
  %v1764 = vsel %vm1138, %v1676, 0
  %v1767 = vsel %vm1138, %v1678, 0
  %1769 = vmatprep.subr.bf16.mxu0 0
  %1770 = vmatpush1.bf16.msra.mxu0 %v1680
  %1771 = vmatprep.subr.bf16.mxu0 0
  %1772 = vmatpush1.bf16.msra.mxu0 %v1682
  %1773 = vmatprep.subr.bf16.mxu0 0
  %1774 = vmatpush1.bf16.msra.mxu0 %v1684
  %1775 = vmatprep.subr.bf16.mxu0 0
  %1776 = vmatpush1.bf16.msra.mxu0 %v1686
  %1777 = vmatprep.subr.bf16.mxu0 0
  %1778 = vmatpush1.bf16.msra.mxu0 %v1688
  %1779 = vmatprep.subr.bf16.mxu0 0
  %1780 = vmatpush1.bf16.msra.mxu0 %v1690
  %1781 = vmatprep.subr.bf16.mxu0 0
  %1782 = vmatpush1.bf16.msra.mxu0 %v1692
  %1783 = vmatprep.subr.bf16.mxu0 0
  %1784 = vmatpush1.bf16.msra.mxu0 %v1694
  %1785 = vmatprep.subr.bf16.mxu0 0
  %1786 = vmatpush1.bf16.msra.mxu0 %v1696
  %1787 = vmatprep.subr.bf16.mxu0 0
  %1788 = vmatpush1.bf16.msra.mxu0 %v1698
  %1789 = vmatprep.subr.bf16.mxu0 0
  %1790 = vmatpush1.bf16.msra.mxu0 %v1700
  %1791 = vmatprep.subr.bf16.mxu0 0
  %1792 = vmatpush1.bf16.msra.mxu0 %v1702
  %1793 = vmatprep.subr.bf16.mxu0 0
  %1794 = vmatpush1.bf16.msra.mxu0 %v1704
  %1795 = vmatprep.subr.bf16.mxu0 0
  %1796 = vmatpush1.bf16.msra.mxu0 %v1706
  %1797 = vmatprep.subr.bf16.mxu0 0
  %1798 = vmatpush1.bf16.msra.mxu0 %v1708
  %1799 = vmatprep.subr.bf16.mxu0 0
  %1800 = vmatpush1.bf16.msra.mxu0 0
  %1801 = vmatprep.mubr.bf16.mxu0 %v1725
  %1802 = vmatmul.mubr.bf16.gmra.mrb[0].mxu0 %v1649
  %v1803 = vpop.f32.mrb[0].mxu0
  %v1804 = vadd.f32 0.0, %v1803
  %v1805 = vpop.f32.mrb[0].mxu0
  %v1806 = vpop.f32.mrb[0].mxu0
  %v1807 = vadd.f32 0.0, %v1806
  %v1808 = vpop.f32.mrb[0].mxu0
  %1809 = vmatprep.mubr.bf16.mxu0 %v1728
  %1810 = vmatmul.mubr.bf16.gmra.mrb[0].mxu0 %v1651
  %v1811 = vpop.f32.mrb[0].mxu0
  %v1812 = vadd.f32 0.0, %v1811
  %v1813 = vpop.f32.mrb[0].mxu0
  %v1814 = vpop.f32.mrb[0].mxu0
  %v1815 = vadd.f32 0.0, %v1814
  %v1816 = vpop.f32.mrb[0].mxu0
  %1817 = vmatprep.mubr.bf16.mxu0 %v1731
  %1818 = vmatmul.mubr.bf16.gmra.mrb[0].mxu0 %v1653
  %v1819 = vpop.f32.mrb[0].mxu0
  %v1820 = vadd.f32 0.0, %v1819
  %v1821 = vpop.f32.mrb[0].mxu0
  %v1822 = vpop.f32.mrb[0].mxu0
  %v1823 = vadd.f32 0.0, %v1822
  %v1824 = vpop.f32.mrb[0].mxu0
  %1825 = vmatprep.mubr.bf16.mxu0 %v1734
  %1826 = vmatmul.mubr.bf16.gmra.mrb[0].mxu0 %v1655
  %v1827 = vpop.f32.mrb[0].mxu0
  %v1828 = vadd.f32 0.0, %v1827
  %v1829 = vpop.f32.mrb[0].mxu0
  %v1830 = vpop.f32.mrb[0].mxu0
  %v1831 = vadd.f32 0.0, %v1830
  %v1832 = vpop.f32.mrb[0].mxu0
  %1833 = vmatprep.mubr.bf16.mxu0 %v1737
  %1834 = vmatmul.mubr.bf16.gmra.mrb[0].mxu0 %v1657
  %v1835 = vpop.f32.mrb[0].mxu0
  %v1836 = vadd.f32 0.0, %v1835
  %v1837 = vpop.f32.mrb[0].mxu0
  %v1838 = vpop.f32.mrb[0].mxu0
  %v1839 = vadd.f32 0.0, %v1838
  %v1840 = vpop.f32.mrb[0].mxu0
  %1841 = vmatprep.mubr.bf16.mxu0 %v1740
  %1842 = vmatmul.mubr.bf16.gmra.mrb[0].mxu0 %v1659
  %v1843 = vpop.f32.mrb[0].mxu0
  %v1844 = vadd.f32 0.0, %v1843
  %v1845 = vpop.f32.mrb[0].mxu0
  %v1846 = vpop.f32.mrb[0].mxu0
  %v1847 = vadd.f32 0.0, %v1846
  %v1848 = vpop.f32.mrb[0].mxu0
  %1849 = vmatprep.mubr.bf16.mxu0 %v1743
  %1850 = vmatmul.mubr.bf16.gmra.mrb[0].mxu0 %v1661
  %v1851 = vpop.f32.mrb[0].mxu0
  %v1852 = vadd.f32 0.0, %v1851
  %v1853 = vpop.f32.mrb[0].mxu0
  %v1854 = vpop.f32.mrb[0].mxu0
  %v1855 = vadd.f32 0.0, %v1854
  %v1856 = vpop.f32.mrb[0].mxu0
  %1857 = vmatprep.mubr.bf16.mxu0 %v1746
  %1858 = vmatmul.mubr.bf16.gmra.mrb[0].mxu0 %v1663
  %v1859 = vpop.f32.mrb[0].mxu0
  %v1860 = vadd.f32 0.0, %v1859
  %v1861 = vpop.f32.mrb[0].mxu0
  %v1862 = vpop.f32.mrb[0].mxu0
  %v1863 = vadd.f32 0.0, %v1862
  %v1864 = vpop.f32.mrb[0].mxu0
  %1865 = vmatprep.mubr.bf16.mxu0 %v1749
  %1866 = vmatmul.mubr.bf16.gmra.mrb[0].mxu0 %v1665
  %v1867 = vpop.f32.mrb[0].mxu0
  %v1868 = vadd.f32 0.0, %v1867
  %v1869 = vpop.f32.mrb[0].mxu0
  %v1870 = vpop.f32.mrb[0].mxu0
  %v1871 = vadd.f32 0.0, %v1870
  %v1872 = vpop.f32.mrb[0].mxu0
  %1873 = vmatprep.mubr.bf16.mxu0 %v1752
  %1874 = vmatmul.mubr.bf16.gmra.mrb[0].mxu0 %v1667
  %v1875 = vpop.f32.mrb[0].mxu0
  %v1876 = vadd.f32 0.0, %v1875
  %v1877 = vpop.f32.mrb[0].mxu0
  %v1878 = vpop.f32.mrb[0].mxu0
  %v1879 = vadd.f32 0.0, %v1878
  %v1880 = vpop.f32.mrb[0].mxu0
  %1881 = vmatprep.mubr.bf16.mxu0 %v1755
  %1882 = vmatmul.mubr.bf16.gmra.mrb[0].mxu0 %v1669
  %v1883 = vpop.f32.mrb[0].mxu0
  %v1884 = vadd.f32 0.0, %v1883
  %v1885 = vpop.f32.mrb[0].mxu0
  %v1886 = vpop.f32.mrb[0].mxu0
  %v1887 = vadd.f32 0.0, %v1886
  %v1888 = vpop.f32.mrb[0].mxu0
  %1889 = vmatprep.mubr.bf16.mxu0 %v1758
  %1890 = vmatmul.mubr.bf16.gmra.mrb[0].mxu0 %v1671
  %v1891 = vpop.f32.mrb[0].mxu0
  %v1892 = vadd.f32 0.0, %v1891
  %v1893 = vpop.f32.mrb[0].mxu0
  %v1894 = vpop.f32.mrb[0].mxu0
  %v1895 = vadd.f32 0.0, %v1894
  %v1896 = vpop.f32.mrb[0].mxu0
  %1897 = vmatprep.mubr.bf16.mxu0 %v1761
  %1898 = vmatmul.mubr.bf16.gmra.mrb[0].mxu0 %v1673
  %v1899 = vpop.f32.mrb[0].mxu0
  %v1900 = vadd.f32 0.0, %v1899
  %v1901 = vpop.f32.mrb[0].mxu0
  %v1902 = vpop.f32.mrb[0].mxu0
  %v1903 = vadd.f32 0.0, %v1902
  %v1904 = vpop.f32.mrb[0].mxu0
  %1905 = vmatprep.mubr.bf16.mxu0 %v1764
  %1906 = vmatmul.mubr.bf16.gmra.mrb[0].mxu0 %v1675
  %v1907 = vpop.f32.mrb[0].mxu0
  %v1908 = vadd.f32 0.0, %v1907
  %v1909 = vpop.f32.mrb[0].mxu0
  %v1910 = vpop.f32.mrb[0].mxu0
  %v1911 = vadd.f32 0.0, %v1910
  %v1912 = vpop.f32.mrb[0].mxu0
  %1913 = vmatprep.mubr.bf16.mxu0 %v1767
  %1914 = vmatmul.mubr.bf16.gmra.mrb[0].mxu0 %v1677
  %v1915 = vpop.f32.mrb[0].mxu0
  %v1916 = vadd.f32 0.0, %v1915
  %v1917 = vpop.f32.mrb[0].mxu0
  %v1918 = vpop.f32.mrb[0].mxu0
  %v1919 = vadd.f32 0.0, %v1918
  %v1920 = vpop.f32.mrb[0].mxu0
  %1921 = vdwg.mxu0
  %1922 = vrot.lane.b32.xlu0 %v804, 112
  %v1923 = vpop.permute.xlu0 %1922
  %1924 = vrot.lane.b32.xlu0 %v805, 112
  %v1925 = vpop.permute.xlu0 %1924
  %1926 = vrot.lane.b32.xlu0 %v806, 112
  %v1927 = vpop.permute.xlu0 %1926
  %1928 = vrot.lane.b32.xlu0 %v807, 112
  %v1929 = vpop.permute.xlu0 %1928
  %1930 = vrot.lane.b32.xlu0 %v808, 112
  %v1931 = vpop.permute.xlu0 %1930
  %1932 = vrot.lane.b32.xlu0 %v809, 112
  %v1933 = vpop.permute.xlu0 %1932
  %1934 = vrot.lane.b32.xlu0 %v810, 112
  %v1935 = vpop.permute.xlu0 %1934
  %1936 = vrot.lane.b32.xlu0 %v811, 112
  %v1937 = vpop.permute.xlu0 %1936
  %1938 = vrot.lane.b32.xlu0 %v812, 112
  %v1939 = vpop.permute.xlu0 %1938
  %1940 = vrot.lane.b32.xlu0 %v813, 112
  %v1941 = vpop.permute.xlu0 %1940
  %1942 = vrot.lane.b32.xlu0 %v814, 112
  %v1943 = vpop.permute.xlu0 %1942
  %1944 = vrot.lane.b32.xlu0 %v815, 112
  %v1945 = vpop.permute.xlu0 %1944
  %1946 = vrot.lane.b32.xlu0 %v816, 112
  %v1947 = vpop.permute.xlu0 %1946
  %1948 = vrot.lane.b32.xlu0 %v817, 112
  %v1949 = vpop.permute.xlu0 %1948
  %1950 = vrot.lane.b32.xlu0 %v818, 112
  %v1951 = vpop.permute.xlu0 %1950
  %1952 = vrot.lane.b32.xlu0 %v804, 80
  %v1953 = vpop.permute.xlu0 %1952
  %1954 = vrot.lane.b32.xlu0 %v805, 80
  %v1955 = vpop.permute.xlu0 %1954
  %1956 = vrot.lane.b32.xlu0 %v806, 80
  %v1957 = vpop.permute.xlu0 %1956
  %1958 = vrot.lane.b32.xlu0 %v807, 80
  %v1959 = vpop.permute.xlu0 %1958
  %1960 = vrot.lane.b32.xlu0 %v808, 80
  %v1961 = vpop.permute.xlu0 %1960
  %1962 = vrot.lane.b32.xlu0 %v809, 80
  %v1963 = vpop.permute.xlu0 %1962
  %1964 = vrot.lane.b32.xlu0 %v810, 80
  %v1965 = vpop.permute.xlu0 %1964
  %1966 = vrot.lane.b32.xlu0 %v811, 80
  %v1967 = vpop.permute.xlu0 %1966
  %1968 = vrot.lane.b32.xlu0 %v812, 80
  %v1969 = vpop.permute.xlu0 %1968
  %1970 = vrot.lane.b32.xlu0 %v813, 80
  %v1971 = vpop.permute.xlu0 %1970
  %1972 = vrot.lane.b32.xlu0 %v814, 80
  %v1973 = vpop.permute.xlu0 %1972
  %1974 = vrot.lane.b32.xlu0 %v815, 80
  %v1975 = vpop.permute.xlu0 %1974
  %1976 = vrot.lane.b32.xlu0 %v816, 80
  %v1977 = vpop.permute.xlu0 %1976
  %1978 = vrot.lane.b32.xlu0 %v817, 80
  %v1979 = vpop.permute.xlu0 %1978
  %1980 = vrot.lane.b32.xlu0 %v818, 80
  %v1981 = vpop.permute.xlu0 %1980
  %v1983 = vsel %vm864, %v1923, 0
  %v1986 = vsel %vm864, %v1925, 0
  %v1989 = vsel %vm864, %v1927, 0
  %v1992 = vsel %vm864, %v1929, 0
  %v1995 = vsel %vm864, %v1931, 0
  %v1998 = vsel %vm864, %v1933, 0
  %v2001 = vsel %vm864, %v1935, 0
  %v2004 = vsel %vm864, %v1937, 0
  %v2007 = vsel %vm864, %v1939, 0
  %v2010 = vsel %vm864, %v1941, 0
  %v2013 = vsel %vm864, %v1943, 0
  %v2016 = vsel %vm864, %v1945, 0
  %v2019 = vsel %vm864, %v1947, 0
  %v2022 = vsel %vm864, %v1949, 0
  %v2025 = vsel %vm864, %v1951, 0
  %v2028 = vsel %vm864, %v1953, 0
  %v2031 = vsel %vm864, %v1955, 0
  %v2034 = vsel %vm864, %v1957, 0
  %v2037 = vsel %vm864, %v1959, 0
  %v2040 = vsel %vm864, %v1961, 0
  %v2043 = vsel %vm864, %v1963, 0
  %v2046 = vsel %vm864, %v1965, 0
  %v2049 = vsel %vm864, %v1967, 0
  %v2052 = vsel %vm864, %v1969, 0
  %v2055 = vsel %vm864, %v1971, 0
  %v2058 = vsel %vm864, %v1973, 0
  %v2061 = vsel %vm864, %v1975, 0
  %v2064 = vsel %vm864, %v1977, 0
  %v2067 = vsel %vm864, %v1979, 0
  %v2070 = vsel %vm864, %v1981, 0
  %2072 = vmatprep.subr.bf16.mxu0 0
  %2073 = vmatpush1.bf16.xpose.msra.mxu0 %v2028
  %2074 = vmatprep.subr.bf16.mxu0 0
  %2075 = vmatpush1.bf16.xpose.msra.mxu0 %v2031
  %2076 = vmatprep.subr.bf16.mxu0 0
  %2077 = vmatpush1.bf16.xpose.msra.mxu0 %v2034
  %2078 = vmatprep.subr.bf16.mxu0 0
  %2079 = vmatpush1.bf16.xpose.msra.mxu0 %v2037
  %2080 = vmatprep.subr.bf16.mxu0 0
  %2081 = vmatpush1.bf16.xpose.msra.mxu0 %v2040
  %2082 = vmatprep.subr.bf16.mxu0 0
  %2083 = vmatpush1.bf16.xpose.msra.mxu0 %v2043
  %2084 = vmatprep.subr.bf16.mxu0 0
  %2085 = vmatpush1.bf16.xpose.msra.mxu0 %v2046
  %2086 = vmatprep.subr.bf16.mxu0 0
  %2087 = vmatpush1.bf16.xpose.msra.mxu0 %v2049
  %2088 = vmatprep.subr.bf16.mxu0 0
  %2089 = vmatpush1.bf16.xpose.msra.mxu0 %v2052
  %2090 = vmatprep.subr.bf16.mxu0 0
  %2091 = vmatpush1.bf16.xpose.msra.mxu0 %v2055
  %2092 = vmatprep.subr.bf16.mxu0 0
  %2093 = vmatpush1.bf16.xpose.msra.mxu0 %v2058
  %2094 = vmatprep.subr.bf16.mxu0 0
  %2095 = vmatpush1.bf16.xpose.msra.mxu0 %v2061
  %2096 = vmatprep.subr.bf16.mxu0 0
  %2097 = vmatpush1.bf16.xpose.msra.mxu0 %v2064
  %2098 = vmatprep.subr.bf16.mxu0 0
  %2099 = vmatpush1.bf16.xpose.msra.mxu0 %v2067
  %2100 = vmatprep.subr.bf16.mxu0 0
  %2101 = vmatpush1.bf16.xpose.msra.mxu0 %v2070
  %2102 = vmatprep.subr.bf16.mxu0 0
  %2103 = vmatpush1.bf16.xpose.msra.mxu0 0
  %2104 = vmatprep.mubr.bf16.mxu0 0
  %2105 = vmatmul.mubr.bf16.gmra.mrb[0].mxu0 %v1983
  %v2106 = vpop.f32.mrb[0].mxu0
  %v2107 = vadd.f32 %v510, %v2106
  %v2108 = vpop.f32.mrb[0].mxu0
  %v2109 = vadd.f32 %v511, %v2108
  %v2110 = vpop.f32.mrb[0].mxu0
  %v2111 = vadd.f32 %v512, %v2110
  %v2112 = vpop.f32.mrb[0].mxu0
  %v2113 = vadd.f32 %v513, %v2112
  %2114 = vmatprep.mubr.bf16.mxu0 0
  %2115 = vmatmul.mubr.bf16.gmra.mrb[0].mxu0 %v1986
  %v2116 = vpop.f32.mrb[0].mxu0
  %v2117 = vadd.f32 %v514, %v2116
  %v2118 = vpop.f32.mrb[0].mxu0
  %v2119 = vadd.f32 %v515, %v2118
  %v2120 = vpop.f32.mrb[0].mxu0
  %v2121 = vadd.f32 %v516, %v2120
  %v2122 = vpop.f32.mrb[0].mxu0
  %v2123 = vadd.f32 %v517, %v2122
  %2124 = vmatprep.mubr.bf16.mxu0 0
  %2125 = vmatmul.mubr.bf16.gmra.mrb[0].mxu0 %v1989
  %v2126 = vpop.f32.mrb[0].mxu0
  %v2127 = vadd.f32 %v518, %v2126
  %v2128 = vpop.f32.mrb[0].mxu0
  %v2129 = vadd.f32 %v519, %v2128
  %v2130 = vpop.f32.mrb[0].mxu0
  %v2131 = vadd.f32 %v520, %v2130
  %v2132 = vpop.f32.mrb[0].mxu0
  %v2133 = vadd.f32 %v521, %v2132
  %2134 = vmatprep.mubr.bf16.mxu0 0
  %2135 = vmatmul.mubr.bf16.gmra.mrb[0].mxu0 %v1992
  %v2136 = vpop.f32.mrb[0].mxu0
  %v2137 = vadd.f32 %v522, %v2136
  %v2138 = vpop.f32.mrb[0].mxu0
  %v2139 = vadd.f32 %v523, %v2138
  %v2140 = vpop.f32.mrb[0].mxu0
  %v2141 = vadd.f32 %v524, %v2140
  %v2142 = vpop.f32.mrb[0].mxu0
  %v2143 = vadd.f32 %v525, %v2142
  %2144 = vmatprep.mubr.bf16.mxu0 0
  %2145 = vmatmul.mubr.bf16.gmra.mrb[0].mxu0 %v1995
  %v2146 = vpop.f32.mrb[0].mxu0
  %v2147 = vadd.f32 %v526, %v2146
  %v2148 = vpop.f32.mrb[0].mxu0
  %v2149 = vadd.f32 %v527, %v2148
  %v2150 = vpop.f32.mrb[0].mxu0
  %v2151 = vadd.f32 %v528, %v2150
  %v2152 = vpop.f32.mrb[0].mxu0
  %v2153 = vadd.f32 %v529, %v2152
  %2154 = vmatprep.mubr.bf16.mxu0 0
  %2155 = vmatmul.mubr.bf16.gmra.mrb[0].mxu0 %v1998
  %v2156 = vpop.f32.mrb[0].mxu0
  %v2157 = vadd.f32 %v530, %v2156
  %v2158 = vpop.f32.mrb[0].mxu0
  %v2159 = vadd.f32 %v531, %v2158
  %v2160 = vpop.f32.mrb[0].mxu0
  %v2161 = vadd.f32 %v532, %v2160
  %v2162 = vpop.f32.mrb[0].mxu0
  %v2163 = vadd.f32 %v533, %v2162
  %2164 = vmatprep.mubr.bf16.mxu0 0
  %2165 = vmatmul.mubr.bf16.gmra.mrb[0].mxu0 %v2001
  %v2166 = vpop.f32.mrb[0].mxu0
  %v2167 = vadd.f32 %v534, %v2166
  %v2168 = vpop.f32.mrb[0].mxu0
  %v2169 = vadd.f32 %v535, %v2168
  %v2170 = vpop.f32.mrb[0].mxu0
  %v2171 = vadd.f32 %v536, %v2170
  %v2172 = vpop.f32.mrb[0].mxu0
  %v2173 = vadd.f32 %v537, %v2172
  %2174 = vmatprep.mubr.bf16.mxu0 0
  %2175 = vmatmul.mubr.bf16.gmra.mrb[0].mxu0 %v2004
  %v2176 = vpop.f32.mrb[0].mxu0
  %v2177 = vadd.f32 %v538, %v2176
  %v2178 = vpop.f32.mrb[0].mxu0
  %v2179 = vadd.f32 %v539, %v2178
  %v2180 = vpop.f32.mrb[0].mxu0
  %v2181 = vadd.f32 %v540, %v2180
  %v2182 = vpop.f32.mrb[0].mxu0
  %v2183 = vadd.f32 %v541, %v2182
  %2184 = vmatprep.mubr.bf16.mxu0 0
  %2185 = vmatmul.mubr.bf16.gmra.mrb[0].mxu0 %v2007
  %v2186 = vpop.f32.mrb[0].mxu0
  %v2187 = vadd.f32 %v542, %v2186
  %v2188 = vpop.f32.mrb[0].mxu0
  %v2189 = vadd.f32 %v543, %v2188
  %v2190 = vpop.f32.mrb[0].mxu0
  %v2191 = vadd.f32 %v544, %v2190
  %v2192 = vpop.f32.mrb[0].mxu0
  %v2193 = vadd.f32 %v545, %v2192
  %2194 = vmatprep.mubr.bf16.mxu0 0
  %2195 = vmatmul.mubr.bf16.gmra.mrb[0].mxu0 %v2010
  %v2196 = vpop.f32.mrb[0].mxu0
  %v2197 = vadd.f32 %v546, %v2196
  %v2198 = vpop.f32.mrb[0].mxu0
  %v2199 = vadd.f32 %v547, %v2198
  %v2200 = vpop.f32.mrb[0].mxu0
  %v2201 = vadd.f32 %v548, %v2200
  %v2202 = vpop.f32.mrb[0].mxu0
  %v2203 = vadd.f32 %v549, %v2202
  %2204 = vmatprep.mubr.bf16.mxu0 0
  %2205 = vmatmul.mubr.bf16.gmra.mrb[0].mxu0 %v2013
  %v2206 = vpop.f32.mrb[0].mxu0
  %v2207 = vadd.f32 %v550, %v2206
  %v2208 = vpop.f32.mrb[0].mxu0
  %v2209 = vadd.f32 %v551, %v2208
  %v2210 = vpop.f32.mrb[0].mxu0
  %v2211 = vadd.f32 %v552, %v2210
  %v2212 = vpop.f32.mrb[0].mxu0
  %v2213 = vadd.f32 %v553, %v2212
  %2214 = vmatprep.mubr.bf16.mxu0 0
  %2215 = vmatmul.mubr.bf16.gmra.mrb[0].mxu0 %v2016
  %v2216 = vpop.f32.mrb[0].mxu0
  %v2217 = vadd.f32 %v554, %v2216
  %v2218 = vpop.f32.mrb[0].mxu0
  %v2219 = vadd.f32 %v555, %v2218
  %v2220 = vpop.f32.mrb[0].mxu0
  %v2221 = vadd.f32 %v556, %v2220
  %v2222 = vpop.f32.mrb[0].mxu0
  %v2223 = vadd.f32 %v557, %v2222
  %2224 = vmatprep.mubr.bf16.mxu0 0
  %2225 = vmatmul.mubr.bf16.gmra.mrb[0].mxu0 %v2019
  %v2226 = vpop.f32.mrb[0].mxu0
  %v2227 = vadd.f32 %v558, %v2226
  %v2228 = vpop.f32.mrb[0].mxu0
  %v2229 = vadd.f32 %v559, %v2228
  %v2230 = vpop.f32.mrb[0].mxu0
  %v2231 = vadd.f32 %v560, %v2230
  %v2232 = vpop.f32.mrb[0].mxu0
  %v2233 = vadd.f32 %v561, %v2232
  %2234 = vmatprep.mubr.bf16.mxu0 0
  %2235 = vmatmul.mubr.bf16.gmra.mrb[0].mxu0 %v2022
  %v2236 = vpop.f32.mrb[0].mxu0
  %v2237 = vadd.f32 %v562, %v2236
  %v2238 = vpop.f32.mrb[0].mxu0
  %v2239 = vadd.f32 %v563, %v2238
  %v2240 = vpop.f32.mrb[0].mxu0
  %v2241 = vadd.f32 %v564, %v2240
  %v2242 = vpop.f32.mrb[0].mxu0
  %v2243 = vadd.f32 %v565, %v2242
  %2244 = vmatprep.mubr.bf16.mxu0 0
  %2245 = vmatmul.mubr.bf16.gmra.mrb[0].mxu0 %v2025
  %v2246 = vpop.f32.mrb[0].mxu0
  %v2247 = vadd.f32 %v566, %v2246
  %v2248 = vpop.f32.mrb[0].mxu0
  %v2249 = vadd.f32 %v567, %v2248
  %v2250 = vpop.f32.mrb[0].mxu0
  %v2251 = vadd.f32 %v568, %v2250
  %v2252 = vpop.f32.mrb[0].mxu0
  %v2253 = vadd.f32 %v569, %v2252
  %2254 = vdwg.mxu0
  %v2255 = vsel %vm1138, %v2109, -inf
  %v2256 = vmax.f32 %v2107, %v2255
  %2257 = vmax.xlane.f32.xlu0 %v2256
  %v2258 = vpop.xlane.xlu0 %2257
  %v2259 = vsel %vm1138, %v2113, -inf
  %v2260 = vmax.f32 %v2111, %v2259
  %2261 = vmax.xlane.f32.xlu0 %v2260
  %v2262 = vpop.xlane.xlu0 %2261
  %v2263 = vsel %vm1138, %v2119, -inf
  %v2264 = vmax.f32 %v2117, %v2263
  %2265 = vmax.xlane.f32.xlu0 %v2264
  %v2266 = vpop.xlane.xlu0 %2265
  %v2267 = vsel %vm1138, %v2123, -inf
  %v2268 = vmax.f32 %v2121, %v2267
  %2269 = vmax.xlane.f32.xlu0 %v2268
  %v2270 = vpop.xlane.xlu0 %2269
  %v2271 = vsel %vm1138, %v2129, -inf
  %v2272 = vmax.f32 %v2127, %v2271
  %2273 = vmax.xlane.f32.xlu0 %v2272
  %v2274 = vpop.xlane.xlu0 %2273
  %v2275 = vsel %vm1138, %v2133, -inf
  %v2276 = vmax.f32 %v2131, %v2275
  %2277 = vmax.xlane.f32.xlu0 %v2276
  %v2278 = vpop.xlane.xlu0 %2277
  %v2279 = vsel %vm1138, %v2139, -inf
  %v2280 = vmax.f32 %v2137, %v2279
  %2281 = vmax.xlane.f32.xlu0 %v2280
  %v2282 = vpop.xlane.xlu0 %2281
  %v2283 = vsel %vm1138, %v2143, -inf
  %v2284 = vmax.f32 %v2141, %v2283
  %2285 = vmax.xlane.f32.xlu0 %v2284
  %v2286 = vpop.xlane.xlu0 %2285
  %v2287 = vsel %vm1138, %v2149, -inf
  %v2288 = vmax.f32 %v2147, %v2287
  %2289 = vmax.xlane.f32.xlu0 %v2288
  %v2290 = vpop.xlane.xlu0 %2289
  %v2291 = vsel %vm1138, %v2153, -inf
  %v2292 = vmax.f32 %v2151, %v2291
  %2293 = vmax.xlane.f32.xlu0 %v2292
  %v2294 = vpop.xlane.xlu0 %2293
  %v2295 = vsel %vm1138, %v2159, -inf
  %v2296 = vmax.f32 %v2157, %v2295
  %2297 = vmax.xlane.f32.xlu0 %v2296
  %v2298 = vpop.xlane.xlu0 %2297
  %v2299 = vsel %vm1138, %v2163, -inf
  %v2300 = vmax.f32 %v2161, %v2299
  %2301 = vmax.xlane.f32.xlu0 %v2300
  %v2302 = vpop.xlane.xlu0 %2301
  %v2303 = vsel %vm1138, %v2169, -inf
  %v2304 = vmax.f32 %v2167, %v2303
  %2305 = vmax.xlane.f32.xlu0 %v2304
  %v2306 = vpop.xlane.xlu0 %2305
  %v2307 = vsel %vm1138, %v2173, -inf
  %v2308 = vmax.f32 %v2171, %v2307
  %2309 = vmax.xlane.f32.xlu0 %v2308
  %v2310 = vpop.xlane.xlu0 %2309
  %v2311 = vsel %vm1138, %v2179, -inf
  %v2312 = vmax.f32 %v2177, %v2311
  %2313 = vmax.xlane.f32.xlu0 %v2312
  %v2314 = vpop.xlane.xlu0 %2313
  %v2315 = vsel %vm1138, %v2183, -inf
  %v2316 = vmax.f32 %v2181, %v2315
  %2317 = vmax.xlane.f32.xlu0 %v2316
  %v2318 = vpop.xlane.xlu0 %2317
  %v2319 = vsel %vm1138, %v2189, -inf
  %v2320 = vmax.f32 %v2187, %v2319
  %2321 = vmax.xlane.f32.xlu0 %v2320
  %v2322 = vpop.xlane.xlu0 %2321
  %v2323 = vsel %vm1138, %v2193, -inf
  %v2324 = vmax.f32 %v2191, %v2323
  %2325 = vmax.xlane.f32.xlu0 %v2324
  %v2326 = vpop.xlane.xlu0 %2325
  %v2327 = vsel %vm1138, %v2199, -inf
  %v2328 = vmax.f32 %v2197, %v2327
  %2329 = vmax.xlane.f32.xlu0 %v2328
  %v2330 = vpop.xlane.xlu0 %2329
  %v2331 = vsel %vm1138, %v2203, -inf
  %v2332 = vmax.f32 %v2201, %v2331
  %2333 = vmax.xlane.f32.xlu0 %v2332
  %v2334 = vpop.xlane.xlu0 %2333
  %v2335 = vsel %vm1138, %v2209, -inf
  %v2336 = vmax.f32 %v2207, %v2335
  %2337 = vmax.xlane.f32.xlu0 %v2336
  %v2338 = vpop.xlane.xlu0 %2337
  %v2339 = vsel %vm1138, %v2213, -inf
  %v2340 = vmax.f32 %v2211, %v2339
  %2341 = vmax.xlane.f32.xlu0 %v2340
  %v2342 = vpop.xlane.xlu0 %2341
  %v2343 = vsel %vm1138, %v2219, -inf
  %v2344 = vmax.f32 %v2217, %v2343
  %2345 = vmax.xlane.f32.xlu0 %v2344
  %v2346 = vpop.xlane.xlu0 %2345
  %v2347 = vsel %vm1138, %v2223, -inf
  %v2348 = vmax.f32 %v2221, %v2347
  %2349 = vmax.xlane.f32.xlu0 %v2348
  %v2350 = vpop.xlane.xlu0 %2349
  %v2351 = vsel %vm1138, %v2229, -inf
  %v2352 = vmax.f32 %v2227, %v2351
  %2353 = vmax.xlane.f32.xlu0 %v2352
  %v2354 = vpop.xlane.xlu0 %2353
  %v2355 = vsel %vm1138, %v2233, -inf
  %v2356 = vmax.f32 %v2231, %v2355
  %2357 = vmax.xlane.f32.xlu0 %v2356
  %v2358 = vpop.xlane.xlu0 %2357
  %v2359 = vsel %vm1138, %v2239, -inf
  %v2360 = vmax.f32 %v2237, %v2359
  %2361 = vmax.xlane.f32.xlu0 %v2360
  %v2362 = vpop.xlane.xlu0 %2361
  %v2363 = vsel %vm1138, %v2243, -inf
  %v2364 = vmax.f32 %v2241, %v2363
  %2365 = vmax.xlane.f32.xlu0 %v2364
  %v2366 = vpop.xlane.xlu0 %2365
  %v2367 = vsel %vm1138, %v2249, -inf
  %v2368 = vmax.f32 %v2247, %v2367
  %2369 = vmax.xlane.f32.xlu0 %v2368
  %v2370 = vpop.xlane.xlu0 %2369
  %v2371 = vsel %vm1138, %v2253, -inf
  %v2372 = vmax.f32 %v2251, %v2371
  %2373 = vmax.xlane.f32.xlu0 %v2372
  %v2374 = vpop.xlane.xlu0 %2373
  %v2375 = vsub.f32 %v2107, %v2258
  %v2376 = vsub.f32 %v2109, %v2258
  %v2377 = vsub.f32 %v2111, %v2262
  %v2378 = vsub.f32 %v2113, %v2262
  %v2379 = vsub.f32 %v2117, %v2266
  %v2380 = vsub.f32 %v2119, %v2266
  %v2381 = vsub.f32 %v2121, %v2270
  %v2382 = vsub.f32 %v2123, %v2270
  %v2383 = vsub.f32 %v2127, %v2274
  %v2384 = vsub.f32 %v2129, %v2274
  %v2385 = vsub.f32 %v2131, %v2278
  %v2386 = vsub.f32 %v2133, %v2278
  %v2387 = vsub.f32 %v2137, %v2282
  %v2388 = vsub.f32 %v2139, %v2282
  %v2389 = vsub.f32 %v2141, %v2286
  %v2390 = vsub.f32 %v2143, %v2286
  %v2391 = vsub.f32 %v2147, %v2290
  %v2392 = vsub.f32 %v2149, %v2290
  %v2393 = vsub.f32 %v2151, %v2294
  %v2394 = vsub.f32 %v2153, %v2294
  %v2395 = vsub.f32 %v2157, %v2298
  %v2396 = vsub.f32 %v2159, %v2298
  %v2397 = vsub.f32 %v2161, %v2302
  %v2398 = vsub.f32 %v2163, %v2302
  %v2399 = vsub.f32 %v2167, %v2306
  %v2400 = vsub.f32 %v2169, %v2306
  %v2401 = vsub.f32 %v2171, %v2310
  %v2402 = vsub.f32 %v2173, %v2310
  %v2403 = vsub.f32 %v2177, %v2314
  %v2404 = vsub.f32 %v2179, %v2314
  %v2405 = vsub.f32 %v2181, %v2318
  %v2406 = vsub.f32 %v2183, %v2318
  %v2407 = vsub.f32 %v2187, %v2322
  %v2408 = vsub.f32 %v2189, %v2322
  %v2409 = vsub.f32 %v2191, %v2326
  %v2410 = vsub.f32 %v2193, %v2326
  %v2411 = vsub.f32 %v2197, %v2330
  %v2412 = vsub.f32 %v2199, %v2330
  %v2413 = vsub.f32 %v2201, %v2334
  %v2414 = vsub.f32 %v2203, %v2334
  %v2415 = vsub.f32 %v2207, %v2338
  %v2416 = vsub.f32 %v2209, %v2338
  %v2417 = vsub.f32 %v2211, %v2342
  %v2418 = vsub.f32 %v2213, %v2342
  %v2419 = vsub.f32 %v2217, %v2346
  %v2420 = vsub.f32 %v2219, %v2346
  %v2421 = vsub.f32 %v2221, %v2350
  %v2422 = vsub.f32 %v2223, %v2350
  %v2423 = vsub.f32 %v2227, %v2354
  %v2424 = vsub.f32 %v2229, %v2354
  %v2425 = vsub.f32 %v2231, %v2358
  %v2426 = vsub.f32 %v2233, %v2358
  %v2427 = vsub.f32 %v2237, %v2362
  %v2428 = vsub.f32 %v2239, %v2362
  %v2429 = vsub.f32 %v2241, %v2366
  %v2430 = vsub.f32 %v2243, %v2366
  %v2431 = vsub.f32 %v2247, %v2370
  %v2432 = vsub.f32 %v2249, %v2370
  %v2433 = vsub.f32 %v2251, %v2374
  %v2434 = vsub.f32 %v2253, %v2374
  %v2435 = vmul.f32 %v2375, 1.442695
  %v2436 = vpow.pop %v2435
  %v2437 = vmul.f32 %v2376, 1.442695
  %v2438 = vpow.pop %v2437
  %v2439 = vmul.f32 %v2377, 1.442695
  %v2440 = vpow.pop %v2439
  %v2441 = vmul.f32 %v2378, 1.442695
  %v2442 = vpow.pop %v2441
  %v2443 = vmul.f32 %v2379, 1.442695
  %v2444 = vpow.pop %v2443
  %v2445 = vmul.f32 %v2380, 1.442695
  %v2446 = vpow.pop %v2445
  %v2447 = vmul.f32 %v2381, 1.442695
  %v2448 = vpow.pop %v2447
  %v2449 = vmul.f32 %v2382, 1.442695
  %v2450 = vpow.pop %v2449
  %v2451 = vmul.f32 %v2383, 1.442695
  %v2452 = vpow.pop %v2451
  %v2453 = vmul.f32 %v2384, 1.442695
  %v2454 = vpow.pop %v2453
  %v2455 = vmul.f32 %v2385, 1.442695
  %v2456 = vpow.pop %v2455
  %v2457 = vmul.f32 %v2386, 1.442695
  %v2458 = vpow.pop %v2457
  %v2459 = vmul.f32 %v2387, 1.442695
  %v2460 = vpow.pop %v2459
  %v2461 = vmul.f32 %v2388, 1.442695
  %v2462 = vpow.pop %v2461
  %v2463 = vmul.f32 %v2389, 1.442695
  %v2464 = vpow.pop %v2463
  %v2465 = vmul.f32 %v2390, 1.442695
  %v2466 = vpow.pop %v2465
  %v2467 = vmul.f32 %v2391, 1.442695
  %v2468 = vpow.pop %v2467
  %v2469 = vmul.f32 %v2392, 1.442695
  %v2470 = vpow.pop %v2469
  %v2471 = vmul.f32 %v2393, 1.442695
  %v2472 = vpow.pop %v2471
  %v2473 = vmul.f32 %v2394, 1.442695
  %v2474 = vpow.pop %v2473
  %v2475 = vmul.f32 %v2395, 1.442695
  %v2476 = vpow.pop %v2475
  %v2477 = vmul.f32 %v2396, 1.442695
  %v2478 = vpow.pop %v2477
  %v2479 = vmul.f32 %v2397, 1.442695
  %v2480 = vpow.pop %v2479
  %v2481 = vmul.f32 %v2398, 1.442695
  %v2482 = vpow.pop %v2481
  %v2483 = vmul.f32 %v2399, 1.442695
  %v2484 = vpow.pop %v2483
  %v2485 = vmul.f32 %v2400, 1.442695
  %v2486 = vpow.pop %v2485
  %v2487 = vmul.f32 %v2401, 1.442695
  %v2488 = vpow.pop %v2487
  %v2489 = vmul.f32 %v2402, 1.442695
  %v2490 = vpow.pop %v2489
  %v2491 = vmul.f32 %v2403, 1.442695
  %v2492 = vpow.pop %v2491
  %v2493 = vmul.f32 %v2404, 1.442695
  %v2494 = vpow.pop %v2493
  %v2495 = vmul.f32 %v2405, 1.442695
  %v2496 = vpow.pop %v2495
  %v2497 = vmul.f32 %v2406, 1.442695
  %v2498 = vpow.pop %v2497
  %v2499 = vmul.f32 %v2407, 1.442695
  %v2500 = vpow.pop %v2499
  %v2501 = vmul.f32 %v2408, 1.442695
  %v2502 = vpow.pop %v2501
  %v2503 = vmul.f32 %v2409, 1.442695
  %v2504 = vpow.pop %v2503
  %v2505 = vmul.f32 %v2410, 1.442695
  %v2506 = vpow.pop %v2505
  %v2507 = vmul.f32 %v2411, 1.442695
  %v2508 = vpow.pop %v2507
  %v2509 = vmul.f32 %v2412, 1.442695
  %v2510 = vpow.pop %v2509
  %v2511 = vmul.f32 %v2413, 1.442695
  %v2512 = vpow.pop %v2511
  %v2513 = vmul.f32 %v2414, 1.442695
  %v2514 = vpow.pop %v2513
  %v2515 = vmul.f32 %v2415, 1.442695
  %v2516 = vpow.pop %v2515
  %v2517 = vmul.f32 %v2416, 1.442695
  %v2518 = vpow.pop %v2517
  %v2519 = vmul.f32 %v2417, 1.442695
  %v2520 = vpow.pop %v2519
  %v2521 = vmul.f32 %v2418, 1.442695
  %v2522 = vpow.pop %v2521
  %v2523 = vmul.f32 %v2419, 1.442695
  %v2524 = vpow.pop %v2523
  %v2525 = vmul.f32 %v2420, 1.442695
  %v2526 = vpow.pop %v2525
  %v2527 = vmul.f32 %v2421, 1.442695
  %v2528 = vpow.pop %v2527
  %v2529 = vmul.f32 %v2422, 1.442695
  %v2530 = vpow.pop %v2529
  %v2531 = vmul.f32 %v2423, 1.442695
  %v2532 = vpow.pop %v2531
  %v2533 = vmul.f32 %v2424, 1.442695
  %v2534 = vpow.pop %v2533
  %v2535 = vmul.f32 %v2425, 1.442695
  %v2536 = vpow.pop %v2535
  %v2537 = vmul.f32 %v2426, 1.442695
  %v2538 = vpow.pop %v2537
  %v2539 = vmul.f32 %v2427, 1.442695
  %v2540 = vpow.pop %v2539
  %v2541 = vmul.f32 %v2428, 1.442695
  %v2542 = vpow.pop %v2541
  %v2543 = vmul.f32 %v2429, 1.442695
  %v2544 = vpow.pop %v2543
  %v2545 = vmul.f32 %v2430, 1.442695
  %v2546 = vpow.pop %v2545
  %v2547 = vmul.f32 %v2431, 1.442695
  %v2548 = vpow.pop %v2547
  %v2549 = vmul.f32 %v2432, 1.442695
  %v2550 = vpow.pop %v2549
  %v2551 = vmul.f32 %v2433, 1.442695
  %v2552 = vpow.pop %v2551
  %v2553 = vmul.f32 %v2434, 1.442695
  %v2554 = vpow.pop %v2553
  %v2555 = vsel %vm1138, %v2438, 0.0
  %v2556 = vadd.f32 %v2436, %v2555
  %2557 = vadd.xlane.f32.xlu0 %v2556
  %v2558 = vpop.xlane.xlu0 %2557
  %v2559 = vsel %vm1138, %v2442, 0.0
  %v2560 = vadd.f32 %v2440, %v2559
  %2561 = vadd.xlane.f32.xlu0 %v2560
  %v2562 = vpop.xlane.xlu0 %2561
  %v2563 = vsel %vm1138, %v2446, 0.0
  %v2564 = vadd.f32 %v2444, %v2563
  %2565 = vadd.xlane.f32.xlu0 %v2564
  %v2566 = vpop.xlane.xlu0 %2565
  %v2567 = vsel %vm1138, %v2450, 0.0
  %v2568 = vadd.f32 %v2448, %v2567
  %2569 = vadd.xlane.f32.xlu0 %v2568
  %v2570 = vpop.xlane.xlu0 %2569
  %v2571 = vsel %vm1138, %v2454, 0.0
  %v2572 = vadd.f32 %v2452, %v2571
  %2573 = vadd.xlane.f32.xlu0 %v2572
  %v2574 = vpop.xlane.xlu0 %2573
  %v2575 = vsel %vm1138, %v2458, 0.0
  %v2576 = vadd.f32 %v2456, %v2575
  %2577 = vadd.xlane.f32.xlu0 %v2576
  %v2578 = vpop.xlane.xlu0 %2577
  %v2579 = vsel %vm1138, %v2462, 0.0
  %v2580 = vadd.f32 %v2460, %v2579
  %2581 = vadd.xlane.f32.xlu0 %v2580
  %v2582 = vpop.xlane.xlu0 %2581
  %v2583 = vsel %vm1138, %v2466, 0.0
  %v2584 = vadd.f32 %v2464, %v2583
  %2585 = vadd.xlane.f32.xlu0 %v2584
  %v2586 = vpop.xlane.xlu0 %2585
  %v2587 = vsel %vm1138, %v2470, 0.0
  %v2588 = vadd.f32 %v2468, %v2587
  %2589 = vadd.xlane.f32.xlu0 %v2588
  %v2590 = vpop.xlane.xlu0 %2589
  %v2591 = vsel %vm1138, %v2474, 0.0
  %v2592 = vadd.f32 %v2472, %v2591
  %2593 = vadd.xlane.f32.xlu0 %v2592
  %v2594 = vpop.xlane.xlu0 %2593
  %v2595 = vsel %vm1138, %v2478, 0.0
  %v2596 = vadd.f32 %v2476, %v2595
  %2597 = vadd.xlane.f32.xlu0 %v2596
  %v2598 = vpop.xlane.xlu0 %2597
  %v2599 = vsel %vm1138, %v2482, 0.0
  %v2600 = vadd.f32 %v2480, %v2599
  %2601 = vadd.xlane.f32.xlu0 %v2600
  %v2602 = vpop.xlane.xlu0 %2601
  %v2603 = vsel %vm1138, %v2486, 0.0
  %v2604 = vadd.f32 %v2484, %v2603
  %2605 = vadd.xlane.f32.xlu0 %v2604
  %v2606 = vpop.xlane.xlu0 %2605
  %v2607 = vsel %vm1138, %v2490, 0.0
  %v2608 = vadd.f32 %v2488, %v2607
  %2609 = vadd.xlane.f32.xlu0 %v2608
  %v2610 = vpop.xlane.xlu0 %2609
  %v2611 = vsel %vm1138, %v2494, 0.0
  %v2612 = vadd.f32 %v2492, %v2611
  %2613 = vadd.xlane.f32.xlu0 %v2612
  %v2614 = vpop.xlane.xlu0 %2613
  %v2615 = vsel %vm1138, %v2498, 0.0
  %v2616 = vadd.f32 %v2496, %v2615
  %2617 = vadd.xlane.f32.xlu0 %v2616
  %v2618 = vpop.xlane.xlu0 %2617
  %v2619 = vsel %vm1138, %v2502, 0.0
  %v2620 = vadd.f32 %v2500, %v2619
  %2621 = vadd.xlane.f32.xlu0 %v2620
  %v2622 = vpop.xlane.xlu0 %2621
  %v2623 = vsel %vm1138, %v2506, 0.0
  %v2624 = vadd.f32 %v2504, %v2623
  %2625 = vadd.xlane.f32.xlu0 %v2624
  %v2626 = vpop.xlane.xlu0 %2625
  %v2627 = vsel %vm1138, %v2510, 0.0
  %v2628 = vadd.f32 %v2508, %v2627
  %2629 = vadd.xlane.f32.xlu0 %v2628
  %v2630 = vpop.xlane.xlu0 %2629
  %v2631 = vsel %vm1138, %v2514, 0.0
  %v2632 = vadd.f32 %v2512, %v2631
  %2633 = vadd.xlane.f32.xlu0 %v2632
  %v2634 = vpop.xlane.xlu0 %2633
  %v2635 = vsel %vm1138, %v2518, 0.0
  %v2636 = vadd.f32 %v2516, %v2635
  %2637 = vadd.xlane.f32.xlu0 %v2636
  %v2638 = vpop.xlane.xlu0 %2637
  %v2639 = vsel %vm1138, %v2522, 0.0
  %v2640 = vadd.f32 %v2520, %v2639
  %2641 = vadd.xlane.f32.xlu0 %v2640
  %v2642 = vpop.xlane.xlu0 %2641
  %v2643 = vsel %vm1138, %v2526, 0.0
  %v2644 = vadd.f32 %v2524, %v2643
  %2645 = vadd.xlane.f32.xlu0 %v2644
  %v2646 = vpop.xlane.xlu0 %2645
  %v2647 = vsel %vm1138, %v2530, 0.0
  %v2648 = vadd.f32 %v2528, %v2647
  %2649 = vadd.xlane.f32.xlu0 %v2648
  %v2650 = vpop.xlane.xlu0 %2649
  %v2651 = vsel %vm1138, %v2534, 0.0
  %v2652 = vadd.f32 %v2532, %v2651
  %2653 = vadd.xlane.f32.xlu0 %v2652
  %v2654 = vpop.xlane.xlu0 %2653
  %v2655 = vsel %vm1138, %v2538, 0.0
  %v2656 = vadd.f32 %v2536, %v2655
  %2657 = vadd.xlane.f32.xlu0 %v2656
  %v2658 = vpop.xlane.xlu0 %2657
  %v2659 = vsel %vm1138, %v2542, 0.0
  %v2660 = vadd.f32 %v2540, %v2659
  %2661 = vadd.xlane.f32.xlu0 %v2660
  %v2662 = vpop.xlane.xlu0 %2661
  %v2663 = vsel %vm1138, %v2546, 0.0
  %v2664 = vadd.f32 %v2544, %v2663
  %2665 = vadd.xlane.f32.xlu0 %v2664
  %v2666 = vpop.xlane.xlu0 %2665
  %v2667 = vsel %vm1138, %v2550, 0.0
  %v2668 = vadd.f32 %v2548, %v2667
  %2669 = vadd.xlane.f32.xlu0 %v2668
  %v2670 = vpop.xlane.xlu0 %2669
  %v2671 = vsel %vm1138, %v2554, 0.0
  %v2672 = vadd.f32 %v2552, %v2671
  %2673 = vadd.xlane.f32.xlu0 %v2672
  %v2674 = vpop.xlane.xlu0 %2673
  %v2675 = vrcp.pop %v2558
  %v2676 = vrcp.pop %v2562
  %v2677 = vrcp.pop %v2566
  %v2678 = vrcp.pop %v2570
  %v2679 = vrcp.pop %v2574
  %v2680 = vrcp.pop %v2578
  %v2681 = vrcp.pop %v2582
  %v2682 = vrcp.pop %v2586
  %v2683 = vrcp.pop %v2590
  %v2684 = vrcp.pop %v2594
  %v2685 = vrcp.pop %v2598
  %v2686 = vrcp.pop %v2602
  %v2687 = vrcp.pop %v2606
  %v2688 = vrcp.pop %v2610
  %v2689 = vrcp.pop %v2614
  %v2690 = vrcp.pop %v2618
  %v2691 = vrcp.pop %v2622
  %v2692 = vrcp.pop %v2626
  %v2693 = vrcp.pop %v2630
  %v2694 = vrcp.pop %v2634
  %v2695 = vrcp.pop %v2638
  %v2696 = vrcp.pop %v2642
  %v2697 = vrcp.pop %v2646
  %v2698 = vrcp.pop %v2650
  %v2699 = vrcp.pop %v2654
  %v2700 = vrcp.pop %v2658
  %v2701 = vrcp.pop %v2662
  %v2702 = vrcp.pop %v2666
  %v2703 = vrcp.pop %v2670
  %v2704 = vrcp.pop %v2674
  %v2705 = vmul.f32 %v2436, %v2675
  %v2706 = vmul.f32 %v2438, %v2675
  %v2707 = vmul.f32 %v2440, %v2676
  %v2708 = vmul.f32 %v2442, %v2676
  %v2709 = vmul.f32 %v2444, %v2677
  %v2710 = vmul.f32 %v2446, %v2677
  %v2711 = vmul.f32 %v2448, %v2678
  %v2712 = vmul.f32 %v2450, %v2678
  %v2713 = vmul.f32 %v2452, %v2679
  %v2714 = vmul.f32 %v2454, %v2679
  %v2715 = vmul.f32 %v2456, %v2680
  %v2716 = vmul.f32 %v2458, %v2680
  %v2717 = vmul.f32 %v2460, %v2681
  %v2718 = vmul.f32 %v2462, %v2681
  %v2719 = vmul.f32 %v2464, %v2682
  %v2720 = vmul.f32 %v2466, %v2682
  %v2721 = vmul.f32 %v2468, %v2683
  %v2722 = vmul.f32 %v2470, %v2683
  %v2723 = vmul.f32 %v2472, %v2684
  %v2724 = vmul.f32 %v2474, %v2684
  %v2725 = vmul.f32 %v2476, %v2685
  %v2726 = vmul.f32 %v2478, %v2685
  %v2727 = vmul.f32 %v2480, %v2686
  %v2728 = vmul.f32 %v2482, %v2686
  %v2729 = vmul.f32 %v2484, %v2687
  %v2730 = vmul.f32 %v2486, %v2687
  %v2731 = vmul.f32 %v2488, %v2688
  %v2732 = vmul.f32 %v2490, %v2688
  %v2733 = vmul.f32 %v2492, %v2689
  %v2734 = vmul.f32 %v2494, %v2689
  %v2735 = vmul.f32 %v2496, %v2690
  %v2736 = vmul.f32 %v2498, %v2690
  %v2737 = vmul.f32 %v2500, %v2691
  %v2738 = vmul.f32 %v2502, %v2691
  %v2739 = vmul.f32 %v2504, %v2692
  %v2740 = vmul.f32 %v2506, %v2692
  %v2741 = vmul.f32 %v2508, %v2693
  %v2742 = vmul.f32 %v2510, %v2693
  %v2743 = vmul.f32 %v2512, %v2694
  %v2744 = vmul.f32 %v2514, %v2694
  %v2745 = vmul.f32 %v2516, %v2695
  %v2746 = vmul.f32 %v2518, %v2695
  %v2747 = vmul.f32 %v2520, %v2696
  %v2748 = vmul.f32 %v2522, %v2696
  %v2749 = vmul.f32 %v2524, %v2697
  %v2750 = vmul.f32 %v2526, %v2697
  %v2751 = vmul.f32 %v2528, %v2698
  %v2752 = vmul.f32 %v2530, %v2698
  %v2753 = vmul.f32 %v2532, %v2699
  %v2754 = vmul.f32 %v2534, %v2699
  %v2755 = vmul.f32 %v2536, %v2700
  %v2756 = vmul.f32 %v2538, %v2700
  %v2757 = vmul.f32 %v2540, %v2701
  %v2758 = vmul.f32 %v2542, %v2701
  %v2759 = vmul.f32 %v2544, %v2702
  %v2760 = vmul.f32 %v2546, %v2702
  %v2761 = vmul.f32 %v2548, %v2703
  %v2762 = vmul.f32 %v2550, %v2703
  %v2763 = vmul.f32 %v2552, %v2704
  %v2764 = vmul.f32 %v2554, %v2704
  %v2765 = vpack.c.bf16 %v2707, %v2705
  %v2766 = vpack.c.bf16 %v2708, %v2706
  %v2767 = vpack.c.bf16 %v2711, %v2709
  %v2768 = vpack.c.bf16 %v2712, %v2710
  %v2769 = vpack.c.bf16 %v2715, %v2713
  %v2770 = vpack.c.bf16 %v2716, %v2714
  %v2771 = vpack.c.bf16 %v2719, %v2717
  %v2772 = vpack.c.bf16 %v2720, %v2718
  %v2773 = vpack.c.bf16 %v2723, %v2721
  %v2774 = vpack.c.bf16 %v2724, %v2722
  %v2775 = vpack.c.bf16 %v2727, %v2725
  %v2776 = vpack.c.bf16 %v2728, %v2726
  %v2777 = vpack.c.bf16 %v2731, %v2729
  %v2778 = vpack.c.bf16 %v2732, %v2730
  %v2779 = vpack.c.bf16 %v2735, %v2733
  %v2780 = vpack.c.bf16 %v2736, %v2734
  %v2781 = vpack.c.bf16 %v2739, %v2737
  %v2782 = vpack.c.bf16 %v2740, %v2738
  %v2783 = vpack.c.bf16 %v2743, %v2741
  %v2784 = vpack.c.bf16 %v2744, %v2742
  %v2785 = vpack.c.bf16 %v2747, %v2745
  %v2786 = vpack.c.bf16 %v2748, %v2746
  %v2787 = vpack.c.bf16 %v2751, %v2749
  %v2788 = vpack.c.bf16 %v2752, %v2750
  %v2789 = vpack.c.bf16 %v2755, %v2753
  %v2790 = vpack.c.bf16 %v2756, %v2754
  %v2791 = vpack.c.bf16 %v2759, %v2757
  %v2792 = vpack.c.bf16 %v2760, %v2758
  %v2793 = vpack.c.bf16 %v2763, %v2761
  %v2794 = vpack.c.bf16 %v2764, %v2762
  %2795 = vrot.lane.b32.xlu0 %v804, 48
  %v2796 = vpop.permute.xlu0 %2795
  %2797 = vrot.lane.b32.xlu0 %v805, 48
  %v2798 = vpop.permute.xlu0 %2797
  %2799 = vrot.lane.b32.xlu0 %v806, 48
  %v2800 = vpop.permute.xlu0 %2799
  %2801 = vrot.lane.b32.xlu0 %v807, 48
  %v2802 = vpop.permute.xlu0 %2801
  %2803 = vrot.lane.b32.xlu0 %v808, 48
  %v2804 = vpop.permute.xlu0 %2803
  %2805 = vrot.lane.b32.xlu0 %v809, 48
  %v2806 = vpop.permute.xlu0 %2805
  %2807 = vrot.lane.b32.xlu0 %v810, 48
  %v2808 = vpop.permute.xlu0 %2807
  %2809 = vrot.lane.b32.xlu0 %v811, 48
  %v2810 = vpop.permute.xlu0 %2809
  %2811 = vrot.lane.b32.xlu0 %v812, 48
  %v2812 = vpop.permute.xlu0 %2811
  %2813 = vrot.lane.b32.xlu0 %v813, 48
  %v2814 = vpop.permute.xlu0 %2813
  %2815 = vrot.lane.b32.xlu0 %v814, 48
  %v2816 = vpop.permute.xlu0 %2815
  %2817 = vrot.lane.b32.xlu0 %v815, 48
  %v2818 = vpop.permute.xlu0 %2817
  %2819 = vrot.lane.b32.xlu0 %v816, 48
  %v2820 = vpop.permute.xlu0 %2819
  %2821 = vrot.lane.b32.xlu0 %v817, 48
  %v2822 = vpop.permute.xlu0 %2821
  %2823 = vrot.lane.b32.xlu0 %v818, 48
  %v2824 = vpop.permute.xlu0 %2823
  %v2841 = vsel %vm1138, %v2766, 0
  %v2844 = vsel %vm1138, %v2768, 0
  %v2847 = vsel %vm1138, %v2770, 0
  %v2850 = vsel %vm1138, %v2772, 0
  %v2853 = vsel %vm1138, %v2774, 0
  %v2856 = vsel %vm1138, %v2776, 0
  %v2859 = vsel %vm1138, %v2778, 0
  %v2862 = vsel %vm1138, %v2780, 0
  %v2865 = vsel %vm1138, %v2782, 0
  %v2868 = vsel %vm1138, %v2784, 0
  %v2871 = vsel %vm1138, %v2786, 0
  %v2874 = vsel %vm1138, %v2788, 0
  %v2877 = vsel %vm1138, %v2790, 0
  %v2880 = vsel %vm1138, %v2792, 0
  %v2883 = vsel %vm1138, %v2794, 0
  %2885 = vmatprep.subr.bf16.mxu0 0
  %2886 = vmatpush1.bf16.msra.mxu0 %v2796
  %2887 = vmatprep.subr.bf16.mxu0 0
  %2888 = vmatpush1.bf16.msra.mxu0 %v2798
  %2889 = vmatprep.subr.bf16.mxu0 0
  %2890 = vmatpush1.bf16.msra.mxu0 %v2800
  %2891 = vmatprep.subr.bf16.mxu0 0
  %2892 = vmatpush1.bf16.msra.mxu0 %v2802
  %2893 = vmatprep.subr.bf16.mxu0 0
  %2894 = vmatpush1.bf16.msra.mxu0 %v2804
  %2895 = vmatprep.subr.bf16.mxu0 0
  %2896 = vmatpush1.bf16.msra.mxu0 %v2806
  %2897 = vmatprep.subr.bf16.mxu0 0
  %2898 = vmatpush1.bf16.msra.mxu0 %v2808
  %2899 = vmatprep.subr.bf16.mxu0 0
  %2900 = vmatpush1.bf16.msra.mxu0 %v2810
  %2901 = vmatprep.subr.bf16.mxu0 0
  %2902 = vmatpush1.bf16.msra.mxu0 %v2812
  %2903 = vmatprep.subr.bf16.mxu0 0
  %2904 = vmatpush1.bf16.msra.mxu0 %v2814
  %2905 = vmatprep.subr.bf16.mxu0 0
  %2906 = vmatpush1.bf16.msra.mxu0 %v2816
  %2907 = vmatprep.subr.bf16.mxu0 0
  %2908 = vmatpush1.bf16.msra.mxu0 %v2818
  %2909 = vmatprep.subr.bf16.mxu0 0
  %2910 = vmatpush1.bf16.msra.mxu0 %v2820
  %2911 = vmatprep.subr.bf16.mxu0 0
  %2912 = vmatpush1.bf16.msra.mxu0 %v2822
  %2913 = vmatprep.subr.bf16.mxu0 0
  %2914 = vmatpush1.bf16.msra.mxu0 %v2824
  %2915 = vmatprep.subr.bf16.mxu0 0
  %2916 = vmatpush1.bf16.msra.mxu0 0
  %2917 = vmatprep.mubr.bf16.mxu0 %v2841
  %2918 = vmatmul.mubr.bf16.gmra.mrb[0].mxu0 %v2765
  %v2919 = vpop.f32.mrb[0].mxu0
  %v2920 = vadd.f32 0.0, %v2919
  %v2921 = vpop.f32.mrb[0].mxu0
  %v2922 = vpop.f32.mrb[0].mxu0
  %v2923 = vadd.f32 0.0, %v2922
  %v2924 = vpop.f32.mrb[0].mxu0
  %2925 = vmatprep.mubr.bf16.mxu0 %v2844
  %2926 = vmatmul.mubr.bf16.gmra.mrb[0].mxu0 %v2767
  %v2927 = vpop.f32.mrb[0].mxu0
  %v2928 = vadd.f32 0.0, %v2927
  %v2929 = vpop.f32.mrb[0].mxu0
  %v2930 = vpop.f32.mrb[0].mxu0
  %v2931 = vadd.f32 0.0, %v2930
  %v2932 = vpop.f32.mrb[0].mxu0
  %2933 = vmatprep.mubr.bf16.mxu0 %v2847
  %2934 = vmatmul.mubr.bf16.gmra.mrb[0].mxu0 %v2769
  %v2935 = vpop.f32.mrb[0].mxu0
  %v2936 = vadd.f32 0.0, %v2935
  %v2937 = vpop.f32.mrb[0].mxu0
  %v2938 = vpop.f32.mrb[0].mxu0
  %v2939 = vadd.f32 0.0, %v2938
  %v2940 = vpop.f32.mrb[0].mxu0
  %2941 = vmatprep.mubr.bf16.mxu0 %v2850
  %2942 = vmatmul.mubr.bf16.gmra.mrb[0].mxu0 %v2771
  %v2943 = vpop.f32.mrb[0].mxu0
  %v2944 = vadd.f32 0.0, %v2943
  %v2945 = vpop.f32.mrb[0].mxu0
  %v2946 = vpop.f32.mrb[0].mxu0
  %v2947 = vadd.f32 0.0, %v2946
  %v2948 = vpop.f32.mrb[0].mxu0
  %2949 = vmatprep.mubr.bf16.mxu0 %v2853
  %2950 = vmatmul.mubr.bf16.gmra.mrb[0].mxu0 %v2773
  %v2951 = vpop.f32.mrb[0].mxu0
  %v2952 = vadd.f32 0.0, %v2951
  %v2953 = vpop.f32.mrb[0].mxu0
  %v2954 = vpop.f32.mrb[0].mxu0
  %v2955 = vadd.f32 0.0, %v2954
  %v2956 = vpop.f32.mrb[0].mxu0
  %2957 = vmatprep.mubr.bf16.mxu0 %v2856
  %2958 = vmatmul.mubr.bf16.gmra.mrb[0].mxu0 %v2775
  %v2959 = vpop.f32.mrb[0].mxu0
  %v2960 = vadd.f32 0.0, %v2959
  %v2961 = vpop.f32.mrb[0].mxu0
  %v2962 = vpop.f32.mrb[0].mxu0
  %v2963 = vadd.f32 0.0, %v2962
  %v2964 = vpop.f32.mrb[0].mxu0
  %2965 = vmatprep.mubr.bf16.mxu0 %v2859
  %2966 = vmatmul.mubr.bf16.gmra.mrb[0].mxu0 %v2777
  %v2967 = vpop.f32.mrb[0].mxu0
  %v2968 = vadd.f32 0.0, %v2967
  %v2969 = vpop.f32.mrb[0].mxu0
  %v2970 = vpop.f32.mrb[0].mxu0
  %v2971 = vadd.f32 0.0, %v2970
  %v2972 = vpop.f32.mrb[0].mxu0
  %2973 = vmatprep.mubr.bf16.mxu0 %v2862
  %2974 = vmatmul.mubr.bf16.gmra.mrb[0].mxu0 %v2779
  %v2975 = vpop.f32.mrb[0].mxu0
  %v2976 = vadd.f32 0.0, %v2975
  %v2977 = vpop.f32.mrb[0].mxu0
  %v2978 = vpop.f32.mrb[0].mxu0
  %v2979 = vadd.f32 0.0, %v2978
  %v2980 = vpop.f32.mrb[0].mxu0
  %2981 = vmatprep.mubr.bf16.mxu0 %v2865
  %2982 = vmatmul.mubr.bf16.gmra.mrb[0].mxu0 %v2781
  %v2983 = vpop.f32.mrb[0].mxu0
  %v2984 = vadd.f32 0.0, %v2983
  %v2985 = vpop.f32.mrb[0].mxu0
  %v2986 = vpop.f32.mrb[0].mxu0
  %v2987 = vadd.f32 0.0, %v2986
  %v2988 = vpop.f32.mrb[0].mxu0
  %2989 = vmatprep.mubr.bf16.mxu0 %v2868
  %2990 = vmatmul.mubr.bf16.gmra.mrb[0].mxu0 %v2783
  %v2991 = vpop.f32.mrb[0].mxu0
  %v2992 = vadd.f32 0.0, %v2991
  %v2993 = vpop.f32.mrb[0].mxu0
  %v2994 = vpop.f32.mrb[0].mxu0
  %v2995 = vadd.f32 0.0, %v2994
  %v2996 = vpop.f32.mrb[0].mxu0
  %2997 = vmatprep.mubr.bf16.mxu0 %v2871
  %2998 = vmatmul.mubr.bf16.gmra.mrb[0].mxu0 %v2785
  %v2999 = vpop.f32.mrb[0].mxu0
  %v3000 = vadd.f32 0.0, %v2999
  %v3001 = vpop.f32.mrb[0].mxu0
  %v3002 = vpop.f32.mrb[0].mxu0
  %v3003 = vadd.f32 0.0, %v3002
  %v3004 = vpop.f32.mrb[0].mxu0
  %3005 = vmatprep.mubr.bf16.mxu0 %v2874
  %3006 = vmatmul.mubr.bf16.gmra.mrb[0].mxu0 %v2787
  %v3007 = vpop.f32.mrb[0].mxu0
  %v3008 = vadd.f32 0.0, %v3007
  %v3009 = vpop.f32.mrb[0].mxu0
  %v3010 = vpop.f32.mrb[0].mxu0
  %v3011 = vadd.f32 0.0, %v3010
  %v3012 = vpop.f32.mrb[0].mxu0
  %3013 = vmatprep.mubr.bf16.mxu0 %v2877
  %3014 = vmatmul.mubr.bf16.gmra.mrb[0].mxu0 %v2789
  %v3015 = vpop.f32.mrb[0].mxu0
  %v3016 = vadd.f32 0.0, %v3015
  %v3017 = vpop.f32.mrb[0].mxu0
  %v3018 = vpop.f32.mrb[0].mxu0
  %v3019 = vadd.f32 0.0, %v3018
  %v3020 = vpop.f32.mrb[0].mxu0
  %3021 = vmatprep.mubr.bf16.mxu0 %v2880
  %3022 = vmatmul.mubr.bf16.gmra.mrb[0].mxu0 %v2791
  %v3023 = vpop.f32.mrb[0].mxu0
  %v3024 = vadd.f32 0.0, %v3023
  %v3025 = vpop.f32.mrb[0].mxu0
  %v3026 = vpop.f32.mrb[0].mxu0
  %v3027 = vadd.f32 0.0, %v3026
  %v3028 = vpop.f32.mrb[0].mxu0
  %3029 = vmatprep.mubr.bf16.mxu0 %v2883
  %3030 = vmatmul.mubr.bf16.gmra.mrb[0].mxu0 %v2793
  %v3031 = vpop.f32.mrb[0].mxu0
  %v3032 = vadd.f32 0.0, %v3031
  %v3033 = vpop.f32.mrb[0].mxu0
  %v3034 = vpop.f32.mrb[0].mxu0
  %v3035 = vadd.f32 0.0, %v3034
  %v3036 = vpop.f32.mrb[0].mxu0
  %3037 = vdwg.mxu0
  %3068 = vrot.lane.b32.xlu0 %v2920, 16
  %v3069 = vpop.permute.xlu0 %3068
  %3070 = vrot.lane.b32.xlu0 %v2923, 16
  %v3071 = vpop.permute.xlu0 %3070
  %3072 = vrot.lane.b32.xlu0 %v2928, 16
  %v3073 = vpop.permute.xlu0 %3072
  %3074 = vrot.lane.b32.xlu0 %v2931, 16
  %v3075 = vpop.permute.xlu0 %3074
  %3076 = vrot.lane.b32.xlu0 %v2936, 16
  %v3077 = vpop.permute.xlu0 %3076
  %3078 = vrot.lane.b32.xlu0 %v2939, 16
  %v3079 = vpop.permute.xlu0 %3078
  %3080 = vrot.lane.b32.xlu0 %v2944, 16
  %v3081 = vpop.permute.xlu0 %3080
  %3082 = vrot.lane.b32.xlu0 %v2947, 16
  %v3083 = vpop.permute.xlu0 %3082
  %3084 = vrot.lane.b32.xlu0 %v2952, 16
  %v3085 = vpop.permute.xlu0 %3084
  %3086 = vrot.lane.b32.xlu0 %v2955, 16
  %v3087 = vpop.permute.xlu0 %3086
  %3088 = vrot.lane.b32.xlu0 %v2960, 16
  %v3089 = vpop.permute.xlu0 %3088
  %3090 = vrot.lane.b32.xlu0 %v2963, 16
  %v3091 = vpop.permute.xlu0 %3090
  %3092 = vrot.lane.b32.xlu0 %v2968, 16
  %v3093 = vpop.permute.xlu0 %3092
  %3094 = vrot.lane.b32.xlu0 %v2971, 16
  %v3095 = vpop.permute.xlu0 %3094
  %3096 = vrot.lane.b32.xlu0 %v2976, 16
  %v3097 = vpop.permute.xlu0 %3096
  %3098 = vrot.lane.b32.xlu0 %v2979, 16
  %v3099 = vpop.permute.xlu0 %3098
  %3100 = vrot.lane.b32.xlu0 %v2984, 16
  %v3101 = vpop.permute.xlu0 %3100
  %3102 = vrot.lane.b32.xlu0 %v2987, 16
  %v3103 = vpop.permute.xlu0 %3102
  %3104 = vrot.lane.b32.xlu0 %v2992, 16
  %v3105 = vpop.permute.xlu0 %3104
  %3106 = vrot.lane.b32.xlu0 %v2995, 16
  %v3107 = vpop.permute.xlu0 %3106
  %3108 = vrot.lane.b32.xlu0 %v3000, 16
  %v3109 = vpop.permute.xlu0 %3108
  %3110 = vrot.lane.b32.xlu0 %v3003, 16
  %v3111 = vpop.permute.xlu0 %3110
  %3112 = vrot.lane.b32.xlu0 %v3008, 16
  %v3113 = vpop.permute.xlu0 %3112
  %3114 = vrot.lane.b32.xlu0 %v3011, 16
  %v3115 = vpop.permute.xlu0 %3114
  %3116 = vrot.lane.b32.xlu0 %v3016, 16
  %v3117 = vpop.permute.xlu0 %3116
  %3118 = vrot.lane.b32.xlu0 %v3019, 16
  %v3119 = vpop.permute.xlu0 %3118
  %3120 = vrot.lane.b32.xlu0 %v3024, 16
  %v3121 = vpop.permute.xlu0 %3120
  %3122 = vrot.lane.b32.xlu0 %v3027, 16
  %v3123 = vpop.permute.xlu0 %3122
  %3124 = vrot.lane.b32.xlu0 %v3032, 16
  %v3125 = vpop.permute.xlu0 %3124
  %3126 = vrot.lane.b32.xlu0 %v3035, 16
  %v3127 = vpop.permute.xlu0 %3126
  %v3158 = vsel %vm864, %v1804, %v3069
  %v3159 = vsel %vm864, %v1807, %v3071
  %v3160 = vsel %vm864, %v1812, %v3073
  %v3161 = vsel %vm864, %v1815, %v3075
  %v3162 = vsel %vm864, %v1820, %v3077
  %v3163 = vsel %vm864, %v1823, %v3079
  %v3164 = vsel %vm864, %v1828, %v3081
  %v3165 = vsel %vm864, %v1831, %v3083
  %v3166 = vsel %vm864, %v1836, %v3085
  %v3167 = vsel %vm864, %v1839, %v3087
  %v3168 = vsel %vm864, %v1844, %v3089
  %v3169 = vsel %vm864, %v1847, %v3091
  %v3170 = vsel %vm864, %v1852, %v3093
  %v3171 = vsel %vm864, %v1855, %v3095
  %v3172 = vsel %vm864, %v1860, %v3097
  %v3173 = vsel %vm864, %v1863, %v3099
  %v3174 = vsel %vm864, %v1868, %v3101
  %v3175 = vsel %vm864, %v1871, %v3103
  %v3176 = vsel %vm864, %v1876, %v3105
  %v3177 = vsel %vm864, %v1879, %v3107
  %v3178 = vsel %vm864, %v1884, %v3109
  %v3179 = vsel %vm864, %v1887, %v3111
  %v3180 = vsel %vm864, %v1892, %v3113
  %v3181 = vsel %vm864, %v1895, %v3115
  %v3182 = vsel %vm864, %v1900, %v3117
  %v3183 = vsel %vm864, %v1903, %v3119
  %v3184 = vsel %vm864, %v1908, %v3121
  %v3185 = vsel %vm864, %v1911, %v3123
  %v3186 = vsel %vm864, %v1916, %v3125
  %v3187 = vsel %vm864, %v1919, %v3127
  %v3188 = vld [vmem:[%s2 + $0x10] sm:$0xf]
  %v3189 = vld [vmem:[%s2 + $0x14] sm:$0xf]
  %v3190 = vld [vmem:[%s2 + $0x18] sm:$0xf]
  %v3191 = vld [vmem:[%s2 + $0x1c] sm:$0xf]
  %v3192 = vpack.c.bf16 %v3159, %v3158
  %v3193 = vpack.c.bf16 %v3161, %v3160
  %v3194 = vpack.c.bf16 %v3163, %v3162
  %v3195 = vpack.c.bf16 %v3165, %v3164
  %v3196 = vpack.c.bf16 %v3167, %v3166
  %v3197 = vpack.c.bf16 %v3169, %v3168
  %v3198 = vpack.c.bf16 %v3171, %v3170
  %v3199 = vpack.c.bf16 %v3173, %v3172
  %v3200 = vpack.c.bf16 %v3175, %v3174
  %v3201 = vpack.c.bf16 %v3177, %v3176
  %v3202 = vpack.c.bf16 %v3179, %v3178
  %v3203 = vpack.c.bf16 %v3181, %v3180
  %v3204 = vpack.c.bf16 %v3183, %v3182
  %v3205 = vpack.c.bf16 %v3185, %v3184
  %v3206 = vpack.c.bf16 %v3187, %v3186
  %v3207 = vld [vmem:[%s3 + $0x3] sm:$0x1]
  %v3208 = vlaneseq
  %v3209 = vshrl.u32 %v3208, 7
  %v3210 = vsub.s32 0, %v3209
  %v3211 = vrot.slane %v3207, %v3210
  %v3216 = vunpack.c.l.b16 %v3188
  %v3217 = vunpack.c.l.b16 %v3189
  %v3218 = vunpack.c.l.b16 %v3190
  %v3219 = vunpack.c.l.b16 %v3191
  %v3220 = vpack.c.b16 %v3217, %v3216
  %v3221 = vpack.c.b16 %v3219, %v3218
  %v3225 = vsel %vm50, %v3192, 0
  %v3228 = vsel %vm50, %v3193, 0
  %v3231 = vsel %vm50, %v3194, 0
  %v3234 = vsel %vm50, %v3195, 0
  %v3237 = vsel %vm50, %v3196, 0
  %v3240 = vsel %vm50, %v3197, 0
  %v3243 = vsel %vm50, %v3198, 0
  %v3246 = vsel %vm50, %v3199, 0
  %v3249 = vsel %vm50, %v3200, 0
  %v3252 = vsel %vm50, %v3201, 0
  %v3255 = vsel %vm50, %v3202, 0
  %v3258 = vsel %vm50, %v3203, 0
  %v3261 = vsel %vm50, %v3204, 0
  %v3264 = vsel %vm50, %v3205, 0
  %v3267 = vsel %vm50, %v3206, 0
  %3269 = vmatprep.subr.bf16.mxu0 0
  %3270 = vmatpush1.bf16.msra.mxu0 %v3220
  %3271 = vmatprep.subr.bf16.mxu0 0
  %3272 = vmatpush1.bf16.msra.mxu0 %v3221
  %3273 = vmatprep.subr.bf16.mxu0 0
  %3274 = vmatpush1.bf16.msra.mxu0 0
  %3275 = vmatprep.subr.bf16.mxu0 0
  %3276 = vmatpush1.bf16.msra.mxu0 0
  %3277 = vmatprep.subr.bf16.mxu0 0
  %3278 = vmatpush1.bf16.msra.mxu0 0
  %3279 = vmatprep.subr.bf16.mxu0 0
  %3280 = vmatpush1.bf16.msra.mxu0 0
  %3281 = vmatprep.subr.bf16.mxu0 0
  %3282 = vmatpush1.bf16.msra.mxu0 0
  %3283 = vmatprep.subr.bf16.mxu0 0
  %3284 = vmatpush1.bf16.msra.mxu0 0
  %3285 = vmatprep.subr.bf16.mxu0 0
  %3286 = vmatpush1.bf16.msra.mxu0 0
  %3287 = vmatprep.subr.bf16.mxu0 0
  %3288 = vmatpush1.bf16.msra.mxu0 0
  %3289 = vmatprep.subr.bf16.mxu0 0
  %3290 = vmatpush1.bf16.msra.mxu0 0
  %3291 = vmatprep.subr.bf16.mxu0 0
  %3292 = vmatpush1.bf16.msra.mxu0 0
  %3293 = vmatprep.subr.bf16.mxu0 0
  %3294 = vmatpush1.bf16.msra.mxu0 0
  %3295 = vmatprep.subr.bf16.mxu0 0
  %3296 = vmatpush1.bf16.msra.mxu0 0
  %3297 = vmatprep.subr.bf16.mxu0 0
  %3298 = vmatpush1.bf16.msra.mxu0 0
  %3299 = vmatprep.subr.bf16.mxu0 0
  %3300 = vmatpush1.bf16.msra.mxu0 0
  %3301 = vmatprep.mubr.bf16.mxu0 0
  %3302 = vmatmul.mubr.bf16.gmra.mrb[0].mxu0 %v3225
  %v3303 = vpop.f32.mrb[0].mxu0
  %v3304 = vadd.f32 %v3211, %v3303
  %v3305 = vpop.f32.mrb[0].mxu0
  %v3306 = vpop.f32.mrb[0].mxu0
  %v3307 = vadd.f32 %v3211, %v3306
  %v3308 = vpop.f32.mrb[0].mxu0
  %3309 = vmatprep.mubr.bf16.mxu0 0
  %3310 = vmatmul.mubr.bf16.gmra.mrb[0].mxu0 %v3228
  %v3311 = vpop.f32.mrb[0].mxu0
  %v3312 = vadd.f32 %v3211, %v3311
  %v3313 = vpop.f32.mrb[0].mxu0
  %v3314 = vpop.f32.mrb[0].mxu0
  %v3315 = vadd.f32 %v3211, %v3314
  %v3316 = vpop.f32.mrb[0].mxu0
  %3317 = vmatprep.mubr.bf16.mxu0 0
  %3318 = vmatmul.mubr.bf16.gmra.mrb[0].mxu0 %v3231
  %v3319 = vpop.f32.mrb[0].mxu0
  %v3320 = vadd.f32 %v3211, %v3319
  %v3321 = vpop.f32.mrb[0].mxu0
  %v3322 = vpop.f32.mrb[0].mxu0
  %v3323 = vadd.f32 %v3211, %v3322
  %v3324 = vpop.f32.mrb[0].mxu0
  %3325 = vmatprep.mubr.bf16.mxu0 0
  %3326 = vmatmul.mubr.bf16.gmra.mrb[0].mxu0 %v3234
  %v3327 = vpop.f32.mrb[0].mxu0
  %v3328 = vadd.f32 %v3211, %v3327
  %v3329 = vpop.f32.mrb[0].mxu0
  %v3330 = vpop.f32.mrb[0].mxu0
  %v3331 = vadd.f32 %v3211, %v3330
  %v3332 = vpop.f32.mrb[0].mxu0
  %3333 = vmatprep.mubr.bf16.mxu0 0
  %3334 = vmatmul.mubr.bf16.gmra.mrb[0].mxu0 %v3237
  %v3335 = vpop.f32.mrb[0].mxu0
  %v3336 = vadd.f32 %v3211, %v3335
  %v3337 = vpop.f32.mrb[0].mxu0
  %v3338 = vpop.f32.mrb[0].mxu0
  %v3339 = vadd.f32 %v3211, %v3338
  %v3340 = vpop.f32.mrb[0].mxu0
  %3341 = vmatprep.mubr.bf16.mxu0 0
  %3342 = vmatmul.mubr.bf16.gmra.mrb[0].mxu0 %v3240
  %v3343 = vpop.f32.mrb[0].mxu0
  %v3344 = vadd.f32 %v3211, %v3343
  %v3345 = vpop.f32.mrb[0].mxu0
  %v3346 = vpop.f32.mrb[0].mxu0
  %v3347 = vadd.f32 %v3211, %v3346
  %v3348 = vpop.f32.mrb[0].mxu0
  %3349 = vmatprep.mubr.bf16.mxu0 0
  %3350 = vmatmul.mubr.bf16.gmra.mrb[0].mxu0 %v3243
  %v3351 = vpop.f32.mrb[0].mxu0
  %v3352 = vadd.f32 %v3211, %v3351
  %v3353 = vpop.f32.mrb[0].mxu0
  %v3354 = vpop.f32.mrb[0].mxu0
  %v3355 = vadd.f32 %v3211, %v3354
  %v3356 = vpop.f32.mrb[0].mxu0
  %3357 = vmatprep.mubr.bf16.mxu0 0
  %3358 = vmatmul.mubr.bf16.gmra.mrb[0].mxu0 %v3246
  %v3359 = vpop.f32.mrb[0].mxu0
  %v3360 = vadd.f32 %v3211, %v3359
  %v3361 = vpop.f32.mrb[0].mxu0
  %v3362 = vpop.f32.mrb[0].mxu0
  %v3363 = vadd.f32 %v3211, %v3362
  %v3364 = vpop.f32.mrb[0].mxu0
  %3365 = vmatprep.mubr.bf16.mxu0 0
  %3366 = vmatmul.mubr.bf16.gmra.mrb[0].mxu0 %v3249
  %v3367 = vpop.f32.mrb[0].mxu0
  %v3368 = vadd.f32 %v3211, %v3367
  %v3369 = vpop.f32.mrb[0].mxu0
  %v3370 = vpop.f32.mrb[0].mxu0
  %v3371 = vadd.f32 %v3211, %v3370
  %v3372 = vpop.f32.mrb[0].mxu0
  %3373 = vmatprep.mubr.bf16.mxu0 0
  %3374 = vmatmul.mubr.bf16.gmra.mrb[0].mxu0 %v3252
  %v3375 = vpop.f32.mrb[0].mxu0
  %v3376 = vadd.f32 %v3211, %v3375
  %v3377 = vpop.f32.mrb[0].mxu0
  %v3378 = vpop.f32.mrb[0].mxu0
  %v3379 = vadd.f32 %v3211, %v3378
  %v3380 = vpop.f32.mrb[0].mxu0
  %3381 = vmatprep.mubr.bf16.mxu0 0
  %3382 = vmatmul.mubr.bf16.gmra.mrb[0].mxu0 %v3255
  %v3383 = vpop.f32.mrb[0].mxu0
  %v3384 = vadd.f32 %v3211, %v3383
  %v3385 = vpop.f32.mrb[0].mxu0
  %v3386 = vpop.f32.mrb[0].mxu0
  %v3387 = vadd.f32 %v3211, %v3386
  %v3388 = vpop.f32.mrb[0].mxu0
  %3389 = vmatprep.mubr.bf16.mxu0 0
  %3390 = vmatmul.mubr.bf16.gmra.mrb[0].mxu0 %v3258
  %v3391 = vpop.f32.mrb[0].mxu0
  %v3392 = vadd.f32 %v3211, %v3391
  %v3393 = vpop.f32.mrb[0].mxu0
  %v3394 = vpop.f32.mrb[0].mxu0
  %v3395 = vadd.f32 %v3211, %v3394
  %v3396 = vpop.f32.mrb[0].mxu0
  %3397 = vmatprep.mubr.bf16.mxu0 0
  %3398 = vmatmul.mubr.bf16.gmra.mrb[0].mxu0 %v3261
  %v3399 = vpop.f32.mrb[0].mxu0
  %v3400 = vadd.f32 %v3211, %v3399
  %v3401 = vpop.f32.mrb[0].mxu0
  %v3402 = vpop.f32.mrb[0].mxu0
  %v3403 = vadd.f32 %v3211, %v3402
  %v3404 = vpop.f32.mrb[0].mxu0
  %3405 = vmatprep.mubr.bf16.mxu0 0
  %3406 = vmatmul.mubr.bf16.gmra.mrb[0].mxu0 %v3264
  %v3407 = vpop.f32.mrb[0].mxu0
  %v3408 = vadd.f32 %v3211, %v3407
  %v3409 = vpop.f32.mrb[0].mxu0
  %v3410 = vpop.f32.mrb[0].mxu0
  %v3411 = vadd.f32 %v3211, %v3410
  %v3412 = vpop.f32.mrb[0].mxu0
  %3413 = vmatprep.mubr.bf16.mxu0 0
  %3414 = vmatmul.mubr.bf16.gmra.mrb[0].mxu0 %v3267
  %v3415 = vpop.f32.mrb[0].mxu0
  %v3416 = vadd.f32 %v3211, %v3415
  %v3417 = vpop.f32.mrb[0].mxu0
  %v3418 = vpop.f32.mrb[0].mxu0
  %v3419 = vadd.f32 %v3211, %v3418
  %v3420 = vpop.f32.mrb[0].mxu0
  %3421 = vdwg.mxu0
  %v3422 = vadd.f32 %v3304, %v480
  %v3423 = vadd.f32 %v3307, %v481
  %v3424 = vadd.f32 %v3312, %v482
  %v3425 = vadd.f32 %v3315, %v483
  %v3426 = vadd.f32 %v3320, %v484
  %v3427 = vadd.f32 %v3323, %v485
  %v3428 = vadd.f32 %v3328, %v486
  %v3429 = vadd.f32 %v3331, %v487
  %v3430 = vadd.f32 %v3336, %v488
  %v3431 = vadd.f32 %v3339, %v489
  %v3432 = vadd.f32 %v3344, %v490
  %v3433 = vadd.f32 %v3347, %v491
  %v3434 = vadd.f32 %v3352, %v492
  %v3435 = vadd.f32 %v3355, %v493
  %v3436 = vadd.f32 %v3360, %v494
  %v3437 = vadd.f32 %v3363, %v495
  %v3438 = vadd.f32 %v3368, %v496
  %v3439 = vadd.f32 %v3371, %v497
  %v3440 = vadd.f32 %v3376, %v498
  %v3441 = vadd.f32 %v3379, %v499
  %v3442 = vadd.f32 %v3384, %v500
  %v3443 = vadd.f32 %v3387, %v501
  %v3444 = vadd.f32 %v3392, %v502
  %v3445 = vadd.f32 %v3395, %v503
  %v3446 = vadd.f32 %v3400, %v504
  %v3447 = vadd.f32 %v3403, %v505
  %v3448 = vadd.f32 %v3408, %v506
  %v3449 = vadd.f32 %v3411, %v507
  %v3450 = vadd.f32 %v3416, %v508
  %v3451 = vadd.f32 %v3419, %v509
  %v3452 = vld [vmem:[%s3 + $0x4] sm:$0x1]
  %v3453 = vld [vmem:[%s3 + $0x5] sm:$0x1]
  %v3454 = vsel %vm50, %v3422, 0.0
  %3455 = vadd.xlane.f32.xlu0 %v3454
  %v3456 = vpop.xlane.xlu0 %3455
  %v3457 = vsel %vm50, %v3423, 0.0
  %3458 = vadd.xlane.f32.xlu0 %v3457
  %v3459 = vpop.xlane.xlu0 %3458
  %v3460 = vsel %vm50, %v3424, 0.0
  %3461 = vadd.xlane.f32.xlu0 %v3460
  %v3462 = vpop.xlane.xlu0 %3461
  %v3463 = vsel %vm50, %v3425, 0.0
  %3464 = vadd.xlane.f32.xlu0 %v3463
  %v3465 = vpop.xlane.xlu0 %3464
  %v3466 = vsel %vm50, %v3426, 0.0
  %3467 = vadd.xlane.f32.xlu0 %v3466
  %v3468 = vpop.xlane.xlu0 %3467
  %v3469 = vsel %vm50, %v3427, 0.0
  %3470 = vadd.xlane.f32.xlu0 %v3469
  %v3471 = vpop.xlane.xlu0 %3470
  %v3472 = vsel %vm50, %v3428, 0.0
  %3473 = vadd.xlane.f32.xlu0 %v3472
  %v3474 = vpop.xlane.xlu0 %3473
  %v3475 = vsel %vm50, %v3429, 0.0
  %3476 = vadd.xlane.f32.xlu0 %v3475
  %v3477 = vpop.xlane.xlu0 %3476
  %v3478 = vsel %vm50, %v3430, 0.0
  %3479 = vadd.xlane.f32.xlu0 %v3478
  %v3480 = vpop.xlane.xlu0 %3479
  %v3481 = vsel %vm50, %v3431, 0.0
  %3482 = vadd.xlane.f32.xlu0 %v3481
  %v3483 = vpop.xlane.xlu0 %3482
  %v3484 = vsel %vm50, %v3432, 0.0
  %3485 = vadd.xlane.f32.xlu0 %v3484
  %v3486 = vpop.xlane.xlu0 %3485
  %v3487 = vsel %vm50, %v3433, 0.0
  %3488 = vadd.xlane.f32.xlu0 %v3487
  %v3489 = vpop.xlane.xlu0 %3488
  %v3490 = vsel %vm50, %v3434, 0.0
  %3491 = vadd.xlane.f32.xlu0 %v3490
  %v3492 = vpop.xlane.xlu0 %3491
  %v3493 = vsel %vm50, %v3435, 0.0
  %3494 = vadd.xlane.f32.xlu0 %v3493
  %v3495 = vpop.xlane.xlu0 %3494
  %v3496 = vsel %vm50, %v3436, 0.0
  %3497 = vadd.xlane.f32.xlu0 %v3496
  %v3498 = vpop.xlane.xlu0 %3497
  %v3499 = vsel %vm50, %v3437, 0.0
  %3500 = vadd.xlane.f32.xlu0 %v3499
  %v3501 = vpop.xlane.xlu0 %3500
  %v3502 = vsel %vm50, %v3438, 0.0
  %3503 = vadd.xlane.f32.xlu0 %v3502
  %v3504 = vpop.xlane.xlu0 %3503
  %v3505 = vsel %vm50, %v3439, 0.0
  %3506 = vadd.xlane.f32.xlu0 %v3505
  %v3507 = vpop.xlane.xlu0 %3506
  %v3508 = vsel %vm50, %v3440, 0.0
  %3509 = vadd.xlane.f32.xlu0 %v3508
  %v3510 = vpop.xlane.xlu0 %3509
  %v3511 = vsel %vm50, %v3441, 0.0
  %3512 = vadd.xlane.f32.xlu0 %v3511
  %v3513 = vpop.xlane.xlu0 %3512
  %v3514 = vsel %vm50, %v3442, 0.0
  %3515 = vadd.xlane.f32.xlu0 %v3514
  %v3516 = vpop.xlane.xlu0 %3515
  %v3517 = vsel %vm50, %v3443, 0.0
  %3518 = vadd.xlane.f32.xlu0 %v3517
  %v3519 = vpop.xlane.xlu0 %3518
  %v3520 = vsel %vm50, %v3444, 0.0
  %3521 = vadd.xlane.f32.xlu0 %v3520
  %v3522 = vpop.xlane.xlu0 %3521
  %v3523 = vsel %vm50, %v3445, 0.0
  %3524 = vadd.xlane.f32.xlu0 %v3523
  %v3525 = vpop.xlane.xlu0 %3524
  %v3526 = vsel %vm50, %v3446, 0.0
  %3527 = vadd.xlane.f32.xlu0 %v3526
  %v3528 = vpop.xlane.xlu0 %3527
  %v3529 = vsel %vm50, %v3447, 0.0
  %3530 = vadd.xlane.f32.xlu0 %v3529
  %v3531 = vpop.xlane.xlu0 %3530
  %v3532 = vsel %vm50, %v3448, 0.0
  %3533 = vadd.xlane.f32.xlu0 %v3532
  %v3534 = vpop.xlane.xlu0 %3533
  %v3535 = vsel %vm50, %v3449, 0.0
  %3536 = vadd.xlane.f32.xlu0 %v3535
  %v3537 = vpop.xlane.xlu0 %3536
  %v3538 = vsel %vm50, %v3450, 0.0
  %3539 = vadd.xlane.f32.xlu0 %v3538
  %v3540 = vpop.xlane.xlu0 %3539
  %v3541 = vsel %vm50, %v3451, 0.0
  %3542 = vadd.xlane.f32.xlu0 %v3541
  %v3543 = vpop.xlane.xlu0 %3542
  %v3544 = vmul.f32 %v3456, %v141
  %v3545 = vmul.f32 %v3459, %v141
  %v3546 = vmul.f32 %v3462, %v141
  %v3547 = vmul.f32 %v3465, %v141
  %v3548 = vmul.f32 %v3468, %v141
  %v3549 = vmul.f32 %v3471, %v141
  %v3550 = vmul.f32 %v3474, %v141
  %v3551 = vmul.f32 %v3477, %v141
  %v3552 = vmul.f32 %v3480, %v141
  %v3553 = vmul.f32 %v3483, %v141
  %v3554 = vmul.f32 %v3486, %v141
  %v3555 = vmul.f32 %v3489, %v141
  %v3556 = vmul.f32 %v3492, %v141
  %v3557 = vmul.f32 %v3495, %v141
  %v3558 = vmul.f32 %v3498, %v141
  %v3559 = vmul.f32 %v3501, %v141
  %v3560 = vmul.f32 %v3504, %v141
  %v3561 = vmul.f32 %v3507, %v141
  %v3562 = vmul.f32 %v3510, %v141
  %v3563 = vmul.f32 %v3513, %v141
  %v3564 = vmul.f32 %v3516, %v141
  %v3565 = vmul.f32 %v3519, %v141
  %v3566 = vmul.f32 %v3522, %v141
  %v3567 = vmul.f32 %v3525, %v141
  %v3568 = vmul.f32 %v3528, %v141
  %v3569 = vmul.f32 %v3531, %v141
  %v3570 = vmul.f32 %v3534, %v141
  %v3571 = vmul.f32 %v3537, %v141
  %v3572 = vmul.f32 %v3540, %v141
  %v3573 = vmul.f32 %v3543, %v141
  %v3574 = vsub.f32 %v3422, %v3544
  %v3575 = vsub.f32 %v3423, %v3545
  %v3576 = vsub.f32 %v3424, %v3546
  %v3577 = vsub.f32 %v3425, %v3547
  %v3578 = vsub.f32 %v3426, %v3548
  %v3579 = vsub.f32 %v3427, %v3549
  %v3580 = vsub.f32 %v3428, %v3550
  %v3581 = vsub.f32 %v3429, %v3551
  %v3582 = vsub.f32 %v3430, %v3552
  %v3583 = vsub.f32 %v3431, %v3553
  %v3584 = vsub.f32 %v3432, %v3554
  %v3585 = vsub.f32 %v3433, %v3555
  %v3586 = vsub.f32 %v3434, %v3556
  %v3587 = vsub.f32 %v3435, %v3557
  %v3588 = vsub.f32 %v3436, %v3558
  %v3589 = vsub.f32 %v3437, %v3559
  %v3590 = vsub.f32 %v3438, %v3560
  %v3591 = vsub.f32 %v3439, %v3561
  %v3592 = vsub.f32 %v3440, %v3562
  %v3593 = vsub.f32 %v3441, %v3563
  %v3594 = vsub.f32 %v3442, %v3564
  %v3595 = vsub.f32 %v3443, %v3565
  %v3596 = vsub.f32 %v3444, %v3566
  %v3597 = vsub.f32 %v3445, %v3567
  %v3598 = vsub.f32 %v3446, %v3568
  %v3599 = vsub.f32 %v3447, %v3569
  %v3600 = vsub.f32 %v3448, %v3570
  %v3601 = vsub.f32 %v3449, %v3571
  %v3602 = vsub.f32 %v3450, %v3572
  %v3603 = vsub.f32 %v3451, %v3573
  %v3604 = vmul.f32 %v3574, %v3574
  %v3605 = vmul.f32 %v3575, %v3575
  %v3606 = vmul.f32 %v3576, %v3576
  %v3607 = vmul.f32 %v3577, %v3577
  %v3608 = vmul.f32 %v3578, %v3578
  %v3609 = vmul.f32 %v3579, %v3579
  %v3610 = vmul.f32 %v3580, %v3580
  %v3611 = vmul.f32 %v3581, %v3581
  %v3612 = vmul.f32 %v3582, %v3582
  %v3613 = vmul.f32 %v3583, %v3583
  %v3614 = vmul.f32 %v3584, %v3584
  %v3615 = vmul.f32 %v3585, %v3585
  %v3616 = vmul.f32 %v3586, %v3586
  %v3617 = vmul.f32 %v3587, %v3587
  %v3618 = vmul.f32 %v3588, %v3588
  %v3619 = vmul.f32 %v3589, %v3589
  %v3620 = vmul.f32 %v3590, %v3590
  %v3621 = vmul.f32 %v3591, %v3591
  %v3622 = vmul.f32 %v3592, %v3592
  %v3623 = vmul.f32 %v3593, %v3593
  %v3624 = vmul.f32 %v3594, %v3594
  %v3625 = vmul.f32 %v3595, %v3595
  %v3626 = vmul.f32 %v3596, %v3596
  %v3627 = vmul.f32 %v3597, %v3597
  %v3628 = vmul.f32 %v3598, %v3598
  %v3629 = vmul.f32 %v3599, %v3599
  %v3630 = vmul.f32 %v3600, %v3600
  %v3631 = vmul.f32 %v3601, %v3601
  %v3632 = vmul.f32 %v3602, %v3602
  %v3633 = vmul.f32 %v3603, %v3603
  %v3634 = vsel %vm50, %v3604, 0.0
  %3635 = vadd.xlane.f32.xlu0 %v3634
  %v3636 = vpop.xlane.xlu0 %3635
  %v3637 = vsel %vm50, %v3605, 0.0
  %3638 = vadd.xlane.f32.xlu0 %v3637
  %v3639 = vpop.xlane.xlu0 %3638
  %v3640 = vsel %vm50, %v3606, 0.0
  %3641 = vadd.xlane.f32.xlu0 %v3640
  %v3642 = vpop.xlane.xlu0 %3641
  %v3643 = vsel %vm50, %v3607, 0.0
  %3644 = vadd.xlane.f32.xlu0 %v3643
  %v3645 = vpop.xlane.xlu0 %3644
  %v3646 = vsel %vm50, %v3608, 0.0
  %3647 = vadd.xlane.f32.xlu0 %v3646
  %v3648 = vpop.xlane.xlu0 %3647
  %v3649 = vsel %vm50, %v3609, 0.0
  %3650 = vadd.xlane.f32.xlu0 %v3649
  %v3651 = vpop.xlane.xlu0 %3650
  %v3652 = vsel %vm50, %v3610, 0.0
  %3653 = vadd.xlane.f32.xlu0 %v3652
  %v3654 = vpop.xlane.xlu0 %3653
  %v3655 = vsel %vm50, %v3611, 0.0
  %3656 = vadd.xlane.f32.xlu0 %v3655
  %v3657 = vpop.xlane.xlu0 %3656
  %v3658 = vsel %vm50, %v3612, 0.0
  %3659 = vadd.xlane.f32.xlu0 %v3658
  %v3660 = vpop.xlane.xlu0 %3659
  %v3661 = vsel %vm50, %v3613, 0.0
  %3662 = vadd.xlane.f32.xlu0 %v3661
  %v3663 = vpop.xlane.xlu0 %3662
  %v3664 = vsel %vm50, %v3614, 0.0
  %3665 = vadd.xlane.f32.xlu0 %v3664
  %v3666 = vpop.xlane.xlu0 %3665
  %v3667 = vsel %vm50, %v3615, 0.0
  %3668 = vadd.xlane.f32.xlu0 %v3667
  %v3669 = vpop.xlane.xlu0 %3668
  %v3670 = vsel %vm50, %v3616, 0.0
  %3671 = vadd.xlane.f32.xlu0 %v3670
  %v3672 = vpop.xlane.xlu0 %3671
  %v3673 = vsel %vm50, %v3617, 0.0
  %3674 = vadd.xlane.f32.xlu0 %v3673
  %v3675 = vpop.xlane.xlu0 %3674
  %v3676 = vsel %vm50, %v3618, 0.0
  %3677 = vadd.xlane.f32.xlu0 %v3676
  %v3678 = vpop.xlane.xlu0 %3677
  %v3679 = vsel %vm50, %v3619, 0.0
  %3680 = vadd.xlane.f32.xlu0 %v3679
  %v3681 = vpop.xlane.xlu0 %3680
  %v3682 = vsel %vm50, %v3620, 0.0
  %3683 = vadd.xlane.f32.xlu0 %v3682
  %v3684 = vpop.xlane.xlu0 %3683
  %v3685 = vsel %vm50, %v3621, 0.0
  %3686 = vadd.xlane.f32.xlu0 %v3685
  %v3687 = vpop.xlane.xlu0 %3686
  %v3688 = vsel %vm50, %v3622, 0.0
  %3689 = vadd.xlane.f32.xlu0 %v3688
  %v3690 = vpop.xlane.xlu0 %3689
  %v3691 = vsel %vm50, %v3623, 0.0
  %3692 = vadd.xlane.f32.xlu0 %v3691
  %v3693 = vpop.xlane.xlu0 %3692
  %v3694 = vsel %vm50, %v3624, 0.0
  %3695 = vadd.xlane.f32.xlu0 %v3694
  %v3696 = vpop.xlane.xlu0 %3695
  %v3697 = vsel %vm50, %v3625, 0.0
  %3698 = vadd.xlane.f32.xlu0 %v3697
  %v3699 = vpop.xlane.xlu0 %3698
  %v3700 = vsel %vm50, %v3626, 0.0
  %3701 = vadd.xlane.f32.xlu0 %v3700
  %v3702 = vpop.xlane.xlu0 %3701
  %v3703 = vsel %vm50, %v3627, 0.0
  %3704 = vadd.xlane.f32.xlu0 %v3703
  %v3705 = vpop.xlane.xlu0 %3704
  %v3706 = vsel %vm50, %v3628, 0.0
  %3707 = vadd.xlane.f32.xlu0 %v3706
  %v3708 = vpop.xlane.xlu0 %3707
  %v3709 = vsel %vm50, %v3629, 0.0
  %3710 = vadd.xlane.f32.xlu0 %v3709
  %v3711 = vpop.xlane.xlu0 %3710
  %v3712 = vsel %vm50, %v3630, 0.0
  %3713 = vadd.xlane.f32.xlu0 %v3712
  %v3714 = vpop.xlane.xlu0 %3713
  %v3715 = vsel %vm50, %v3631, 0.0
  %3716 = vadd.xlane.f32.xlu0 %v3715
  %v3717 = vpop.xlane.xlu0 %3716
  %v3718 = vsel %vm50, %v3632, 0.0
  %3719 = vadd.xlane.f32.xlu0 %v3718
  %v3720 = vpop.xlane.xlu0 %3719
  %v3721 = vsel %vm50, %v3633, 0.0
  %3722 = vadd.xlane.f32.xlu0 %v3721
  %v3723 = vpop.xlane.xlu0 %3722
  %v3724 = vmul.f32 %v3636, %v141
  %v3725 = vmul.f32 %v3639, %v141
  %v3726 = vmul.f32 %v3642, %v141
  %v3727 = vmul.f32 %v3645, %v141
  %v3728 = vmul.f32 %v3648, %v141
  %v3729 = vmul.f32 %v3651, %v141
  %v3730 = vmul.f32 %v3654, %v141
  %v3731 = vmul.f32 %v3657, %v141
  %v3732 = vmul.f32 %v3660, %v141
  %v3733 = vmul.f32 %v3663, %v141
  %v3734 = vmul.f32 %v3666, %v141
  %v3735 = vmul.f32 %v3669, %v141
  %v3736 = vmul.f32 %v3672, %v141
  %v3737 = vmul.f32 %v3675, %v141
  %v3738 = vmul.f32 %v3678, %v141
  %v3739 = vmul.f32 %v3681, %v141
  %v3740 = vmul.f32 %v3684, %v141
  %v3741 = vmul.f32 %v3687, %v141
  %v3742 = vmul.f32 %v3690, %v141
  %v3743 = vmul.f32 %v3693, %v141
  %v3744 = vmul.f32 %v3696, %v141
  %v3745 = vmul.f32 %v3699, %v141
  %v3746 = vmul.f32 %v3702, %v141
  %v3747 = vmul.f32 %v3705, %v141
  %v3748 = vmul.f32 %v3708, %v141
  %v3749 = vmul.f32 %v3711, %v141
  %v3750 = vmul.f32 %v3714, %v141
  %v3751 = vmul.f32 %v3717, %v141
  %v3752 = vmul.f32 %v3720, %v141
  %v3753 = vmul.f32 %v3723, %v141
  %v3754 = vadd.f32 %v3724, 1e-12
  %v3755 = vadd.f32 %v3725, 1e-12
  %v3756 = vadd.f32 %v3726, 1e-12
  %v3757 = vadd.f32 %v3727, 1e-12
  %v3758 = vadd.f32 %v3728, 1e-12
  %v3759 = vadd.f32 %v3729, 1e-12
  %v3760 = vadd.f32 %v3730, 1e-12
  %v3761 = vadd.f32 %v3731, 1e-12
  %v3762 = vadd.f32 %v3732, 1e-12
  %v3763 = vadd.f32 %v3733, 1e-12
  %v3764 = vadd.f32 %v3734, 1e-12
  %v3765 = vadd.f32 %v3735, 1e-12
  %v3766 = vadd.f32 %v3736, 1e-12
  %v3767 = vadd.f32 %v3737, 1e-12
  %v3768 = vadd.f32 %v3738, 1e-12
  %v3769 = vadd.f32 %v3739, 1e-12
  %v3770 = vadd.f32 %v3740, 1e-12
  %v3771 = vadd.f32 %v3741, 1e-12
  %v3772 = vadd.f32 %v3742, 1e-12
  %v3773 = vadd.f32 %v3743, 1e-12
  %v3774 = vadd.f32 %v3744, 1e-12
  %v3775 = vadd.f32 %v3745, 1e-12
  %v3776 = vadd.f32 %v3746, 1e-12
  %v3777 = vadd.f32 %v3747, 1e-12
  %v3778 = vadd.f32 %v3748, 1e-12
  %v3779 = vadd.f32 %v3749, 1e-12
  %v3780 = vadd.f32 %v3750, 1e-12
  %v3781 = vadd.f32 %v3751, 1e-12
  %v3782 = vadd.f32 %v3752, 1e-12
  %v3783 = vadd.f32 %v3753, 1e-12
  %v3784 = vrsqrt.pop %v3754
  %v3785 = vrsqrt.pop %v3755
  %v3786 = vrsqrt.pop %v3756
  %v3787 = vrsqrt.pop %v3757
  %v3788 = vrsqrt.pop %v3758
  %v3789 = vrsqrt.pop %v3759
  %v3790 = vrsqrt.pop %v3760
  %v3791 = vrsqrt.pop %v3761
  %v3792 = vrsqrt.pop %v3762
  %v3793 = vrsqrt.pop %v3763
  %v3794 = vrsqrt.pop %v3764
  %v3795 = vrsqrt.pop %v3765
  %v3796 = vrsqrt.pop %v3766
  %v3797 = vrsqrt.pop %v3767
  %v3798 = vrsqrt.pop %v3768
  %v3799 = vrsqrt.pop %v3769
  %v3800 = vrsqrt.pop %v3770
  %v3801 = vrsqrt.pop %v3771
  %v3802 = vrsqrt.pop %v3772
  %v3803 = vrsqrt.pop %v3773
  %v3804 = vrsqrt.pop %v3774
  %v3805 = vrsqrt.pop %v3775
  %v3806 = vrsqrt.pop %v3776
  %v3807 = vrsqrt.pop %v3777
  %v3808 = vrsqrt.pop %v3778
  %v3809 = vrsqrt.pop %v3779
  %v3810 = vrsqrt.pop %v3780
  %v3811 = vrsqrt.pop %v3781
  %v3812 = vrsqrt.pop %v3782
  %v3813 = vrsqrt.pop %v3783
  %v3814 = vmul.f32 %v3574, %v3784
  %v3815 = vmul.f32 %v3575, %v3785
  %v3816 = vmul.f32 %v3576, %v3786
  %v3817 = vmul.f32 %v3577, %v3787
  %v3818 = vmul.f32 %v3578, %v3788
  %v3819 = vmul.f32 %v3579, %v3789
  %v3820 = vmul.f32 %v3580, %v3790
  %v3821 = vmul.f32 %v3581, %v3791
  %v3822 = vmul.f32 %v3582, %v3792
  %v3823 = vmul.f32 %v3583, %v3793
  %v3824 = vmul.f32 %v3584, %v3794
  %v3825 = vmul.f32 %v3585, %v3795
  %v3826 = vmul.f32 %v3586, %v3796
  %v3827 = vmul.f32 %v3587, %v3797
  %v3828 = vmul.f32 %v3588, %v3798
  %v3829 = vmul.f32 %v3589, %v3799
  %v3830 = vmul.f32 %v3590, %v3800
  %v3831 = vmul.f32 %v3591, %v3801
  %v3832 = vmul.f32 %v3592, %v3802
  %v3833 = vmul.f32 %v3593, %v3803
  %v3834 = vmul.f32 %v3594, %v3804
  %v3835 = vmul.f32 %v3595, %v3805
  %v3836 = vmul.f32 %v3596, %v3806
  %v3837 = vmul.f32 %v3597, %v3807
  %v3838 = vmul.f32 %v3598, %v3808
  %v3839 = vmul.f32 %v3599, %v3809
  %v3840 = vmul.f32 %v3600, %v3810
  %v3841 = vmul.f32 %v3601, %v3811
  %v3842 = vmul.f32 %v3602, %v3812
  %v3843 = vmul.f32 %v3603, %v3813
  %v3844 = vlaneseq
  %v3845 = vshrl.u32 %v3844, 7
  %v3846 = vsub.s32 0, %v3845
  %v3847 = vrot.slane %v3452, %v3846
  %v3848 = vmul.f32 %v3814, %v3847
  %v3849 = vmul.f32 %v3815, %v3847
  %v3850 = vmul.f32 %v3816, %v3847
  %v3851 = vmul.f32 %v3817, %v3847
  %v3852 = vmul.f32 %v3818, %v3847
  %v3853 = vmul.f32 %v3819, %v3847
  %v3854 = vmul.f32 %v3820, %v3847
  %v3855 = vmul.f32 %v3821, %v3847
  %v3856 = vmul.f32 %v3822, %v3847
  %v3857 = vmul.f32 %v3823, %v3847
  %v3858 = vmul.f32 %v3824, %v3847
  %v3859 = vmul.f32 %v3825, %v3847
  %v3860 = vmul.f32 %v3826, %v3847
  %v3861 = vmul.f32 %v3827, %v3847
  %v3862 = vmul.f32 %v3828, %v3847
  %v3863 = vmul.f32 %v3829, %v3847
  %v3864 = vmul.f32 %v3830, %v3847
  %v3865 = vmul.f32 %v3831, %v3847
  %v3866 = vmul.f32 %v3832, %v3847
  %v3867 = vmul.f32 %v3833, %v3847
  %v3868 = vmul.f32 %v3834, %v3847
  %v3869 = vmul.f32 %v3835, %v3847
  %v3870 = vmul.f32 %v3836, %v3847
  %v3871 = vmul.f32 %v3837, %v3847
  %v3872 = vmul.f32 %v3838, %v3847
  %v3873 = vmul.f32 %v3839, %v3847
  %v3874 = vmul.f32 %v3840, %v3847
  %v3875 = vmul.f32 %v3841, %v3847
  %v3876 = vmul.f32 %v3842, %v3847
  %v3877 = vmul.f32 %v3843, %v3847
  %v3878 = vlaneseq
  %v3879 = vshrl.u32 %v3878, 7
  %v3880 = vsub.s32 0, %v3879
  %v3881 = vrot.slane %v3453, %v3880
  %v3882 = vadd.f32 %v3848, %v3881
  %v3883 = vadd.f32 %v3849, %v3881
  %v3884 = vadd.f32 %v3850, %v3881
  %v3885 = vadd.f32 %v3851, %v3881
  %v3886 = vadd.f32 %v3852, %v3881
  %v3887 = vadd.f32 %v3853, %v3881
  %v3888 = vadd.f32 %v3854, %v3881
  %v3889 = vadd.f32 %v3855, %v3881
  %v3890 = vadd.f32 %v3856, %v3881
  %v3891 = vadd.f32 %v3857, %v3881
  %v3892 = vadd.f32 %v3858, %v3881
  %v3893 = vadd.f32 %v3859, %v3881
  %v3894 = vadd.f32 %v3860, %v3881
  %v3895 = vadd.f32 %v3861, %v3881
  %v3896 = vadd.f32 %v3862, %v3881
  %v3897 = vadd.f32 %v3863, %v3881
  %v3898 = vadd.f32 %v3864, %v3881
  %v3899 = vadd.f32 %v3865, %v3881
  %v3900 = vadd.f32 %v3866, %v3881
  %v3901 = vadd.f32 %v3867, %v3881
  %v3902 = vadd.f32 %v3868, %v3881
  %v3903 = vadd.f32 %v3869, %v3881
  %v3904 = vadd.f32 %v3870, %v3881
  %v3905 = vadd.f32 %v3871, %v3881
  %v3906 = vadd.f32 %v3872, %v3881
  %v3907 = vadd.f32 %v3873, %v3881
  %v3908 = vadd.f32 %v3874, %v3881
  %v3909 = vadd.f32 %v3875, %v3881
  %v3910 = vadd.f32 %v3876, %v3881
  %v3911 = vadd.f32 %v3877, %v3881
  %v3912 = vld [vmem:[%s2 + $0x20] sm:$0xf]
  %v3913 = vld [vmem:[%s2 + $0x24] sm:$0xf]
  %v3914 = vld [vmem:[%s2 + $0x28] sm:$0xf]
  %v3915 = vld [vmem:[%s2 + $0x2c] sm:$0xf]
  %v3916 = vpack.c.bf16 %v3883, %v3882
  %v3917 = vpack.c.bf16 %v3885, %v3884
  %v3918 = vpack.c.bf16 %v3887, %v3886
  %v3919 = vpack.c.bf16 %v3889, %v3888
  %v3920 = vpack.c.bf16 %v3891, %v3890
  %v3921 = vpack.c.bf16 %v3893, %v3892
  %v3922 = vpack.c.bf16 %v3895, %v3894
  %v3923 = vpack.c.bf16 %v3897, %v3896
  %v3924 = vpack.c.bf16 %v3899, %v3898
  %v3925 = vpack.c.bf16 %v3901, %v3900
  %v3926 = vpack.c.bf16 %v3903, %v3902
  %v3927 = vpack.c.bf16 %v3905, %v3904
  %v3928 = vpack.c.bf16 %v3907, %v3906
  %v3929 = vpack.c.bf16 %v3909, %v3908
  %v3930 = vpack.c.bf16 %v3911, %v3910
  %v3931 = vld [vmem:[%s3 + $0x6] sm:$0x1]
  %v3932 = vlaneseq
  %v3933 = vshrl.u32 %v3932, 7
  %v3934 = vsub.s32 0, %v3933
  %v3935 = vrot.slane %v3931, %v3934
  %v3940 = vunpack.c.l.b16 %v3912
  %v3941 = vunpack.c.l.b16 %v3913
  %v3942 = vunpack.c.l.b16 %v3914
  %v3943 = vunpack.c.l.b16 %v3915
  %v3944 = vpack.c.b16 %v3941, %v3940
  %v3945 = vpack.c.b16 %v3943, %v3942
  %v3949 = vsel %vm50, %v3916, 0
  %v3952 = vsel %vm50, %v3917, 0
  %v3955 = vsel %vm50, %v3918, 0
  %v3958 = vsel %vm50, %v3919, 0
  %v3961 = vsel %vm50, %v3920, 0
  %v3964 = vsel %vm50, %v3921, 0
  %v3967 = vsel %vm50, %v3922, 0
  %v3970 = vsel %vm50, %v3923, 0
  %v3973 = vsel %vm50, %v3924, 0
  %v3976 = vsel %vm50, %v3925, 0
  %v3979 = vsel %vm50, %v3926, 0
  %v3982 = vsel %vm50, %v3927, 0
  %v3985 = vsel %vm50, %v3928, 0
  %v3988 = vsel %vm50, %v3929, 0
  %v3991 = vsel %vm50, %v3930, 0
  %3993 = vmatprep.subr.bf16.mxu0 0
  %3994 = vmatpush1.bf16.msra.mxu0 %v3944
  %3995 = vmatprep.subr.bf16.mxu0 0
  %3996 = vmatpush1.bf16.msra.mxu0 %v3945
  %3997 = vmatprep.subr.bf16.mxu0 0
  %3998 = vmatpush1.bf16.msra.mxu0 0
  %3999 = vmatprep.subr.bf16.mxu0 0
  %4000 = vmatpush1.bf16.msra.mxu0 0
  %4001 = vmatprep.subr.bf16.mxu0 0
  %4002 = vmatpush1.bf16.msra.mxu0 0
  %4003 = vmatprep.subr.bf16.mxu0 0
  %4004 = vmatpush1.bf16.msra.mxu0 0
  %4005 = vmatprep.subr.bf16.mxu0 0
  %4006 = vmatpush1.bf16.msra.mxu0 0
  %4007 = vmatprep.subr.bf16.mxu0 0
  %4008 = vmatpush1.bf16.msra.mxu0 0
  %4009 = vmatprep.subr.bf16.mxu0 0
  %4010 = vmatpush1.bf16.msra.mxu0 0
  %4011 = vmatprep.subr.bf16.mxu0 0
  %4012 = vmatpush1.bf16.msra.mxu0 0
  %4013 = vmatprep.subr.bf16.mxu0 0
  %4014 = vmatpush1.bf16.msra.mxu0 0
  %4015 = vmatprep.subr.bf16.mxu0 0
  %4016 = vmatpush1.bf16.msra.mxu0 0
  %4017 = vmatprep.subr.bf16.mxu0 0
  %4018 = vmatpush1.bf16.msra.mxu0 0
  %4019 = vmatprep.subr.bf16.mxu0 0
  %4020 = vmatpush1.bf16.msra.mxu0 0
  %4021 = vmatprep.subr.bf16.mxu0 0
  %4022 = vmatpush1.bf16.msra.mxu0 0
  %4023 = vmatprep.subr.bf16.mxu0 0
  %4024 = vmatpush1.bf16.msra.mxu0 0
  %4025 = vmatprep.mubr.bf16.mxu0 0
  %4026 = vmatmul.mubr.bf16.gmra.mrb[0].mxu0 %v3949
  %v4027 = vpop.f32.mrb[0].mxu0
  %v4028 = vadd.f32 %v3935, %v4027
  %v4029 = vpop.f32.mrb[0].mxu0
  %v4030 = vpop.f32.mrb[0].mxu0
  %v4031 = vadd.f32 %v3935, %v4030
  %v4032 = vpop.f32.mrb[0].mxu0
  %4033 = vmatprep.mubr.bf16.mxu0 0
  %4034 = vmatmul.mubr.bf16.gmra.mrb[0].mxu0 %v3952
  %v4035 = vpop.f32.mrb[0].mxu0
  %v4036 = vadd.f32 %v3935, %v4035
  %v4037 = vpop.f32.mrb[0].mxu0
  %v4038 = vpop.f32.mrb[0].mxu0
  %v4039 = vadd.f32 %v3935, %v4038
  %v4040 = vpop.f32.mrb[0].mxu0
  %4041 = vmatprep.mubr.bf16.mxu0 0
  %4042 = vmatmul.mubr.bf16.gmra.mrb[0].mxu0 %v3955
  %v4043 = vpop.f32.mrb[0].mxu0
  %v4044 = vadd.f32 %v3935, %v4043
  %v4045 = vpop.f32.mrb[0].mxu0
  %v4046 = vpop.f32.mrb[0].mxu0
  %v4047 = vadd.f32 %v3935, %v4046
  %v4048 = vpop.f32.mrb[0].mxu0
  %4049 = vmatprep.mubr.bf16.mxu0 0
  %4050 = vmatmul.mubr.bf16.gmra.mrb[0].mxu0 %v3958
  %v4051 = vpop.f32.mrb[0].mxu0
  %v4052 = vadd.f32 %v3935, %v4051
  %v4053 = vpop.f32.mrb[0].mxu0
  %v4054 = vpop.f32.mrb[0].mxu0
  %v4055 = vadd.f32 %v3935, %v4054
  %v4056 = vpop.f32.mrb[0].mxu0
  %4057 = vmatprep.mubr.bf16.mxu0 0
  %4058 = vmatmul.mubr.bf16.gmra.mrb[0].mxu0 %v3961
  %v4059 = vpop.f32.mrb[0].mxu0
  %v4060 = vadd.f32 %v3935, %v4059
  %v4061 = vpop.f32.mrb[0].mxu0
  %v4062 = vpop.f32.mrb[0].mxu0
  %v4063 = vadd.f32 %v3935, %v4062
  %v4064 = vpop.f32.mrb[0].mxu0
  %4065 = vmatprep.mubr.bf16.mxu0 0
  %4066 = vmatmul.mubr.bf16.gmra.mrb[0].mxu0 %v3964
  %v4067 = vpop.f32.mrb[0].mxu0
  %v4068 = vadd.f32 %v3935, %v4067
  %v4069 = vpop.f32.mrb[0].mxu0
  %v4070 = vpop.f32.mrb[0].mxu0
  %v4071 = vadd.f32 %v3935, %v4070
  %v4072 = vpop.f32.mrb[0].mxu0
  %4073 = vmatprep.mubr.bf16.mxu0 0
  %4074 = vmatmul.mubr.bf16.gmra.mrb[0].mxu0 %v3967
  %v4075 = vpop.f32.mrb[0].mxu0
  %v4076 = vadd.f32 %v3935, %v4075
  %v4077 = vpop.f32.mrb[0].mxu0
  %v4078 = vpop.f32.mrb[0].mxu0
  %v4079 = vadd.f32 %v3935, %v4078
  %v4080 = vpop.f32.mrb[0].mxu0
  %4081 = vmatprep.mubr.bf16.mxu0 0
  %4082 = vmatmul.mubr.bf16.gmra.mrb[0].mxu0 %v3970
  %v4083 = vpop.f32.mrb[0].mxu0
  %v4084 = vadd.f32 %v3935, %v4083
  %v4085 = vpop.f32.mrb[0].mxu0
  %v4086 = vpop.f32.mrb[0].mxu0
  %v4087 = vadd.f32 %v3935, %v4086
  %v4088 = vpop.f32.mrb[0].mxu0
  %4089 = vmatprep.mubr.bf16.mxu0 0
  %4090 = vmatmul.mubr.bf16.gmra.mrb[0].mxu0 %v3973
  %v4091 = vpop.f32.mrb[0].mxu0
  %v4092 = vadd.f32 %v3935, %v4091
  %v4093 = vpop.f32.mrb[0].mxu0
  %v4094 = vpop.f32.mrb[0].mxu0
  %v4095 = vadd.f32 %v3935, %v4094
  %v4096 = vpop.f32.mrb[0].mxu0
  %4097 = vmatprep.mubr.bf16.mxu0 0
  %4098 = vmatmul.mubr.bf16.gmra.mrb[0].mxu0 %v3976
  %v4099 = vpop.f32.mrb[0].mxu0
  %v4100 = vadd.f32 %v3935, %v4099
  %v4101 = vpop.f32.mrb[0].mxu0
  %v4102 = vpop.f32.mrb[0].mxu0
  %v4103 = vadd.f32 %v3935, %v4102
  %v4104 = vpop.f32.mrb[0].mxu0
  %4105 = vmatprep.mubr.bf16.mxu0 0
  %4106 = vmatmul.mubr.bf16.gmra.mrb[0].mxu0 %v3979
  %v4107 = vpop.f32.mrb[0].mxu0
  %v4108 = vadd.f32 %v3935, %v4107
  %v4109 = vpop.f32.mrb[0].mxu0
  %v4110 = vpop.f32.mrb[0].mxu0
  %v4111 = vadd.f32 %v3935, %v4110
  %v4112 = vpop.f32.mrb[0].mxu0
  %4113 = vmatprep.mubr.bf16.mxu0 0
  %4114 = vmatmul.mubr.bf16.gmra.mrb[0].mxu0 %v3982
  %v4115 = vpop.f32.mrb[0].mxu0
  %v4116 = vadd.f32 %v3935, %v4115
  %v4117 = vpop.f32.mrb[0].mxu0
  %v4118 = vpop.f32.mrb[0].mxu0
  %v4119 = vadd.f32 %v3935, %v4118
  %v4120 = vpop.f32.mrb[0].mxu0
  %4121 = vmatprep.mubr.bf16.mxu0 0
  %4122 = vmatmul.mubr.bf16.gmra.mrb[0].mxu0 %v3985
  %v4123 = vpop.f32.mrb[0].mxu0
  %v4124 = vadd.f32 %v3935, %v4123
  %v4125 = vpop.f32.mrb[0].mxu0
  %v4126 = vpop.f32.mrb[0].mxu0
  %v4127 = vadd.f32 %v3935, %v4126
  %v4128 = vpop.f32.mrb[0].mxu0
  %4129 = vmatprep.mubr.bf16.mxu0 0
  %4130 = vmatmul.mubr.bf16.gmra.mrb[0].mxu0 %v3988
  %v4131 = vpop.f32.mrb[0].mxu0
  %v4132 = vadd.f32 %v3935, %v4131
  %v4133 = vpop.f32.mrb[0].mxu0
  %v4134 = vpop.f32.mrb[0].mxu0
  %v4135 = vadd.f32 %v3935, %v4134
  %v4136 = vpop.f32.mrb[0].mxu0
  %4137 = vmatprep.mubr.bf16.mxu0 0
  %4138 = vmatmul.mubr.bf16.gmra.mrb[0].mxu0 %v3991
  %v4139 = vpop.f32.mrb[0].mxu0
  %v4140 = vadd.f32 %v3935, %v4139
  %v4141 = vpop.f32.mrb[0].mxu0
  %v4142 = vpop.f32.mrb[0].mxu0
  %v4143 = vadd.f32 %v3935, %v4142
  %v4144 = vpop.f32.mrb[0].mxu0
  %4145 = vdwg.mxu0
  %v4146 = vmul.f32 %v4028, %v4028
  %v4147 = vmul.f32 %v4031, %v4031
  %v4148 = vmul.f32 %v4036, %v4036
  %v4149 = vmul.f32 %v4039, %v4039
  %v4150 = vmul.f32 %v4044, %v4044
  %v4151 = vmul.f32 %v4047, %v4047
  %v4152 = vmul.f32 %v4052, %v4052
  %v4153 = vmul.f32 %v4055, %v4055
  %v4154 = vmul.f32 %v4060, %v4060
  %v4155 = vmul.f32 %v4063, %v4063
  %v4156 = vmul.f32 %v4068, %v4068
  %v4157 = vmul.f32 %v4071, %v4071
  %v4158 = vmul.f32 %v4076, %v4076
  %v4159 = vmul.f32 %v4079, %v4079
  %v4160 = vmul.f32 %v4084, %v4084
  %v4161 = vmul.f32 %v4087, %v4087
  %v4162 = vmul.f32 %v4092, %v4092
  %v4163 = vmul.f32 %v4095, %v4095
  %v4164 = vmul.f32 %v4100, %v4100
  %v4165 = vmul.f32 %v4103, %v4103
  %v4166 = vmul.f32 %v4108, %v4108
  %v4167 = vmul.f32 %v4111, %v4111
  %v4168 = vmul.f32 %v4116, %v4116
  %v4169 = vmul.f32 %v4119, %v4119
  %v4170 = vmul.f32 %v4124, %v4124
  %v4171 = vmul.f32 %v4127, %v4127
  %v4172 = vmul.f32 %v4132, %v4132
  %v4173 = vmul.f32 %v4135, %v4135
  %v4174 = vmul.f32 %v4140, %v4140
  %v4175 = vmul.f32 %v4143, %v4143
  %v4176 = vmul.f32 %v4028, %v4146
  %v4177 = vmul.f32 %v4031, %v4147
  %v4178 = vmul.f32 %v4036, %v4148
  %v4179 = vmul.f32 %v4039, %v4149
  %v4180 = vmul.f32 %v4044, %v4150
  %v4181 = vmul.f32 %v4047, %v4151
  %v4182 = vmul.f32 %v4052, %v4152
  %v4183 = vmul.f32 %v4055, %v4153
  %v4184 = vmul.f32 %v4060, %v4154
  %v4185 = vmul.f32 %v4063, %v4155
  %v4186 = vmul.f32 %v4068, %v4156
  %v4187 = vmul.f32 %v4071, %v4157
  %v4188 = vmul.f32 %v4076, %v4158
  %v4189 = vmul.f32 %v4079, %v4159
  %v4190 = vmul.f32 %v4084, %v4160
  %v4191 = vmul.f32 %v4087, %v4161
  %v4192 = vmul.f32 %v4092, %v4162
  %v4193 = vmul.f32 %v4095, %v4163
  %v4194 = vmul.f32 %v4100, %v4164
  %v4195 = vmul.f32 %v4103, %v4165
  %v4196 = vmul.f32 %v4108, %v4166
  %v4197 = vmul.f32 %v4111, %v4167
  %v4198 = vmul.f32 %v4116, %v4168
  %v4199 = vmul.f32 %v4119, %v4169
  %v4200 = vmul.f32 %v4124, %v4170
  %v4201 = vmul.f32 %v4127, %v4171
  %v4202 = vmul.f32 %v4132, %v4172
  %v4203 = vmul.f32 %v4135, %v4173
  %v4204 = vmul.f32 %v4140, %v4174
  %v4205 = vmul.f32 %v4143, %v4175
  %v4206 = vmul.f32 %v4176, 0.044715
  %v4207 = vmul.f32 %v4177, 0.044715
  %v4208 = vmul.f32 %v4178, 0.044715
  %v4209 = vmul.f32 %v4179, 0.044715
  %v4210 = vmul.f32 %v4180, 0.044715
  %v4211 = vmul.f32 %v4181, 0.044715
  %v4212 = vmul.f32 %v4182, 0.044715
  %v4213 = vmul.f32 %v4183, 0.044715
  %v4214 = vmul.f32 %v4184, 0.044715
  %v4215 = vmul.f32 %v4185, 0.044715
  %v4216 = vmul.f32 %v4186, 0.044715
  %v4217 = vmul.f32 %v4187, 0.044715
  %v4218 = vmul.f32 %v4188, 0.044715
  %v4219 = vmul.f32 %v4189, 0.044715
  %v4220 = vmul.f32 %v4190, 0.044715
  %v4221 = vmul.f32 %v4191, 0.044715
  %v4222 = vmul.f32 %v4192, 0.044715
  %v4223 = vmul.f32 %v4193, 0.044715
  %v4224 = vmul.f32 %v4194, 0.044715
  %v4225 = vmul.f32 %v4195, 0.044715
  %v4226 = vmul.f32 %v4196, 0.044715
  %v4227 = vmul.f32 %v4197, 0.044715
  %v4228 = vmul.f32 %v4198, 0.044715
  %v4229 = vmul.f32 %v4199, 0.044715
  %v4230 = vmul.f32 %v4200, 0.044715
  %v4231 = vmul.f32 %v4201, 0.044715
  %v4232 = vmul.f32 %v4202, 0.044715
  %v4233 = vmul.f32 %v4203, 0.044715
  %v4234 = vmul.f32 %v4204, 0.044715
  %v4235 = vmul.f32 %v4205, 0.044715
  %v4236 = vadd.f32 %v4028, %v4206
  %v4237 = vadd.f32 %v4031, %v4207
  %v4238 = vadd.f32 %v4036, %v4208
  %v4239 = vadd.f32 %v4039, %v4209
  %v4240 = vadd.f32 %v4044, %v4210
  %v4241 = vadd.f32 %v4047, %v4211
  %v4242 = vadd.f32 %v4052, %v4212
  %v4243 = vadd.f32 %v4055, %v4213
  %v4244 = vadd.f32 %v4060, %v4214
  %v4245 = vadd.f32 %v4063, %v4215
  %v4246 = vadd.f32 %v4068, %v4216
  %v4247 = vadd.f32 %v4071, %v4217
  %v4248 = vadd.f32 %v4076, %v4218
  %v4249 = vadd.f32 %v4079, %v4219
  %v4250 = vadd.f32 %v4084, %v4220
  %v4251 = vadd.f32 %v4087, %v4221
  %v4252 = vadd.f32 %v4092, %v4222
  %v4253 = vadd.f32 %v4095, %v4223
  %v4254 = vadd.f32 %v4100, %v4224
  %v4255 = vadd.f32 %v4103, %v4225
  %v4256 = vadd.f32 %v4108, %v4226
  %v4257 = vadd.f32 %v4111, %v4227
  %v4258 = vadd.f32 %v4116, %v4228
  %v4259 = vadd.f32 %v4119, %v4229
  %v4260 = vadd.f32 %v4124, %v4230
  %v4261 = vadd.f32 %v4127, %v4231
  %v4262 = vadd.f32 %v4132, %v4232
  %v4263 = vadd.f32 %v4135, %v4233
  %v4264 = vadd.f32 %v4140, %v4234
  %v4265 = vadd.f32 %v4143, %v4235
  %v4266 = vmul.f32 %v4236, 0.7978846
  %v4267 = vmul.f32 %v4237, 0.7978846
  %v4268 = vmul.f32 %v4238, 0.7978846
  %v4269 = vmul.f32 %v4239, 0.7978846
  %v4270 = vmul.f32 %v4240, 0.7978846
  %v4271 = vmul.f32 %v4241, 0.7978846
  %v4272 = vmul.f32 %v4242, 0.7978846
  %v4273 = vmul.f32 %v4243, 0.7978846
  %v4274 = vmul.f32 %v4244, 0.7978846
  %v4275 = vmul.f32 %v4245, 0.7978846
  %v4276 = vmul.f32 %v4246, 0.7978846
  %v4277 = vmul.f32 %v4247, 0.7978846
  %v4278 = vmul.f32 %v4248, 0.7978846
  %v4279 = vmul.f32 %v4249, 0.7978846
  %v4280 = vmul.f32 %v4250, 0.7978846
  %v4281 = vmul.f32 %v4251, 0.7978846
  %v4282 = vmul.f32 %v4252, 0.7978846
  %v4283 = vmul.f32 %v4253, 0.7978846
  %v4284 = vmul.f32 %v4254, 0.7978846
  %v4285 = vmul.f32 %v4255, 0.7978846
  %v4286 = vmul.f32 %v4256, 0.7978846
  %v4287 = vmul.f32 %v4257, 0.7978846
  %v4288 = vmul.f32 %v4258, 0.7978846
  %v4289 = vmul.f32 %v4259, 0.7978846
  %v4290 = vmul.f32 %v4260, 0.7978846
  %v4291 = vmul.f32 %v4261, 0.7978846
  %v4292 = vmul.f32 %v4262, 0.7978846
  %v4293 = vmul.f32 %v4263, 0.7978846
  %v4294 = vmul.f32 %v4264, 0.7978846
  %v4295 = vmul.f32 %v4265, 0.7978846
  %v4296 = vtanh.pop %v4266
  %v4297 = vtanh.pop %v4267
  %v4298 = vtanh.pop %v4268
  %v4299 = vtanh.pop %v4269
  %v4300 = vtanh.pop %v4270
  %v4301 = vtanh.pop %v4271
  %v4302 = vtanh.pop %v4272
  %v4303 = vtanh.pop %v4273
  %v4304 = vtanh.pop %v4274
  %v4305 = vtanh.pop %v4275
  %v4306 = vtanh.pop %v4276
  %v4307 = vtanh.pop %v4277
  %v4308 = vtanh.pop %v4278
  %v4309 = vtanh.pop %v4279
  %v4310 = vtanh.pop %v4280
  %v4311 = vtanh.pop %v4281
  %v4312 = vtanh.pop %v4282
  %v4313 = vtanh.pop %v4283
  %v4314 = vtanh.pop %v4284
  %v4315 = vtanh.pop %v4285
  %v4316 = vtanh.pop %v4286
  %v4317 = vtanh.pop %v4287
  %v4318 = vtanh.pop %v4288
  %v4319 = vtanh.pop %v4289
  %v4320 = vtanh.pop %v4290
  %v4321 = vtanh.pop %v4291
  %v4322 = vtanh.pop %v4292
  %v4323 = vtanh.pop %v4293
  %v4324 = vtanh.pop %v4294
  %v4325 = vtanh.pop %v4295
  %v4326 = vadd.f32 %v4296, 1.0
  %v4327 = vadd.f32 %v4297, 1.0
  %v4328 = vadd.f32 %v4298, 1.0
  %v4329 = vadd.f32 %v4299, 1.0
  %v4330 = vadd.f32 %v4300, 1.0
  %v4331 = vadd.f32 %v4301, 1.0
  %v4332 = vadd.f32 %v4302, 1.0
  %v4333 = vadd.f32 %v4303, 1.0
  %v4334 = vadd.f32 %v4304, 1.0
  %v4335 = vadd.f32 %v4305, 1.0
  %v4336 = vadd.f32 %v4306, 1.0
  %v4337 = vadd.f32 %v4307, 1.0
  %v4338 = vadd.f32 %v4308, 1.0
  %v4339 = vadd.f32 %v4309, 1.0
  %v4340 = vadd.f32 %v4310, 1.0
  %v4341 = vadd.f32 %v4311, 1.0
  %v4342 = vadd.f32 %v4312, 1.0
  %v4343 = vadd.f32 %v4313, 1.0
  %v4344 = vadd.f32 %v4314, 1.0
  %v4345 = vadd.f32 %v4315, 1.0
  %v4346 = vadd.f32 %v4316, 1.0
  %v4347 = vadd.f32 %v4317, 1.0
  %v4348 = vadd.f32 %v4318, 1.0
  %v4349 = vadd.f32 %v4319, 1.0
  %v4350 = vadd.f32 %v4320, 1.0
  %v4351 = vadd.f32 %v4321, 1.0
  %v4352 = vadd.f32 %v4322, 1.0
  %v4353 = vadd.f32 %v4323, 1.0
  %v4354 = vadd.f32 %v4324, 1.0
  %v4355 = vadd.f32 %v4325, 1.0
  %v4356 = vmul.f32 %v4326, 0.5
  %v4357 = vmul.f32 %v4327, 0.5
  %v4358 = vmul.f32 %v4328, 0.5
  %v4359 = vmul.f32 %v4329, 0.5
  %v4360 = vmul.f32 %v4330, 0.5
  %v4361 = vmul.f32 %v4331, 0.5
  %v4362 = vmul.f32 %v4332, 0.5
  %v4363 = vmul.f32 %v4333, 0.5
  %v4364 = vmul.f32 %v4334, 0.5
  %v4365 = vmul.f32 %v4335, 0.5
  %v4366 = vmul.f32 %v4336, 0.5
  %v4367 = vmul.f32 %v4337, 0.5
  %v4368 = vmul.f32 %v4338, 0.5
  %v4369 = vmul.f32 %v4339, 0.5
  %v4370 = vmul.f32 %v4340, 0.5
  %v4371 = vmul.f32 %v4341, 0.5
  %v4372 = vmul.f32 %v4342, 0.5
  %v4373 = vmul.f32 %v4343, 0.5
  %v4374 = vmul.f32 %v4344, 0.5
  %v4375 = vmul.f32 %v4345, 0.5
  %v4376 = vmul.f32 %v4346, 0.5
  %v4377 = vmul.f32 %v4347, 0.5
  %v4378 = vmul.f32 %v4348, 0.5
  %v4379 = vmul.f32 %v4349, 0.5
  %v4380 = vmul.f32 %v4350, 0.5
  %v4381 = vmul.f32 %v4351, 0.5
  %v4382 = vmul.f32 %v4352, 0.5
  %v4383 = vmul.f32 %v4353, 0.5
  %v4384 = vmul.f32 %v4354, 0.5
  %v4385 = vmul.f32 %v4355, 0.5
  %v4386 = vmul.f32 %v4028, %v4356
  %v4387 = vmul.f32 %v4031, %v4357
  %v4388 = vmul.f32 %v4036, %v4358
  %v4389 = vmul.f32 %v4039, %v4359
  %v4390 = vmul.f32 %v4044, %v4360
  %v4391 = vmul.f32 %v4047, %v4361
  %v4392 = vmul.f32 %v4052, %v4362
  %v4393 = vmul.f32 %v4055, %v4363
  %v4394 = vmul.f32 %v4060, %v4364
  %v4395 = vmul.f32 %v4063, %v4365
  %v4396 = vmul.f32 %v4068, %v4366
  %v4397 = vmul.f32 %v4071, %v4367
  %v4398 = vmul.f32 %v4076, %v4368
  %v4399 = vmul.f32 %v4079, %v4369
  %v4400 = vmul.f32 %v4084, %v4370
  %v4401 = vmul.f32 %v4087, %v4371
  %v4402 = vmul.f32 %v4092, %v4372
  %v4403 = vmul.f32 %v4095, %v4373
  %v4404 = vmul.f32 %v4100, %v4374
  %v4405 = vmul.f32 %v4103, %v4375
  %v4406 = vmul.f32 %v4108, %v4376
  %v4407 = vmul.f32 %v4111, %v4377
  %v4408 = vmul.f32 %v4116, %v4378
  %v4409 = vmul.f32 %v4119, %v4379
  %v4410 = vmul.f32 %v4124, %v4380
  %v4411 = vmul.f32 %v4127, %v4381
  %v4412 = vmul.f32 %v4132, %v4382
  %v4413 = vmul.f32 %v4135, %v4383
  %v4414 = vmul.f32 %v4140, %v4384
  %v4415 = vmul.f32 %v4143, %v4385
  %v4416 = vld [vmem:[%s2 + $0x30] sm:$0xf]
  %v4417 = vld [vmem:[%s2 + $0x34] sm:$0xf]
  %v4418 = vld [vmem:[%s2 + $0x38] sm:$0xf]
  %v4419 = vld [vmem:[%s2 + $0x3c] sm:$0xf]
  %v4420 = vld [vmem:[%s2 + $0x40] sm:$0xf]
  %v4421 = vld [vmem:[%s2 + $0x44] sm:$0xf]
  %v4422 = vld [vmem:[%s2 + $0x48] sm:$0xf]
  %v4423 = vld [vmem:[%s2 + $0x4c] sm:$0xf]
  %v4424 = vpack.c.bf16 %v4387, %v4386
  %v4425 = vpack.c.bf16 %v4389, %v4388
  %v4426 = vpack.c.bf16 %v4391, %v4390
  %v4427 = vpack.c.bf16 %v4393, %v4392
  %v4428 = vpack.c.bf16 %v4395, %v4394
  %v4429 = vpack.c.bf16 %v4397, %v4396
  %v4430 = vpack.c.bf16 %v4399, %v4398
  %v4431 = vpack.c.bf16 %v4401, %v4400
  %v4432 = vpack.c.bf16 %v4403, %v4402
  %v4433 = vpack.c.bf16 %v4405, %v4404
  %v4434 = vpack.c.bf16 %v4407, %v4406
  %v4435 = vpack.c.bf16 %v4409, %v4408
  %v4436 = vpack.c.bf16 %v4411, %v4410
  %v4437 = vpack.c.bf16 %v4413, %v4412
  %v4438 = vpack.c.bf16 %v4415, %v4414
  %v4439 = vld [vmem:[%s3 + $0x7] sm:$0x1]
  %v4440 = vlaneseq
  %v4441 = vshrl.u32 %v4440, 7
  %v4442 = vsub.s32 0, %v4441
  %v4443 = vrot.slane %v4439, %v4442
  %v4452 = vunpack.c.l.b16 %v4416
  %v4453 = vunpack.c.l.b16 %v4417
  %v4454 = vunpack.c.l.b16 %v4418
  %v4455 = vunpack.c.l.b16 %v4419
  %v4456 = vunpack.c.l.b16 %v4420
  %v4457 = vunpack.c.l.b16 %v4421
  %v4458 = vunpack.c.l.b16 %v4422
  %v4459 = vunpack.c.l.b16 %v4423
  %v4460 = vpack.c.b16 %v4453, %v4452
  %v4461 = vpack.c.b16 %v4455, %v4454
  %v4462 = vpack.c.b16 %v4457, %v4456
  %v4463 = vpack.c.b16 %v4459, %v4458
  %vm4468 = vcmask 523264
  %v4470 = vsel %vm4468, %v4424, 0
  %v4473 = vsel %vm4468, %v4425, 0
  %v4476 = vsel %vm4468, %v4426, 0
  %v4479 = vsel %vm4468, %v4427, 0
  %v4482 = vsel %vm4468, %v4428, 0
  %v4485 = vsel %vm4468, %v4429, 0
  %v4488 = vsel %vm4468, %v4430, 0
  %v4491 = vsel %vm4468, %v4431, 0
  %v4494 = vsel %vm4468, %v4432, 0
  %v4497 = vsel %vm4468, %v4433, 0
  %v4500 = vsel %vm4468, %v4434, 0
  %v4503 = vsel %vm4468, %v4435, 0
  %v4506 = vsel %vm4468, %v4436, 0
  %v4509 = vsel %vm4468, %v4437, 0
  %v4512 = vsel %vm4468, %v4438, 0
  %4514 = vmatprep.subr.bf16.mxu0 0
  %4515 = vmatpush1.bf16.msra.mxu0 %v4460
  %4516 = vmatprep.subr.bf16.mxu0 0
  %4517 = vmatpush1.bf16.msra.mxu0 %v4461
  %4518 = vmatprep.subr.bf16.mxu0 0
  %4519 = vmatpush1.bf16.msra.mxu0 %v4462
  %4520 = vmatprep.subr.bf16.mxu0 0
  %4521 = vmatpush1.bf16.msra.mxu0 %v4463
  %4522 = vmatprep.subr.bf16.mxu0 0
  %4523 = vmatpush1.bf16.msra.mxu0 0
  %4524 = vmatprep.subr.bf16.mxu0 0
  %4525 = vmatpush1.bf16.msra.mxu0 0
  %4526 = vmatprep.subr.bf16.mxu0 0
  %4527 = vmatpush1.bf16.msra.mxu0 0
  %4528 = vmatprep.subr.bf16.mxu0 0
  %4529 = vmatpush1.bf16.msra.mxu0 0
  %4530 = vmatprep.subr.bf16.mxu0 0
  %4531 = vmatpush1.bf16.msra.mxu0 0
  %4532 = vmatprep.subr.bf16.mxu0 0
  %4533 = vmatpush1.bf16.msra.mxu0 0
  %4534 = vmatprep.subr.bf16.mxu0 0
  %4535 = vmatpush1.bf16.msra.mxu0 0
  %4536 = vmatprep.subr.bf16.mxu0 0
  %4537 = vmatpush1.bf16.msra.mxu0 0
  %4538 = vmatprep.subr.bf16.mxu0 0
  %4539 = vmatpush1.bf16.msra.mxu0 0
  %4540 = vmatprep.subr.bf16.mxu0 0
  %4541 = vmatpush1.bf16.msra.mxu0 0
  %4542 = vmatprep.subr.bf16.mxu0 0
  %4543 = vmatpush1.bf16.msra.mxu0 0
  %4544 = vmatprep.subr.bf16.mxu0 0
  %4545 = vmatpush1.bf16.msra.mxu0 0
  %4546 = vmatprep.mubr.bf16.mxu0 0
  %4547 = vmatmul.mubr.bf16.gmra.mrb[0].mxu0 %v4470
  %v4548 = vpop.f32.mrb[0].mxu0
  %v4549 = vadd.f32 %v4443, %v4548
  %v4550 = vpop.f32.mrb[0].mxu0
  %v4551 = vpop.f32.mrb[0].mxu0
  %v4552 = vadd.f32 %v4443, %v4551
  %v4553 = vpop.f32.mrb[0].mxu0
  %4554 = vmatprep.mubr.bf16.mxu0 0
  %4555 = vmatmul.mubr.bf16.gmra.mrb[0].mxu0 %v4473
  %v4556 = vpop.f32.mrb[0].mxu0
  %v4557 = vadd.f32 %v4443, %v4556
  %v4558 = vpop.f32.mrb[0].mxu0
  %v4559 = vpop.f32.mrb[0].mxu0
  %v4560 = vadd.f32 %v4443, %v4559
  %v4561 = vpop.f32.mrb[0].mxu0
  %4562 = vmatprep.mubr.bf16.mxu0 0
  %4563 = vmatmul.mubr.bf16.gmra.mrb[0].mxu0 %v4476
  %v4564 = vpop.f32.mrb[0].mxu0
  %v4565 = vadd.f32 %v4443, %v4564
  %v4566 = vpop.f32.mrb[0].mxu0
  %v4567 = vpop.f32.mrb[0].mxu0
  %v4568 = vadd.f32 %v4443, %v4567
  %v4569 = vpop.f32.mrb[0].mxu0
  %4570 = vmatprep.mubr.bf16.mxu0 0
  %4571 = vmatmul.mubr.bf16.gmra.mrb[0].mxu0 %v4479
  %v4572 = vpop.f32.mrb[0].mxu0
  %v4573 = vadd.f32 %v4443, %v4572
  %v4574 = vpop.f32.mrb[0].mxu0
  %v4575 = vpop.f32.mrb[0].mxu0
  %v4576 = vadd.f32 %v4443, %v4575
  %v4577 = vpop.f32.mrb[0].mxu0
  %4578 = vmatprep.mubr.bf16.mxu0 0
  %4579 = vmatmul.mubr.bf16.gmra.mrb[0].mxu0 %v4482
  %v4580 = vpop.f32.mrb[0].mxu0
  %v4581 = vadd.f32 %v4443, %v4580
  %v4582 = vpop.f32.mrb[0].mxu0
  %v4583 = vpop.f32.mrb[0].mxu0
  %v4584 = vadd.f32 %v4443, %v4583
  %v4585 = vpop.f32.mrb[0].mxu0
  %4586 = vmatprep.mubr.bf16.mxu0 0
  %4587 = vmatmul.mubr.bf16.gmra.mrb[0].mxu0 %v4485
  %v4588 = vpop.f32.mrb[0].mxu0
  %v4589 = vadd.f32 %v4443, %v4588
  %v4590 = vpop.f32.mrb[0].mxu0
  %v4591 = vpop.f32.mrb[0].mxu0
  %v4592 = vadd.f32 %v4443, %v4591
  %v4593 = vpop.f32.mrb[0].mxu0
  %4594 = vmatprep.mubr.bf16.mxu0 0
  %4595 = vmatmul.mubr.bf16.gmra.mrb[0].mxu0 %v4488
  %v4596 = vpop.f32.mrb[0].mxu0
  %v4597 = vadd.f32 %v4443, %v4596
  %v4598 = vpop.f32.mrb[0].mxu0
  %v4599 = vpop.f32.mrb[0].mxu0
  %v4600 = vadd.f32 %v4443, %v4599
  %v4601 = vpop.f32.mrb[0].mxu0
  %4602 = vmatprep.mubr.bf16.mxu0 0
  %4603 = vmatmul.mubr.bf16.gmra.mrb[0].mxu0 %v4491
  %v4604 = vpop.f32.mrb[0].mxu0
  %v4605 = vadd.f32 %v4443, %v4604
  %v4606 = vpop.f32.mrb[0].mxu0
  %v4607 = vpop.f32.mrb[0].mxu0
  %v4608 = vadd.f32 %v4443, %v4607
  %v4609 = vpop.f32.mrb[0].mxu0
  %4610 = vmatprep.mubr.bf16.mxu0 0
  %4611 = vmatmul.mubr.bf16.gmra.mrb[0].mxu0 %v4494
  %v4612 = vpop.f32.mrb[0].mxu0
  %v4613 = vadd.f32 %v4443, %v4612
  %v4614 = vpop.f32.mrb[0].mxu0
  %v4615 = vpop.f32.mrb[0].mxu0
  %v4616 = vadd.f32 %v4443, %v4615
  %v4617 = vpop.f32.mrb[0].mxu0
  %4618 = vmatprep.mubr.bf16.mxu0 0
  %4619 = vmatmul.mubr.bf16.gmra.mrb[0].mxu0 %v4497
  %v4620 = vpop.f32.mrb[0].mxu0
  %v4621 = vadd.f32 %v4443, %v4620
  %v4622 = vpop.f32.mrb[0].mxu0
  %v4623 = vpop.f32.mrb[0].mxu0
  %v4624 = vadd.f32 %v4443, %v4623
  %v4625 = vpop.f32.mrb[0].mxu0
  %4626 = vmatprep.mubr.bf16.mxu0 0
  %4627 = vmatmul.mubr.bf16.gmra.mrb[0].mxu0 %v4500
  %v4628 = vpop.f32.mrb[0].mxu0
  %v4629 = vadd.f32 %v4443, %v4628
  %v4630 = vpop.f32.mrb[0].mxu0
  %v4631 = vpop.f32.mrb[0].mxu0
  %v4632 = vadd.f32 %v4443, %v4631
  %v4633 = vpop.f32.mrb[0].mxu0
  %4634 = vmatprep.mubr.bf16.mxu0 0
  %4635 = vmatmul.mubr.bf16.gmra.mrb[0].mxu0 %v4503
  %v4636 = vpop.f32.mrb[0].mxu0
  %v4637 = vadd.f32 %v4443, %v4636
  %v4638 = vpop.f32.mrb[0].mxu0
  %v4639 = vpop.f32.mrb[0].mxu0
  %v4640 = vadd.f32 %v4443, %v4639
  %v4641 = vpop.f32.mrb[0].mxu0
  %4642 = vmatprep.mubr.bf16.mxu0 0
  %4643 = vmatmul.mubr.bf16.gmra.mrb[0].mxu0 %v4506
  %v4644 = vpop.f32.mrb[0].mxu0
  %v4645 = vadd.f32 %v4443, %v4644
  %v4646 = vpop.f32.mrb[0].mxu0
  %v4647 = vpop.f32.mrb[0].mxu0
  %v4648 = vadd.f32 %v4443, %v4647
  %v4649 = vpop.f32.mrb[0].mxu0
  %4650 = vmatprep.mubr.bf16.mxu0 0
  %4651 = vmatmul.mubr.bf16.gmra.mrb[0].mxu0 %v4509
  %v4652 = vpop.f32.mrb[0].mxu0
  %v4653 = vadd.f32 %v4443, %v4652
  %v4654 = vpop.f32.mrb[0].mxu0
  %v4655 = vpop.f32.mrb[0].mxu0
  %v4656 = vadd.f32 %v4443, %v4655
  %v4657 = vpop.f32.mrb[0].mxu0
  %4658 = vmatprep.mubr.bf16.mxu0 0
  %4659 = vmatmul.mubr.bf16.gmra.mrb[0].mxu0 %v4512
  %v4660 = vpop.f32.mrb[0].mxu0
  %v4661 = vadd.f32 %v4443, %v4660
  %v4662 = vpop.f32.mrb[0].mxu0
  %v4663 = vpop.f32.mrb[0].mxu0
  %v4664 = vadd.f32 %v4443, %v4663
  %v4665 = vpop.f32.mrb[0].mxu0
  %4666 = vdwg.mxu0
  %v4667 = vadd.f32 %v4549, %v3882
  %v4668 = vadd.f32 %v4552, %v3883
  %v4669 = vadd.f32 %v4557, %v3884
  %v4670 = vadd.f32 %v4560, %v3885
  %v4671 = vadd.f32 %v4565, %v3886
  %v4672 = vadd.f32 %v4568, %v3887
  %v4673 = vadd.f32 %v4573, %v3888
  %v4674 = vadd.f32 %v4576, %v3889
  %v4675 = vadd.f32 %v4581, %v3890
  %v4676 = vadd.f32 %v4584, %v3891
  %v4677 = vadd.f32 %v4589, %v3892
  %v4678 = vadd.f32 %v4592, %v3893
  %v4679 = vadd.f32 %v4597, %v3894
  %v4680 = vadd.f32 %v4600, %v3895
  %v4681 = vadd.f32 %v4605, %v3896
  %v4682 = vadd.f32 %v4608, %v3897
  %v4683 = vadd.f32 %v4613, %v3898
  %v4684 = vadd.f32 %v4616, %v3899
  %v4685 = vadd.f32 %v4621, %v3900
  %v4686 = vadd.f32 %v4624, %v3901
  %v4687 = vadd.f32 %v4629, %v3902
  %v4688 = vadd.f32 %v4632, %v3903
  %v4689 = vadd.f32 %v4637, %v3904
  %v4690 = vadd.f32 %v4640, %v3905
  %v4691 = vadd.f32 %v4645, %v3906
  %v4692 = vadd.f32 %v4648, %v3907
  %v4693 = vadd.f32 %v4653, %v3908
  %v4694 = vadd.f32 %v4656, %v3909
  %v4695 = vadd.f32 %v4661, %v3910
  %v4696 = vadd.f32 %v4664, %v3911
  %v4697 = vld [vmem:[%s3 + $0x8] sm:$0x1]
  %v4698 = vld [vmem:[%s3 + $0x9] sm:$0x1]
  %v4699 = vsel %vm50, %v4667, 0.0
  %4700 = vadd.xlane.f32.xlu0 %v4699
  %v4701 = vpop.xlane.xlu0 %4700
  %v4702 = vsel %vm50, %v4668, 0.0
  %4703 = vadd.xlane.f32.xlu0 %v4702
  %v4704 = vpop.xlane.xlu0 %4703
  %v4705 = vsel %vm50, %v4669, 0.0
  %4706 = vadd.xlane.f32.xlu0 %v4705
  %v4707 = vpop.xlane.xlu0 %4706
  %v4708 = vsel %vm50, %v4670, 0.0
  %4709 = vadd.xlane.f32.xlu0 %v4708
  %v4710 = vpop.xlane.xlu0 %4709
  %v4711 = vsel %vm50, %v4671, 0.0
  %4712 = vadd.xlane.f32.xlu0 %v4711
  %v4713 = vpop.xlane.xlu0 %4712
  %v4714 = vsel %vm50, %v4672, 0.0
  %4715 = vadd.xlane.f32.xlu0 %v4714
  %v4716 = vpop.xlane.xlu0 %4715
  %v4717 = vsel %vm50, %v4673, 0.0
  %4718 = vadd.xlane.f32.xlu0 %v4717
  %v4719 = vpop.xlane.xlu0 %4718
  %v4720 = vsel %vm50, %v4674, 0.0
  %4721 = vadd.xlane.f32.xlu0 %v4720
  %v4722 = vpop.xlane.xlu0 %4721
  %v4723 = vsel %vm50, %v4675, 0.0
  %4724 = vadd.xlane.f32.xlu0 %v4723
  %v4725 = vpop.xlane.xlu0 %4724
  %v4726 = vsel %vm50, %v4676, 0.0
  %4727 = vadd.xlane.f32.xlu0 %v4726
  %v4728 = vpop.xlane.xlu0 %4727
  %v4729 = vsel %vm50, %v4677, 0.0
  %4730 = vadd.xlane.f32.xlu0 %v4729
  %v4731 = vpop.xlane.xlu0 %4730
  %v4732 = vsel %vm50, %v4678, 0.0
  %4733 = vadd.xlane.f32.xlu0 %v4732
  %v4734 = vpop.xlane.xlu0 %4733
  %v4735 = vsel %vm50, %v4679, 0.0
  %4736 = vadd.xlane.f32.xlu0 %v4735
  %v4737 = vpop.xlane.xlu0 %4736
  %v4738 = vsel %vm50, %v4680, 0.0
  %4739 = vadd.xlane.f32.xlu0 %v4738
  %v4740 = vpop.xlane.xlu0 %4739
  %v4741 = vsel %vm50, %v4681, 0.0
  %4742 = vadd.xlane.f32.xlu0 %v4741
  %v4743 = vpop.xlane.xlu0 %4742
  %v4744 = vsel %vm50, %v4682, 0.0
  %4745 = vadd.xlane.f32.xlu0 %v4744
  %v4746 = vpop.xlane.xlu0 %4745
  %v4747 = vsel %vm50, %v4683, 0.0
  %4748 = vadd.xlane.f32.xlu0 %v4747
  %v4749 = vpop.xlane.xlu0 %4748
  %v4750 = vsel %vm50, %v4684, 0.0
  %4751 = vadd.xlane.f32.xlu0 %v4750
  %v4752 = vpop.xlane.xlu0 %4751
  %v4753 = vsel %vm50, %v4685, 0.0
  %4754 = vadd.xlane.f32.xlu0 %v4753
  %v4755 = vpop.xlane.xlu0 %4754
  %v4756 = vsel %vm50, %v4686, 0.0
  %4757 = vadd.xlane.f32.xlu0 %v4756
  %v4758 = vpop.xlane.xlu0 %4757
  %v4759 = vsel %vm50, %v4687, 0.0
  %4760 = vadd.xlane.f32.xlu0 %v4759
  %v4761 = vpop.xlane.xlu0 %4760
  %v4762 = vsel %vm50, %v4688, 0.0
  %4763 = vadd.xlane.f32.xlu0 %v4762
  %v4764 = vpop.xlane.xlu0 %4763
  %v4765 = vsel %vm50, %v4689, 0.0
  %4766 = vadd.xlane.f32.xlu0 %v4765
  %v4767 = vpop.xlane.xlu0 %4766
  %v4768 = vsel %vm50, %v4690, 0.0
  %4769 = vadd.xlane.f32.xlu0 %v4768
  %v4770 = vpop.xlane.xlu0 %4769
  %v4771 = vsel %vm50, %v4691, 0.0
  %4772 = vadd.xlane.f32.xlu0 %v4771
  %v4773 = vpop.xlane.xlu0 %4772
  %v4774 = vsel %vm50, %v4692, 0.0
  %4775 = vadd.xlane.f32.xlu0 %v4774
  %v4776 = vpop.xlane.xlu0 %4775
  %v4777 = vsel %vm50, %v4693, 0.0
  %4778 = vadd.xlane.f32.xlu0 %v4777
  %v4779 = vpop.xlane.xlu0 %4778
  %v4780 = vsel %vm50, %v4694, 0.0
  %4781 = vadd.xlane.f32.xlu0 %v4780
  %v4782 = vpop.xlane.xlu0 %4781
  %v4783 = vsel %vm50, %v4695, 0.0
  %4784 = vadd.xlane.f32.xlu0 %v4783
  %v4785 = vpop.xlane.xlu0 %4784
  %v4786 = vsel %vm50, %v4696, 0.0
  %4787 = vadd.xlane.f32.xlu0 %v4786
  %v4788 = vpop.xlane.xlu0 %4787
  %v4789 = vmul.f32 %v4701, %v141
  %v4790 = vmul.f32 %v4704, %v141
  %v4791 = vmul.f32 %v4707, %v141
  %v4792 = vmul.f32 %v4710, %v141
  %v4793 = vmul.f32 %v4713, %v141
  %v4794 = vmul.f32 %v4716, %v141
  %v4795 = vmul.f32 %v4719, %v141
  %v4796 = vmul.f32 %v4722, %v141
  %v4797 = vmul.f32 %v4725, %v141
  %v4798 = vmul.f32 %v4728, %v141
  %v4799 = vmul.f32 %v4731, %v141
  %v4800 = vmul.f32 %v4734, %v141
  %v4801 = vmul.f32 %v4737, %v141
  %v4802 = vmul.f32 %v4740, %v141
  %v4803 = vmul.f32 %v4743, %v141
  %v4804 = vmul.f32 %v4746, %v141
  %v4805 = vmul.f32 %v4749, %v141
  %v4806 = vmul.f32 %v4752, %v141
  %v4807 = vmul.f32 %v4755, %v141
  %v4808 = vmul.f32 %v4758, %v141
  %v4809 = vmul.f32 %v4761, %v141
  %v4810 = vmul.f32 %v4764, %v141
  %v4811 = vmul.f32 %v4767, %v141
  %v4812 = vmul.f32 %v4770, %v141
  %v4813 = vmul.f32 %v4773, %v141
  %v4814 = vmul.f32 %v4776, %v141
  %v4815 = vmul.f32 %v4779, %v141
  %v4816 = vmul.f32 %v4782, %v141
  %v4817 = vmul.f32 %v4785, %v141
  %v4818 = vmul.f32 %v4788, %v141
  %v4819 = vsub.f32 %v4667, %v4789
  %v4820 = vsub.f32 %v4668, %v4790
  %v4821 = vsub.f32 %v4669, %v4791
  %v4822 = vsub.f32 %v4670, %v4792
  %v4823 = vsub.f32 %v4671, %v4793
  %v4824 = vsub.f32 %v4672, %v4794
  %v4825 = vsub.f32 %v4673, %v4795
  %v4826 = vsub.f32 %v4674, %v4796
  %v4827 = vsub.f32 %v4675, %v4797
  %v4828 = vsub.f32 %v4676, %v4798
  %v4829 = vsub.f32 %v4677, %v4799
  %v4830 = vsub.f32 %v4678, %v4800
  %v4831 = vsub.f32 %v4679, %v4801
  %v4832 = vsub.f32 %v4680, %v4802
  %v4833 = vsub.f32 %v4681, %v4803
  %v4834 = vsub.f32 %v4682, %v4804
  %v4835 = vsub.f32 %v4683, %v4805
  %v4836 = vsub.f32 %v4684, %v4806
  %v4837 = vsub.f32 %v4685, %v4807
  %v4838 = vsub.f32 %v4686, %v4808
  %v4839 = vsub.f32 %v4687, %v4809
  %v4840 = vsub.f32 %v4688, %v4810
  %v4841 = vsub.f32 %v4689, %v4811
  %v4842 = vsub.f32 %v4690, %v4812
  %v4843 = vsub.f32 %v4691, %v4813
  %v4844 = vsub.f32 %v4692, %v4814
  %v4845 = vsub.f32 %v4693, %v4815
  %v4846 = vsub.f32 %v4694, %v4816
  %v4847 = vsub.f32 %v4695, %v4817
  %v4848 = vsub.f32 %v4696, %v4818
  %v4849 = vmul.f32 %v4819, %v4819
  %v4850 = vmul.f32 %v4820, %v4820
  %v4851 = vmul.f32 %v4821, %v4821
  %v4852 = vmul.f32 %v4822, %v4822
  %v4853 = vmul.f32 %v4823, %v4823
  %v4854 = vmul.f32 %v4824, %v4824
  %v4855 = vmul.f32 %v4825, %v4825
  %v4856 = vmul.f32 %v4826, %v4826
  %v4857 = vmul.f32 %v4827, %v4827
  %v4858 = vmul.f32 %v4828, %v4828
  %v4859 = vmul.f32 %v4829, %v4829
  %v4860 = vmul.f32 %v4830, %v4830
  %v4861 = vmul.f32 %v4831, %v4831
  %v4862 = vmul.f32 %v4832, %v4832
  %v4863 = vmul.f32 %v4833, %v4833
  %v4864 = vmul.f32 %v4834, %v4834
  %v4865 = vmul.f32 %v4835, %v4835
  %v4866 = vmul.f32 %v4836, %v4836
  %v4867 = vmul.f32 %v4837, %v4837
  %v4868 = vmul.f32 %v4838, %v4838
  %v4869 = vmul.f32 %v4839, %v4839
  %v4870 = vmul.f32 %v4840, %v4840
  %v4871 = vmul.f32 %v4841, %v4841
  %v4872 = vmul.f32 %v4842, %v4842
  %v4873 = vmul.f32 %v4843, %v4843
  %v4874 = vmul.f32 %v4844, %v4844
  %v4875 = vmul.f32 %v4845, %v4845
  %v4876 = vmul.f32 %v4846, %v4846
  %v4877 = vmul.f32 %v4847, %v4847
  %v4878 = vmul.f32 %v4848, %v4848
  %v4879 = vsel %vm50, %v4849, 0.0
  %4880 = vadd.xlane.f32.xlu0 %v4879
  %v4881 = vpop.xlane.xlu0 %4880
  %v4882 = vsel %vm50, %v4850, 0.0
  %4883 = vadd.xlane.f32.xlu0 %v4882
  %v4884 = vpop.xlane.xlu0 %4883
  %v4885 = vsel %vm50, %v4851, 0.0
  %4886 = vadd.xlane.f32.xlu0 %v4885
  %v4887 = vpop.xlane.xlu0 %4886
  %v4888 = vsel %vm50, %v4852, 0.0
  %4889 = vadd.xlane.f32.xlu0 %v4888
  %v4890 = vpop.xlane.xlu0 %4889
  %v4891 = vsel %vm50, %v4853, 0.0
  %4892 = vadd.xlane.f32.xlu0 %v4891
  %v4893 = vpop.xlane.xlu0 %4892
  %v4894 = vsel %vm50, %v4854, 0.0
  %4895 = vadd.xlane.f32.xlu0 %v4894
  %v4896 = vpop.xlane.xlu0 %4895
  %v4897 = vsel %vm50, %v4855, 0.0
  %4898 = vadd.xlane.f32.xlu0 %v4897
  %v4899 = vpop.xlane.xlu0 %4898
  %v4900 = vsel %vm50, %v4856, 0.0
  %4901 = vadd.xlane.f32.xlu0 %v4900
  %v4902 = vpop.xlane.xlu0 %4901
  %v4903 = vsel %vm50, %v4857, 0.0
  %4904 = vadd.xlane.f32.xlu0 %v4903
  %v4905 = vpop.xlane.xlu0 %4904
  %v4906 = vsel %vm50, %v4858, 0.0
  %4907 = vadd.xlane.f32.xlu0 %v4906
  %v4908 = vpop.xlane.xlu0 %4907
  %v4909 = vsel %vm50, %v4859, 0.0
  %4910 = vadd.xlane.f32.xlu0 %v4909
  %v4911 = vpop.xlane.xlu0 %4910
  %v4912 = vsel %vm50, %v4860, 0.0
  %4913 = vadd.xlane.f32.xlu0 %v4912
  %v4914 = vpop.xlane.xlu0 %4913
  %v4915 = vsel %vm50, %v4861, 0.0
  %4916 = vadd.xlane.f32.xlu0 %v4915
  %v4917 = vpop.xlane.xlu0 %4916
  %v4918 = vsel %vm50, %v4862, 0.0
  %4919 = vadd.xlane.f32.xlu0 %v4918
  %v4920 = vpop.xlane.xlu0 %4919
  %v4921 = vsel %vm50, %v4863, 0.0
  %4922 = vadd.xlane.f32.xlu0 %v4921
  %v4923 = vpop.xlane.xlu0 %4922
  %v4924 = vsel %vm50, %v4864, 0.0
  %4925 = vadd.xlane.f32.xlu0 %v4924
  %v4926 = vpop.xlane.xlu0 %4925
  %v4927 = vsel %vm50, %v4865, 0.0
  %4928 = vadd.xlane.f32.xlu0 %v4927
  %v4929 = vpop.xlane.xlu0 %4928
  %v4930 = vsel %vm50, %v4866, 0.0
  %4931 = vadd.xlane.f32.xlu0 %v4930
  %v4932 = vpop.xlane.xlu0 %4931
  %v4933 = vsel %vm50, %v4867, 0.0
  %4934 = vadd.xlane.f32.xlu0 %v4933
  %v4935 = vpop.xlane.xlu0 %4934
  %v4936 = vsel %vm50, %v4868, 0.0
  %4937 = vadd.xlane.f32.xlu0 %v4936
  %v4938 = vpop.xlane.xlu0 %4937
  %v4939 = vsel %vm50, %v4869, 0.0
  %4940 = vadd.xlane.f32.xlu0 %v4939
  %v4941 = vpop.xlane.xlu0 %4940
  %v4942 = vsel %vm50, %v4870, 0.0
  %4943 = vadd.xlane.f32.xlu0 %v4942
  %v4944 = vpop.xlane.xlu0 %4943
  %v4945 = vsel %vm50, %v4871, 0.0
  %4946 = vadd.xlane.f32.xlu0 %v4945
  %v4947 = vpop.xlane.xlu0 %4946
  %v4948 = vsel %vm50, %v4872, 0.0
  %4949 = vadd.xlane.f32.xlu0 %v4948
  %v4950 = vpop.xlane.xlu0 %4949
  %v4951 = vsel %vm50, %v4873, 0.0
  %4952 = vadd.xlane.f32.xlu0 %v4951
  %v4953 = vpop.xlane.xlu0 %4952
  %v4954 = vsel %vm50, %v4874, 0.0
  %4955 = vadd.xlane.f32.xlu0 %v4954
  %v4956 = vpop.xlane.xlu0 %4955
  %v4957 = vsel %vm50, %v4875, 0.0
  %4958 = vadd.xlane.f32.xlu0 %v4957
  %v4959 = vpop.xlane.xlu0 %4958
  %v4960 = vsel %vm50, %v4876, 0.0
  %4961 = vadd.xlane.f32.xlu0 %v4960
  %v4962 = vpop.xlane.xlu0 %4961
  %v4963 = vsel %vm50, %v4877, 0.0
  %4964 = vadd.xlane.f32.xlu0 %v4963
  %v4965 = vpop.xlane.xlu0 %4964
  %v4966 = vsel %vm50, %v4878, 0.0
  %4967 = vadd.xlane.f32.xlu0 %v4966
  %v4968 = vpop.xlane.xlu0 %4967
  %v4969 = vmul.f32 %v4881, %v141
  %v4970 = vmul.f32 %v4884, %v141
  %v4971 = vmul.f32 %v4887, %v141
  %v4972 = vmul.f32 %v4890, %v141
  %v4973 = vmul.f32 %v4893, %v141
  %v4974 = vmul.f32 %v4896, %v141
  %v4975 = vmul.f32 %v4899, %v141
  %v4976 = vmul.f32 %v4902, %v141
  %v4977 = vmul.f32 %v4905, %v141
  %v4978 = vmul.f32 %v4908, %v141
  %v4979 = vmul.f32 %v4911, %v141
  %v4980 = vmul.f32 %v4914, %v141
  %v4981 = vmul.f32 %v4917, %v141
  %v4982 = vmul.f32 %v4920, %v141
  %v4983 = vmul.f32 %v4923, %v141
  %v4984 = vmul.f32 %v4926, %v141
  %v4985 = vmul.f32 %v4929, %v141
  %v4986 = vmul.f32 %v4932, %v141
  %v4987 = vmul.f32 %v4935, %v141
  %v4988 = vmul.f32 %v4938, %v141
  %v4989 = vmul.f32 %v4941, %v141
  %v4990 = vmul.f32 %v4944, %v141
  %v4991 = vmul.f32 %v4947, %v141
  %v4992 = vmul.f32 %v4950, %v141
  %v4993 = vmul.f32 %v4953, %v141
  %v4994 = vmul.f32 %v4956, %v141
  %v4995 = vmul.f32 %v4959, %v141
  %v4996 = vmul.f32 %v4962, %v141
  %v4997 = vmul.f32 %v4965, %v141
  %v4998 = vmul.f32 %v4968, %v141
  %v4999 = vadd.f32 %v4969, 1e-12
  %v5000 = vadd.f32 %v4970, 1e-12
  %v5001 = vadd.f32 %v4971, 1e-12
  %v5002 = vadd.f32 %v4972, 1e-12
  %v5003 = vadd.f32 %v4973, 1e-12
  %v5004 = vadd.f32 %v4974, 1e-12
  %v5005 = vadd.f32 %v4975, 1e-12
  %v5006 = vadd.f32 %v4976, 1e-12
  %v5007 = vadd.f32 %v4977, 1e-12
  %v5008 = vadd.f32 %v4978, 1e-12
  %v5009 = vadd.f32 %v4979, 1e-12
  %v5010 = vadd.f32 %v4980, 1e-12
  %v5011 = vadd.f32 %v4981, 1e-12
  %v5012 = vadd.f32 %v4982, 1e-12
  %v5013 = vadd.f32 %v4983, 1e-12
  %v5014 = vadd.f32 %v4984, 1e-12
  %v5015 = vadd.f32 %v4985, 1e-12
  %v5016 = vadd.f32 %v4986, 1e-12
  %v5017 = vadd.f32 %v4987, 1e-12
  %v5018 = vadd.f32 %v4988, 1e-12
  %v5019 = vadd.f32 %v4989, 1e-12
  %v5020 = vadd.f32 %v4990, 1e-12
  %v5021 = vadd.f32 %v4991, 1e-12
  %v5022 = vadd.f32 %v4992, 1e-12
  %v5023 = vadd.f32 %v4993, 1e-12
  %v5024 = vadd.f32 %v4994, 1e-12
  %v5025 = vadd.f32 %v4995, 1e-12
  %v5026 = vadd.f32 %v4996, 1e-12
  %v5027 = vadd.f32 %v4997, 1e-12
  %v5028 = vadd.f32 %v4998, 1e-12
  %v5029 = vrsqrt.pop %v4999
  %v5030 = vrsqrt.pop %v5000
  %v5031 = vrsqrt.pop %v5001
  %v5032 = vrsqrt.pop %v5002
  %v5033 = vrsqrt.pop %v5003
  %v5034 = vrsqrt.pop %v5004
  %v5035 = vrsqrt.pop %v5005
  %v5036 = vrsqrt.pop %v5006
  %v5037 = vrsqrt.pop %v5007
  %v5038 = vrsqrt.pop %v5008
  %v5039 = vrsqrt.pop %v5009
  %v5040 = vrsqrt.pop %v5010
  %v5041 = vrsqrt.pop %v5011
  %v5042 = vrsqrt.pop %v5012
  %v5043 = vrsqrt.pop %v5013
  %v5044 = vrsqrt.pop %v5014
  %v5045 = vrsqrt.pop %v5015
  %v5046 = vrsqrt.pop %v5016
  %v5047 = vrsqrt.pop %v5017
  %v5048 = vrsqrt.pop %v5018
  %v5049 = vrsqrt.pop %v5019
  %v5050 = vrsqrt.pop %v5020
  %v5051 = vrsqrt.pop %v5021
  %v5052 = vrsqrt.pop %v5022
  %v5053 = vrsqrt.pop %v5023
  %v5054 = vrsqrt.pop %v5024
  %v5055 = vrsqrt.pop %v5025
  %v5056 = vrsqrt.pop %v5026
  %v5057 = vrsqrt.pop %v5027
  %v5058 = vrsqrt.pop %v5028
  %v5059 = vmul.f32 %v4819, %v5029
  %v5060 = vmul.f32 %v4820, %v5030
  %v5061 = vmul.f32 %v4821, %v5031
  %v5062 = vmul.f32 %v4822, %v5032
  %v5063 = vmul.f32 %v4823, %v5033
  %v5064 = vmul.f32 %v4824, %v5034
  %v5065 = vmul.f32 %v4825, %v5035
  %v5066 = vmul.f32 %v4826, %v5036
  %v5067 = vmul.f32 %v4827, %v5037
  %v5068 = vmul.f32 %v4828, %v5038
  %v5069 = vmul.f32 %v4829, %v5039
  %v5070 = vmul.f32 %v4830, %v5040
  %v5071 = vmul.f32 %v4831, %v5041
  %v5072 = vmul.f32 %v4832, %v5042
  %v5073 = vmul.f32 %v4833, %v5043
  %v5074 = vmul.f32 %v4834, %v5044
  %v5075 = vmul.f32 %v4835, %v5045
  %v5076 = vmul.f32 %v4836, %v5046
  %v5077 = vmul.f32 %v4837, %v5047
  %v5078 = vmul.f32 %v4838, %v5048
  %v5079 = vmul.f32 %v4839, %v5049
  %v5080 = vmul.f32 %v4840, %v5050
  %v5081 = vmul.f32 %v4841, %v5051
  %v5082 = vmul.f32 %v4842, %v5052
  %v5083 = vmul.f32 %v4843, %v5053
  %v5084 = vmul.f32 %v4844, %v5054
  %v5085 = vmul.f32 %v4845, %v5055
  %v5086 = vmul.f32 %v4846, %v5056
  %v5087 = vmul.f32 %v4847, %v5057
  %v5088 = vmul.f32 %v4848, %v5058
  %v5089 = vlaneseq
  %v5090 = vshrl.u32 %v5089, 7
  %v5091 = vsub.s32 0, %v5090
  %v5092 = vrot.slane %v4697, %v5091
  %v5093 = vmul.f32 %v5059, %v5092
  %v5094 = vmul.f32 %v5060, %v5092
  %v5095 = vmul.f32 %v5061, %v5092
  %v5096 = vmul.f32 %v5062, %v5092
  %v5097 = vmul.f32 %v5063, %v5092
  %v5098 = vmul.f32 %v5064, %v5092
  %v5099 = vmul.f32 %v5065, %v5092
  %v5100 = vmul.f32 %v5066, %v5092
  %v5101 = vmul.f32 %v5067, %v5092
  %v5102 = vmul.f32 %v5068, %v5092
  %v5103 = vmul.f32 %v5069, %v5092
  %v5104 = vmul.f32 %v5070, %v5092
  %v5105 = vmul.f32 %v5071, %v5092
  %v5106 = vmul.f32 %v5072, %v5092
  %v5107 = vmul.f32 %v5073, %v5092
  %v5108 = vmul.f32 %v5074, %v5092
  %v5109 = vmul.f32 %v5075, %v5092
  %v5110 = vmul.f32 %v5076, %v5092
  %v5111 = vmul.f32 %v5077, %v5092
  %v5112 = vmul.f32 %v5078, %v5092
  %v5113 = vmul.f32 %v5079, %v5092
  %v5114 = vmul.f32 %v5080, %v5092
  %v5115 = vmul.f32 %v5081, %v5092
  %v5116 = vmul.f32 %v5082, %v5092
  %v5117 = vmul.f32 %v5083, %v5092
  %v5118 = vmul.f32 %v5084, %v5092
  %v5119 = vmul.f32 %v5085, %v5092
  %v5120 = vmul.f32 %v5086, %v5092
  %v5121 = vmul.f32 %v5087, %v5092
  %v5122 = vmul.f32 %v5088, %v5092
  %v5123 = vlaneseq
  %v5124 = vshrl.u32 %v5123, 7
  %v5125 = vsub.s32 0, %v5124
  %v5126 = vrot.slane %v4698, %v5125
  %v5127 = vadd.f32 %v5093, %v5126
  %v5128 = vadd.f32 %v5094, %v5126
  %v5129 = vadd.f32 %v5095, %v5126
  %v5130 = vadd.f32 %v5096, %v5126
  %v5131 = vadd.f32 %v5097, %v5126
  %v5132 = vadd.f32 %v5098, %v5126
  %v5133 = vadd.f32 %v5099, %v5126
  %v5134 = vadd.f32 %v5100, %v5126
  %v5135 = vadd.f32 %v5101, %v5126
  %v5136 = vadd.f32 %v5102, %v5126
  %v5137 = vadd.f32 %v5103, %v5126
  %v5138 = vadd.f32 %v5104, %v5126
  %v5139 = vadd.f32 %v5105, %v5126
  %v5140 = vadd.f32 %v5106, %v5126
  %v5141 = vadd.f32 %v5107, %v5126
  %v5142 = vadd.f32 %v5108, %v5126
  %v5143 = vadd.f32 %v5109, %v5126
  %v5144 = vadd.f32 %v5110, %v5126
  %v5145 = vadd.f32 %v5111, %v5126
  %v5146 = vadd.f32 %v5112, %v5126
  %v5147 = vadd.f32 %v5113, %v5126
  %v5148 = vadd.f32 %v5114, %v5126
  %v5149 = vadd.f32 %v5115, %v5126
  %v5150 = vadd.f32 %v5116, %v5126
  %v5151 = vadd.f32 %v5117, %v5126
  %v5152 = vadd.f32 %v5118, %v5126
  %v5153 = vadd.f32 %v5119, %v5126
  %v5154 = vadd.f32 %v5120, %v5126
  %v5155 = vadd.f32 %v5121, %v5126
  %v5156 = vadd.f32 %v5122, %v5126
  %v5157 = vld [vmem:[%s2 + $0x50] sm:$0xf]
  %v5158 = vld [vmem:[%s2 + $0x54] sm:$0xf]
  %v5159 = vld [vmem:[%s2 + $0x58] sm:$0xf]
  %v5160 = vld [vmem:[%s2 + $0x5c] sm:$0xf]
  %v5161 = vpack.c.bf16 %v5127, %v5127
  %v5162 = vpack.c.bf16 %v5128, %v5128
  %v5163 = vpack.c.bf16 %v5129, %v5129
  %v5164 = vpack.c.bf16 %v5130, %v5130
  %v5165 = vpack.c.bf16 %v5131, %v5131
  %v5166 = vpack.c.bf16 %v5132, %v5132
  %v5167 = vpack.c.bf16 %v5133, %v5133
  %v5168 = vpack.c.bf16 %v5134, %v5134
  %v5169 = vpack.c.bf16 %v5135, %v5135
  %v5170 = vpack.c.bf16 %v5136, %v5136
  %v5171 = vpack.c.bf16 %v5137, %v5137
  %v5172 = vpack.c.bf16 %v5138, %v5138
  %v5173 = vpack.c.bf16 %v5139, %v5139
  %v5174 = vpack.c.bf16 %v5140, %v5140
  %v5175 = vpack.c.bf16 %v5141, %v5141
  %v5176 = vpack.c.bf16 %v5142, %v5142
  %v5177 = vpack.c.bf16 %v5143, %v5143
  %v5178 = vpack.c.bf16 %v5144, %v5144
  %v5179 = vpack.c.bf16 %v5145, %v5145
  %v5180 = vpack.c.bf16 %v5146, %v5146
  %v5181 = vpack.c.bf16 %v5147, %v5147
  %v5182 = vpack.c.bf16 %v5148, %v5148
  %v5183 = vpack.c.bf16 %v5149, %v5149
  %v5184 = vpack.c.bf16 %v5150, %v5150
  %v5185 = vpack.c.bf16 %v5151, %v5151
  %v5186 = vpack.c.bf16 %v5152, %v5152
  %v5187 = vpack.c.bf16 %v5153, %v5153
  %v5188 = vpack.c.bf16 %v5154, %v5154
  %v5189 = vpack.c.bf16 %v5155, %v5155
  %v5190 = vpack.c.bf16 %v5156, %v5156
  %v5191 = vld [vmem:[%s3 + $0xa] sm:$0x1]
  %v5192 = vlaneseq
  %v5193 = vshrl.u32 %v5192, 7
  %v5194 = vsub.s32 0, %v5193
  %v5195 = vrot.slane %v5191, %v5194
  %v5226 = vunpack.c.l.b16 %v5161
  %v5227 = vunpack.c.l.b16 %v5162
  %v5228 = vunpack.c.l.b16 %v5163
  %v5229 = vunpack.c.l.b16 %v5164
  %v5230 = vunpack.c.l.b16 %v5165
  %v5231 = vunpack.c.l.b16 %v5166
  %v5232 = vunpack.c.l.b16 %v5167
  %v5233 = vunpack.c.l.b16 %v5168
  %v5234 = vunpack.c.l.b16 %v5169
  %v5235 = vunpack.c.l.b16 %v5170
  %v5236 = vunpack.c.l.b16 %v5171
  %v5237 = vunpack.c.l.b16 %v5172
  %v5238 = vunpack.c.l.b16 %v5173
  %v5239 = vunpack.c.l.b16 %v5174
  %v5240 = vunpack.c.l.b16 %v5175
  %v5241 = vunpack.c.l.b16 %v5176
  %v5242 = vunpack.c.l.b16 %v5177
  %v5243 = vunpack.c.l.b16 %v5178
  %v5244 = vunpack.c.l.b16 %v5179
  %v5245 = vunpack.c.l.b16 %v5180
  %v5246 = vunpack.c.l.b16 %v5181
  %v5247 = vunpack.c.l.b16 %v5182
  %v5248 = vunpack.c.l.b16 %v5183
  %v5249 = vunpack.c.l.b16 %v5184
  %v5250 = vunpack.c.l.b16 %v5185
  %v5251 = vunpack.c.l.b16 %v5186
  %v5252 = vunpack.c.l.b16 %v5187
  %v5253 = vunpack.c.l.b16 %v5188
  %v5254 = vunpack.c.l.b16 %v5189
  %v5255 = vunpack.c.l.b16 %v5190
  %v5256 = vrot.slane %v5227, 7
  %vm5257 = vcmask 1041409
  %v5258 = vsel %vm5257, %v5256, %v5226
  %v5259 = vrot.slane %v5228, 6
  %vm5260 = vcmask 1042434
  %v5261 = vsel %vm5260, %v5259, %v5258
  %v5262 = vrot.slane %v5229, 5
  %vm5263 = vcmask 1043459
  %v5264 = vsel %vm5263, %v5262, %v5261
  %v5265 = vrot.slane %v5230, 4
  %vm5266 = vcmask 1044484
  %v5267 = vsel %vm5266, %v5265, %v5264
  %v5268 = vrot.slane %v5231, 3
  %vm5269 = vcmask 1045509
  %v5270 = vsel %vm5269, %v5268, %v5267
  %v5271 = vrot.slane %v5232, 2
  %vm5272 = vcmask 1046534
  %v5273 = vsel %vm5272, %v5271, %v5270
  %v5274 = vrot.slane %v5233, 1
  %vm5275 = vcmask 1047559
  %v5276 = vsel %vm5275, %v5274, %v5273
  %v5277 = vrot.slane %v5235, 7
  %v5278 = vsel %vm5257, %v5277, %v5234
  %v5279 = vrot.slane %v5236, 6
  %v5280 = vsel %vm5260, %v5279, %v5278
  %v5281 = vrot.slane %v5237, 5
  %v5282 = vsel %vm5263, %v5281, %v5280
  %v5283 = vrot.slane %v5238, 4
  %v5284 = vsel %vm5266, %v5283, %v5282
  %v5285 = vrot.slane %v5239, 3
  %v5286 = vsel %vm5269, %v5285, %v5284
  %v5287 = vrot.slane %v5240, 2
  %v5288 = vsel %vm5272, %v5287, %v5286
  %v5289 = vrot.slane %v5241, 1
  %v5290 = vsel %vm5275, %v5289, %v5288
  %v5291 = vrot.slane %v5243, 7
  %v5292 = vsel %vm5257, %v5291, %v5242
  %v5293 = vrot.slane %v5244, 6
  %v5294 = vsel %vm5260, %v5293, %v5292
  %v5295 = vrot.slane %v5245, 5
  %v5296 = vsel %vm5263, %v5295, %v5294
  %v5297 = vrot.slane %v5246, 4
  %v5298 = vsel %vm5266, %v5297, %v5296
  %v5299 = vrot.slane %v5247, 3
  %v5300 = vsel %vm5269, %v5299, %v5298
  %v5301 = vrot.slane %v5248, 2
  %v5302 = vsel %vm5272, %v5301, %v5300
  %v5303 = vrot.slane %v5249, 1
  %v5304 = vsel %vm5275, %v5303, %v5302
  %v5305 = vrot.slane %v5251, 7
  %v5306 = vsel %vm5257, %v5305, %v5250
  %v5307 = vrot.slane %v5252, 6
  %v5308 = vsel %vm5260, %v5307, %v5306
  %v5309 = vrot.slane %v5253, 5
  %v5310 = vsel %vm5263, %v5309, %v5308
  %v5311 = vrot.slane %v5254, 4
  %v5312 = vsel %vm5266, %v5311, %v5310
  %v5313 = vrot.slane %v5255, 3
  %v5314 = vsel %vm5269, %v5313, %v5312
  %v5315 = vpack.c.b16 %v5290, %v5276
  %v5316 = vpack.c.b16 %v5314, %v5304
  %v5321 = vunpack.c.l.b16 %v5157
  %v5322 = vunpack.c.l.b16 %v5158
  %v5323 = vunpack.c.l.b16 %v5159
  %v5324 = vunpack.c.l.b16 %v5160
  %v5325 = vpack.c.b16 %v5322, %v5321
  %v5326 = vpack.c.b16 %v5324, %v5323
  %v5330 = vsel %vm50, %v5315, 0
  %v5333 = vsel %vm50, %v5316, 0
  %5335 = vmatprep.subr.bf16.mxu0 0
  %5336 = vmatpush1.bf16.msra.mxu0 %v5325
  %5337 = vmatprep.subr.bf16.mxu0 0
  %5338 = vmatpush1.bf16.msra.mxu0 %v5326
  %5339 = vmatprep.subr.bf16.mxu0 0
  %5340 = vmatpush1.bf16.msra.mxu0 0
  %5341 = vmatprep.subr.bf16.mxu0 0
  %5342 = vmatpush1.bf16.msra.mxu0 0
  %5343 = vmatprep.subr.bf16.mxu0 0
  %5344 = vmatpush1.bf16.msra.mxu0 0
  %5345 = vmatprep.subr.bf16.mxu0 0
  %5346 = vmatpush1.bf16.msra.mxu0 0
  %5347 = vmatprep.subr.bf16.mxu0 0
  %5348 = vmatpush1.bf16.msra.mxu0 0
  %5349 = vmatprep.subr.bf16.mxu0 0
  %5350 = vmatpush1.bf16.msra.mxu0 0
  %5351 = vmatprep.subr.bf16.mxu0 0
  %5352 = vmatpush1.bf16.msra.mxu0 0
  %5353 = vmatprep.subr.bf16.mxu0 0
  %5354 = vmatpush1.bf16.msra.mxu0 0
  %5355 = vmatprep.subr.bf16.mxu0 0
  %5356 = vmatpush1.bf16.msra.mxu0 0
  %5357 = vmatprep.subr.bf16.mxu0 0
  %5358 = vmatpush1.bf16.msra.mxu0 0
  %5359 = vmatprep.subr.bf16.mxu0 0
  %5360 = vmatpush1.bf16.msra.mxu0 0
  %5361 = vmatprep.subr.bf16.mxu0 0
  %5362 = vmatpush1.bf16.msra.mxu0 0
  %5363 = vmatprep.subr.bf16.mxu0 0
  %5364 = vmatpush1.bf16.msra.mxu0 0
  %5365 = vmatprep.subr.bf16.mxu0 0
  %5366 = vmatpush1.bf16.msra.mxu0 0
  %5367 = vmatprep.mubr.bf16.mxu0 0
  %5368 = vmatmul.mubr.bf16.gmra.mrb[0].mxu0 %v5330
  %v5369 = vpop.f32.mrb[0].mxu0
  %v5370 = vadd.f32 %v5195, %v5369
  %v5371 = vpop.f32.mrb[0].mxu0
  %v5372 = vpop.f32.mrb[0].mxu0
  %v5373 = vadd.f32 %v5195, %v5372
  %v5374 = vpop.f32.mrb[0].mxu0
  %5375 = vmatprep.mubr.bf16.mxu0 0
  %5376 = vmatmul.mubr.bf16.gmra.mrb[0].mxu0 %v5333
  %v5377 = vpop.f32.mrb[0].mxu0
  %v5378 = vadd.f32 %v5195, %v5377
  %v5379 = vpop.f32.mrb[0].mxu0
  %v5380 = vpop.f32.mrb[0].mxu0
  %v5381 = vadd.f32 %v5195, %v5380
  %v5382 = vpop.f32.mrb[0].mxu0
  %5383 = vdwg.mxu0
  %v5384 = vtanh.pop %v5370
  %v5385 = vtanh.pop %v5373
  %v5386 = vtanh.pop %v5378
  %v5387 = vtanh.pop %v5381
  %5388 = vst.msk [vmem:[%s4] sm:$0xff] %vm50, %v5384
  %5389 = vst.msk [vmem:[%s4 + $0x8] sm:$0xff] %vm50, %v5385
  %5390 = vst.msk [vmem:[%s4 + $0x10] sm:$0xff] %vm50, %v5386
  %vm5391 = vcmask 259072
  %5392 = vst.msk [vmem:[%s4 + $0x18] sm:$0x3f] %vm5391, %v5387
  // Predicated region
  $region18: #{model_forward.2} parent=0 // pred_check
    _
  $region19: #{model_forward.2} parent=0 // pred_check_branch
    %5394 = sbr.rel (0) target = $region21
  $region20: #{model_forward.2} parent=0 // pred_region
    _
  $region21: #{model_forward.2} parent=0 // pred_fallthru
    _
  // Predicated region
  $region22: #{model_forward.2} parent=0 // pred_check
    _
  $region23: #{model_forward.2} parent=0 // pred_check_branch
    %5396 = sbr.rel (0) target = $region25
  $region24: #{model_forward.2} parent=0 // pred_region
    _
  $region25: #{model_forward.2} parent=0 // pred_fallthru
    _

</llo_original>
